<compile_context>
chip_gen: v5e
topology: v5e:2x2
jax: 0.10.0
libtpu: 0.0.40
codegen_flags: <defaults>
</compile_context>

<pallas_src>
import functools
import numpy as np
import jax
import jax.numpy as jnp
from jax.experimental import pallas as pl
from jax.experimental.pallas import tpu as pltpu

# ---------------- mini config (scaled-down ConfigTrans; same structure) -----
B = 2
PAD_SIZE = 16        # torch: 340   (pad_size == seq len)
EMBED = 20           # torch: 340   (dim_model, divisible by NUM_HEAD)
NUM_HEAD = 5
DIM_HEAD = EMBED // NUM_HEAD
HIDDEN = 32          # torch: 1024  (FFN hidden)
NUM_ENCODER = 2
NUM_CLASSES = 13
C_CONV = 8           # torch: 128   (1x1-conv channels == final VGG channels)
IMG = 64             # torch: ~224  (image spatial; 5 maxpools -> 2x2)
VGG_CFG = [4, 'M', 8, 'M', 8, 8, 'M', 8, 8, 'M', C_CONV, C_CONV, 'M']
FC_H1 = 128          # torch: 2048
FC_H2 = 64           # torch: 512
N_TOK = C_CONV * 7 * 7
LN_EPS = 1e-5
BN_EPS = 1e-5


# ============================ Pallas kernels ================================

def _linear_kernel(x_ref, w_ref, b_ref, o_ref):
    # plain y = x @ w + b (no affine / relu streams when not needed)
    o_ref[...] = (jnp.dot(x_ref[...], w_ref[...],
                          preferred_element_type=jnp.float32) + b_ref[...])


def linear(x, w, b, tm):
    """(M, K) @ (K, N) + b, tiled over rows with a parallel grid axis."""
    M, K = x.shape
    N = w.shape[1]
    tm = min(tm, M)
    return pl.pallas_call(
        _linear_kernel,
        out_shape=jax.ShapeDtypeStruct((M, N), jnp.float32),
        grid=(pl.cdiv(M, tm),),
        in_specs=[pl.BlockSpec((tm, K), lambda i: (i, 0)),
                  pl.BlockSpec((K, N), lambda i: (0, 0)),
                  pl.BlockSpec((1, N), lambda i: (0, 0))],
        out_specs=pl.BlockSpec((tm, N), lambda i: (i, 0)),
        compiler_params=pltpu.CompilerParams(dimension_semantics=("parallel",)),
    )(x, w, b)


def _sdpa_kernel(q_ref, k_ref, v_ref, o_ref, *, scale):
    # all heads of one batch element in a single block (batched einsum on MXU)
    q = q_ref[...]                        # (H, S, Dh)
    k = k_ref[...]
    v = v_ref[...]
    s = jnp.einsum('gsd,gtd->gst', q, k,
                   preferred_element_type=jnp.float32) * scale      # (H, S, S)
    m = jnp.max(s, axis=-1, keepdims=True)
    p = jnp.exp(s - m)
    p = p * pl.reciprocal(jnp.sum(p, axis=-1, keepdims=True), approx=True)
    o_ref[...] = jnp.einsum('gst,gtd->gsd', p, v,
                            preferred_element_type=jnp.float32)


def sdpa(q, k, v, scale):
    BH, S, Dh = q.shape
    nb = BH // NUM_HEAD                   # one grid step per batch element
    spec = pl.BlockSpec((NUM_HEAD, S, Dh), lambda i: (i, 0, 0))
    return pl.pallas_call(
        functools.partial(_sdpa_kernel, scale=scale),
        out_shape=jax.ShapeDtypeStruct((BH, S, Dh), jnp.float32),
        grid=(nb,),
        in_specs=[spec, spec, spec],
        out_specs=spec,
        compiler_params=pltpu.CompilerParams(dimension_semantics=("parallel",)),
    )(q, k, v)


def _mha_ffn_kernel(ctx_ref, x_ref, wo_ref, bo_ref, g1_ref, be1_ref,
                    w1_ref, b1_ref, w2_ref, b2_ref, g2_ref, be2_ref, o_ref):
    # fused: output projection + residual + LN1 + FFN(relu) + residual + LN2
    x = x_ref[...]
    o = jnp.dot(ctx_ref[...], wo_ref[...],
                preferred_element_type=jnp.float32) + bo_ref[...]
    z = o + x
    mu = jnp.mean(z, axis=-1, keepdims=True)
    var = jnp.mean(jnp.square(z - mu), axis=-1, keepdims=True)
    a = (z - mu) * jax.lax.rsqrt(var + LN_EPS) * g1_ref[...] + be1_ref[...]
    h = jnp.maximum(jnp.dot(a, w1_ref[...],
                            preferred_element_type=jnp.float32) + b1_ref[...], 0.0)
    f = jnp.dot(h, w2_ref[...], preferred_element_type=jnp.float32) + b2_ref[...]
    z2 = f + a
    mu2 = jnp.mean(z2, axis=-1, keepdims=True)
    var2 = jnp.mean(jnp.square(z2 - mu2), axis=-1, keepdims=True)
    o_ref[...] = (z2 - mu2) * jax.lax.rsqrt(var2 + LN_EPS) * g2_ref[...] + be2_ref[...]


def mha_ffn(ctx2, x2, p):
    M, D = x2.shape
    row = pl.BlockSpec((PAD_SIZE, D), lambda i: (i, 0))
    full = lambda shp: pl.BlockSpec(shp, lambda i: (0, 0))
    return pl.pallas_call(
        _mha_ffn_kernel,
        out_shape=jax.ShapeDtypeStruct((M, D), jnp.float32),
        grid=(M // PAD_SIZE,),
        in_specs=[row, row,
                  full((D, D)), full((1, D)), full((1, D)), full((1, D)),
                  full((D, HIDDEN)), full((1, HIDDEN)),
                  full((HIDDEN, D)), full((1, D)),
                  full((1, D)), full((1, D))],
        out_specs=row,
        compiler_params=pltpu.CompilerParams(dimension_semantics=("parallel",)),
    )(ctx2, x2, p['wo'], p['bo'], p['ln1_g'], p['ln1_b'],
      p['w1'], p['b1'], p['w2'], p['b2'], p['ln2_g'], p['ln2_b'])


def _conv3x3_kernel(p_ref, w_ref, b_ref, o_ref, *, relu):
    # "transposed" conv matmul: (Cout, 9*Cin) @ (9*Cin, H*W) -> lane-dense out
    y = jnp.dot(w_ref[...], p_ref[0], preferred_element_type=jnp.float32)
    y = y + b_ref[...]
    if relu:
        y = jnp.maximum(y, 0.0)
    o_ref[0] = y.astype(o_ref.dtype)


def conv3x3_relu(x, w, bcol):
    """3x3 conv (pad=1) + bias + ReLU. Patches built in glue (bf16), matmul +
    bias + ReLU fused in one kernel with the spatial axis on lanes."""
    Bn, Cin, H, W = x.shape
    Cout = w.shape[0]
    # TODO(synk): im2col patch build is XLA glue (9x read amplification); move
    # the shifted-window accumulation in-kernel once unaligned lane slicing /
    # pltpu.roll semantics are validated on the target Mosaic version.
    xp = jnp.pad(x, ((0, 0), (0, 0), (1, 1), (1, 1)))
    taps = [xp[:, :, ky:ky + H, kx:kx + W] for ky in range(3) for kx in range(3)]
    patches = jnp.concatenate(taps, axis=1).reshape(Bn, 9 * Cin, H * W)
    out = pl.pallas_call(
        functools.partial(_conv3x3_kernel, relu=True),
        out_shape=jax.ShapeDtypeStruct((Bn, Cout, H * W), jnp.bfloat16),
        grid=(Bn,),
        in_specs=[pl.BlockSpec((1, 9 * Cin, H * W), lambda i: (i, 0, 0)),
                  pl.BlockSpec((Cout, 9 * Cin), lambda i: (0, 0)),
                  pl.BlockSpec((Cout, 1), lambda i: (0, 0))],
        out_specs=pl.BlockSpec((1, Cout, H * W), lambda i: (i, 0, 0)),
        compiler_params=pltpu.CompilerParams(dimension_semantics=("parallel",)),
    )(patches, w, bcol)
    return out.reshape(Bn, Cout, H, W)


def _max4_kernel(a_ref, b_ref, c_ref, d_ref, o_ref):
    o_ref[...] = jnp.maximum(jnp.maximum(a_ref[...], b_ref[...]),
                             jnp.maximum(c_ref[...], d_ref[...]))


def maxpool2x2(x):
    """2x2/2 max-pool; strided selection in glue, lane-dense max kernel."""
    Bn, C, H, W = x.shape
    H2, W2 = H // 2, W // 2
    x00 = x[:, :, 0::2, 0::2].reshape(Bn, C, H2 * W2)
    x01 = x[:, :, 0::2, 1::2].reshape(Bn, C, H2 * W2)
    x10 = x[:, :, 1::2, 0::2].reshape(Bn, C, H2 * W2)
    x11 = x[:, :, 1::2, 1::2].reshape(Bn, C, H2 * W2)
    spec = pl.BlockSpec((1, C, H2 * W2), lambda i: (i, 0, 0))
    out = pl.pallas_call(
        _max4_kernel,
        out_shape=jax.ShapeDtypeStruct((Bn, C, H2 * W2), x.dtype),
        grid=(Bn,),
        in_specs=[spec, spec, spec, spec],
        out_specs=spec,
        compiler_params=pltpu.CompilerParams(dimension_semantics=("parallel",)),
    )(x00, x01, x10, x11)
    return out.reshape(Bn, C, H2, W2)


def _fusion_head_kernel(xd_ref, xr_ref, w1a_ref, w1b_ref, s1_ref, c1_ref,
                        w2_ref, s2_ref, c2_ref, w3_ref, s3_ref, c3_ref,
                        o_ref, *, inv_d):
    # cross attention:  softmax((x_d / d) @ x_r^T) @ x_r   (per batch element),
    # then the 3-layer (Linear + folded-BN + ReLU) head, all in one kernel.
    xd = xd_ref[0]                          # (N, 1)  column layout
    xr = xr_ref[0]                          # (1, N)  lane-dense row layout
    logits = (xd * inv_d) * xr              # (N, N) outer product, j on lanes
    m = jnp.max(logits, axis=-1, keepdims=True)
    prob = jnp.exp(logits - m)
    prob = prob * pl.reciprocal(jnp.sum(prob, axis=-1, keepdims=True), approx=True)
    # x1[i] = sum_j prob[i, j] * xr[j]  -> lane-dense (1, N) row
    x1 = jax.lax.dot_general(xr, prob, (((1,), (1,)), ((), ())),
                             preferred_element_type=jnp.float32)        # (1, N)
    # head layer 1 (concat avoided by splitting W1 into the x1 / x_r halves)
    h = (jnp.dot(x1, w1a_ref[...], preferred_element_type=jnp.float32) +
         jnp.dot(xr, w1b_ref[...], preferred_element_type=jnp.float32))
    h = jnp.maximum(h * s1_ref[...] + c1_ref[...], 0.0)
    h = jnp.dot(h, w2_ref[...], preferred_element_type=jnp.float32)
    h = jnp.maximum(h * s2_ref[...] + c2_ref[...], 0.0)
    h = jnp.dot(h, w3_ref[...], preferred_element_type=jnp.float32)
    o_ref[0] = jnp.maximum(h * s3_ref[...] + c3_ref[...], 0.0)


def fusion_head(x_d, x_r, hp, inv_d):
    Bn = x_d.shape[0]
    N = x_d.shape[1]
    col = pl.BlockSpec((1, N, 1), lambda i: (i, 0, 0))
    row = pl.BlockSpec((1, 1, N), lambda i: (i, 0, 0))
    full = lambda shp: pl.BlockSpec(shp, lambda i: (0, 0))
    return pl.pallas_call(
        functools.partial(_fusion_head_kernel, inv_d=inv_d),
        out_shape=jax.ShapeDtypeStruct((Bn, 1, NUM_CLASSES), jnp.float32),
        grid=(Bn,),
        in_specs=[col, row,
                  full((N, FC_H1)), full((N, FC_H1)),
                  full((1, FC_H1)), full((1, FC_H1)),
                  full((FC_H1, FC_H2)), full((1, FC_H2)), full((1, FC_H2)),
                  full((FC_H2, NUM_CLASSES)),
                  full((1, NUM_CLASSES)), full((1, NUM_CLASSES))],
        out_specs=pl.BlockSpec((1, 1, NUM_CLASSES), lambda i: (i, 0, 0)),
        compiler_params=pltpu.CompilerParams(dimension_semantics=("parallel",)),
    )(x_d, x_r, hp['w1a'], hp['w1b'], hp['s1'], hp['c1'],
      hp['w2'], hp['s2'], hp['c2'], hp['w3'], hp['s3'], hp['c3'])


# =========================== model building blocks ==========================

def encoder_layer(x2, p):
    """One transformer encoder layer = 3 pallas_calls (QKV, SDPA, rest)."""
    qkv = linear(x2, p['wqkv'], p['bqkv'], tm=PAD_SIZE)          # (B*S, 3D)
    q = qkv[:, :EMBED]
    k = qkv[:, EMBED:2 * EMBED]
    v = qkv[:, 2 * EMBED:]
    # exact replica of torch's `.view(batch*num_head, -1, dim_head)` (row-major)
    qh = q.reshape(B * NUM_HEAD, -1, DIM_HEAD)
    kh = k.reshape(B * NUM_HEAD, -1, DIM_HEAD)
    vh = v.reshape(B * NUM_HEAD, -1, DIM_HEAD)
    ctx = sdpa(qh, kh, vh, DIM_HEAD ** -0.5)
    ctx2 = ctx.reshape(B * PAD_SIZE, EMBED)
    return mha_ffn(ctx2, x2, p)                                   # (B*S, D)


def _adaptive_pool_matrix(in_size, out_size):
    # exact torch AdaptiveAvgPool windows: [floor(i*in/out), ceil((i+1)*in/out))
    A = np.zeros((out_size, in_size), np.float32)
    for i in range(out_size):
        start = (i * in_size) // out_size
        end = -((-(i + 1) * in_size) // out_size)
        A[i, start:end] = 1.0 / (end - start)
    return jnp.asarray(A)


def forward(x_i_nchw, x_t, params):
    # ---------------- transformer branch ----------------
    x_pe = (x_t + params['pe'][None]).reshape(B * PAD_SIZE, EMBED)  # PE (dropout no-op)
    h = x_pe
    for _ in range(NUM_ENCODER):          # encoders are deepcopies -> same weights
        h = encoder_layer(h, params['enc'])
    out_t = h.reshape(B, PAD_SIZE, EMBED)

    # AdaptiveAvgPool2d((7,7)) of the single-channel (B,1,S,E) map, then the
    # 1x1 Conv2d(1,C) folded in (average and per-channel affine commute).
    # TODO(synk): pooling-matrix einsums kept as tiny XLA glue.
    Ah_t = _adaptive_pool_matrix(PAD_SIZE, 7)
    Aw_t = _adaptive_pool_matrix(EMBED, 7)
    pt = jnp.einsum('ih,bhe->bie', Ah_t, out_t)
    pt = jnp.einsum('je,bie->bij', Aw_t, pt)                         # (B,7,7)
    conv_t = (pt.reshape(B, 1, 49) * params['conv_w'].reshape(1, C_CONV, 1)
              + params['conv_b'].reshape(1, C_CONV, 1))              # (B,C,49)

    # ---------------- image branch (VGG-ish features, bf16 operands) --------
    feat = x_i_nchw.astype(jnp.bfloat16)
    li = 0
    for v in VGG_CFG:
        if v == 'M':
            feat = maxpool2x2(feat)
        else:
            w, bcol = params['vgg'][li]
            li += 1
            feat = conv3x3_relu(feat, w, bcol)
    fi = feat.astype(jnp.float32)                                    # (B,C,2,2)
    Ah_i = _adaptive_pool_matrix(fi.shape[2], 7)
    Aw_i = _adaptive_pool_matrix(fi.shape[3], 7)
    pi = jnp.einsum('ih,bchw->bciw', Ah_i, fi)
    pi = jnp.einsum('jw,bciw->bcij', Aw_i, pi)                       # (B,C,7,7)
    conv_i = pi.reshape(B, C_CONV, 49)

    # ---------------- fusion ----------------
    # linear_i applied to BOTH branches (as in the torch module) in one call.
    rows = jnp.concatenate([conv_t.reshape(B * C_CONV, 49),
                            conv_i.reshape(B * C_CONV, 49)], axis=0)
    li_out = linear(rows, params['li_w'], params['li_b'], tm=B * C_CONV)
    x_d = li_out[:B * C_CONV].reshape(B, N_TOK, 1)      # column layout for the kernel
    x_r = li_out[B * C_CONV:].reshape(B, 1, N_TOK)      # lane-dense row layout

    inv_d = 1.0 / (float(C_CONV) ** 0.5)
    logits = fusion_head(x_d, x_r, params['head'], inv_d)            # (B,1,13)

    return (x_r.reshape(B, N_TOK), x_d.reshape(B, N_TOK),
            logits.reshape(B, NUM_CLASSES))


# ============================ parameter init ================================

def positional_encoding_table(embed, pad_size):
    pe = np.array([[pos / (10000.0 ** ((i // 2) * 2.0 / embed)) for i in range(embed)]
                   for pos in range(pad_size)], dtype=np.float32)
    pe[:, 0::2] = np.sin(pe[:, 0::2])
    pe[:, 1::2] = np.cos(pe[:, 1::2])
    return pe


def init_params(key):
    cnt = [0]

    def nk():
        cnt[0] += 1
        return jax.random.fold_in(key, cnt[0])

    def nrm(shape, fan_in):
        return jax.random.normal(nk(), shape, jnp.float32) * (float(fan_in) ** -0.5)

    # encoder (Q/K/V weights concatenated into one fused projection)
    wq = nrm((EMBED, EMBED), EMBED)
    wk = nrm((EMBED, EMBED), EMBED)
    wv = nrm((EMBED, EMBED), EMBED)
    bq = nrm((EMBED,), EMBED)
    bk = nrm((EMBED,), EMBED)
    bv = nrm((EMBED,), EMBED)
    enc = dict(
        wqkv=jnp.concatenate([wq, wk, wv], axis=1),
        bqkv=jnp.concatenate([bq, bk, bv]).reshape(1, 3 * EMBED),
        wo=nrm((EMBED, EMBED), EMBED),
        bo=nrm((EMBED,), EMBED).reshape(1, EMBED),
        ln1_g=jnp.ones((1, EMBED), jnp.float32),
        ln1_b=jnp.zeros((1, EMBED), jnp.float32),
        w1=nrm((EMBED, HIDDEN), EMBED),
        b1=nrm((HIDDEN,), EMBED).reshape(1, HIDDEN),
        w2=nrm((HIDDEN, EMBED), HIDDEN),
        b2=nrm((EMBED,), HIDDEN).reshape(1, EMBED),
        ln2_g=jnp.ones((1, EMBED), jnp.float32),
        ln2_b=jnp.zeros((1, EMBED), jnp.float32),
    )

    # VGG conv weights stored "transposed": (Cout, 9*Cin), bf16 operands.
    vgg = []
    cin = 3
    for v in VGG_CFG:
        if v == 'M':
            continue
        vgg.append((nrm((v, 9 * cin), 9 * cin).astype(jnp.bfloat16),
                    nrm((v, 1), 9 * cin)))
        cin = v

    def bn_fold(n):
        gamma = 1.0 + 0.1 * jax.random.normal(nk(), (n,), jnp.float32)
        beta = 0.1 * jax.random.normal(nk(), (n,), jnp.float32)
        mean = 0.1 * jax.random.normal(nk(), (n,), jnp.float32)
        var = jax.random.uniform(nk(), (n,), jnp.float32, 0.5, 1.5)
        scale = gamma * jax.lax.rsqrt(var + BN_EPS)
        shift = beta - mean * scale
        return scale, shift

    # classification head: Linear bias is pre-folded into the BN shift.
    w1 = nrm((2 * N_TOK, FC_H1), 2 * N_TOK)
    b1 = nrm((FC_H1,), 2 * N_TOK)
    s1, t1 = bn_fold(FC_H1)
    w2 = nrm((FC_H1, FC_H2), FC_H1)
    b2 = nrm((FC_H2,), FC_H1)
    s2, t2 = bn_fold(FC_H2)
    w3 = nrm((FC_H2, NUM_CLASSES), FC_H2)
    b3 = nrm((NUM_CLASSES,), FC_H2)
    s3, t3 = bn_fold(NUM_CLASSES)
    head = dict(
        w1a=w1[:N_TOK], w1b=w1[N_TOK:],
        s1=s1.reshape(1, FC_H1), c1=(b1 * s1 + t1).reshape(1, FC_H1),
        w2=w2, s2=s2.reshape(1, FC_H2), c2=(b2 * s2 + t2).reshape(1, FC_H2),
        w3=w3, s3=s3.reshape(1, NUM_CLASSES),
        c3=(b3 * s3 + t3).reshape(1, NUM_CLASSES),
    )

    return dict(
        pe=jnp.asarray(positional_encoding_table(EMBED, PAD_SIZE)),
        enc=enc,
        conv_w=nrm((C_CONV,), 1), conv_b=nrm((C_CONV,), 1),
        vgg=vgg,
        li_w=nrm((49, 49), 49), li_b=nrm((49,), 49).reshape(1, 49),
        head=head,
    )


# ================================== main ====================================

if __name__ == "__main__":
    key = jax.random.PRNGKey(0)
    params = init_params(jax.random.fold_in(key, 1000))
    x_t = jax.random.normal(jax.random.fold_in(key, 1), (B, PAD_SIZE, EMBED), jnp.float32)
    x_i = jax.random.normal(jax.random.fold_in(key, 2), (B, 3, IMG, IMG), jnp.float32)

    fwd = jax.jit(forward)
    x_r_out, x_d_out, logits = fwd(x_i, x_t, params)
    jax.block_until_ready((x_r_out, x_d_out, logits))

    assert x_r_out.shape == (B, N_TOK)
    assert x_d_out.shape == (B, N_TOK)
    assert logits.shape == (B, NUM_CLASSES)
    print("KERNEL_OK")
</pallas_src>

<mosaic_0001>
module attributes {stable_mosaic.version = 11 : i64} {
  func.func @_conv3x3_kernel(%arg0: i32, %arg1: memref<1x27x4096xbf16, #tpu.memory_space<vmem>>, %arg2: memref<4x27xbf16, #tpu.memory_space<vmem>>, %arg3: memref<4x1xf32, #tpu.memory_space<vmem>>, %arg4: memref<1x4x4096xbf16, #tpu.memory_space<vmem>>) attributes {dimension_semantics = [#tpu.dimension_semantics<parallel>], iteration_bounds = array<i64: 2>, scalar_prefetch = 0 : i64, scratch_operands = 0 : i64, tpu.core_type = #tpu.core_type<tc>, window_params = [{transform_indices = @transform_0, window_bounds = array<i64: 1, 27, 4096>}, {pipeline_mode = #tpu.pipeline_mode<synchronous>, transform_indices = @transform_1, window_bounds = array<i64: 4, 27>}, {pipeline_mode = #tpu.pipeline_mode<synchronous>, transform_indices = @transform_2, window_bounds = array<i64: 4, 1>}, {transform_indices = @transform_3, window_bounds = array<i64: 1, 4, 4096>}]} {
    %c0 = arith.constant 0 : index
    %c0_0 = arith.constant 0 : index
    %0 = vector.load %arg2[%c0, %c0_0] : memref<4x27xbf16, #tpu.memory_space<vmem>>, vector<4x27xbf16>
    %c0_1 = arith.constant 0 : index
    %c0_2 = arith.constant 0 : index
    %c0_3 = arith.constant 0 : index
    %1 = vector.load %arg1[%c0_1, %c0_2, %c0_3] : memref<1x27x4096xbf16, #tpu.memory_space<vmem>>, vector<1x27x4096xbf16>
    %2 = vector.shape_cast %1 : vector<1x27x4096xbf16> to vector<27x4096xbf16>
    %cst = arith.constant dense<0.000000e+00> : vector<4x4096xf32>
    %3 = tpu.matmul %0, %2, %cst {dimension_numbers = #tpu.dot_dimension_numbers<[1], [0], [0], [1], [0, 0, 1, 1], [], []>} : vector<4x27xbf16>, vector<27x4096xbf16>, vector<4x4096xf32> -> vector<4x4096xf32>
    %c0_4 = arith.constant 0 : index
    %c0_5 = arith.constant 0 : index
    %4 = vector.load %arg3[%c0_4, %c0_5] : memref<4x1xf32, #tpu.memory_space<vmem>>, vector<4x1xf32>
    %5 = vector.broadcast %4 : vector<4x1xf32> to vector<4x4096xf32>
    %6 = arith.addf %3, %5 : vector<4x4096xf32>
    %cst_6 = arith.constant 0.000000e+00 : f32
    %7 = vector.broadcast %cst_6 : f32 to vector<4x4096xf32>
    %8 = arith.maximumf %6, %7 : vector<4x4096xf32>
    %9 = arith.truncf %8 : vector<4x4096xf32> to vector<4x4096xbf16>
    %c0_7 = arith.constant 0 : index
    %c0_8 = arith.constant 0 : index
    %c0_9 = arith.constant 0 : index
    %10 = vector.load %arg4[%c0_7, %c0_8, %c0_9] : memref<1x4x4096xbf16, #tpu.memory_space<vmem>>, vector<1x4x4096xbf16>
    %11 = vector.shape_cast %10 : vector<1x4x4096xbf16> to vector<4x4096xbf16>
    %12 = vector.shape_cast %9 : vector<4x4096xbf16> to vector<1x4x4096xbf16>
    tpu.vector_store %arg4[%c0_7, %c0_8, %c0_9], %12 {strides = array<i32>} : memref<1x4x4096xbf16, #tpu.memory_space<vmem>>, vector<1x4x4096xbf16>,
    return
  }
  func.func @transform_0(%arg0: i32) -> (i32, i32, i32) {
    %c0_i32 = arith.constant 0 : i32
    %c0_i32_0 = arith.constant 0 : i32
    %c0_i32_1 = arith.constant 0 : i32
    return %arg0, %c0_i32, %c0_i32_0 : i32, i32, i32
  }
  func.func @transform_1(%arg0: i32) -> (i32, i32) {
    %c0_i32 = arith.constant 0 : i32
    %c0_i32_0 = arith.constant 0 : i32
    %c0_i32_1 = arith.constant 0 : i32
    return %c0_i32, %c0_i32_0 : i32, i32
  }
  func.func @transform_2(%arg0: i32) -> (i32, i32) {
    %c0_i32 = arith.constant 0 : i32
    %c0_i32_0 = arith.constant 0 : i32
    %c0_i32_1 = arith.constant 0 : i32
    return %c0_i32, %c0_i32_0 : i32, i32
  }
  func.func @transform_3(%arg0: i32) -> (i32, i32, i32) {
    %c0_i32 = arith.constant 0 : i32
    %c0_i32_0 = arith.constant 0 : i32
    %c0_i32_1 = arith.constant 0 : i32
    return %arg0, %c0_i32, %c0_i32_0 : i32, i32, i32
  }
}

module attributes {stable_mosaic.version = 11 : i64} {
  func.func @_max4_kernel(%arg0: i32, %arg1: memref<1x4x1024xbf16, #tpu.memory_space<vmem>>, %arg2: memref<1x4x1024xbf16, #tpu.memory_space<vmem>>, %arg3: memref<1x4x1024xbf16, #tpu.memory_space<vmem>>, %arg4: memref<1x4x1024xbf16, #tpu.memory_space<vmem>>, %arg5: memref<1x4x1024xbf16, #tpu.memory_space<vmem>>) attributes {dimension_semantics = [#tpu.dimension_semantics<parallel>], iteration_bounds = array<i64: 2>, scalar_prefetch = 0 : i64, scratch_operands = 0 : i64, tpu.core_type = #tpu.core_type<tc>, window_params = [{transform_indices = @transform_0, window_bounds = array<i64: 1, 4, 1024>}, {transform_indices = @transform_1, window_bounds = array<i64: 1, 4, 1024>}, {transform_indices = @transform_2, window_bounds = array<i64: 1, 4, 1024>}, {transform_indices = @transform_3, window_bounds = array<i64: 1, 4, 1024>}, {transform_indices = @transform_4, window_bounds = array<i64: 1, 4, 1024>}]} {
    %c0 = arith.constant 0 : index
    %c0_0 = arith.constant 0 : index
    %c0_1 = arith.constant 0 : index
    %0 = vector.load %arg1[%c0, %c0_0, %c0_1] : memref<1x4x1024xbf16, #tpu.memory_space<vmem>>, vector<1x4x1024xbf16>
    %c0_2 = arith.constant 0 : index
    %c0_3 = arith.constant 0 : index
    %c0_4 = arith.constant 0 : index
    %1 = vector.load %arg2[%c0_2, %c0_3, %c0_4] : memref<1x4x1024xbf16, #tpu.memory_space<vmem>>, vector<1x4x1024xbf16>
    %2 = arith.maximumf %0, %1 : vector<1x4x1024xbf16>
    %c0_5 = arith.constant 0 : index
    %c0_6 = arith.constant 0 : index
    %c0_7 = arith.constant 0 : index
    %3 = vector.load %arg3[%c0_5, %c0_6, %c0_7] : memref<1x4x1024xbf16, #tpu.memory_space<vmem>>, vector<1x4x1024xbf16>
    %c0_8 = arith.constant 0 : index
    %c0_9 = arith.constant 0 : index
    %c0_10 = arith.constant 0 : index
    %4 = vector.load %arg4[%c0_8, %c0_9, %c0_10] : memref<1x4x1024xbf16, #tpu.memory_space<vmem>>, vector<1x4x1024xbf16>
    %5 = arith.maximumf %3, %4 : vector<1x4x1024xbf16>
    %6 = arith.maximumf %2, %5 : vector<1x4x1024xbf16>
    %c0_11 = arith.constant 0 : index
    %c0_12 = arith.constant 0 : index
    %c0_13 = arith.constant 0 : index
    %7 = vector.load %arg5[%c0_11, %c0_12, %c0_13] : memref<1x4x1024xbf16, #tpu.memory_space<vmem>>, vector<1x4x1024xbf16>
    tpu.vector_store %arg5[%c0_11, %c0_12, %c0_13], %6 {strides = array<i32>} : memref<1x4x1024xbf16, #tpu.memory_space<vmem>>, vector<1x4x1024xbf16>,
    return
  }
  func.func @transform_0(%arg0: i32) -> (i32, i32, i32) {
    %c0_i32 = arith.constant 0 : i32
    %c0_i32_0 = arith.constant 0 : i32
    %c0_i32_1 = arith.constant 0 : i32
    return %arg0, %c0_i32, %c0_i32_0 : i32, i32, i32
  }
  func.func @transform_1(%arg0: i32) -> (i32, i32, i32) {
    %c0_i32 = arith.constant 0 : i32
    %c0_i32_0 = arith.constant 0 : i32
    %c0_i32_1 = arith.constant 0 : i32
    return %arg0, %c0_i32, %c0_i32_0 : i32, i32, i32
  }
  func.func @transform_2(%arg0: i32) -> (i32, i32, i32) {
    %c0_i32 = arith.constant 0 : i32
    %c0_i32_0 = arith.constant 0 : i32
    %c0_i32_1 = arith.constant 0 : i32
    return %arg0, %c0_i32, %c0_i32_0 : i32, i32, i32
  }
  func.func @transform_3(%arg0: i32) -> (i32, i32, i32) {
    %c0_i32 = arith.constant 0 : i32
    %c0_i32_0 = arith.constant 0 : i32
    %c0_i32_1 = arith.constant 0 : i32
    return %arg0, %c0_i32, %c0_i32_0 : i32, i32, i32
  }
  func.func @transform_4(%arg0: i32) -> (i32, i32, i32) {
    %c0_i32 = arith.constant 0 : i32
    %c0_i32_0 = arith.constant 0 : i32
    %c0_i32_1 = arith.constant 0 : i32
    return %arg0, %c0_i32, %c0_i32_0 : i32, i32, i32
  }
}

module attributes {stable_mosaic.version = 11 : i64} {
  func.func @_conv3x3_kernel(%arg0: i32, %arg1: memref<1x36x1024xbf16, #tpu.memory_space<vmem>>, %arg2: memref<8x36xbf16, #tpu.memory_space<vmem>>, %arg3: memref<8x1xf32, #tpu.memory_space<vmem>>, %arg4: memref<1x8x1024xbf16, #tpu.memory_space<vmem>>) attributes {dimension_semantics = [#tpu.dimension_semantics<parallel>], iteration_bounds = array<i64: 2>, scalar_prefetch = 0 : i64, scratch_operands = 0 : i64, tpu.core_type = #tpu.core_type<tc>, window_params = [{transform_indices = @transform_0, window_bounds = array<i64: 1, 36, 1024>}, {pipeline_mode = #tpu.pipeline_mode<synchronous>, transform_indices = @transform_1, window_bounds = array<i64: 8, 36>}, {pipeline_mode = #tpu.pipeline_mode<synchronous>, transform_indices = @transform_2, window_bounds = array<i64: 8, 1>}, {transform_indices = @transform_3, window_bounds = array<i64: 1, 8, 1024>}]} {
    %c0 = arith.constant 0 : index
    %c0_0 = arith.constant 0 : index
    %0 = vector.load %arg2[%c0, %c0_0] : memref<8x36xbf16, #tpu.memory_space<vmem>>, vector<8x36xbf16>
    %c0_1 = arith.constant 0 : index
    %c0_2 = arith.constant 0 : index
    %c0_3 = arith.constant 0 : index
    %1 = vector.load %arg1[%c0_1, %c0_2, %c0_3] : memref<1x36x1024xbf16, #tpu.memory_space<vmem>>, vector<1x36x1024xbf16>
    %2 = vector.shape_cast %1 : vector<1x36x1024xbf16> to vector<36x1024xbf16>
    %cst = arith.constant dense<0.000000e+00> : vector<8x1024xf32>
    %3 = tpu.matmul %0, %2, %cst {dimension_numbers = #tpu.dot_dimension_numbers<[1], [0], [0], [1], [0, 0, 1, 1], [], []>} : vector<8x36xbf16>, vector<36x1024xbf16>, vector<8x1024xf32> -> vector<8x1024xf32>
    %c0_4 = arith.constant 0 : index
    %c0_5 = arith.constant 0 : index
    %4 = vector.load %arg3[%c0_4, %c0_5] : memref<8x1xf32, #tpu.memory_space<vmem>>, vector<8x1xf32>
    %5 = vector.broadcast %4 : vector<8x1xf32> to vector<8x1024xf32>
    %6 = arith.addf %3, %5 : vector<8x1024xf32>
    %cst_6 = arith.constant 0.000000e+00 : f32
    %7 = vector.broadcast %cst_6 : f32 to vector<8x1024xf32>
    %8 = arith.maximumf %6, %7 : vector<8x1024xf32>
    %9 = arith.truncf %8 : vector<8x1024xf32> to vector<8x1024xbf16>
    %c0_7 = arith.constant 0 : index
    %c0_8 = arith.constant 0 : index
    %c0_9 = arith.constant 0 : index
    %10 = vector.load %arg4[%c0_7, %c0_8, %c0_9] : memref<1x8x1024xbf16, #tpu.memory_space<vmem>>, vector<1x8x1024xbf16>
    %11 = vector.shape_cast %10 : vector<1x8x1024xbf16> to vector<8x1024xbf16>
    %12 = vector.shape_cast %9 : vector<8x1024xbf16> to vector<1x8x1024xbf16>
    tpu.vector_store %arg4[%c0_7, %c0_8, %c0_9], %12 {strides = array<i32>} : memref<1x8x1024xbf16, #tpu.memory_space<vmem>>, vector<1x8x1024xbf16>,
    return
  }
  func.func @transform_0(%arg0: i32) -> (i32, i32, i32) {
    %c0_i32 = arith.constant 0 : i32
    %c0_i32_0 = arith.constant 0 : i32
    %c0_i32_1 = arith.constant 0 : i32
    return %arg0, %c0_i32, %c0_i32_0 : i32, i32, i32
  }
  func.func @transform_1(%arg0: i32) -> (i32, i32) {
    %c0_i32 = arith.constant 0 : i32
    %c0_i32_0 = arith.constant 0 : i32
    %c0_i32_1 = arith.constant 0 : i32
    return %c0_i32, %c0_i32_0 : i32, i32
  }
  func.func @transform_2(%arg0: i32) -> (i32, i32) {
    %c0_i32 = arith.constant 0 : i32
    %c0_i32_0 = arith.constant 0 : i32
    %c0_i32_1 = arith.constant 0 : i32
    return %c0_i32, %c0_i32_0 : i32, i32
  }
  func.func @transform_3(%arg0: i32) -> (i32, i32, i32) {
    %c0_i32 = arith.constant 0 : i32
    %c0_i32_0 = arith.constant 0 : i32
    %c0_i32_1 = arith.constant 0 : i32
    return %arg0, %c0_i32, %c0_i32_0 : i32, i32, i32
  }
}

module attributes {stable_mosaic.version = 11 : i64} {
  func.func @_max4_kernel(%arg0: i32, %arg1: memref<1x8x256xbf16, #tpu.memory_space<vmem>>, %arg2: memref<1x8x256xbf16, #tpu.memory_space<vmem>>, %arg3: memref<1x8x256xbf16, #tpu.memory_space<vmem>>, %arg4: memref<1x8x256xbf16, #tpu.memory_space<vmem>>, %arg5: memref<1x8x256xbf16, #tpu.memory_space<vmem>>) attributes {dimension_semantics = [#tpu.dimension_semantics<parallel>], iteration_bounds = array<i64: 2>, scalar_prefetch = 0 : i64, scratch_operands = 0 : i64, tpu.core_type = #tpu.core_type<tc>, window_params = [{transform_indices = @transform_0, window_bounds = array<i64: 1, 8, 256>}, {transform_indices = @transform_1, window_bounds = array<i64: 1, 8, 256>}, {transform_indices = @transform_2, window_bounds = array<i64: 1, 8, 256>}, {transform_indices = @transform_3, window_bounds = array<i64: 1, 8, 256>}, {transform_indices = @transform_4, window_bounds = array<i64: 1, 8, 256>}]} {
    %c0 = arith.constant 0 : index
    %c0_0 = arith.constant 0 : index
    %c0_1 = arith.constant 0 : index
    %0 = vector.load %arg1[%c0, %c0_0, %c0_1] : memref<1x8x256xbf16, #tpu.memory_space<vmem>>, vector<1x8x256xbf16>
    %c0_2 = arith.constant 0 : index
    %c0_3 = arith.constant 0 : index
    %c0_4 = arith.constant 0 : index
    %1 = vector.load %arg2[%c0_2, %c0_3, %c0_4] : memref<1x8x256xbf16, #tpu.memory_space<vmem>>, vector<1x8x256xbf16>
    %2 = arith.maximumf %0, %1 : vector<1x8x256xbf16>
    %c0_5 = arith.constant 0 : index
    %c0_6 = arith.constant 0 : index
    %c0_7 = arith.constant 0 : index
    %3 = vector.load %arg3[%c0_5, %c0_6, %c0_7] : memref<1x8x256xbf16, #tpu.memory_space<vmem>>, vector<1x8x256xbf16>
    %c0_8 = arith.constant 0 : index
    %c0_9 = arith.constant 0 : index
    %c0_10 = arith.constant 0 : index
    %4 = vector.load %arg4[%c0_8, %c0_9, %c0_10] : memref<1x8x256xbf16, #tpu.memory_space<vmem>>, vector<1x8x256xbf16>
    %5 = arith.maximumf %3, %4 : vector<1x8x256xbf16>
    %6 = arith.maximumf %2, %5 : vector<1x8x256xbf16>
    %c0_11 = arith.constant 0 : index
    %c0_12 = arith.constant 0 : index
    %c0_13 = arith.constant 0 : index
    %7 = vector.load %arg5[%c0_11, %c0_12, %c0_13] : memref<1x8x256xbf16, #tpu.memory_space<vmem>>, vector<1x8x256xbf16>
    tpu.vector_store %arg5[%c0_11, %c0_12, %c0_13], %6 {strides = array<i32>} : memref<1x8x256xbf16, #tpu.memory_space<vmem>>, vector<1x8x256xbf16>,
    return
  }
  func.func @transform_0(%arg0: i32) -> (i32, i32, i32) {
    %c0_i32 = arith.constant 0 : i32
    %c0_i32_0 = arith.constant 0 : i32
    %c0_i32_1 = arith.constant 0 : i32
    return %arg0, %c0_i32, %c0_i32_0 : i32, i32, i32
  }
  func.func @transform_1(%arg0: i32) -> (i32, i32, i32) {
    %c0_i32 = arith.constant 0 : i32
    %c0_i32_0 = arith.constant 0 : i32
    %c0_i32_1 = arith.constant 0 : i32
    return %arg0, %c0_i32, %c0_i32_0 : i32, i32, i32
  }
  func.func @transform_2(%arg0: i32) -> (i32, i32, i32) {
    %c0_i32 = arith.constant 0 : i32
    %c0_i32_0 = arith.constant 0 : i32
    %c0_i32_1 = arith.constant 0 : i32
    return %arg0, %c0_i32, %c0_i32_0 : i32, i32, i32
  }
  func.func @transform_3(%arg0: i32) -> (i32, i32, i32) {
    %c0_i32 = arith.constant 0 : i32
    %c0_i32_0 = arith.constant 0 : i32
    %c0_i32_1 = arith.constant 0 : i32
    return %arg0, %c0_i32, %c0_i32_0 : i32, i32, i32
  }
  func.func @transform_4(%arg0: i32) -> (i32, i32, i32) {
    %c0_i32 = arith.constant 0 : i32
    %c0_i32_0 = arith.constant 0 : i32
    %c0_i32_1 = arith.constant 0 : i32
    return %arg0, %c0_i32, %c0_i32_0 : i32, i32, i32
  }
}

module attributes {stable_mosaic.version = 11 : i64} {
  func.func @_conv3x3_kernel(%arg0: i32, %arg1: memref<1x72x256xbf16, #tpu.memory_space<vmem>>, %arg2: memref<8x72xbf16, #tpu.memory_space<vmem>>, %arg3: memref<8x1xf32, #tpu.memory_space<vmem>>, %arg4: memref<1x8x256xbf16, #tpu.memory_space<vmem>>) attributes {dimension_semantics = [#tpu.dimension_semantics<parallel>], iteration_bounds = array<i64: 2>, scalar_prefetch = 0 : i64, scratch_operands = 0 : i64, tpu.core_type = #tpu.core_type<tc>, window_params = [{transform_indices = @transform_0, window_bounds = array<i64: 1, 72, 256>}, {pipeline_mode = #tpu.pipeline_mode<synchronous>, transform_indices = @transform_1, window_bounds = array<i64: 8, 72>}, {pipeline_mode = #tpu.pipeline_mode<synchronous>, transform_indices = @transform_2, window_bounds = array<i64: 8, 1>}, {transform_indices = @transform_3, window_bounds = array<i64: 1, 8, 256>}]} {
    %c0 = arith.constant 0 : index
    %c0_0 = arith.constant 0 : index
    %0 = vector.load %arg2[%c0, %c0_0] : memref<8x72xbf16, #tpu.memory_space<vmem>>, vector<8x72xbf16>
    %c0_1 = arith.constant 0 : index
    %c0_2 = arith.constant 0 : index
    %c0_3 = arith.constant 0 : index
    %1 = vector.load %arg1[%c0_1, %c0_2, %c0_3] : memref<1x72x256xbf16, #tpu.memory_space<vmem>>, vector<1x72x256xbf16>
    %2 = vector.shape_cast %1 : vector<1x72x256xbf16> to vector<72x256xbf16>
    %cst = arith.constant dense<0.000000e+00> : vector<8x256xf32>
    %3 = tpu.matmul %0, %2, %cst {dimension_numbers = #tpu.dot_dimension_numbers<[1], [0], [0], [1], [0, 0, 1, 1], [], []>} : vector<8x72xbf16>, vector<72x256xbf16>, vector<8x256xf32> -> vector<8x256xf32>
    %c0_4 = arith.constant 0 : index
    %c0_5 = arith.constant 0 : index
    %4 = vector.load %arg3[%c0_4, %c0_5] : memref<8x1xf32, #tpu.memory_space<vmem>>, vector<8x1xf32>
    %5 = vector.broadcast %4 : vector<8x1xf32> to vector<8x256xf32>
    %6 = arith.addf %3, %5 : vector<8x256xf32>
    %cst_6 = arith.constant 0.000000e+00 : f32
    %7 = vector.broadcast %cst_6 : f32 to vector<8x256xf32>
    %8 = arith.maximumf %6, %7 : vector<8x256xf32>
    %9 = arith.truncf %8 : vector<8x256xf32> to vector<8x256xbf16>
    %c0_7 = arith.constant 0 : index
    %c0_8 = arith.constant 0 : index
    %c0_9 = arith.constant 0 : index
    %10 = vector.load %arg4[%c0_7, %c0_8, %c0_9] : memref<1x8x256xbf16, #tpu.memory_space<vmem>>, vector<1x8x256xbf16>
    %11 = vector.shape_cast %10 : vector<1x8x256xbf16> to vector<8x256xbf16>
    %12 = vector.shape_cast %9 : vector<8x256xbf16> to vector<1x8x256xbf16>
    tpu.vector_store %arg4[%c0_7, %c0_8, %c0_9], %12 {strides = array<i32>} : memref<1x8x256xbf16, #tpu.memory_space<vmem>>, vector<1x8x256xbf16>,
    return
  }
  func.func @transform_0(%arg0: i32) -> (i32, i32, i32) {
    %c0_i32 = arith.constant 0 : i32
    %c0_i32_0 = arith.constant 0 : i32
    %c0_i32_1 = arith.constant 0 : i32
    return %arg0, %c0_i32, %c0_i32_0 : i32, i32, i32
  }
  func.func @transform_1(%arg0: i32) -> (i32, i32) {
    %c0_i32 = arith.constant 0 : i32
    %c0_i32_0 = arith.constant 0 : i32
    %c0_i32_1 = arith.constant 0 : i32
    return %c0_i32, %c0_i32_0 : i32, i32
  }
  func.func @transform_2(%arg0: i32) -> (i32, i32) {
    %c0_i32 = arith.constant 0 : i32
    %c0_i32_0 = arith.constant 0 : i32
    %c0_i32_1 = arith.constant 0 : i32
    return %c0_i32, %c0_i32_0 : i32, i32
  }
  func.func @transform_3(%arg0: i32) -> (i32, i32, i32) {
    %c0_i32 = arith.constant 0 : i32
    %c0_i32_0 = arith.constant 0 : i32
    %c0_i32_1 = arith.constant 0 : i32
    return %arg0, %c0_i32, %c0_i32_0 : i32, i32, i32
  }
}

module attributes {stable_mosaic.version = 11 : i64} {
  func.func @_max4_kernel(%arg0: i32, %arg1: memref<1x8x64xbf16, #tpu.memory_space<vmem>>, %arg2: memref<1x8x64xbf16, #tpu.memory_space<vmem>>, %arg3: memref<1x8x64xbf16, #tpu.memory_space<vmem>>, %arg4: memref<1x8x64xbf16, #tpu.memory_space<vmem>>, %arg5: memref<1x8x64xbf16, #tpu.memory_space<vmem>>) attributes {dimension_semantics = [#tpu.dimension_semantics<parallel>], iteration_bounds = array<i64: 2>, scalar_prefetch = 0 : i64, scratch_operands = 0 : i64, tpu.core_type = #tpu.core_type<tc>, window_params = [{transform_indices = @transform_0, window_bounds = array<i64: 1, 8, 64>}, {transform_indices = @transform_1, window_bounds = array<i64: 1, 8, 64>}, {transform_indices = @transform_2, window_bounds = array<i64: 1, 8, 64>}, {transform_indices = @transform_3, window_bounds = array<i64: 1, 8, 64>}, {transform_indices = @transform_4, window_bounds = array<i64: 1, 8, 64>}]} {
    %c0 = arith.constant 0 : index
    %c0_0 = arith.constant 0 : index
    %c0_1 = arith.constant 0 : index
    %0 = vector.load %arg1[%c0, %c0_0, %c0_1] : memref<1x8x64xbf16, #tpu.memory_space<vmem>>, vector<1x8x64xbf16>
    %c0_2 = arith.constant 0 : index
    %c0_3 = arith.constant 0 : index
    %c0_4 = arith.constant 0 : index
    %1 = vector.load %arg2[%c0_2, %c0_3, %c0_4] : memref<1x8x64xbf16, #tpu.memory_space<vmem>>, vector<1x8x64xbf16>
    %2 = arith.maximumf %0, %1 : vector<1x8x64xbf16>
    %c0_5 = arith.constant 0 : index
    %c0_6 = arith.constant 0 : index
    %c0_7 = arith.constant 0 : index
    %3 = vector.load %arg3[%c0_5, %c0_6, %c0_7] : memref<1x8x64xbf16, #tpu.memory_space<vmem>>, vector<1x8x64xbf16>
    %c0_8 = arith.constant 0 : index
    %c0_9 = arith.constant 0 : index
    %c0_10 = arith.constant 0 : index
    %4 = vector.load %arg4[%c0_8, %c0_9, %c0_10] : memref<1x8x64xbf16, #tpu.memory_space<vmem>>, vector<1x8x64xbf16>
    %5 = arith.maximumf %3, %4 : vector<1x8x64xbf16>
    %6 = arith.maximumf %2, %5 : vector<1x8x64xbf16>
    %c0_11 = arith.constant 0 : index
    %c0_12 = arith.constant 0 : index
    %c0_13 = arith.constant 0 : index
    %7 = vector.load %arg5[%c0_11, %c0_12, %c0_13] : memref<1x8x64xbf16, #tpu.memory_space<vmem>>, vector<1x8x64xbf16>
    tpu.vector_store %arg5[%c0_11, %c0_12, %c0_13], %6 {strides = array<i32>} : memref<1x8x64xbf16, #tpu.memory_space<vmem>>, vector<1x8x64xbf16>,
    return
  }
  func.func @transform_0(%arg0: i32) -> (i32, i32, i32) {
    %c0_i32 = arith.constant 0 : i32
    %c0_i32_0 = arith.constant 0 : i32
    %c0_i32_1 = arith.constant 0 : i32
    return %arg0, %c0_i32, %c0_i32_0 : i32, i32, i32
  }
  func.func @transform_1(%arg0: i32) -> (i32, i32, i32) {
    %c0_i32 = arith.constant 0 : i32
    %c0_i32_0 = arith.constant 0 : i32
    %c0_i32_1 = arith.constant 0 : i32
    return %arg0, %c0_i32, %c0_i32_0 : i32, i32, i32
  }
  func.func @transform_2(%arg0: i32) -> (i32, i32, i32) {
    %c0_i32 = arith.constant 0 : i32
    %c0_i32_0 = arith.constant 0 : i32
    %c0_i32_1 = arith.constant 0 : i32
    return %arg0, %c0_i32, %c0_i32_0 : i32, i32, i32
  }
  func.func @transform_3(%arg0: i32) -> (i32, i32, i32) {
    %c0_i32 = arith.constant 0 : i32
    %c0_i32_0 = arith.constant 0 : i32
    %c0_i32_1 = arith.constant 0 : i32
    return %arg0, %c0_i32, %c0_i32_0 : i32, i32, i32
  }
  func.func @transform_4(%arg0: i32) -> (i32, i32, i32) {
    %c0_i32 = arith.constant 0 : i32
    %c0_i32_0 = arith.constant 0 : i32
    %c0_i32_1 = arith.constant 0 : i32
    return %arg0, %c0_i32, %c0_i32_0 : i32, i32, i32
  }
}

module attributes {stable_mosaic.version = 11 : i64} {
  func.func @_conv3x3_kernel(%arg0: i32, %arg1: memref<1x72x64xbf16, #tpu.memory_space<vmem>>, %arg2: memref<8x72xbf16, #tpu.memory_space<vmem>>, %arg3: memref<8x1xf32, #tpu.memory_space<vmem>>, %arg4: memref<1x8x64xbf16, #tpu.memory_space<vmem>>) attributes {dimension_semantics = [#tpu.dimension_semantics<parallel>], iteration_bounds = array<i64: 2>, scalar_prefetch = 0 : i64, scratch_operands = 0 : i64, tpu.core_type = #tpu.core_type<tc>, window_params = [{transform_indices = @transform_0, window_bounds = array<i64: 1, 72, 64>}, {pipeline_mode = #tpu.pipeline_mode<synchronous>, transform_indices = @transform_1, window_bounds = array<i64: 8, 72>}, {pipeline_mode = #tpu.pipeline_mode<synchronous>, transform_indices = @transform_2, window_bounds = array<i64: 8, 1>}, {transform_indices = @transform_3, window_bounds = array<i64: 1, 8, 64>}]} {
    %c0 = arith.constant 0 : index
    %c0_0 = arith.constant 0 : index
    %0 = vector.load %arg2[%c0, %c0_0] : memref<8x72xbf16, #tpu.memory_space<vmem>>, vector<8x72xbf16>
    %c0_1 = arith.constant 0 : index
    %c0_2 = arith.constant 0 : index
    %c0_3 = arith.constant 0 : index
    %1 = vector.load %arg1[%c0_1, %c0_2, %c0_3] : memref<1x72x64xbf16, #tpu.memory_space<vmem>>, vector<1x72x64xbf16>
    %2 = vector.shape_cast %1 : vector<1x72x64xbf16> to vector<72x64xbf16>
    %cst = arith.constant dense<0.000000e+00> : vector<8x64xf32>
    %3 = tpu.matmul %0, %2, %cst {dimension_numbers = #tpu.dot_dimension_numbers<[1], [0], [0], [1], [0, 0, 1, 1], [], []>} : vector<8x72xbf16>, vector<72x64xbf16>, vector<8x64xf32> -> vector<8x64xf32>
    %c0_4 = arith.constant 0 : index
    %c0_5 = arith.constant 0 : index
    %4 = vector.load %arg3[%c0_4, %c0_5] : memref<8x1xf32, #tpu.memory_space<vmem>>, vector<8x1xf32>
    %5 = vector.broadcast %4 : vector<8x1xf32> to vector<8x64xf32>
    %6 = arith.addf %3, %5 : vector<8x64xf32>
    %cst_6 = arith.constant 0.000000e+00 : f32
    %7 = vector.broadcast %cst_6 : f32 to vector<8x64xf32>
    %8 = arith.maximumf %6, %7 : vector<8x64xf32>
    %9 = arith.truncf %8 : vector<8x64xf32> to vector<8x64xbf16>
    %c0_7 = arith.constant 0 : index
    %c0_8 = arith.constant 0 : index
    %c0_9 = arith.constant 0 : index
    %10 = vector.load %arg4[%c0_7, %c0_8, %c0_9] : memref<1x8x64xbf16, #tpu.memory_space<vmem>>, vector<1x8x64xbf16>
    %11 = vector.shape_cast %10 : vector<1x8x64xbf16> to vector<8x64xbf16>
    %12 = vector.shape_cast %9 : vector<8x64xbf16> to vector<1x8x64xbf16>
    tpu.vector_store %arg4[%c0_7, %c0_8, %c0_9], %12 {strides = array<i32>} : memref<1x8x64xbf16, #tpu.memory_space<vmem>>, vector<1x8x64xbf16>,
    return
  }
  func.func @transform_0(%arg0: i32) -> (i32, i32, i32) {
    %c0_i32 = arith.constant 0 : i32
    %c0_i32_0 = arith.constant 0 : i32
    %c0_i32_1 = arith.constant 0 : i32
    return %arg0, %c0_i32, %c0_i32_0 : i32, i32, i32
  }
  func.func @transform_1(%arg0: i32) -> (i32, i32) {
    %c0_i32 = arith.constant 0 : i32
    %c0_i32_0 = arith.constant 0 : i32
    %c0_i32_1 = arith.constant 0 : i32
    return %c0_i32, %c0_i32_0 : i32, i32
  }
  func.func @transform_2(%arg0: i32) -> (i32, i32) {
    %c0_i32 = arith.constant 0 : i32
    %c0_i32_0 = arith.constant 0 : i32
    %c0_i32_1 = arith.constant 0 : i32
    return %c0_i32, %c0_i32_0 : i32, i32
  }
  func.func @transform_3(%arg0: i32) -> (i32, i32, i32) {
    %c0_i32 = arith.constant 0 : i32
    %c0_i32_0 = arith.constant 0 : i32
    %c0_i32_1 = arith.constant 0 : i32
    return %arg0, %c0_i32, %c0_i32_0 : i32, i32, i32
  }
}

module attributes {stable_mosaic.version = 11 : i64} {
  func.func @_max4_kernel(%arg0: i32, %arg1: memref<1x8x16xbf16, #tpu.memory_space<vmem>>, %arg2: memref<1x8x16xbf16, #tpu.memory_space<vmem>>, %arg3: memref<1x8x16xbf16, #tpu.memory_space<vmem>>, %arg4: memref<1x8x16xbf16, #tpu.memory_space<vmem>>, %arg5: memref<1x8x16xbf16, #tpu.memory_space<vmem>>) attributes {dimension_semantics = [#tpu.dimension_semantics<parallel>], iteration_bounds = array<i64: 2>, scalar_prefetch = 0 : i64, scratch_operands = 0 : i64, tpu.core_type = #tpu.core_type<tc>, window_params = [{transform_indices = @transform_0, window_bounds = array<i64: 1, 8, 16>}, {transform_indices = @transform_1, window_bounds = array<i64: 1, 8, 16>}, {transform_indices = @transform_2, window_bounds = array<i64: 1, 8, 16>}, {transform_indices = @transform_3, window_bounds = array<i64: 1, 8, 16>}, {transform_indices = @transform_4, window_bounds = array<i64: 1, 8, 16>}]} {
    %c0 = arith.constant 0 : index
    %c0_0 = arith.constant 0 : index
    %c0_1 = arith.constant 0 : index
    %0 = vector.load %arg1[%c0, %c0_0, %c0_1] : memref<1x8x16xbf16, #tpu.memory_space<vmem>>, vector<1x8x16xbf16>
    %c0_2 = arith.constant 0 : index
    %c0_3 = arith.constant 0 : index
    %c0_4 = arith.constant 0 : index
    %1 = vector.load %arg2[%c0_2, %c0_3, %c0_4] : memref<1x8x16xbf16, #tpu.memory_space<vmem>>, vector<1x8x16xbf16>
    %2 = arith.maximumf %0, %1 : vector<1x8x16xbf16>
    %c0_5 = arith.constant 0 : index
    %c0_6 = arith.constant 0 : index
    %c0_7 = arith.constant 0 : index
    %3 = vector.load %arg3[%c0_5, %c0_6, %c0_7] : memref<1x8x16xbf16, #tpu.memory_space<vmem>>, vector<1x8x16xbf16>
    %c0_8 = arith.constant 0 : index
    %c0_9 = arith.constant 0 : index
    %c0_10 = arith.constant 0 : index
    %4 = vector.load %arg4[%c0_8, %c0_9, %c0_10] : memref<1x8x16xbf16, #tpu.memory_space<vmem>>, vector<1x8x16xbf16>
    %5 = arith.maximumf %3, %4 : vector<1x8x16xbf16>
    %6 = arith.maximumf %2, %5 : vector<1x8x16xbf16>
    %c0_11 = arith.constant 0 : index
    %c0_12 = arith.constant 0 : index
    %c0_13 = arith.constant 0 : index
    %7 = vector.load %arg5[%c0_11, %c0_12, %c0_13] : memref<1x8x16xbf16, #tpu.memory_space<vmem>>, vector<1x8x16xbf16>
    tpu.vector_store %arg5[%c0_11, %c0_12, %c0_13], %6 {strides = array<i32>} : memref<1x8x16xbf16, #tpu.memory_space<vmem>>, vector<1x8x16xbf16>,
    return
  }
  func.func @transform_0(%arg0: i32) -> (i32, i32, i32) {
    %c0_i32 = arith.constant 0 : i32
    %c0_i32_0 = arith.constant 0 : i32
    %c0_i32_1 = arith.constant 0 : i32
    return %arg0, %c0_i32, %c0_i32_0 : i32, i32, i32
  }
  func.func @transform_1(%arg0: i32) -> (i32, i32, i32) {
    %c0_i32 = arith.constant 0 : i32
    %c0_i32_0 = arith.constant 0 : i32
    %c0_i32_1 = arith.constant 0 : i32
    return %arg0, %c0_i32, %c0_i32_0 : i32, i32, i32
  }
  func.func @transform_2(%arg0: i32) -> (i32, i32, i32) {
    %c0_i32 = arith.constant 0 : i32
    %c0_i32_0 = arith.constant 0 : i32
    %c0_i32_1 = arith.constant 0 : i32
    return %arg0, %c0_i32, %c0_i32_0 : i32, i32, i32
  }
  func.func @transform_3(%arg0: i32) -> (i32, i32, i32) {
    %c0_i32 = arith.constant 0 : i32
    %c0_i32_0 = arith.constant 0 : i32
    %c0_i32_1 = arith.constant 0 : i32
    return %arg0, %c0_i32, %c0_i32_0 : i32, i32, i32
  }
  func.func @transform_4(%arg0: i32) -> (i32, i32, i32) {
    %c0_i32 = arith.constant 0 : i32
    %c0_i32_0 = arith.constant 0 : i32
    %c0_i32_1 = arith.constant 0 : i32
    return %arg0, %c0_i32, %c0_i32_0 : i32, i32, i32
  }
}

module attributes {stable_mosaic.version = 11 : i64} {
  func.func @_conv3x3_kernel(%arg0: i32, %arg1: memref<1x72x16xbf16, #tpu.memory_space<vmem>>, %arg2: memref<8x72xbf16, #tpu.memory_space<vmem>>, %arg3: memref<8x1xf32, #tpu.memory_space<vmem>>, %arg4: memref<1x8x16xbf16, #tpu.memory_space<vmem>>) attributes {dimension_semantics = [#tpu.dimension_semantics<parallel>], iteration_bounds = array<i64: 2>, scalar_prefetch = 0 : i64, scratch_operands = 0 : i64, tpu.core_type = #tpu.core_type<tc>, window_params = [{transform_indices = @transform_0, window_bounds = array<i64: 1, 72, 16>}, {pipeline_mode = #tpu.pipeline_mode<synchronous>, transform_indices = @transform_1, window_bounds = array<i64: 8, 72>}, {pipeline_mode = #tpu.pipeline_mode<synchronous>, transform_indices = @transform_2, window_bounds = array<i64: 8, 1>}, {transform_indices = @transform_3, window_bounds = array<i64: 1, 8, 16>}]} {
    %c0 = arith.constant 0 : index
    %c0_0 = arith.constant 0 : index
    %0 = vector.load %arg2[%c0, %c0_0] : memref<8x72xbf16, #tpu.memory_space<vmem>>, vector<8x72xbf16>
    %c0_1 = arith.constant 0 : index
    %c0_2 = arith.constant 0 : index
    %c0_3 = arith.constant 0 : index
    %1 = vector.load %arg1[%c0_1, %c0_2, %c0_3] : memref<1x72x16xbf16, #tpu.memory_space<vmem>>, vector<1x72x16xbf16>
    %2 = vector.shape_cast %1 : vector<1x72x16xbf16> to vector<72x16xbf16>
    %cst = arith.constant dense<0.000000e+00> : vector<8x16xf32>
    %3 = tpu.matmul %0, %2, %cst {dimension_numbers = #tpu.dot_dimension_numbers<[1], [0], [0], [1], [0, 0, 1, 1], [], []>} : vector<8x72xbf16>, vector<72x16xbf16>, vector<8x16xf32> -> vector<8x16xf32>
    %c0_4 = arith.constant 0 : index
    %c0_5 = arith.constant 0 : index
    %4 = vector.load %arg3[%c0_4, %c0_5] : memref<8x1xf32, #tpu.memory_space<vmem>>, vector<8x1xf32>
    %5 = vector.broadcast %4 : vector<8x1xf32> to vector<8x16xf32>
    %6 = arith.addf %3, %5 : vector<8x16xf32>
    %cst_6 = arith.constant 0.000000e+00 : f32
    %7 = vector.broadcast %cst_6 : f32 to vector<8x16xf32>
    %8 = arith.maximumf %6, %7 : vector<8x16xf32>
    %9 = arith.truncf %8 : vector<8x16xf32> to vector<8x16xbf16>
    %c0_7 = arith.constant 0 : index
    %c0_8 = arith.constant 0 : index
    %c0_9 = arith.constant 0 : index
    %10 = vector.load %arg4[%c0_7, %c0_8, %c0_9] : memref<1x8x16xbf16, #tpu.memory_space<vmem>>, vector<1x8x16xbf16>
    %11 = vector.shape_cast %10 : vector<1x8x16xbf16> to vector<8x16xbf16>
    %12 = vector.shape_cast %9 : vector<8x16xbf16> to vector<1x8x16xbf16>
    tpu.vector_store %arg4[%c0_7, %c0_8, %c0_9], %12 {strides = array<i32>} : memref<1x8x16xbf16, #tpu.memory_space<vmem>>, vector<1x8x16xbf16>,
    return
  }
  func.func @transform_0(%arg0: i32) -> (i32, i32, i32) {
    %c0_i32 = arith.constant 0 : i32
    %c0_i32_0 = arith.constant 0 : i32
    %c0_i32_1 = arith.constant 0 : i32
    return %arg0, %c0_i32, %c0_i32_0 : i32, i32, i32
  }
  func.func @transform_1(%arg0: i32) -> (i32, i32) {
    %c0_i32 = arith.constant 0 : i32
    %c0_i32_0 = arith.constant 0 : i32
    %c0_i32_1 = arith.constant 0 : i32
    return %c0_i32, %c0_i32_0 : i32, i32
  }
  func.func @transform_2(%arg0: i32) -> (i32, i32) {
    %c0_i32 = arith.constant 0 : i32
    %c0_i32_0 = arith.constant 0 : i32
    %c0_i32_1 = arith.constant 0 : i32
    return %c0_i32, %c0_i32_0 : i32, i32
  }
  func.func @transform_3(%arg0: i32) -> (i32, i32, i32) {
    %c0_i32 = arith.constant 0 : i32
    %c0_i32_0 = arith.constant 0 : i32
    %c0_i32_1 = arith.constant 0 : i32
    return %arg0, %c0_i32, %c0_i32_0 : i32, i32, i32
  }
}

module attributes {stable_mosaic.version = 11 : i64} {
  func.func @_max4_kernel(%arg0: i32, %arg1: memref<1x8x4xbf16, #tpu.memory_space<vmem>>, %arg2: memref<1x8x4xbf16, #tpu.memory_space<vmem>>, %arg3: memref<1x8x4xbf16, #tpu.memory_space<vmem>>, %arg4: memref<1x8x4xbf16, #tpu.memory_space<vmem>>, %arg5: memref<1x8x4xbf16, #tpu.memory_space<vmem>>) attributes {dimension_semantics = [#tpu.dimension_semantics<parallel>], iteration_bounds = array<i64: 2>, scalar_prefetch = 0 : i64, scratch_operands = 0 : i64, tpu.core_type = #tpu.core_type<tc>, window_params = [{transform_indices = @transform_0, window_bounds = array<i64: 1, 8, 4>}, {transform_indices = @transform_1, window_bounds = array<i64: 1, 8, 4>}, {transform_indices = @transform_2, window_bounds = array<i64: 1, 8, 4>}, {transform_indices = @transform_3, window_bounds = array<i64: 1, 8, 4>}, {transform_indices = @transform_4, window_bounds = array<i64: 1, 8, 4>}]} {
    %c0 = arith.constant 0 : index
    %c0_0 = arith.constant 0 : index
    %c0_1 = arith.constant 0 : index
    %0 = vector.load %arg1[%c0, %c0_0, %c0_1] : memref<1x8x4xbf16, #tpu.memory_space<vmem>>, vector<1x8x4xbf16>
    %c0_2 = arith.constant 0 : index
    %c0_3 = arith.constant 0 : index
    %c0_4 = arith.constant 0 : index
    %1 = vector.load %arg2[%c0_2, %c0_3, %c0_4] : memref<1x8x4xbf16, #tpu.memory_space<vmem>>, vector<1x8x4xbf16>
    %2 = arith.maximumf %0, %1 : vector<1x8x4xbf16>
    %c0_5 = arith.constant 0 : index
    %c0_6 = arith.constant 0 : index
    %c0_7 = arith.constant 0 : index
    %3 = vector.load %arg3[%c0_5, %c0_6, %c0_7] : memref<1x8x4xbf16, #tpu.memory_space<vmem>>, vector<1x8x4xbf16>
    %c0_8 = arith.constant 0 : index
    %c0_9 = arith.constant 0 : index
    %c0_10 = arith.constant 0 : index
    %4 = vector.load %arg4[%c0_8, %c0_9, %c0_10] : memref<1x8x4xbf16, #tpu.memory_space<vmem>>, vector<1x8x4xbf16>
    %5 = arith.maximumf %3, %4 : vector<1x8x4xbf16>
    %6 = arith.maximumf %2, %5 : vector<1x8x4xbf16>
    %c0_11 = arith.constant 0 : index
    %c0_12 = arith.constant 0 : index
    %c0_13 = arith.constant 0 : index
    %7 = vector.load %arg5[%c0_11, %c0_12, %c0_13] : memref<1x8x4xbf16, #tpu.memory_space<vmem>>, vector<1x8x4xbf16>
    tpu.vector_store %arg5[%c0_11, %c0_12, %c0_13], %6 {strides = array<i32>} : memref<1x8x4xbf16, #tpu.memory_space<vmem>>, vector<1x8x4xbf16>,
    return
  }
  func.func @transform_0(%arg0: i32) -> (i32, i32, i32) {
    %c0_i32 = arith.constant 0 : i32
    %c0_i32_0 = arith.constant 0 : i32
    %c0_i32_1 = arith.constant 0 : i32
    return %arg0, %c0_i32, %c0_i32_0 : i32, i32, i32
  }
  func.func @transform_1(%arg0: i32) -> (i32, i32, i32) {
    %c0_i32 = arith.constant 0 : i32
    %c0_i32_0 = arith.constant 0 : i32
    %c0_i32_1 = arith.constant 0 : i32
    return %arg0, %c0_i32, %c0_i32_0 : i32, i32, i32
  }
  func.func @transform_2(%arg0: i32) -> (i32, i32, i32) {
    %c0_i32 = arith.constant 0 : i32
    %c0_i32_0 = arith.constant 0 : i32
    %c0_i32_1 = arith.constant 0 : i32
    return %arg0, %c0_i32, %c0_i32_0 : i32, i32, i32
  }
  func.func @transform_3(%arg0: i32) -> (i32, i32, i32) {
    %c0_i32 = arith.constant 0 : i32
    %c0_i32_0 = arith.constant 0 : i32
    %c0_i32_1 = arith.constant 0 : i32
    return %arg0, %c0_i32, %c0_i32_0 : i32, i32, i32
  }
  func.func @transform_4(%arg0: i32) -> (i32, i32, i32) {
    %c0_i32 = arith.constant 0 : i32
    %c0_i32_0 = arith.constant 0 : i32
    %c0_i32_1 = arith.constant 0 : i32
    return %arg0, %c0_i32, %c0_i32_0 : i32, i32, i32
  }
}

module attributes {stable_mosaic.version = 11 : i64} {
  func.func @_linear_kernel(%arg0: i32, %arg1: memref<16x20xf32, #tpu.memory_space<vmem>>, %arg2: memref<20x60xf32, #tpu.memory_space<vmem>>, %arg3: memref<1x60xf32, #tpu.memory_space<vmem>>, %arg4: memref<16x60xf32, #tpu.memory_space<vmem>>) attributes {dimension_semantics = [#tpu.dimension_semantics<parallel>], iteration_bounds = array<i64: 2>, scalar_prefetch = 0 : i64, scratch_operands = 0 : i64, tpu.core_type = #tpu.core_type<tc>, window_params = [{transform_indices = @transform_0, window_bounds = array<i64: 16, 20>}, {pipeline_mode = #tpu.pipeline_mode<synchronous>, transform_indices = @transform_1, window_bounds = array<i64: 20, 60>}, {pipeline_mode = #tpu.pipeline_mode<synchronous>, transform_indices = @transform_2, window_bounds = array<i64: 1, 60>}, {transform_indices = @transform_3, window_bounds = array<i64: 16, 60>}]} {
    %c0 = arith.constant 0 : index
    %c0_0 = arith.constant 0 : index
    %0 = vector.load %arg1[%c0, %c0_0] : memref<16x20xf32, #tpu.memory_space<vmem>>, vector<16x20xf32>
    %c0_1 = arith.constant 0 : index
    %c0_2 = arith.constant 0 : index
    %1 = vector.load %arg2[%c0_1, %c0_2] : memref<20x60xf32, #tpu.memory_space<vmem>>, vector<20x60xf32>
    %cst = arith.constant dense<0.000000e+00> : vector<16x60xf32>
    %2 = tpu.matmul %0, %1, %cst {dimension_numbers = #tpu.dot_dimension_numbers<[1], [0], [0], [1], [0, 0, 1, 1], [], []>} : vector<16x20xf32>, vector<20x60xf32>, vector<16x60xf32> -> vector<16x60xf32>
    %c0_3 = arith.constant 0 : index
    %c0_4 = arith.constant 0 : index
    %3 = vector.load %arg3[%c0_3, %c0_4] : memref<1x60xf32, #tpu.memory_space<vmem>>, vector<1x60xf32>
    %4 = vector.broadcast %3 : vector<1x60xf32> to vector<16x60xf32>
    %5 = arith.addf %2, %4 : vector<16x60xf32>
    %c0_5 = arith.constant 0 : index
    %c0_6 = arith.constant 0 : index
    %6 = vector.load %arg4[%c0_5, %c0_6] : memref<16x60xf32, #tpu.memory_space<vmem>>, vector<16x60xf32>
    tpu.vector_store %arg4[%c0_5, %c0_6], %5 {strides = array<i32>} : memref<16x60xf32, #tpu.memory_space<vmem>>, vector<16x60xf32>,
    return
  }
  func.func @transform_0(%arg0: i32) -> (i32, i32) {
    %c0_i32 = arith.constant 0 : i32
    %c0_i32_0 = arith.constant 0 : i32
    return %arg0, %c0_i32 : i32, i32
  }
  func.func @transform_1(%arg0: i32) -> (i32, i32) {
    %c0_i32 = arith.constant 0 : i32
    %c0_i32_0 = arith.constant 0 : i32
    %c0_i32_1 = arith.constant 0 : i32
    return %c0_i32, %c0_i32_0 : i32, i32
  }
  func.func @transform_2(%arg0: i32) -> (i32, i32) {
    %c0_i32 = arith.constant 0 : i32
    %c0_i32_0 = arith.constant 0 : i32
    %c0_i32_1 = arith.constant 0 : i32
    return %c0_i32, %c0_i32_0 : i32, i32
  }
  func.func @transform_3(%arg0: i32) -> (i32, i32) {
    %c0_i32 = arith.constant 0 : i32
    %c0_i32_0 = arith.constant 0 : i32
    return %arg0, %c0_i32 : i32, i32
  }
}

module attributes {stable_mosaic.version = 11 : i64} {
  func.func @_sdpa_kernel(%arg0: i32, %arg1: memref<5x16x4xf32, #tpu.memory_space<vmem>>, %arg2: memref<5x16x4xf32, #tpu.memory_space<vmem>>, %arg3: memref<5x16x4xf32, #tpu.memory_space<vmem>>, %arg4: memref<5x16x4xf32, #tpu.memory_space<vmem>>) attributes {dimension_semantics = [#tpu.dimension_semantics<parallel>], iteration_bounds = array<i64: 2>, scalar_prefetch = 0 : i64, scratch_operands = 0 : i64, tpu.core_type = #tpu.core_type<tc>, window_params = [{transform_indices = @transform_0, window_bounds = array<i64: 5, 16, 4>}, {transform_indices = @transform_1, window_bounds = array<i64: 5, 16, 4>}, {transform_indices = @transform_2, window_bounds = array<i64: 5, 16, 4>}, {transform_indices = @transform_3, window_bounds = array<i64: 5, 16, 4>}]} {
    %c0 = arith.constant 0 : index
    %c0_0 = arith.constant 0 : index
    %c0_1 = arith.constant 0 : index
    %0 = vector.load %arg1[%c0, %c0_0, %c0_1] : memref<5x16x4xf32, #tpu.memory_space<vmem>>, vector<5x16x4xf32>
    %c0_2 = arith.constant 0 : index
    %c0_3 = arith.constant 0 : index
    %c0_4 = arith.constant 0 : index
    %1 = vector.load %arg2[%c0_2, %c0_3, %c0_4] : memref<5x16x4xf32, #tpu.memory_space<vmem>>, vector<5x16x4xf32>
    %c0_5 = arith.constant 0 : index
    %c0_6 = arith.constant 0 : index
    %c0_7 = arith.constant 0 : index
    %2 = vector.load %arg3[%c0_5, %c0_6, %c0_7] : memref<5x16x4xf32, #tpu.memory_space<vmem>>, vector<5x16x4xf32>
    "tpu.trace_start"() <{level = 10 : i32, message = "gsd,gtd->gst"}> : () -> ()
    %cst = arith.constant dense<0.000000e+00> : vector<5x16x16xf32>
    %3 = tpu.matmul %0, %1, %cst {dimension_numbers = #tpu.dot_dimension_numbers<[2], [2], [1], [1], [0, 0, 0, 1, 1, 1], [0], [0]>} : vector<5x16x4xf32>, vector<5x16x4xf32>, vector<5x16x16xf32> -> vector<5x16x16xf32>
    "tpu.trace_stop"() : () -> ()
    %cst_8 = arith.constant 5.000000e-01 : f32
    %4 = vector.broadcast %cst_8 : f32 to vector<5x16x16xf32>
    %5 = arith.mulf %3, %4 : vector<5x16x16xf32>
    %cst_9 = arith.constant dense<0xFF800000> : vector<5x16xf32>
    %6 = vector.multi_reduction <maximumf>, %5, %cst_9 [2] : vector<5x16x16xf32> to vector<5x16xf32>
    %7 = vector.shape_cast %6 : vector<5x16xf32> to vector<5x16x1xf32>
    %8 = vector.broadcast %7 : vector<5x16x1xf32> to vector<5x16x16xf32>
    %9 = arith.subf %5, %8 : vector<5x16x16xf32>
    %10 = math.exp %9 : vector<5x16x16xf32>
    %cst_10 = arith.constant dense<0.000000e+00> : vector<5x16xf32>
    %11 = vector.multi_reduction <add>, %10, %cst_10 [2] : vector<5x16x16xf32> to vector<5x16xf32>
    %12 = vector.shape_cast %11 : vector<5x16xf32> to vector<5x16x1xf32>
    %13 = tpu.reciprocal %12 {approx = true} : vector<5x16x1xf32> -> vector<5x16x1xf32>
    %14 = vector.broadcast %13 : vector<5x16x1xf32> to vector<5x16x16xf32>
    %15 = arith.mulf %10, %14 : vector<5x16x16xf32>
    "tpu.trace_start"() <{level = 10 : i32, message = "gst,gtd->gsd"}> : () -> ()
    %cst_11 = arith.constant dense<0.000000e+00> : vector<5x16x4xf32>
    %16 = tpu.matmul %15, %2, %cst_11 {dimension_numbers = #tpu.dot_dimension_numbers<[2], [1], [1], [2], [0, 0, 0, 1, 1, 2], [0], [0]>} : vector<5x16x16xf32>, vector<5x16x4xf32>, vector<5x16x4xf32> -> vector<5x16x4xf32>
    "tpu.trace_stop"() : () -> ()
    %c0_12 = arith.constant 0 : index
    %c0_13 = arith.constant 0 : index
    %c0_14 = arith.constant 0 : index
    %17 = vector.load %arg4[%c0_12, %c0_13, %c0_14] : memref<5x16x4xf32, #tpu.memory_space<vmem>>, vector<5x16x4xf32>
    tpu.vector_store %arg4[%c0_12, %c0_13, %c0_14], %16 {strides = array<i32>} : memref<5x16x4xf32, #tpu.memory_space<vmem>>, vector<5x16x4xf32>,
    return
  }
  func.func @transform_0(%arg0: i32) -> (i32, i32, i32) {
    %c0_i32 = arith.constant 0 : i32
    %c0_i32_0 = arith.constant 0 : i32
    %c0_i32_1 = arith.constant 0 : i32
    return %arg0, %c0_i32, %c0_i32_0 : i32, i32, i32
  }
  func.func @transform_1(%arg0: i32) -> (i32, i32, i32) {
    %c0_i32 = arith.constant 0 : i32
    %c0_i32_0 = arith.constant 0 : i32
    %c0_i32_1 = arith.constant 0 : i32
    return %arg0, %c0_i32, %c0_i32_0 : i32, i32, i32
  }
  func.func @transform_2(%arg0: i32) -> (i32, i32, i32) {
    %c0_i32 = arith.constant 0 : i32
    %c0_i32_0 = arith.constant 0 : i32
    %c0_i32_1 = arith.constant 0 : i32
    return %arg0, %c0_i32, %c0_i32_0 : i32, i32, i32
  }
  func.func @transform_3(%arg0: i32) -> (i32, i32, i32) {
    %c0_i32 = arith.constant 0 : i32
    %c0_i32_0 = arith.constant 0 : i32
    %c0_i32_1 = arith.constant 0 : i32
    return %arg0, %c0_i32, %c0_i32_0 : i32, i32, i32
  }
}

module attributes {stable_mosaic.version = 11 : i64} {
  func.func @_mha_ffn_kernel(%arg0: i32, %arg1: memref<16x20xf32, #tpu.memory_space<vmem>>, %arg2: memref<16x20xf32, #tpu.memory_space<vmem>>, %arg3: memref<20x20xf32, #tpu.memory_space<vmem>>, %arg4: memref<1x20xf32, #tpu.memory_space<vmem>>, %arg5: memref<1x20xf32, #tpu.memory_space<vmem>>, %arg6: memref<1x20xf32, #tpu.memory_space<vmem>>, %arg7: memref<20x32xf32, #tpu.memory_space<vmem>>, %arg8: memref<1x32xf32, #tpu.memory_space<vmem>>, %arg9: memref<32x20xf32, #tpu.memory_space<vmem>>, %arg10: memref<1x20xf32, #tpu.memory_space<vmem>>, %arg11: memref<1x20xf32, #tpu.memory_space<vmem>>, %arg12: memref<1x20xf32, #tpu.memory_space<vmem>>, %arg13: memref<16x20xf32, #tpu.memory_space<vmem>>) attributes {dimension_semantics = [#tpu.dimension_semantics<parallel>], iteration_bounds = array<i64: 2>, scalar_prefetch = 0 : i64, scratch_operands = 0 : i64, tpu.core_type = #tpu.core_type<tc>, window_params = [{transform_indices = @transform_0, window_bounds = array<i64: 16, 20>}, {transform_indices = @transform_1, window_bounds = array<i64: 16, 20>}, {pipeline_mode = #tpu.pipeline_mode<synchronous>, transform_indices = @transform_2, window_bounds = array<i64: 20, 20>}, {pipeline_mode = #tpu.pipeline_mode<synchronous>, transform_indices = @transform_3, window_bounds = array<i64: 1, 20>}, {pipeline_mode = #tpu.pipeline_mode<synchronous>, transform_indices = @transform_4, window_bounds = array<i64: 1, 20>}, {pipeline_mode = #tpu.pipeline_mode<synchronous>, transform_indices = @transform_5, window_bounds = array<i64: 1, 20>}, {pipeline_mode = #tpu.pipeline_mode<synchronous>, transform_indices = @transform_6, window_bounds = array<i64: 20, 32>}, {pipeline_mode = #tpu.pipeline_mode<synchronous>, transform_indices = @transform_7, window_bounds = array<i64: 1, 32>}, {pipeline_mode = #tpu.pipeline_mode<synchronous>, transform_indices = @transform_8, window_bounds = array<i64: 32, 20>}, {pipeline_mode = #tpu.pipeline_mode<synchronous>, transform_indices = @transform_9, window_bounds = array<i64: 1, 20>}, {pipeline_mode = #tpu.pipeline_mode<synchronous>, transform_indices = @transform_10, window_bounds = array<i64: 1, 20>}, {pipeline_mode = #tpu.pipeline_mode<synchronous>, transform_indices = @transform_11, window_bounds = array<i64: 1, 20>}, {transform_indices = @transform_12, window_bounds = array<i64: 16, 20>}]} {
    %c0 = arith.constant 0 : index
    %c0_0 = arith.constant 0 : index
    %0 = vector.load %arg2[%c0, %c0_0] : memref<16x20xf32, #tpu.memory_space<vmem>>, vector<16x20xf32>
    %c0_1 = arith.constant 0 : index
    %c0_2 = arith.constant 0 : index
    %1 = vector.load %arg1[%c0_1, %c0_2] : memref<16x20xf32, #tpu.memory_space<vmem>>, vector<16x20xf32>
    %c0_3 = arith.constant 0 : index
    %c0_4 = arith.constant 0 : index
    %2 = vector.load %arg3[%c0_3, %c0_4] : memref<20x20xf32, #tpu.memory_space<vmem>>, vector<20x20xf32>
    %cst = arith.constant dense<0.000000e+00> : vector<16x20xf32>
    %3 = tpu.matmul %1, %2, %cst {dimension_numbers = #tpu.dot_dimension_numbers<[1], [0], [0], [1], [0, 0, 1, 1], [], []>} : vector<16x20xf32>, vector<20x20xf32>, vector<16x20xf32> -> vector<16x20xf32>
    %c0_5 = arith.constant 0 : index
    %c0_6 = arith.constant 0 : index
    %4 = vector.load %arg4[%c0_5, %c0_6] : memref<1x20xf32, #tpu.memory_space<vmem>>, vector<1x20xf32>
    %5 = vector.broadcast %4 : vector<1x20xf32> to vector<16x20xf32>
    %6 = arith.addf %3, %5 : vector<16x20xf32>
    %7 = arith.addf %6, %0 : vector<16x20xf32>
    %cst_7 = arith.constant dense<0.000000e+00> : vector<16xf32>
    %8 = vector.multi_reduction <add>, %7, %cst_7 [1] : vector<16x20xf32> to vector<16xf32>
    %9 = vector.shape_cast %8 : vector<16xf32> to vector<16x1xf32>
    %cst_8 = arith.constant 2.000000e+01 : f32
    %10 = vector.broadcast %cst_8 : f32 to vector<16x1xf32>
    %11 = arith.divf %9, %10 : vector<16x1xf32>
    %12 = vector.broadcast %11 : vector<16x1xf32> to vector<16x20xf32>
    %13 = arith.subf %7, %12 : vector<16x20xf32>
    %14 = arith.mulf %13, %13 : vector<16x20xf32>
    %cst_9 = arith.constant dense<0.000000e+00> : vector<16xf32>
    %15 = vector.multi_reduction <add>, %14, %cst_9 [1] : vector<16x20xf32> to vector<16xf32>
    %16 = vector.shape_cast %15 : vector<16xf32> to vector<16x1xf32>
    %cst_10 = arith.constant 2.000000e+01 : f32
    %17 = vector.broadcast %cst_10 : f32 to vector<16x1xf32>
    %18 = arith.divf %16, %17 : vector<16x1xf32>
    %19 = vector.broadcast %11 : vector<16x1xf32> to vector<16x20xf32>
    %20 = arith.subf %7, %19 : vector<16x20xf32>
    %cst_11 = arith.constant 9.99999974E-6 : f32
    %21 = vector.broadcast %cst_11 : f32 to vector<16x1xf32>
    %22 = arith.addf %18, %21 : vector<16x1xf32>
    %23 = math.rsqrt %22 : vector<16x1xf32>
    %24 = vector.broadcast %23 : vector<16x1xf32> to vector<16x20xf32>
    %25 = arith.mulf %20, %24 : vector<16x20xf32>
    %c0_12 = arith.constant 0 : index
    %c0_13 = arith.constant 0 : index
    %26 = vector.load %arg5[%c0_12, %c0_13] : memref<1x20xf32, #tpu.memory_space<vmem>>, vector<1x20xf32>
    %27 = vector.broadcast %26 : vector<1x20xf32> to vector<16x20xf32>
    %28 = arith.mulf %25, %27 : vector<16x20xf32>
    %c0_14 = arith.constant 0 : index
    %c0_15 = arith.constant 0 : index
    %29 = vector.load %arg6[%c0_14, %c0_15] : memref<1x20xf32, #tpu.memory_space<vmem>>, vector<1x20xf32>
    %30 = vector.broadcast %29 : vector<1x20xf32> to vector<16x20xf32>
    %31 = arith.addf %28, %30 : vector<16x20xf32>
    %c0_16 = arith.constant 0 : index
    %c0_17 = arith.constant 0 : index
    %32 = vector.load %arg7[%c0_16, %c0_17] : memref<20x32xf32, #tpu.memory_space<vmem>>, vector<20x32xf32>
    %cst_18 = arith.constant dense<0.000000e+00> : vector<16x32xf32>
    %33 = tpu.matmul %31, %32, %cst_18 {dimension_numbers = #tpu.dot_dimension_numbers<[1], [0], [0], [1], [0, 0, 1, 1], [], []>} : vector<16x20xf32>, vector<20x32xf32>, vector<16x32xf32> -> vector<16x32xf32>
    %c0_19 = arith.constant 0 : index
    %c0_20 = arith.constant 0 : index
    %34 = vector.load %arg8[%c0_19, %c0_20] : memref<1x32xf32, #tpu.memory_space<vmem>>, vector<1x32xf32>
    %35 = vector.broadcast %34 : vector<1x32xf32> to vector<16x32xf32>
    %36 = arith.addf %33, %35 : vector<16x32xf32>
    %cst_21 = arith.constant 0.000000e+00 : f32
    %37 = vector.broadcast %cst_21 : f32 to vector<16x32xf32>
    %38 = arith.maximumf %36, %37 : vector<16x32xf32>
    %c0_22 = arith.constant 0 : index
    %c0_23 = arith.constant 0 : index
    %39 = vector.load %arg9[%c0_22, %c0_23] : memref<32x20xf32, #tpu.memory_space<vmem>>, vector<32x20xf32>
    %cst_24 = arith.constant dense<0.000000e+00> : vector<16x20xf32>
    %40 = tpu.matmul %38, %39, %cst_24 {dimension_numbers = #tpu.dot_dimension_numbers<[1], [0], [0], [1], [0, 0, 1, 1], [], []>} : vector<16x32xf32>, vector<32x20xf32>, vector<16x20xf32> -> vector<16x20xf32>
    %c0_25 = arith.constant 0 : index
    %c0_26 = arith.constant 0 : index
    %41 = vector.load %arg10[%c0_25, %c0_26] : memref<1x20xf32, #tpu.memory_space<vmem>>, vector<1x20xf32>
    %42 = vector.broadcast %41 : vector<1x20xf32> to vector<16x20xf32>
    %43 = arith.addf %40, %42 : vector<16x20xf32>
    %44 = arith.addf %43, %31 : vector<16x20xf32>
    %cst_27 = arith.constant dense<0.000000e+00> : vector<16xf32>
    %45 = vector.multi_reduction <add>, %44, %cst_27 [1] : vector<16x20xf32> to vector<16xf32>
    %46 = vector.shape_cast %45 : vector<16xf32> to vector<16x1xf32>
    %cst_28 = arith.constant 2.000000e+01 : f32
    %47 = vector.broadcast %cst_28 : f32 to vector<16x1xf32>
    %48 = arith.divf %46, %47 : vector<16x1xf32>
    %49 = vector.broadcast %48 : vector<16x1xf32> to vector<16x20xf32>
    %50 = arith.subf %44, %49 : vector<16x20xf32>
    %51 = arith.mulf %50, %50 : vector<16x20xf32>
    %cst_29 = arith.constant dense<0.000000e+00> : vector<16xf32>
    %52 = vector.multi_reduction <add>, %51, %cst_29 [1] : vector<16x20xf32> to vector<16xf32>
    %53 = vector.shape_cast %52 : vector<16xf32> to vector<16x1xf32>
    %cst_30 = arith.constant 2.000000e+01 : f32
    %54 = vector.broadcast %cst_30 : f32 to vector<16x1xf32>
    %55 = arith.divf %53, %54 : vector<16x1xf32>
    %56 = vector.broadcast %48 : vector<16x1xf32> to vector<16x20xf32>
    %57 = arith.subf %44, %56 : vector<16x20xf32>
    %cst_31 = arith.constant 9.99999974E-6 : f32
    %58 = vector.broadcast %cst_31 : f32 to vector<16x1xf32>
    %59 = arith.addf %55, %58 : vector<16x1xf32>
    %60 = math.rsqrt %59 : vector<16x1xf32>
    %61 = vector.broadcast %60 : vector<16x1xf32> to vector<16x20xf32>
    %62 = arith.mulf %57, %61 : vector<16x20xf32>
    %c0_32 = arith.constant 0 : index
    %c0_33 = arith.constant 0 : index
    %63 = vector.load %arg11[%c0_32, %c0_33] : memref<1x20xf32, #tpu.memory_space<vmem>>, vector<1x20xf32>
    %64 = vector.broadcast %63 : vector<1x20xf32> to vector<16x20xf32>
    %65 = arith.mulf %62, %64 : vector<16x20xf32>
    %c0_34 = arith.constant 0 : index
    %c0_35 = arith.constant 0 : index
    %66 = vector.load %arg12[%c0_34, %c0_35] : memref<1x20xf32, #tpu.memory_space<vmem>>, vector<1x20xf32>
    %67 = vector.broadcast %66 : vector<1x20xf32> to vector<16x20xf32>
    %68 = arith.addf %65, %67 : vector<16x20xf32>
    %c0_36 = arith.constant 0 : index
    %c0_37 = arith.constant 0 : index
    %69 = vector.load %arg13[%c0_36, %c0_37] : memref<16x20xf32, #tpu.memory_space<vmem>>, vector<16x20xf32>
    tpu.vector_store %arg13[%c0_36, %c0_37], %68 {strides = array<i32>} : memref<16x20xf32, #tpu.memory_space<vmem>>, vector<16x20xf32>,
    return
  }
  func.func @transform_0(%arg0: i32) -> (i32, i32) {
    %c0_i32 = arith.constant 0 : i32
    %c0_i32_0 = arith.constant 0 : i32
    return %arg0, %c0_i32 : i32, i32
  }
  func.func @transform_1(%arg0: i32) -> (i32, i32) {
    %c0_i32 = arith.constant 0 : i32
    %c0_i32_0 = arith.constant 0 : i32
    return %arg0, %c0_i32 : i32, i32
  }
  func.func @transform_2(%arg0: i32) -> (i32, i32) {
    %c0_i32 = arith.constant 0 : i32
    %c0_i32_0 = arith.constant 0 : i32
    %c0_i32_1 = arith.constant 0 : i32
    return %c0_i32, %c0_i32_0 : i32, i32
  }
  func.func @transform_3(%arg0: i32) -> (i32, i32) {
    %c0_i32 = arith.constant 0 : i32
    %c0_i32_0 = arith.constant 0 : i32
    %c0_i32_1 = arith.constant 0 : i32
    return %c0_i32, %c0_i32_0 : i32, i32
  }
  func.func @transform_4(%arg0: i32) -> (i32, i32) {
    %c0_i32 = arith.constant 0 : i32
    %c0_i32_0 = arith.constant 0 : i32
    %c0_i32_1 = arith.constant 0 : i32
    return %c0_i32, %c0_i32_0 : i32, i32
  }
  func.func @transform_5(%arg0: i32) -> (i32, i32) {
    %c0_i32 = arith.constant 0 : i32
    %c0_i32_0 = arith.constant 0 : i32
    %c0_i32_1 = arith.constant 0 : i32
    return %c0_i32, %c0_i32_0 : i32, i32
  }
  func.func @transform_6(%arg0: i32) -> (i32, i32) {
    %c0_i32 = arith.constant 0 : i32
    %c0_i32_0 = arith.constant 0 : i32
    %c0_i32_1 = arith.constant 0 : i32
    return %c0_i32, %c0_i32_0 : i32, i32
  }
  func.func @transform_7(%arg0: i32) -> (i32, i32) {
    %c0_i32 = arith.constant 0 : i32
    %c0_i32_0 = arith.constant 0 : i32
    %c0_i32_1 = arith.constant 0 : i32
    return %c0_i32, %c0_i32_0 : i32, i32
  }
  func.func @transform_8(%arg0: i32) -> (i32, i32) {
    %c0_i32 = arith.constant 0 : i32
    %c0_i32_0 = arith.constant 0 : i32
    %c0_i32_1 = arith.constant 0 : i32
    return %c0_i32, %c0_i32_0 : i32, i32
  }
  func.func @transform_9(%arg0: i32) -> (i32, i32) {
    %c0_i32 = arith.constant 0 : i32
    %c0_i32_0 = arith.constant 0 : i32
    %c0_i32_1 = arith.constant 0 : i32
    return %c0_i32, %c0_i32_0 : i32, i32
  }
  func.func @transform_10(%arg0: i32) -> (i32, i32) {
    %c0_i32 = arith.constant 0 : i32
    %c0_i32_0 = arith.constant 0 : i32
    %c0_i32_1 = arith.constant 0 : i32
    return %c0_i32, %c0_i32_0 : i32, i32
  }
  func.func @transform_11(%arg0: i32) -> (i32, i32) {
    %c0_i32 = arith.constant 0 : i32
    %c0_i32_0 = arith.constant 0 : i32
    %c0_i32_1 = arith.constant 0 : i32
    return %c0_i32, %c0_i32_0 : i32, i32
  }
  func.func @transform_12(%arg0: i32) -> (i32, i32) {
    %c0_i32 = arith.constant 0 : i32
    %c0_i32_0 = arith.constant 0 : i32
    return %arg0, %c0_i32 : i32, i32
  }
}

module attributes {stable_mosaic.version = 11 : i64} {
  func.func @_linear_kernel(%arg0: i32, %arg1: memref<16x49xf32, #tpu.memory_space<vmem>>, %arg2: memref<49x49xf32, #tpu.memory_space<vmem>>, %arg3: memref<1x49xf32, #tpu.memory_space<vmem>>, %arg4: memref<16x49xf32, #tpu.memory_space<vmem>>) attributes {dimension_semantics = [#tpu.dimension_semantics<parallel>], iteration_bounds = array<i64: 2>, scalar_prefetch = 0 : i64, scratch_operands = 0 : i64, tpu.core_type = #tpu.core_type<tc>, window_params = [{transform_indices = @transform_0, window_bounds = array<i64: 16, 49>}, {pipeline_mode = #tpu.pipeline_mode<synchronous>, transform_indices = @transform_1, window_bounds = array<i64: 49, 49>}, {pipeline_mode = #tpu.pipeline_mode<synchronous>, transform_indices = @transform_2, window_bounds = array<i64: 1, 49>}, {transform_indices = @transform_3, window_bounds = array<i64: 16, 49>}]} {
    %c0 = arith.constant 0 : index
    %c0_0 = arith.constant 0 : index
    %0 = vector.load %arg1[%c0, %c0_0] : memref<16x49xf32, #tpu.memory_space<vmem>>, vector<16x49xf32>
    %c0_1 = arith.constant 0 : index
    %c0_2 = arith.constant 0 : index
    %1 = vector.load %arg2[%c0_1, %c0_2] : memref<49x49xf32, #tpu.memory_space<vmem>>, vector<49x49xf32>
    %cst = arith.constant dense<0.000000e+00> : vector<16x49xf32>
    %2 = tpu.matmul %0, %1, %cst {dimension_numbers = #tpu.dot_dimension_numbers<[1], [0], [0], [1], [0, 0, 1, 1], [], []>} : vector<16x49xf32>, vector<49x49xf32>, vector<16x49xf32> -> vector<16x49xf32>
    %c0_3 = arith.constant 0 : index
    %c0_4 = arith.constant 0 : index
    %3 = vector.load %arg3[%c0_3, %c0_4] : memref<1x49xf32, #tpu.memory_space<vmem>>, vector<1x49xf32>
    %4 = vector.broadcast %3 : vector<1x49xf32> to vector<16x49xf32>
    %5 = arith.addf %2, %4 : vector<16x49xf32>
    %c0_5 = arith.constant 0 : index
    %c0_6 = arith.constant 0 : index
    %6 = vector.load %arg4[%c0_5, %c0_6] : memref<16x49xf32, #tpu.memory_space<vmem>>, vector<16x49xf32>
    tpu.vector_store %arg4[%c0_5, %c0_6], %5 {strides = array<i32>} : memref<16x49xf32, #tpu.memory_space<vmem>>, vector<16x49xf32>,
    return
  }
  func.func @transform_0(%arg0: i32) -> (i32, i32) {
    %c0_i32 = arith.constant 0 : i32
    %c0_i32_0 = arith.constant 0 : i32
    return %arg0, %c0_i32 : i32, i32
  }
  func.func @transform_1(%arg0: i32) -> (i32, i32) {
    %c0_i32 = arith.constant 0 : i32
    %c0_i32_0 = arith.constant 0 : i32
    %c0_i32_1 = arith.constant 0 : i32
    return %c0_i32, %c0_i32_0 : i32, i32
  }
  func.func @transform_2(%arg0: i32) -> (i32, i32) {
    %c0_i32 = arith.constant 0 : i32
    %c0_i32_0 = arith.constant 0 : i32
    %c0_i32_1 = arith.constant 0 : i32
    return %c0_i32, %c0_i32_0 : i32, i32
  }
  func.func @transform_3(%arg0: i32) -> (i32, i32) {
    %c0_i32 = arith.constant 0 : i32
    %c0_i32_0 = arith.constant 0 : i32
    return %arg0, %c0_i32 : i32, i32
  }
}

module attributes {stable_mosaic.version = 11 : i64} {
  func.func @_fusion_head_kernel(%arg0: i32, %arg1: memref<1x392x1xf32, #tpu.memory_space<vmem>>, %arg2: memref<1x1x392xf32, #tpu.memory_space<vmem>>, %arg3: memref<392x128xf32, #tpu.memory_space<vmem>>, %arg4: memref<392x128xf32, #tpu.memory_space<vmem>>, %arg5: memref<1x128xf32, #tpu.memory_space<vmem>>, %arg6: memref<1x128xf32, #tpu.memory_space<vmem>>, %arg7: memref<128x64xf32, #tpu.memory_space<vmem>>, %arg8: memref<1x64xf32, #tpu.memory_space<vmem>>, %arg9: memref<1x64xf32, #tpu.memory_space<vmem>>, %arg10: memref<64x13xf32, #tpu.memory_space<vmem>>, %arg11: memref<1x13xf32, #tpu.memory_space<vmem>>, %arg12: memref<1x13xf32, #tpu.memory_space<vmem>>, %arg13: memref<1x1x13xf32, #tpu.memory_space<vmem>>) attributes {dimension_semantics = [#tpu.dimension_semantics<parallel>], iteration_bounds = array<i64: 2>, scalar_prefetch = 0 : i64, scratch_operands = 0 : i64, tpu.core_type = #tpu.core_type<tc>, window_params = [{transform_indices = @transform_0, window_bounds = array<i64: 1, 392, 1>}, {transform_indices = @transform_1, window_bounds = array<i64: 1, 1, 392>}, {pipeline_mode = #tpu.pipeline_mode<synchronous>, transform_indices = @transform_2, window_bounds = array<i64: 392, 128>}, {pipeline_mode = #tpu.pipeline_mode<synchronous>, transform_indices = @transform_3, window_bounds = array<i64: 392, 128>}, {pipeline_mode = #tpu.pipeline_mode<synchronous>, transform_indices = @transform_4, window_bounds = array<i64: 1, 128>}, {pipeline_mode = #tpu.pipeline_mode<synchronous>, transform_indices = @transform_5, window_bounds = array<i64: 1, 128>}, {pipeline_mode = #tpu.pipeline_mode<synchronous>, transform_indices = @transform_6, window_bounds = array<i64: 128, 64>}, {pipeline_mode = #tpu.pipeline_mode<synchronous>, transform_indices = @transform_7, window_bounds = array<i64: 1, 64>}, {pipeline_mode = #tpu.pipeline_mode<synchronous>, transform_indices = @transform_8, window_bounds = array<i64: 1, 64>}, {pipeline_mode = #tpu.pipeline_mode<synchronous>, transform_indices = @transform_9, window_bounds = array<i64: 64, 13>}, {pipeline_mode = #tpu.pipeline_mode<synchronous>, transform_indices = @transform_10, window_bounds = array<i64: 1, 13>}, {pipeline_mode = #tpu.pipeline_mode<synchronous>, transform_indices = @transform_11, window_bounds = array<i64: 1, 13>}, {transform_indices = @transform_12, window_bounds = array<i64: 1, 1, 13>}]} {
    %c0 = arith.constant 0 : index
    %c0_0 = arith.constant 0 : index
    %c0_1 = arith.constant 0 : index
    %0 = vector.load %arg1[%c0, %c0_0, %c0_1] : memref<1x392x1xf32, #tpu.memory_space<vmem>>, vector<1x392x1xf32>
    %1 = vector.shape_cast %0 : vector<1x392x1xf32> to vector<392x1xf32>
    %c0_2 = arith.constant 0 : index
    %c0_3 = arith.constant 0 : index
    %c0_4 = arith.constant 0 : index
    %2 = vector.load %arg2[%c0_2, %c0_3, %c0_4] : memref<1x1x392xf32, #tpu.memory_space<vmem>>, vector<1x1x392xf32>
    %3 = vector.shape_cast %2 : vector<1x1x392xf32> to vector<1x392xf32>
    %cst = arith.constant 0.353553385 : f32
    %4 = vector.broadcast %cst : f32 to vector<392x1xf32>
    %5 = arith.mulf %1, %4 : vector<392x1xf32>
    %6 = vector.broadcast %5 : vector<392x1xf32> to vector<392x392xf32>
    %7 = vector.broadcast %3 : vector<1x392xf32> to vector<392x392xf32>
    %8 = arith.mulf %6, %7 : vector<392x392xf32>
    %cst_5 = arith.constant dense<0xFF800000> : vector<392xf32>
    %9 = vector.multi_reduction <maximumf>, %8, %cst_5 [1] : vector<392x392xf32> to vector<392xf32>
    %10 = vector.shape_cast %9 : vector<392xf32> to vector<392x1xf32>
    %11 = vector.broadcast %10 : vector<392x1xf32> to vector<392x392xf32>
    %12 = arith.subf %8, %11 : vector<392x392xf32>
    %13 = math.exp %12 : vector<392x392xf32>
    %cst_6 = arith.constant dense<0.000000e+00> : vector<392xf32>
    %14 = vector.multi_reduction <add>, %13, %cst_6 [1] : vector<392x392xf32> to vector<392xf32>
    %15 = vector.shape_cast %14 : vector<392xf32> to vector<392x1xf32>
    %16 = tpu.reciprocal %15 {approx = true} : vector<392x1xf32> -> vector<392x1xf32>
    %17 = vector.broadcast %16 : vector<392x1xf32> to vector<392x392xf32>
    %18 = arith.mulf %13, %17 : vector<392x392xf32>
    %cst_7 = arith.constant dense<0.000000e+00> : vector<1x392xf32>
    %19 = tpu.matmul %3, %18, %cst_7 {dimension_numbers = #tpu.dot_dimension_numbers<[1], [1], [0], [0], [0, 0, 1, 0], [], []>} : vector<1x392xf32>, vector<392x392xf32>, vector<1x392xf32> -> vector<1x392xf32>
    %c0_8 = arith.constant 0 : index
    %c0_9 = arith.constant 0 : index
    %20 = vector.load %arg3[%c0_8, %c0_9] : memref<392x128xf32, #tpu.memory_space<vmem>>, vector<392x128xf32>
    %cst_10 = arith.constant dense<0.000000e+00> : vector<1x128xf32>
    %21 = tpu.matmul %19, %20, %cst_10 {dimension_numbers = #tpu.dot_dimension_numbers<[1], [0], [0], [1], [0, 0, 1, 1], [], []>} : vector<1x392xf32>, vector<392x128xf32>, vector<1x128xf32> -> vector<1x128xf32>
    %c0_11 = arith.constant 0 : index
    %c0_12 = arith.constant 0 : index
    %22 = vector.load %arg4[%c0_11, %c0_12] : memref<392x128xf32, #tpu.memory_space<vmem>>, vector<392x128xf32>
    %cst_13 = arith.constant dense<0.000000e+00> : vector<1x128xf32>
    %23 = tpu.matmul %3, %22, %cst_13 {dimension_numbers = #tpu.dot_dimension_numbers<[1], [0], [0], [1], [0, 0, 1, 1], [], []>} : vector<1x392xf32>, vector<392x128xf32>, vector<1x128xf32> -> vector<1x128xf32>
    %24 = arith.addf %21, %23 : vector<1x128xf32>
    %c0_14 = arith.constant 0 : index
    %c0_15 = arith.constant 0 : index
    %25 = vector.load %arg5[%c0_14, %c0_15] : memref<1x128xf32, #tpu.memory_space<vmem>>, vector<1x128xf32>
    %26 = arith.mulf %24, %25 : vector<1x128xf32>
    %c0_16 = arith.constant 0 : index
    %c0_17 = arith.constant 0 : index
    %27 = vector.load %arg6[%c0_16, %c0_17] : memref<1x128xf32, #tpu.memory_space<vmem>>, vector<1x128xf32>
    %28 = arith.addf %26, %27 : vector<1x128xf32>
    %cst_18 = arith.constant 0.000000e+00 : f32
    %29 = vector.broadcast %cst_18 : f32 to vector<1x128xf32>
    %30 = arith.maximumf %28, %29 : vector<1x128xf32>
    %c0_19 = arith.constant 0 : index
    %c0_20 = arith.constant 0 : index
    %31 = vector.load %arg7[%c0_19, %c0_20] : memref<128x64xf32, #tpu.memory_space<vmem>>, vector<128x64xf32>
    %cst_21 = arith.constant dense<0.000000e+00> : vector<1x64xf32>
    %32 = tpu.matmul %30, %31, %cst_21 {dimension_numbers = #tpu.dot_dimension_numbers<[1], [0], [0], [1], [0, 0, 1, 1], [], []>} : vector<1x128xf32>, vector<128x64xf32>, vector<1x64xf32> -> vector<1x64xf32>
    %c0_22 = arith.constant 0 : index
    %c0_23 = arith.constant 0 : index
    %33 = vector.load %arg8[%c0_22, %c0_23] : memref<1x64xf32, #tpu.memory_space<vmem>>, vector<1x64xf32>
    %34 = arith.mulf %32, %33 : vector<1x64xf32>
    %c0_24 = arith.constant 0 : index
    %c0_25 = arith.constant 0 : index
    %35 = vector.load %arg9[%c0_24, %c0_25] : memref<1x64xf32, #tpu.memory_space<vmem>>, vector<1x64xf32>
    %36 = arith.addf %34, %35 : vector<1x64xf32>
    %cst_26 = arith.constant 0.000000e+00 : f32
    %37 = vector.broadcast %cst_26 : f32 to vector<1x64xf32>
    %38 = arith.maximumf %36, %37 : vector<1x64xf32>
    %c0_27 = arith.constant 0 : index
    %c0_28 = arith.constant 0 : index
    %39 = vector.load %arg10[%c0_27, %c0_28] : memref<64x13xf32, #tpu.memory_space<vmem>>, vector<64x13xf32>
    %cst_29 = arith.constant dense<0.000000e+00> : vector<1x13xf32>
    %40 = tpu.matmul %38, %39, %cst_29 {dimension_numbers = #tpu.dot_dimension_numbers<[1], [0], [0], [1], [0, 0, 1, 1], [], []>} : vector<1x64xf32>, vector<64x13xf32>, vector<1x13xf32> -> vector<1x13xf32>
    %c0_30 = arith.constant 0 : index
    %c0_31 = arith.constant 0 : index
    %41 = vector.load %arg11[%c0_30, %c0_31] : memref<1x13xf32, #tpu.memory_space<vmem>>, vector<1x13xf32>
    %42 = arith.mulf %40, %41 : vector<1x13xf32>
    %c0_32 = arith.constant 0 : index
    %c0_33 = arith.constant 0 : index
    %43 = vector.load %arg12[%c0_32, %c0_33] : memref<1x13xf32, #tpu.memory_space<vmem>>, vector<1x13xf32>
    %44 = arith.addf %42, %43 : vector<1x13xf32>
    %cst_34 = arith.constant 0.000000e+00 : f32
    %45 = vector.broadcast %cst_34 : f32 to vector<1x13xf32>
    %46 = arith.maximumf %44, %45 : vector<1x13xf32>
    %c0_35 = arith.constant 0 : index
    %c0_36 = arith.constant 0 : index
    %c0_37 = arith.constant 0 : index
    %47 = vector.load %arg13[%c0_35, %c0_36, %c0_37] : memref<1x1x13xf32, #tpu.memory_space<vmem>>, vector<1x1x13xf32>
    %48 = vector.shape_cast %47 : vector<1x1x13xf32> to vector<1x13xf32>
    %49 = vector.shape_cast %46 : vector<1x13xf32> to vector<1x1x13xf32>
    tpu.vector_store %arg13[%c0_35, %c0_36, %c0_37], %49 {strides = array<i32>} : memref<1x1x13xf32, #tpu.memory_space<vmem>>, vector<1x1x13xf32>,
    return
  }
  func.func @transform_0(%arg0: i32) -> (i32, i32, i32) {
    %c0_i32 = arith.constant 0 : i32
    %c0_i32_0 = arith.constant 0 : i32
    %c0_i32_1 = arith.constant 0 : i32
    return %arg0, %c0_i32, %c0_i32_0 : i32, i32, i32
  }
  func.func @transform_1(%arg0: i32) -> (i32, i32, i32) {
    %c0_i32 = arith.constant 0 : i32
    %c0_i32_0 = arith.constant 0 : i32
    %c0_i32_1 = arith.constant 0 : i32
    return %arg0, %c0_i32, %c0_i32_0 : i32, i32, i32
  }
  func.func @transform_2(%arg0: i32) -> (i32, i32) {
    %c0_i32 = arith.constant 0 : i32
    %c0_i32_0 = arith.constant 0 : i32
    %c0_i32_1 = arith.constant 0 : i32
    return %c0_i32, %c0_i32_0 : i32, i32
  }
  func.func @transform_3(%arg0: i32) -> (i32, i32) {
    %c0_i32 = arith.constant 0 : i32
    %c0_i32_0 = arith.constant 0 : i32
    %c0_i32_1 = arith.constant 0 : i32
    return %c0_i32, %c0_i32_0 : i32, i32
  }
  func.func @transform_4(%arg0: i32) -> (i32, i32) {
    %c0_i32 = arith.constant 0 : i32
    %c0_i32_0 = arith.constant 0 : i32
    %c0_i32_1 = arith.constant 0 : i32
    return %c0_i32, %c0_i32_0 : i32, i32
  }
  func.func @transform_5(%arg0: i32) -> (i32, i32) {
    %c0_i32 = arith.constant 0 : i32
    %c0_i32_0 = arith.constant 0 : i32
    %c0_i32_1 = arith.constant 0 : i32
    return %c0_i32, %c0_i32_0 : i32, i32
  }
  func.func @transform_6(%arg0: i32) -> (i32, i32) {
    %c0_i32 = arith.constant 0 : i32
    %c0_i32_0 = arith.constant 0 : i32
    %c0_i32_1 = arith.constant 0 : i32
    return %c0_i32, %c0_i32_0 : i32, i32
  }
  func.func @transform_7(%arg0: i32) -> (i32, i32) {
    %c0_i32 = arith.constant 0 : i32
    %c0_i32_0 = arith.constant 0 : i32
    %c0_i32_1 = arith.constant 0 : i32
    return %c0_i32, %c0_i32_0 : i32, i32
  }
  func.func @transform_8(%arg0: i32) -> (i32, i32) {
    %c0_i32 = arith.constant 0 : i32
    %c0_i32_0 = arith.constant 0 : i32
    %c0_i32_1 = arith.constant 0 : i32
    return %c0_i32, %c0_i32_0 : i32, i32
  }
  func.func @transform_9(%arg0: i32) -> (i32, i32) {
    %c0_i32 = arith.constant 0 : i32
    %c0_i32_0 = arith.constant 0 : i32
    %c0_i32_1 = arith.constant 0 : i32
    return %c0_i32, %c0_i32_0 : i32, i32
  }
  func.func @transform_10(%arg0: i32) -> (i32, i32) {
    %c0_i32 = arith.constant 0 : i32
    %c0_i32_0 = arith.constant 0 : i32
    %c0_i32_1 = arith.constant 0 : i32
    return %c0_i32, %c0_i32_0 : i32, i32
  }
  func.func @transform_11(%arg0: i32) -> (i32, i32) {
    %c0_i32 = arith.constant 0 : i32
    %c0_i32_0 = arith.constant 0 : i32
    %c0_i32_1 = arith.constant 0 : i32
    return %c0_i32, %c0_i32_0 : i32, i32
  }
  func.func @transform_12(%arg0: i32) -> (i32, i32, i32) {
    %c0_i32 = arith.constant 0 : i32
    %c0_i32_0 = arith.constant 0 : i32
    %c0_i32_1 = arith.constant 0 : i32
    return %arg0, %c0_i32, %c0_i32_0 : i32, i32, i32
  }
}

</mosaic_0001>

<llo_original>
// kernel: forward.27
$region0: #{forward.27}
  #allocation0 [shape = 'u32[]', space=smem, size = 0x4, offset = 0x4, fixed_abs, tag = 'smem constant byte address 0x4 - core index']
  #allocation1 [shape = 'u32[72,128]{1,0:T(1,128)}', space=vmem, size = 0x9000, scoped, tag = 'internal scratch']
  %s0 = inlined_call_operand.vmem [shape: bf16[2,27,4096], index: 0, kind: input, shape index: {}]
  %s1 = inlined_call_operand.vmem [shape: bf16[4,27], index: 1, kind: input, shape index: {}]
  %s2 = inlined_call_operand.vmem [shape: f32[4,1], index: 2, kind: input, shape index: {}]
  %s3 = inlined_call_operand.vmem [shape: bf16[2,4,4096], index: 3, kind: output, shape index: {}]
  %s4 = sld [smem:[#allocation0]]
  $region45: #{forward.27} parent=0
    _
  %s6 = ssub.s32 1, %s4
  %s7 = scalar_select 0, %s6, %s4
  loop: start=0, step=1, limit=4
  $region2: #{forward.27} parent=0 // loop_pre_header
    _
  $region3: #{forward.27} parent=0 // loop_header
    %s9 = sphi 0, %s13
    %p10 = scmp.ge.s32.totalorder %s9, 4
    %s19 = sphi 0, %s21
    %s22 = sphi 0, %s19
    %s23 = sphi 0, %s22
    %s39 = sphi 0, %s23
    %s43 = sphi 0, %s43
    %s45 = sphi 0, %s43
    %s46 = sphi 0, %s45
    %s60 = sphi 0, %s46
    %s64 = sphi 0, %s64
    %s66 = sphi 0, %s64
    %s67 = sphi 0, %s66
    %s81 = sphi 0, %s67
    %s87 = sphi 0, %s89
    %s90 = sphi 0, %s87
    %s91 = sphi 0, %s90
    %s107 = sphi 0, %s91
  $region4: #{forward.27} parent=0 // loop_header_branch
    %12 = sbr.rel (%p10) target = $region8
  $region5: #{forward.27} parent=0 // loop_body
    %s14 = ssub.s32 %s9, 1
    %s15 = ssub.s32 %s9, 2
    %s16 = sadd.s32 %s9, 1
    %s17 = ssub.s32 %s9, %s16
    %p18 = scmp.eq.s32.totalorder %s17, 0
    %s20 = sadd.s32 %s19, 1
    %s21 = scalar_select %p18, %s19, %s20
    %p24 = pneg %p18
    %p25 = scmp.eq.s32.totalorder %s9, 1
    %p26 = por %p24, %p25
    %p27 = scmp.ne.s32.totalorder %s19, %s22
    %p28 = scmp.eq.s32.totalorder %s9, 0
    %p29 = por %p27, %p28
    %p30 = scmp.ne.s32.totalorder %s19, %s22
    %p31 = scmp.eq.s32.totalorder %s14, 1
    %p32 = por %p30, %p31
    %p33 = scmp.ne.s32.totalorder %s22, %s23
    %p34 = scmp.eq.s32.totalorder %s14, 0
    %p35 = por %p33, %p34
    %p36 = scmp.ne.s32.totalorder %s22, %s23
    %p37 = scmp.eq.s32.totalorder %s15, 1
    %p38 = por %p36, %p37
    %p40 = scmp.ne.s32.totalorder %s23, %s39
    %p41 = scmp.eq.s32.totalorder %s15, 0
    %p42 = por %p40, %p41
    %s44 = sadd.s32 %s43, 1
    %p47 = scmp.eq.s32.totalorder %s9, 1
    %p48 = scmp.ne.s32.totalorder %s43, %s45
    %p49 = scmp.eq.s32.totalorder %s9, 0
    %p50 = por %p48, %p49
    %p51 = scmp.ne.s32.totalorder %s43, %s45
    %p52 = scmp.eq.s32.totalorder %s14, 1
    %p53 = por %p51, %p52
    %p54 = scmp.ne.s32.totalorder %s45, %s46
    %p55 = scmp.eq.s32.totalorder %s14, 0
    %p56 = por %p54, %p55
    %p57 = scmp.ne.s32.totalorder %s45, %s46
    %p58 = scmp.eq.s32.totalorder %s15, 1
    %p59 = por %p57, %p58
    %p61 = scmp.ne.s32.totalorder %s46, %s60
    %p62 = scmp.eq.s32.totalorder %s15, 0
    %p63 = por %p61, %p62
    %s65 = sadd.s32 %s64, 1
    %p68 = scmp.eq.s32.totalorder %s9, 1
    %p69 = scmp.ne.s32.totalorder %s64, %s66
    %p70 = scmp.eq.s32.totalorder %s9, 0
    %p71 = por %p69, %p70
    %p72 = scmp.ne.s32.totalorder %s64, %s66
    %p73 = scmp.eq.s32.totalorder %s14, 1
    %p74 = por %p72, %p73
    %p75 = scmp.ne.s32.totalorder %s66, %s67
    %p76 = scmp.eq.s32.totalorder %s14, 0
    %p77 = por %p75, %p76
    %p78 = scmp.ne.s32.totalorder %s66, %s67
    %p79 = scmp.eq.s32.totalorder %s15, 1
    %p80 = por %p78, %p79
    %p82 = scmp.ne.s32.totalorder %s67, %s81
    %p83 = scmp.eq.s32.totalorder %s15, 0
    %p84 = por %p82, %p83
    %s85 = ssub.s32 %s9, %s16
    %p86 = scmp.eq.s32.totalorder %s85, 0
    %s88 = sadd.s32 %s87, 1
    %s89 = scalar_select %p86, %s87, %s88
    %p92 = pneg %p86
    %p93 = scmp.eq.s32.totalorder %s9, 1
    %p94 = por %p92, %p93
    %p95 = scmp.ne.s32.totalorder %s87, %s90
    %p96 = scmp.eq.s32.totalorder %s9, 0
    %p97 = por %p95, %p96
    %p98 = scmp.ne.s32.totalorder %s87, %s90
    %p99 = scmp.eq.s32.totalorder %s14, 1
    %p100 = por %p98, %p99
    %p101 = scmp.ne.s32.totalorder %s90, %s91
    %p102 = scmp.eq.s32.totalorder %s14, 0
    %p103 = por %p101, %p102
    %p104 = scmp.ne.s32.totalorder %s90, %s91
    %p105 = scmp.eq.s32.totalorder %s15, 1
    %p106 = por %p104, %p105
    %p108 = scmp.ne.s32.totalorder %s91, %s107
    %p109 = scmp.eq.s32.totalorder %s15, 0
    %p110 = por %p108, %p109
    %p111 = scmp.le.s32.totalorder 1, %s9
    %p112 = scmp.lt.s32.totalorder %s9, 3
    %p113 = pnand %p111, %p112
    %p114 = pneg %p113
    // Predicated region
    $region9: #{forward.27} parent=5 // pred_check
      _
    $region10: #{forward.27} parent=5 // pred_check_branch
      %116 = sbr.rel (%p113) target = $region12
    $region11: #{forward.27} parent=5 // pred_region
      %s117 = ssub.s32 %s9, 1
      // Predicated region
      $region13: #{forward.27} parent=11 // pred_check
        %p118 = pneg %p56
      $region14: #{forward.27} parent=11 // pred_check_branch
        %120 = sbr.rel (%p118) target = $region16
      $region15: #{forward.27} parent=11 // pred_region
        _
      $region16: #{forward.27} parent=11 // pred_fallthru
        _
      // Predicated region
      $region17: #{forward.27} parent=11 // pred_check
        %p121 = pneg %p77
      $region18: #{forward.27} parent=11 // pred_check_branch
        %123 = sbr.rel (%p121) target = $region20
      $region19: #{forward.27} parent=11 // pred_region
        _
      $region20: #{forward.27} parent=11 // pred_fallthru
        _
    $region12: #{forward.27} parent=5 // pred_fallthru
      _
    %p124 = scmp.lt.s32.totalorder %s9, 2
    // Predicated region
    $region21: #{forward.27} parent=5 // pred_check
      %p125 = pneg %p124
    $region22: #{forward.27} parent=5 // pred_check_branch
      %127 = sbr.rel (%p125) target = $region24
    $region23: #{forward.27} parent=5 // pred_region
      // Predicated region
      $region25: #{forward.27} parent=23 // pred_check
        %p128 = pneg %p29
      $region26: #{forward.27} parent=23 // pred_check_branch
        %130 = sbr.rel (%p128) target = $region28
      $region27: #{forward.27} parent=23 // pred_region
        %p131 = scmp.lt.s32.totalorder %s9, 1
        %s132 = scalar_select %p131, %s9, 1
        %s133 = smul.addr %s132, 128
        %s134 = smul.addr %s133, 4
        %s135 = scalar_lea.vmem %s0, %s134
      $region28: #{forward.27} parent=23 // pred_fallthru
        _
    $region24: #{forward.27} parent=5 // pred_fallthru
      _
    %p136 = scmp.le.s32.totalorder 1, %s9
    %p137 = scmp.lt.s32.totalorder %s9, 3
    %p138 = pnand %p136, %p137
    %p139 = pneg %p138
    // Predicated region
    $region29: #{forward.27} parent=5 // pred_check
      _
    $region30: #{forward.27} parent=5 // pred_check_branch
      %141 = sbr.rel (%p138) target = $region32
    $region31: #{forward.27} parent=5 // pred_region
      %s142 = ssub.s32 %s9, 1
      %p143 = scmp.lt.s32.totalorder %s14, 1
      %s144 = scalar_select %p143, %s14, 1
      %s145 = smul.addr %s144, 128
      %s146 = smul.addr %s145, 4
      %s147 = scalar_lea.vmem %s0, %s146
      %p148 = pneg %p35
      %p149 = pneg %p32
      %p150 = pneg %p56
      %p151 = pneg %p53
      %p152 = pneg %p77
      %p153 = pneg %p74
      %p154 = pneg %p103
      %p155 = pneg %p100
      %p156 = scmp.lt.s32.totalorder %s14, 1
      %s157 = scalar_select %p156, %s14, 1
      %s158 = smul.addr %s157, 32
      %s159 = smul.addr %s158, 2
      %s160 = scalar_lea.vmem %s3, %s159
      %p161 = scmp.lt.s32.totalorder %s14, 1
      %s162 = scalar_select %p161, %s14, 1
      %s163 = smul.addr %s162, 128
      %s164 = smul.addr %s163, 4
      %s165 = scalar_lea.vmem %s0, %s164
      %p166 = scmp.lt.s32.totalorder %s14, 1
      %s167 = scalar_select %p166, %s14, 1
      %s168 = smul.addr %s167, 32
      %s169 = smul.addr %s168, 2
      %s170 = scalar_lea.vmem %s3, %s169
      %v172 = vld [vmem:[%s1] sm:$0x3]
      %v173 = vld [vmem:[%s165] sm:$0xff]
      %v174 = vld [vmem:[%s165 + $0x8] sm:$0xff]
      %v175 = vld [vmem:[%s165 + $0x10] sm:$0xff]
      %v176 = vld [vmem:[%s165 + $0x18] sm:$0xff]
      %v177 = vld [vmem:[%s165 + $0x20] sm:$0xff]
      %v178 = vld [vmem:[%s165 + $0x28] sm:$0xff]
      %v179 = vld [vmem:[%s165 + $0x30] sm:$0xff]
      %v180 = vld [vmem:[%s165 + $0x38] sm:$0xff]
      %v181 = vld [vmem:[%s165 + $0x40] sm:$0xff]
      %v182 = vld [vmem:[%s165 + $0x48] sm:$0xff]
      %v183 = vld [vmem:[%s165 + $0x50] sm:$0xff]
      %v184 = vld [vmem:[%s165 + $0x58] sm:$0xff]
      %v185 = vld [vmem:[%s165 + $0x60] sm:$0xff]
      %v186 = vld [vmem:[%s165 + $0x68] sm:$0xff]
      %v187 = vld [vmem:[%s165 + $0x70] sm:$0xff]
      %v188 = vld [vmem:[%s165 + $0x78] sm:$0xff]
      %v189 = vld [vmem:[%s165 + $0x80] sm:$0xff]
      %v190 = vld [vmem:[%s165 + $0x88] sm:$0xff]
      %v191 = vld [vmem:[%s165 + $0x90] sm:$0xff]
      %v192 = vld [vmem:[%s165 + $0x98] sm:$0xff]
      %v193 = vld [vmem:[%s165 + $0xa0] sm:$0xff]
      %v194 = vld [vmem:[%s165 + $0xa8] sm:$0xff]
      %v195 = vld [vmem:[%s165 + $0xb0] sm:$0xff]
      %v196 = vld [vmem:[%s165 + $0xb8] sm:$0xff]
      %v197 = vld [vmem:[%s165 + $0xc0] sm:$0xff]
      %v198 = vld [vmem:[%s165 + $0xc8] sm:$0xff]
      %v199 = vld [vmem:[%s165 + $0xd0] sm:$0xff]
      %v200 = vld [vmem:[%s165 + $0xd8] sm:$0xff]
      %v201 = vld [vmem:[%s165 + $0xe0] sm:$0xff]
      %v202 = vld [vmem:[%s165 + $0xe8] sm:$0xff]
      %v203 = vld [vmem:[%s165 + $0xf0] sm:$0xff]
      %v204 = vld [vmem:[%s165 + $0xf8] sm:$0xff]
      %v205 = vld [vmem:[%s165 + $0x100] sm:$0xff]
      %v206 = vld [vmem:[%s165 + $0x108] sm:$0xff]
      %v207 = vld [vmem:[%s165 + $0x110] sm:$0xff]
      %v208 = vld [vmem:[%s165 + $0x118] sm:$0xff]
      %v209 = vld [vmem:[%s165 + $0x120] sm:$0xff]
      %v210 = vld [vmem:[%s165 + $0x128] sm:$0xff]
      %v211 = vld [vmem:[%s165 + $0x130] sm:$0xff]
      %v212 = vld [vmem:[%s165 + $0x138] sm:$0xff]
      %v213 = vld [vmem:[%s165 + $0x140] sm:$0xff]
      %v214 = vld [vmem:[%s165 + $0x148] sm:$0xff]
      %v215 = vld [vmem:[%s165 + $0x150] sm:$0xff]
      %v216 = vld [vmem:[%s165 + $0x158] sm:$0xff]
      %v217 = vld [vmem:[%s165 + $0x160] sm:$0xff]
      %v218 = vld [vmem:[%s165 + $0x168] sm:$0xff]
      %v219 = vld [vmem:[%s165 + $0x170] sm:$0xff]
      %v220 = vld [vmem:[%s165 + $0x178] sm:$0xff]
      %v221 = vld [vmem:[%s165 + $0x180] sm:$0x33]
      %v222 = vld [vmem:[%s165 + $0x188] sm:$0x33]
      %v223 = vld [vmem:[%s165 + $0x190] sm:$0x33]
      %v224 = vld [vmem:[%s165 + $0x198] sm:$0x33]
      %v225 = vld [vmem:[%s165 + $0x1a0] sm:$0x33]
      %v226 = vld [vmem:[%s165 + $0x1a8] sm:$0x33]
      %v227 = vld [vmem:[%s165 + $0x1b0] sm:$0x33]
      %v228 = vld [vmem:[%s165 + $0x1b8] sm:$0x33]
      %v229 = vld [vmem:[%s165 + $0x1c0] sm:$0x33]
      %v230 = vld [vmem:[%s165 + $0x1c8] sm:$0x33]
      %v231 = vld [vmem:[%s165 + $0x1d0] sm:$0x33]
      %v232 = vld [vmem:[%s165 + $0x1d8] sm:$0x33]
      %v233 = vld [vmem:[%s165 + $0x1e0] sm:$0x33]
      %v234 = vld [vmem:[%s165 + $0x1e8] sm:$0x33]
      %v235 = vld [vmem:[%s165 + $0x1f0] sm:$0x33]
      %v236 = vld [vmem:[%s165 + $0x1f8] sm:$0x33]
      %v237 = vld [vmem:[%s2] sm:$0xf]
      %239 = vset.pattern.permute.xlu0 0
      %240 = vperm.xlu0 %239, %v237
      %v241 = vpop.permute.xlu0 %240
      %v307 = vunpack.c.l.b16 %v173
      %v308 = vunpack.c.h.b16 %v173
      %v309 = vunpack.c.l.b16 %v174
      %v310 = vunpack.c.h.b16 %v174
      %v311 = vunpack.c.l.b16 %v175
      %v312 = vunpack.c.h.b16 %v175
      %v313 = vunpack.c.l.b16 %v176
      %v314 = vunpack.c.h.b16 %v176
      %v315 = vunpack.c.l.b16 %v177
      %v316 = vunpack.c.h.b16 %v177
      %v317 = vunpack.c.l.b16 %v178
      %v318 = vunpack.c.h.b16 %v178
      %v319 = vunpack.c.l.b16 %v179
      %v320 = vunpack.c.h.b16 %v179
      %v321 = vunpack.c.l.b16 %v180
      %v322 = vunpack.c.h.b16 %v180
      %v323 = vunpack.c.l.b16 %v181
      %v324 = vunpack.c.h.b16 %v181
      %v325 = vunpack.c.l.b16 %v182
      %v326 = vunpack.c.h.b16 %v182
      %v327 = vunpack.c.l.b16 %v183
      %v328 = vunpack.c.h.b16 %v183
      %v329 = vunpack.c.l.b16 %v184
      %v330 = vunpack.c.h.b16 %v184
      %v331 = vunpack.c.l.b16 %v185
      %v332 = vunpack.c.h.b16 %v185
      %v333 = vunpack.c.l.b16 %v186
      %v334 = vunpack.c.h.b16 %v186
      %v335 = vunpack.c.l.b16 %v187
      %v336 = vunpack.c.h.b16 %v187
      %v337 = vunpack.c.l.b16 %v188
      %v338 = vunpack.c.h.b16 %v188
      %v339 = vunpack.c.l.b16 %v189
      %v340 = vunpack.c.h.b16 %v189
      %v341 = vunpack.c.l.b16 %v190
      %v342 = vunpack.c.h.b16 %v190
      %v343 = vunpack.c.l.b16 %v191
      %v344 = vunpack.c.h.b16 %v191
      %v345 = vunpack.c.l.b16 %v192
      %v346 = vunpack.c.h.b16 %v192
      %v347 = vunpack.c.l.b16 %v193
      %v348 = vunpack.c.h.b16 %v193
      %v349 = vunpack.c.l.b16 %v194
      %v350 = vunpack.c.h.b16 %v194
      %v351 = vunpack.c.l.b16 %v195
      %v352 = vunpack.c.h.b16 %v195
      %v353 = vunpack.c.l.b16 %v196
      %v354 = vunpack.c.h.b16 %v196
      %v355 = vunpack.c.l.b16 %v197
      %v356 = vunpack.c.h.b16 %v197
      %v357 = vunpack.c.l.b16 %v198
      %v358 = vunpack.c.h.b16 %v198
      %v359 = vunpack.c.l.b16 %v199
      %v360 = vunpack.c.h.b16 %v199
      %v361 = vunpack.c.l.b16 %v200
      %v362 = vunpack.c.h.b16 %v200
      %v363 = vunpack.c.l.b16 %v201
      %v364 = vunpack.c.h.b16 %v201
      %v365 = vunpack.c.l.b16 %v202
      %v366 = vunpack.c.h.b16 %v202
      %v367 = vunpack.c.l.b16 %v203
      %v368 = vunpack.c.h.b16 %v203
      %v369 = vunpack.c.l.b16 %v204
      %v370 = vunpack.c.h.b16 %v204
      %v371 = vunpack.c.l.b16 %v205
      %v372 = vunpack.c.h.b16 %v205
      %v373 = vunpack.c.l.b16 %v206
      %v374 = vunpack.c.h.b16 %v206
      %v375 = vunpack.c.l.b16 %v207
      %v376 = vunpack.c.h.b16 %v207
      %v377 = vunpack.c.l.b16 %v208
      %v378 = vunpack.c.h.b16 %v208
      %v379 = vunpack.c.l.b16 %v209
      %v380 = vunpack.c.h.b16 %v209
      %v381 = vunpack.c.l.b16 %v210
      %v382 = vunpack.c.h.b16 %v210
      %v383 = vunpack.c.l.b16 %v211
      %v384 = vunpack.c.h.b16 %v211
      %v385 = vunpack.c.l.b16 %v212
      %v386 = vunpack.c.h.b16 %v212
      %v387 = vunpack.c.l.b16 %v213
      %v388 = vunpack.c.h.b16 %v213
      %v389 = vunpack.c.l.b16 %v214
      %v390 = vunpack.c.h.b16 %v214
      %v391 = vunpack.c.l.b16 %v215
      %v392 = vunpack.c.h.b16 %v215
      %v393 = vunpack.c.l.b16 %v216
      %v394 = vunpack.c.h.b16 %v216
      %v395 = vunpack.c.l.b16 %v217
      %v396 = vunpack.c.h.b16 %v217
      %v397 = vunpack.c.l.b16 %v218
      %v398 = vunpack.c.h.b16 %v218
      %v399 = vunpack.c.l.b16 %v219
      %v400 = vunpack.c.h.b16 %v219
      %v401 = vunpack.c.l.b16 %v220
      %v402 = vunpack.c.h.b16 %v220
      %v403 = vunpack.c.l.b16 %v221
      %v404 = vunpack.c.h.b16 %v221
      %v405 = vunpack.c.l.b16 %v222
      %v406 = vunpack.c.h.b16 %v222
      %v407 = vunpack.c.l.b16 %v223
      %v408 = vunpack.c.h.b16 %v223
      %v409 = vunpack.c.l.b16 %v224
      %v410 = vunpack.c.h.b16 %v224
      %v411 = vunpack.c.l.b16 %v225
      %v412 = vunpack.c.h.b16 %v225
      %v413 = vunpack.c.l.b16 %v226
      %v414 = vunpack.c.h.b16 %v226
      %v415 = vunpack.c.l.b16 %v227
      %v416 = vunpack.c.h.b16 %v227
      %v417 = vunpack.c.l.b16 %v228
      %v418 = vunpack.c.h.b16 %v228
      %v419 = vunpack.c.l.b16 %v229
      %v420 = vunpack.c.h.b16 %v229
      %v421 = vunpack.c.l.b16 %v230
      %v422 = vunpack.c.h.b16 %v230
      %v423 = vunpack.c.l.b16 %v231
      %v424 = vunpack.c.h.b16 %v231
      %v425 = vunpack.c.l.b16 %v232
      %v426 = vunpack.c.h.b16 %v232
      %v427 = vunpack.c.l.b16 %v233
      %v428 = vunpack.c.h.b16 %v233
      %v429 = vunpack.c.l.b16 %v234
      %v430 = vunpack.c.h.b16 %v234
      %v431 = vunpack.c.l.b16 %v235
      %v432 = vunpack.c.h.b16 %v235
      %v433 = vunpack.c.l.b16 %v236
      %v434 = vunpack.c.h.b16 %v236
      %v435 = vpack.c.b16 %v339, %v307
      %v436 = vpack.c.b16 %v340, %v308
      %v437 = vpack.c.b16 %v341, %v309
      %v438 = vpack.c.b16 %v342, %v310
      %v439 = vpack.c.b16 %v343, %v311
      %v440 = vpack.c.b16 %v344, %v312
      %v441 = vpack.c.b16 %v345, %v313
      %v442 = vpack.c.b16 %v346, %v314
      %v443 = vpack.c.b16 %v347, %v315
      %v444 = vpack.c.b16 %v348, %v316
      %v445 = vpack.c.b16 %v349, %v317
      %v446 = vpack.c.b16 %v350, %v318
      %v447 = vpack.c.b16 %v351, %v319
      %v448 = vpack.c.b16 %v352, %v320
      %v449 = vpack.c.b16 %v353, %v321
      %v450 = vpack.c.b16 %v354, %v322
      %v451 = vpack.c.b16 %v355, %v323
      %v452 = vpack.c.b16 %v356, %v324
      %v453 = vpack.c.b16 %v357, %v325
      %v454 = vpack.c.b16 %v358, %v326
      %v455 = vpack.c.b16 %v359, %v327
      %v456 = vpack.c.b16 %v360, %v328
      %v457 = vpack.c.b16 %v361, %v329
      %v458 = vpack.c.b16 %v362, %v330
      %v459 = vpack.c.b16 %v363, %v331
      %v460 = vpack.c.b16 %v364, %v332
      %v461 = vpack.c.b16 %v365, %v333
      %v462 = vpack.c.b16 %v366, %v334
      %v463 = vpack.c.b16 %v367, %v335
      %v464 = vpack.c.b16 %v368, %v336
      %v465 = vpack.c.b16 %v369, %v337
      %v466 = vpack.c.b16 %v370, %v338
      %v467 = vpack.c.b16 %v403, %v371
      %v468 = vpack.c.b16 %v404, %v372
      %v469 = vpack.c.b16 %v405, %v373
      %v470 = vpack.c.b16 %v406, %v374
      %v471 = vpack.c.b16 %v407, %v375
      %v472 = vpack.c.b16 %v408, %v376
      %v473 = vpack.c.b16 %v409, %v377
      %v474 = vpack.c.b16 %v410, %v378
      %v475 = vpack.c.b16 %v411, %v379
      %v476 = vpack.c.b16 %v412, %v380
      %v477 = vpack.c.b16 %v413, %v381
      %v478 = vpack.c.b16 %v414, %v382
      %v479 = vpack.c.b16 %v415, %v383
      %v480 = vpack.c.b16 %v416, %v384
      %v481 = vpack.c.b16 %v417, %v385
      %v482 = vpack.c.b16 %v418, %v386
      %v483 = vpack.c.b16 %v419, %v387
      %v484 = vpack.c.b16 %v420, %v388
      %v485 = vpack.c.b16 %v421, %v389
      %v486 = vpack.c.b16 %v422, %v390
      %v487 = vpack.c.b16 %v423, %v391
      %v488 = vpack.c.b16 %v424, %v392
      %v489 = vpack.c.b16 %v425, %v393
      %v490 = vpack.c.b16 %v426, %v394
      %v491 = vpack.c.b16 %v427, %v395
      %v492 = vpack.c.b16 %v428, %v396
      %v493 = vpack.c.b16 %v429, %v397
      %v494 = vpack.c.b16 %v430, %v398
      %v495 = vpack.c.b16 %v431, %v399
      %v496 = vpack.c.b16 %v432, %v400
      %v497 = vpack.c.b16 %v433, %v401
      %v498 = vpack.c.b16 %v434, %v402
      %vm531 = vcmask 220160
      %v533 = vsel %vm531, %v172, 0
      %vm535 = vcmask 1044480
      %vm536 = vcmask 1045504
      %v537 = vsel %vm535, 4294967295, 65535
      %v538 = vsel %vm536, %v537, 0
      %v540 = vand.u32 %v467, %v538
      %v543 = vand.u32 %v468, %v538
      %v546 = vand.u32 %v469, %v538
      %v549 = vand.u32 %v470, %v538
      %v552 = vand.u32 %v471, %v538
      %v555 = vand.u32 %v472, %v538
      %v558 = vand.u32 %v473, %v538
      %v561 = vand.u32 %v474, %v538
      %v564 = vand.u32 %v475, %v538
      %v567 = vand.u32 %v476, %v538
      %v570 = vand.u32 %v477, %v538
      %v573 = vand.u32 %v478, %v538
      %v576 = vand.u32 %v479, %v538
      %v579 = vand.u32 %v480, %v538
      %v582 = vand.u32 %v481, %v538
      %v585 = vand.u32 %v482, %v538
      %v588 = vand.u32 %v483, %v538
      %v591 = vand.u32 %v484, %v538
      %v594 = vand.u32 %v485, %v538
      %v597 = vand.u32 %v486, %v538
      %v600 = vand.u32 %v487, %v538
      %v603 = vand.u32 %v488, %v538
      %v606 = vand.u32 %v489, %v538
      %v609 = vand.u32 %v490, %v538
      %v612 = vand.u32 %v491, %v538
      %v615 = vand.u32 %v492, %v538
      %v618 = vand.u32 %v493, %v538
      %v621 = vand.u32 %v494, %v538
      %v624 = vand.u32 %v495, %v538
      %v627 = vand.u32 %v496, %v538
      %v630 = vand.u32 %v497, %v538
      %v633 = vand.u32 %v498, %v538
      %635 = vmatpush.bf16.msra.mxu0 0
      %636 = vmatpush.bf16.msra.mxu0 0
      %637 = vmatpush.bf16.msra.mxu0 0
      %638 = vmatpush.bf16.msra.mxu0 0
      %639 = vmatpush.bf16.msra.mxu0 0
      %640 = vmatpush.bf16.msra.mxu0 0
      %641 = vmatpush.bf16.msra.mxu0 %v540
      %642 = vmatpush.bf16.msra.mxu0 %v435
      %643 = vmatmul.bf16.gmra.mxu0 %v533
      %v644 = vpop.f32.mrf.mxu0
      %v645 = vadd.f32 %v241, %v644
      %v646 = vpop.f32.mrf.mxu0
      %647 = vdwg.mxu0
      %648 = vmatpush.bf16.msra.mxu0 0
      %649 = vmatpush.bf16.msra.mxu0 0
      %650 = vmatpush.bf16.msra.mxu0 0
      %651 = vmatpush.bf16.msra.mxu0 0
      %652 = vmatpush.bf16.msra.mxu0 0
      %653 = vmatpush.bf16.msra.mxu0 0
      %654 = vmatpush.bf16.msra.mxu0 %v543
      %655 = vmatpush.bf16.msra.mxu0 %v436
      %656 = vmatmul.bf16.gmra.mxu0 %v533
      %v657 = vpop.f32.mrf.mxu0
      %v658 = vadd.f32 %v241, %v657
      %v659 = vpop.f32.mrf.mxu0
      %660 = vdwg.mxu0
      %661 = vmatpush.bf16.msra.mxu0 0
      %662 = vmatpush.bf16.msra.mxu0 0
      %663 = vmatpush.bf16.msra.mxu0 0
      %664 = vmatpush.bf16.msra.mxu0 0
      %665 = vmatpush.bf16.msra.mxu0 0
      %666 = vmatpush.bf16.msra.mxu0 0
      %667 = vmatpush.bf16.msra.mxu0 %v546
      %668 = vmatpush.bf16.msra.mxu0 %v437
      %669 = vmatmul.bf16.gmra.mxu0 %v533
      %v670 = vpop.f32.mrf.mxu0
      %v671 = vadd.f32 %v241, %v670
      %v672 = vpop.f32.mrf.mxu0
      %673 = vdwg.mxu0
      %674 = vmatpush.bf16.msra.mxu0 0
      %675 = vmatpush.bf16.msra.mxu0 0
      %676 = vmatpush.bf16.msra.mxu0 0
      %677 = vmatpush.bf16.msra.mxu0 0
      %678 = vmatpush.bf16.msra.mxu0 0
      %679 = vmatpush.bf16.msra.mxu0 0
      %680 = vmatpush.bf16.msra.mxu0 %v549
      %681 = vmatpush.bf16.msra.mxu0 %v438
      %682 = vmatmul.bf16.gmra.mxu0 %v533
      %v683 = vpop.f32.mrf.mxu0
      %v684 = vadd.f32 %v241, %v683
      %v685 = vpop.f32.mrf.mxu0
      %686 = vdwg.mxu0
      %687 = vmatpush.bf16.msra.mxu0 0
      %688 = vmatpush.bf16.msra.mxu0 0
      %689 = vmatpush.bf16.msra.mxu0 0
      %690 = vmatpush.bf16.msra.mxu0 0
      %691 = vmatpush.bf16.msra.mxu0 0
      %692 = vmatpush.bf16.msra.mxu0 0
      %693 = vmatpush.bf16.msra.mxu0 %v552
      %694 = vmatpush.bf16.msra.mxu0 %v439
      %695 = vmatmul.bf16.gmra.mxu0 %v533
      %v696 = vpop.f32.mrf.mxu0
      %v697 = vadd.f32 %v241, %v696
      %v698 = vpop.f32.mrf.mxu0
      %699 = vdwg.mxu0
      %700 = vmatpush.bf16.msra.mxu0 0
      %701 = vmatpush.bf16.msra.mxu0 0
      %702 = vmatpush.bf16.msra.mxu0 0
      %703 = vmatpush.bf16.msra.mxu0 0
      %704 = vmatpush.bf16.msra.mxu0 0
      %705 = vmatpush.bf16.msra.mxu0 0
      %706 = vmatpush.bf16.msra.mxu0 %v555
      %707 = vmatpush.bf16.msra.mxu0 %v440
      %708 = vmatmul.bf16.gmra.mxu0 %v533
      %v709 = vpop.f32.mrf.mxu0
      %v710 = vadd.f32 %v241, %v709
      %v711 = vpop.f32.mrf.mxu0
      %712 = vdwg.mxu0
      %713 = vmatpush.bf16.msra.mxu0 0
      %714 = vmatpush.bf16.msra.mxu0 0
      %715 = vmatpush.bf16.msra.mxu0 0
      %716 = vmatpush.bf16.msra.mxu0 0
      %717 = vmatpush.bf16.msra.mxu0 0
      %718 = vmatpush.bf16.msra.mxu0 0
      %719 = vmatpush.bf16.msra.mxu0 %v558
      %720 = vmatpush.bf16.msra.mxu0 %v441
      %721 = vmatmul.bf16.gmra.mxu0 %v533
      %v722 = vpop.f32.mrf.mxu0
      %v723 = vadd.f32 %v241, %v722
      %v724 = vpop.f32.mrf.mxu0
      %725 = vdwg.mxu0
      %726 = vmatpush.bf16.msra.mxu0 0
      %727 = vmatpush.bf16.msra.mxu0 0
      %728 = vmatpush.bf16.msra.mxu0 0
      %729 = vmatpush.bf16.msra.mxu0 0
      %730 = vmatpush.bf16.msra.mxu0 0
      %731 = vmatpush.bf16.msra.mxu0 0
      %732 = vmatpush.bf16.msra.mxu0 %v561
      %733 = vmatpush.bf16.msra.mxu0 %v442
      %734 = vmatmul.bf16.gmra.mxu0 %v533
      %v735 = vpop.f32.mrf.mxu0
      %v736 = vadd.f32 %v241, %v735
      %v737 = vpop.f32.mrf.mxu0
      %738 = vdwg.mxu0
      %739 = vmatpush.bf16.msra.mxu0 0
      %740 = vmatpush.bf16.msra.mxu0 0
      %741 = vmatpush.bf16.msra.mxu0 0
      %742 = vmatpush.bf16.msra.mxu0 0
      %743 = vmatpush.bf16.msra.mxu0 0
      %744 = vmatpush.bf16.msra.mxu0 0
      %745 = vmatpush.bf16.msra.mxu0 %v564
      %746 = vmatpush.bf16.msra.mxu0 %v443
      %747 = vmatmul.bf16.gmra.mxu0 %v533
      %v748 = vpop.f32.mrf.mxu0
      %v749 = vadd.f32 %v241, %v748
      %v750 = vpop.f32.mrf.mxu0
      %751 = vdwg.mxu0
      %752 = vmatpush.bf16.msra.mxu0 0
      %753 = vmatpush.bf16.msra.mxu0 0
      %754 = vmatpush.bf16.msra.mxu0 0
      %755 = vmatpush.bf16.msra.mxu0 0
      %756 = vmatpush.bf16.msra.mxu0 0
      %757 = vmatpush.bf16.msra.mxu0 0
      %758 = vmatpush.bf16.msra.mxu0 %v567
      %759 = vmatpush.bf16.msra.mxu0 %v444
      %760 = vmatmul.bf16.gmra.mxu0 %v533
      %v761 = vpop.f32.mrf.mxu0
      %v762 = vadd.f32 %v241, %v761
      %v763 = vpop.f32.mrf.mxu0
      %764 = vdwg.mxu0
      %765 = vmatpush.bf16.msra.mxu0 0
      %766 = vmatpush.bf16.msra.mxu0 0
      %767 = vmatpush.bf16.msra.mxu0 0
      %768 = vmatpush.bf16.msra.mxu0 0
      %769 = vmatpush.bf16.msra.mxu0 0
      %770 = vmatpush.bf16.msra.mxu0 0
      %771 = vmatpush.bf16.msra.mxu0 %v570
      %772 = vmatpush.bf16.msra.mxu0 %v445
      %773 = vmatmul.bf16.gmra.mxu0 %v533
      %v774 = vpop.f32.mrf.mxu0
      %v775 = vadd.f32 %v241, %v774
      %v776 = vpop.f32.mrf.mxu0
      %777 = vdwg.mxu0
      %778 = vmatpush.bf16.msra.mxu0 0
      %779 = vmatpush.bf16.msra.mxu0 0
      %780 = vmatpush.bf16.msra.mxu0 0
      %781 = vmatpush.bf16.msra.mxu0 0
      %782 = vmatpush.bf16.msra.mxu0 0
      %783 = vmatpush.bf16.msra.mxu0 0
      %784 = vmatpush.bf16.msra.mxu0 %v573
      %785 = vmatpush.bf16.msra.mxu0 %v446
      %786 = vmatmul.bf16.gmra.mxu0 %v533
      %v787 = vpop.f32.mrf.mxu0
      %v788 = vadd.f32 %v241, %v787
      %v789 = vpop.f32.mrf.mxu0
      %790 = vdwg.mxu0
      %791 = vmatpush.bf16.msra.mxu0 0
      %792 = vmatpush.bf16.msra.mxu0 0
      %793 = vmatpush.bf16.msra.mxu0 0
      %794 = vmatpush.bf16.msra.mxu0 0
      %795 = vmatpush.bf16.msra.mxu0 0
      %796 = vmatpush.bf16.msra.mxu0 0
      %797 = vmatpush.bf16.msra.mxu0 %v576
      %798 = vmatpush.bf16.msra.mxu0 %v447
      %799 = vmatmul.bf16.gmra.mxu0 %v533
      %v800 = vpop.f32.mrf.mxu0
      %v801 = vadd.f32 %v241, %v800
      %v802 = vpop.f32.mrf.mxu0
      %803 = vdwg.mxu0
      %804 = vmatpush.bf16.msra.mxu0 0
      %805 = vmatpush.bf16.msra.mxu0 0
      %806 = vmatpush.bf16.msra.mxu0 0
      %807 = vmatpush.bf16.msra.mxu0 0
      %808 = vmatpush.bf16.msra.mxu0 0
      %809 = vmatpush.bf16.msra.mxu0 0
      %810 = vmatpush.bf16.msra.mxu0 %v579
      %811 = vmatpush.bf16.msra.mxu0 %v448
      %812 = vmatmul.bf16.gmra.mxu0 %v533
      %v813 = vpop.f32.mrf.mxu0
      %v814 = vadd.f32 %v241, %v813
      %v815 = vpop.f32.mrf.mxu0
      %816 = vdwg.mxu0
      %817 = vmatpush.bf16.msra.mxu0 0
      %818 = vmatpush.bf16.msra.mxu0 0
      %819 = vmatpush.bf16.msra.mxu0 0
      %820 = vmatpush.bf16.msra.mxu0 0
      %821 = vmatpush.bf16.msra.mxu0 0
      %822 = vmatpush.bf16.msra.mxu0 0
      %823 = vmatpush.bf16.msra.mxu0 %v582
      %824 = vmatpush.bf16.msra.mxu0 %v449
      %825 = vmatmul.bf16.gmra.mxu0 %v533
      %v826 = vpop.f32.mrf.mxu0
      %v827 = vadd.f32 %v241, %v826
      %v828 = vpop.f32.mrf.mxu0
      %829 = vdwg.mxu0
      %830 = vmatpush.bf16.msra.mxu0 0
      %831 = vmatpush.bf16.msra.mxu0 0
      %832 = vmatpush.bf16.msra.mxu0 0
      %833 = vmatpush.bf16.msra.mxu0 0
      %834 = vmatpush.bf16.msra.mxu0 0
      %835 = vmatpush.bf16.msra.mxu0 0
      %836 = vmatpush.bf16.msra.mxu0 %v585
      %837 = vmatpush.bf16.msra.mxu0 %v450
      %838 = vmatmul.bf16.gmra.mxu0 %v533
      %v839 = vpop.f32.mrf.mxu0
      %v840 = vadd.f32 %v241, %v839
      %v841 = vpop.f32.mrf.mxu0
      %842 = vdwg.mxu0
      %843 = vmatpush.bf16.msra.mxu0 0
      %844 = vmatpush.bf16.msra.mxu0 0
      %845 = vmatpush.bf16.msra.mxu0 0
      %846 = vmatpush.bf16.msra.mxu0 0
      %847 = vmatpush.bf16.msra.mxu0 0
      %848 = vmatpush.bf16.msra.mxu0 0
      %849 = vmatpush.bf16.msra.mxu0 %v588
      %850 = vmatpush.bf16.msra.mxu0 %v451
      %851 = vmatmul.bf16.gmra.mxu0 %v533
      %v852 = vpop.f32.mrf.mxu0
      %v853 = vadd.f32 %v241, %v852
      %v854 = vpop.f32.mrf.mxu0
      %855 = vdwg.mxu0
      %856 = vmatpush.bf16.msra.mxu0 0
      %857 = vmatpush.bf16.msra.mxu0 0
      %858 = vmatpush.bf16.msra.mxu0 0
      %859 = vmatpush.bf16.msra.mxu0 0
      %860 = vmatpush.bf16.msra.mxu0 0
      %861 = vmatpush.bf16.msra.mxu0 0
      %862 = vmatpush.bf16.msra.mxu0 %v591
      %863 = vmatpush.bf16.msra.mxu0 %v452
      %864 = vmatmul.bf16.gmra.mxu0 %v533
      %v865 = vpop.f32.mrf.mxu0
      %v866 = vadd.f32 %v241, %v865
      %v867 = vpop.f32.mrf.mxu0
      %868 = vdwg.mxu0
      %869 = vmatpush.bf16.msra.mxu0 0
      %870 = vmatpush.bf16.msra.mxu0 0
      %871 = vmatpush.bf16.msra.mxu0 0
      %872 = vmatpush.bf16.msra.mxu0 0
      %873 = vmatpush.bf16.msra.mxu0 0
      %874 = vmatpush.bf16.msra.mxu0 0
      %875 = vmatpush.bf16.msra.mxu0 %v594
      %876 = vmatpush.bf16.msra.mxu0 %v453
      %877 = vmatmul.bf16.gmra.mxu0 %v533
      %v878 = vpop.f32.mrf.mxu0
      %v879 = vadd.f32 %v241, %v878
      %v880 = vpop.f32.mrf.mxu0
      %881 = vdwg.mxu0
      %882 = vmatpush.bf16.msra.mxu0 0
      %883 = vmatpush.bf16.msra.mxu0 0
      %884 = vmatpush.bf16.msra.mxu0 0
      %885 = vmatpush.bf16.msra.mxu0 0
      %886 = vmatpush.bf16.msra.mxu0 0
      %887 = vmatpush.bf16.msra.mxu0 0
      %888 = vmatpush.bf16.msra.mxu0 %v597
      %889 = vmatpush.bf16.msra.mxu0 %v454
      %890 = vmatmul.bf16.gmra.mxu0 %v533
      %v891 = vpop.f32.mrf.mxu0
      %v892 = vadd.f32 %v241, %v891
      %v893 = vpop.f32.mrf.mxu0
      %894 = vdwg.mxu0
      %895 = vmatpush.bf16.msra.mxu0 0
      %896 = vmatpush.bf16.msra.mxu0 0
      %897 = vmatpush.bf16.msra.mxu0 0
      %898 = vmatpush.bf16.msra.mxu0 0
      %899 = vmatpush.bf16.msra.mxu0 0
      %900 = vmatpush.bf16.msra.mxu0 0
      %901 = vmatpush.bf16.msra.mxu0 %v600
      %902 = vmatpush.bf16.msra.mxu0 %v455
      %903 = vmatmul.bf16.gmra.mxu0 %v533
      %v904 = vpop.f32.mrf.mxu0
      %v905 = vadd.f32 %v241, %v904
      %v906 = vpop.f32.mrf.mxu0
      %907 = vdwg.mxu0
      %908 = vmatpush.bf16.msra.mxu0 0
      %909 = vmatpush.bf16.msra.mxu0 0
      %910 = vmatpush.bf16.msra.mxu0 0
      %911 = vmatpush.bf16.msra.mxu0 0
      %912 = vmatpush.bf16.msra.mxu0 0
      %913 = vmatpush.bf16.msra.mxu0 0
      %914 = vmatpush.bf16.msra.mxu0 %v603
      %915 = vmatpush.bf16.msra.mxu0 %v456
      %916 = vmatmul.bf16.gmra.mxu0 %v533
      %v917 = vpop.f32.mrf.mxu0
      %v918 = vadd.f32 %v241, %v917
      %v919 = vpop.f32.mrf.mxu0
      %920 = vdwg.mxu0
      %921 = vmatpush.bf16.msra.mxu0 0
      %922 = vmatpush.bf16.msra.mxu0 0
      %923 = vmatpush.bf16.msra.mxu0 0
      %924 = vmatpush.bf16.msra.mxu0 0
      %925 = vmatpush.bf16.msra.mxu0 0
      %926 = vmatpush.bf16.msra.mxu0 0
      %927 = vmatpush.bf16.msra.mxu0 %v606
      %928 = vmatpush.bf16.msra.mxu0 %v457
      %929 = vmatmul.bf16.gmra.mxu0 %v533
      %v930 = vpop.f32.mrf.mxu0
      %v931 = vadd.f32 %v241, %v930
      %v932 = vpop.f32.mrf.mxu0
      %933 = vdwg.mxu0
      %934 = vmatpush.bf16.msra.mxu0 0
      %935 = vmatpush.bf16.msra.mxu0 0
      %936 = vmatpush.bf16.msra.mxu0 0
      %937 = vmatpush.bf16.msra.mxu0 0
      %938 = vmatpush.bf16.msra.mxu0 0
      %939 = vmatpush.bf16.msra.mxu0 0
      %940 = vmatpush.bf16.msra.mxu0 %v609
      %941 = vmatpush.bf16.msra.mxu0 %v458
      %942 = vmatmul.bf16.gmra.mxu0 %v533
      %v943 = vpop.f32.mrf.mxu0
      %v944 = vadd.f32 %v241, %v943
      %v945 = vpop.f32.mrf.mxu0
      %946 = vdwg.mxu0
      %947 = vmatpush.bf16.msra.mxu0 0
      %948 = vmatpush.bf16.msra.mxu0 0
      %949 = vmatpush.bf16.msra.mxu0 0
      %950 = vmatpush.bf16.msra.mxu0 0
      %951 = vmatpush.bf16.msra.mxu0 0
      %952 = vmatpush.bf16.msra.mxu0 0
      %953 = vmatpush.bf16.msra.mxu0 %v612
      %954 = vmatpush.bf16.msra.mxu0 %v459
      %955 = vmatmul.bf16.gmra.mxu0 %v533
      %v956 = vpop.f32.mrf.mxu0
      %v957 = vadd.f32 %v241, %v956
      %v958 = vpop.f32.mrf.mxu0
      %959 = vdwg.mxu0
      %960 = vmatpush.bf16.msra.mxu0 0
      %961 = vmatpush.bf16.msra.mxu0 0
      %962 = vmatpush.bf16.msra.mxu0 0
      %963 = vmatpush.bf16.msra.mxu0 0
      %964 = vmatpush.bf16.msra.mxu0 0
      %965 = vmatpush.bf16.msra.mxu0 0
      %966 = vmatpush.bf16.msra.mxu0 %v615
      %967 = vmatpush.bf16.msra.mxu0 %v460
      %968 = vmatmul.bf16.gmra.mxu0 %v533
      %v969 = vpop.f32.mrf.mxu0
      %v970 = vadd.f32 %v241, %v969
      %v971 = vpop.f32.mrf.mxu0
      %972 = vdwg.mxu0
      %973 = vmatpush.bf16.msra.mxu0 0
      %974 = vmatpush.bf16.msra.mxu0 0
      %975 = vmatpush.bf16.msra.mxu0 0
      %976 = vmatpush.bf16.msra.mxu0 0
      %977 = vmatpush.bf16.msra.mxu0 0
      %978 = vmatpush.bf16.msra.mxu0 0
      %979 = vmatpush.bf16.msra.mxu0 %v618
      %980 = vmatpush.bf16.msra.mxu0 %v461
      %981 = vmatmul.bf16.gmra.mxu0 %v533
      %v982 = vpop.f32.mrf.mxu0
      %v983 = vadd.f32 %v241, %v982
      %v984 = vpop.f32.mrf.mxu0
      %985 = vdwg.mxu0
      %986 = vmatpush.bf16.msra.mxu0 0
      %987 = vmatpush.bf16.msra.mxu0 0
      %988 = vmatpush.bf16.msra.mxu0 0
      %989 = vmatpush.bf16.msra.mxu0 0
      %990 = vmatpush.bf16.msra.mxu0 0
      %991 = vmatpush.bf16.msra.mxu0 0
      %992 = vmatpush.bf16.msra.mxu0 %v621
      %993 = vmatpush.bf16.msra.mxu0 %v462
      %994 = vmatmul.bf16.gmra.mxu0 %v533
      %v995 = vpop.f32.mrf.mxu0
      %v996 = vadd.f32 %v241, %v995
      %v997 = vpop.f32.mrf.mxu0
      %998 = vdwg.mxu0
      %999 = vmatpush.bf16.msra.mxu0 0
      %1000 = vmatpush.bf16.msra.mxu0 0
      %1001 = vmatpush.bf16.msra.mxu0 0
      %1002 = vmatpush.bf16.msra.mxu0 0
      %1003 = vmatpush.bf16.msra.mxu0 0
      %1004 = vmatpush.bf16.msra.mxu0 0
      %1005 = vmatpush.bf16.msra.mxu0 %v624
      %1006 = vmatpush.bf16.msra.mxu0 %v463
      %1007 = vmatmul.bf16.gmra.mxu0 %v533
      %v1008 = vpop.f32.mrf.mxu0
      %v1009 = vadd.f32 %v241, %v1008
      %v1010 = vpop.f32.mrf.mxu0
      %1011 = vdwg.mxu0
      %1012 = vmatpush.bf16.msra.mxu0 0
      %1013 = vmatpush.bf16.msra.mxu0 0
      %1014 = vmatpush.bf16.msra.mxu0 0
      %1015 = vmatpush.bf16.msra.mxu0 0
      %1016 = vmatpush.bf16.msra.mxu0 0
      %1017 = vmatpush.bf16.msra.mxu0 0
      %1018 = vmatpush.bf16.msra.mxu0 %v627
      %1019 = vmatpush.bf16.msra.mxu0 %v464
      %1020 = vmatmul.bf16.gmra.mxu0 %v533
      %v1021 = vpop.f32.mrf.mxu0
      %v1022 = vadd.f32 %v241, %v1021
      %v1023 = vpop.f32.mrf.mxu0
      %1024 = vdwg.mxu0
      %1025 = vmatpush.bf16.msra.mxu0 0
      %1026 = vmatpush.bf16.msra.mxu0 0
      %1027 = vmatpush.bf16.msra.mxu0 0
      %1028 = vmatpush.bf16.msra.mxu0 0
      %1029 = vmatpush.bf16.msra.mxu0 0
      %1030 = vmatpush.bf16.msra.mxu0 0
      %1031 = vmatpush.bf16.msra.mxu0 %v630
      %1032 = vmatpush.bf16.msra.mxu0 %v465
      %1033 = vmatmul.bf16.gmra.mxu0 %v533
      %v1034 = vpop.f32.mrf.mxu0
      %v1035 = vadd.f32 %v241, %v1034
      %v1036 = vpop.f32.mrf.mxu0
      %1037 = vdwg.mxu0
      %1038 = vmatpush.bf16.msra.mxu0 0
      %1039 = vmatpush.bf16.msra.mxu0 0
      %1040 = vmatpush.bf16.msra.mxu0 0
      %1041 = vmatpush.bf16.msra.mxu0 0
      %1042 = vmatpush.bf16.msra.mxu0 0
      %1043 = vmatpush.bf16.msra.mxu0 0
      %1044 = vmatpush.bf16.msra.mxu0 %v633
      %1045 = vmatpush.bf16.msra.mxu0 %v466
      %1046 = vmatmul.bf16.gmra.mxu0 %v533
      %v1047 = vpop.f32.mrf.mxu0
      %v1048 = vadd.f32 %v241, %v1047
      %v1049 = vpop.f32.mrf.mxu0
      %1050 = vdwg.mxu0
      %v1051 = vmax.f32 %v645, 0.0
      %v1052 = vmax.f32 %v658, 0.0
      %v1053 = vmax.f32 %v671, 0.0
      %v1054 = vmax.f32 %v684, 0.0
      %v1055 = vmax.f32 %v697, 0.0
      %v1056 = vmax.f32 %v710, 0.0
      %v1057 = vmax.f32 %v723, 0.0
      %v1058 = vmax.f32 %v736, 0.0
      %v1059 = vmax.f32 %v749, 0.0
      %v1060 = vmax.f32 %v762, 0.0
      %v1061 = vmax.f32 %v775, 0.0
      %v1062 = vmax.f32 %v788, 0.0
      %v1063 = vmax.f32 %v801, 0.0
      %v1064 = vmax.f32 %v814, 0.0
      %v1065 = vmax.f32 %v827, 0.0
      %v1066 = vmax.f32 %v840, 0.0
      %v1067 = vmax.f32 %v853, 0.0
      %v1068 = vmax.f32 %v866, 0.0
      %v1069 = vmax.f32 %v879, 0.0
      %v1070 = vmax.f32 %v892, 0.0
      %v1071 = vmax.f32 %v905, 0.0
      %v1072 = vmax.f32 %v918, 0.0
      %v1073 = vmax.f32 %v931, 0.0
      %v1074 = vmax.f32 %v944, 0.0
      %v1075 = vmax.f32 %v957, 0.0
      %v1076 = vmax.f32 %v970, 0.0
      %v1077 = vmax.f32 %v983, 0.0
      %v1078 = vmax.f32 %v996, 0.0
      %v1079 = vmax.f32 %v1009, 0.0
      %v1080 = vmax.f32 %v1022, 0.0
      %v1081 = vmax.f32 %v1035, 0.0
      %v1082 = vmax.f32 %v1048, 0.0
      %v1083 = vpack.c.bf16 %v1052, %v1051
      %v1084 = vpack.c.bf16 %v1054, %v1053
      %v1085 = vpack.c.bf16 %v1056, %v1055
      %v1086 = vpack.c.bf16 %v1058, %v1057
      %v1087 = vpack.c.bf16 %v1060, %v1059
      %v1088 = vpack.c.bf16 %v1062, %v1061
      %v1089 = vpack.c.bf16 %v1064, %v1063
      %v1090 = vpack.c.bf16 %v1066, %v1065
      %v1091 = vpack.c.bf16 %v1068, %v1067
      %v1092 = vpack.c.bf16 %v1070, %v1069
      %v1093 = vpack.c.bf16 %v1072, %v1071
      %v1094 = vpack.c.bf16 %v1074, %v1073
      %v1095 = vpack.c.bf16 %v1076, %v1075
      %v1096 = vpack.c.bf16 %v1078, %v1077
      %v1097 = vpack.c.bf16 %v1080, %v1079
      %v1098 = vpack.c.bf16 %v1082, %v1081
      %v1115 = vrot.slane %v1083, 2
      %v1116 = vrot.slane %v1084, 4
      %v1117 = vrot.slane %v1084, 6
      %v1118 = vrot.slane %v1085, 2
      %v1119 = vrot.slane %v1086, 4
      %v1120 = vrot.slane %v1086, 6
      %v1121 = vrot.slane %v1087, 2
      %v1122 = vrot.slane %v1088, 4
      %v1123 = vrot.slane %v1088, 6
      %v1124 = vrot.slane %v1089, 2
      %v1125 = vrot.slane %v1090, 4
      %v1126 = vrot.slane %v1090, 6
      %v1127 = vrot.slane %v1091, 2
      %v1128 = vrot.slane %v1092, 4
      %v1129 = vrot.slane %v1092, 6
      %v1130 = vrot.slane %v1093, 2
      %v1131 = vrot.slane %v1094, 4
      %v1132 = vrot.slane %v1094, 6
      %v1133 = vrot.slane %v1095, 2
      %v1134 = vrot.slane %v1096, 4
      %v1135 = vrot.slane %v1096, 6
      %v1136 = vrot.slane %v1097, 2
      %v1137 = vrot.slane %v1098, 4
      %v1138 = vrot.slane %v1098, 6
      %vm1139 = vcmask 1041408
      %v1142 = vsel %vm1139, %v1083, %v1115
      %vm1143 = vcmask 1045508
      %v1146 = vsel %vm1143, %v1116, %v1117
      %vm1147 = vcmask 1043456
      %v1148 = vsel %vm1147, %v1142, %v1146
      %v1151 = vsel %vm1139, %v1085, %v1118
      %v1154 = vsel %vm1143, %v1119, %v1120
      %v1155 = vsel %vm1147, %v1151, %v1154
      %v1158 = vsel %vm1139, %v1087, %v1121
      %v1161 = vsel %vm1143, %v1122, %v1123
      %v1162 = vsel %vm1147, %v1158, %v1161
      %v1165 = vsel %vm1139, %v1089, %v1124
      %v1168 = vsel %vm1143, %v1125, %v1126
      %v1169 = vsel %vm1147, %v1165, %v1168
      %v1172 = vsel %vm1139, %v1091, %v1127
      %v1175 = vsel %vm1143, %v1128, %v1129
      %v1176 = vsel %vm1147, %v1172, %v1175
      %v1179 = vsel %vm1139, %v1093, %v1130
      %v1182 = vsel %vm1143, %v1131, %v1132
      %v1183 = vsel %vm1147, %v1179, %v1182
      %v1186 = vsel %vm1139, %v1095, %v1133
      %v1189 = vsel %vm1143, %v1134, %v1135
      %v1190 = vsel %vm1147, %v1186, %v1189
      %v1193 = vsel %vm1139, %v1097, %v1136
      %v1196 = vsel %vm1143, %v1137, %v1138
      %v1197 = vsel %vm1147, %v1193, %v1196
      %1206 = vst [vmem:[%s170] sm:$0xff] %v1148
      %1207 = vst [vmem:[%s170 + $0x8] sm:$0xff] %v1155
      %1208 = vst [vmem:[%s170 + $0x10] sm:$0xff] %v1162
      %1209 = vst [vmem:[%s170 + $0x18] sm:$0xff] %v1169
      %1210 = vst [vmem:[%s170 + $0x20] sm:$0xff] %v1176
      %1211 = vst [vmem:[%s170 + $0x28] sm:$0xff] %v1183
      %1212 = vst [vmem:[%s170 + $0x30] sm:$0xff] %v1190
      %1213 = vst [vmem:[%s170 + $0x38] sm:$0xff] %v1197
      %p1214 = scmp.lt.s32.totalorder %s14, 1
      %s1215 = scalar_select %p1214, %s14, 1
      %s1216 = smul.addr %s1215, 32
      %s1217 = smul.addr %s1216, 2
      %s1218 = scalar_lea.vmem %s3, %s1217
      // Predicated region
      $region33: #{forward.27} parent=31 // pred_check
        %p1219 = pneg %p100
      $region34: #{forward.27} parent=31 // pred_check_branch
        %1221 = sbr.rel (%p1219) target = $region36
      $region35: #{forward.27} parent=31 // pred_region
        _
      $region36: #{forward.27} parent=31 // pred_fallthru
        _
    $region32: #{forward.27} parent=5 // pred_fallthru
      _
    %p1222 = scmp.le.s32.totalorder 2, %s9
    // Predicated region
    $region37: #{forward.27} parent=5 // pred_check
      %p1223 = pneg %p1222
    $region38: #{forward.27} parent=5 // pred_check_branch
      %1225 = sbr.rel (%p1223) target = $region40
    $region39: #{forward.27} parent=5 // pred_region
      %s1226 = ssub.s32 %s9, 2
      // Predicated region
      $region41: #{forward.27} parent=39 // pred_check
        %p1227 = pneg %p106
      $region42: #{forward.27} parent=39 // pred_check_branch
        %1229 = sbr.rel (%p1227) target = $region44
      $region43: #{forward.27} parent=39 // pred_region
        %p1230 = scmp.lt.s32.totalorder %s15, 1
        %s1231 = scalar_select %p1230, %s15, 1
        %s1232 = smul.addr %s1231, 32
        %s1233 = smul.addr %s1232, 2
        %s1234 = scalar_lea.vmem %s3, %s1233
      $region44: #{forward.27} parent=39 // pred_fallthru
        _
    $region40: #{forward.27} parent=5 // pred_fallthru
      _
  $region6: #{forward.27} parent=0 // loop_footer
    %s13 = sadd.s32 1, %s9
  $region7: #{forward.27} parent=0 // loop_footer_branch
    %8 = sbr.rel target = $region3
  $region8: #{forward.27} parent=0 // loop_exit
    _

// kernel: forward.28
$region0: #{forward.28}
  #allocation0 [shape = 'u32[]', space=smem, size = 0x4, offset = 0x4, fixed_abs, tag = 'smem constant byte address 0x4 - core index']
  #allocation1 [shape = 'u32[72,128]{1,0:T(1,128)}', space=vmem, size = 0x9000, scoped, tag = 'internal scratch']
  %s0 = inlined_call_operand.vmem [shape: bf16[2,4,1024], index: 0, kind: input, shape index: {}]
  %s1 = inlined_call_operand.vmem [shape: bf16[2,4,1024], index: 1, kind: input, shape index: {}]
  %s2 = inlined_call_operand.vmem [shape: bf16[2,4,1024], index: 2, kind: input, shape index: {}]
  %s3 = inlined_call_operand.vmem [shape: bf16[2,4,1024], index: 3, kind: input, shape index: {}]
  %s4 = inlined_call_operand.vmem [shape: bf16[2,4,1024], index: 4, kind: output, shape index: {}]
  %s5 = sld [smem:[#allocation0]]
  $region49: #{forward.28} parent=0
    _
  %s7 = ssub.s32 1, %s5
  %s8 = scalar_select 0, %s7, %s5
  loop: start=0, step=1, limit=4
  $region2: #{forward.28} parent=0 // loop_pre_header
    _
  $region3: #{forward.28} parent=0 // loop_header
    %s10 = sphi 0, %s14
    %p11 = scmp.ge.s32.totalorder %s10, 4
    %s20 = sphi 0, %s22
    %s23 = sphi 0, %s20
    %s24 = sphi 0, %s23
    %s40 = sphi 0, %s24
    %s46 = sphi 0, %s48
    %s49 = sphi 0, %s46
    %s50 = sphi 0, %s49
    %s66 = sphi 0, %s50
    %s72 = sphi 0, %s74
    %s75 = sphi 0, %s72
    %s76 = sphi 0, %s75
    %s92 = sphi 0, %s76
    %s98 = sphi 0, %s100
    %s101 = sphi 0, %s98
    %s102 = sphi 0, %s101
    %s118 = sphi 0, %s102
    %s124 = sphi 0, %s126
    %s127 = sphi 0, %s124
    %s128 = sphi 0, %s127
    %s144 = sphi 0, %s128
  $region4: #{forward.28} parent=0 // loop_header_branch
    %13 = sbr.rel (%p11) target = $region8
  $region5: #{forward.28} parent=0 // loop_body
    %s15 = ssub.s32 %s10, 1
    %s16 = ssub.s32 %s10, 2
    %s17 = sadd.s32 %s10, 1
    %s18 = ssub.s32 %s10, %s17
    %p19 = scmp.eq.s32.totalorder %s18, 0
    %s21 = sadd.s32 %s20, 1
    %s22 = scalar_select %p19, %s20, %s21
    %p25 = pneg %p19
    %p26 = scmp.eq.s32.totalorder %s10, 1
    %p27 = por %p25, %p26
    %p28 = scmp.ne.s32.totalorder %s20, %s23
    %p29 = scmp.eq.s32.totalorder %s10, 0
    %p30 = por %p28, %p29
    %p31 = scmp.ne.s32.totalorder %s20, %s23
    %p32 = scmp.eq.s32.totalorder %s15, 1
    %p33 = por %p31, %p32
    %p34 = scmp.ne.s32.totalorder %s23, %s24
    %p35 = scmp.eq.s32.totalorder %s15, 0
    %p36 = por %p34, %p35
    %p37 = scmp.ne.s32.totalorder %s23, %s24
    %p38 = scmp.eq.s32.totalorder %s16, 1
    %p39 = por %p37, %p38
    %p41 = scmp.ne.s32.totalorder %s24, %s40
    %p42 = scmp.eq.s32.totalorder %s16, 0
    %p43 = por %p41, %p42
    %s44 = ssub.s32 %s10, %s17
    %p45 = scmp.eq.s32.totalorder %s44, 0
    %s47 = sadd.s32 %s46, 1
    %s48 = scalar_select %p45, %s46, %s47
    %p51 = pneg %p45
    %p52 = scmp.eq.s32.totalorder %s10, 1
    %p53 = por %p51, %p52
    %p54 = scmp.ne.s32.totalorder %s46, %s49
    %p55 = scmp.eq.s32.totalorder %s10, 0
    %p56 = por %p54, %p55
    %p57 = scmp.ne.s32.totalorder %s46, %s49
    %p58 = scmp.eq.s32.totalorder %s15, 1
    %p59 = por %p57, %p58
    %p60 = scmp.ne.s32.totalorder %s49, %s50
    %p61 = scmp.eq.s32.totalorder %s15, 0
    %p62 = por %p60, %p61
    %p63 = scmp.ne.s32.totalorder %s49, %s50
    %p64 = scmp.eq.s32.totalorder %s16, 1
    %p65 = por %p63, %p64
    %p67 = scmp.ne.s32.totalorder %s50, %s66
    %p68 = scmp.eq.s32.totalorder %s16, 0
    %p69 = por %p67, %p68
    %s70 = ssub.s32 %s10, %s17
    %p71 = scmp.eq.s32.totalorder %s70, 0
    %s73 = sadd.s32 %s72, 1
    %s74 = scalar_select %p71, %s72, %s73
    %p77 = pneg %p71
    %p78 = scmp.eq.s32.totalorder %s10, 1
    %p79 = por %p77, %p78
    %p80 = scmp.ne.s32.totalorder %s72, %s75
    %p81 = scmp.eq.s32.totalorder %s10, 0
    %p82 = por %p80, %p81
    %p83 = scmp.ne.s32.totalorder %s72, %s75
    %p84 = scmp.eq.s32.totalorder %s15, 1
    %p85 = por %p83, %p84
    %p86 = scmp.ne.s32.totalorder %s75, %s76
    %p87 = scmp.eq.s32.totalorder %s15, 0
    %p88 = por %p86, %p87
    %p89 = scmp.ne.s32.totalorder %s75, %s76
    %p90 = scmp.eq.s32.totalorder %s16, 1
    %p91 = por %p89, %p90
    %p93 = scmp.ne.s32.totalorder %s76, %s92
    %p94 = scmp.eq.s32.totalorder %s16, 0
    %p95 = por %p93, %p94
    %s96 = ssub.s32 %s10, %s17
    %p97 = scmp.eq.s32.totalorder %s96, 0
    %s99 = sadd.s32 %s98, 1
    %s100 = scalar_select %p97, %s98, %s99
    %p103 = pneg %p97
    %p104 = scmp.eq.s32.totalorder %s10, 1
    %p105 = por %p103, %p104
    %p106 = scmp.ne.s32.totalorder %s98, %s101
    %p107 = scmp.eq.s32.totalorder %s10, 0
    %p108 = por %p106, %p107
    %p109 = scmp.ne.s32.totalorder %s98, %s101
    %p110 = scmp.eq.s32.totalorder %s15, 1
    %p111 = por %p109, %p110
    %p112 = scmp.ne.s32.totalorder %s101, %s102
    %p113 = scmp.eq.s32.totalorder %s15, 0
    %p114 = por %p112, %p113
    %p115 = scmp.ne.s32.totalorder %s101, %s102
    %p116 = scmp.eq.s32.totalorder %s16, 1
    %p117 = por %p115, %p116
    %p119 = scmp.ne.s32.totalorder %s102, %s118
    %p120 = scmp.eq.s32.totalorder %s16, 0
    %p121 = por %p119, %p120
    %s122 = ssub.s32 %s10, %s17
    %p123 = scmp.eq.s32.totalorder %s122, 0
    %s125 = sadd.s32 %s124, 1
    %s126 = scalar_select %p123, %s124, %s125
    %p129 = pneg %p123
    %p130 = scmp.eq.s32.totalorder %s10, 1
    %p131 = por %p129, %p130
    %p132 = scmp.ne.s32.totalorder %s124, %s127
    %p133 = scmp.eq.s32.totalorder %s10, 0
    %p134 = por %p132, %p133
    %p135 = scmp.ne.s32.totalorder %s124, %s127
    %p136 = scmp.eq.s32.totalorder %s15, 1
    %p137 = por %p135, %p136
    %p138 = scmp.ne.s32.totalorder %s127, %s128
    %p139 = scmp.eq.s32.totalorder %s15, 0
    %p140 = por %p138, %p139
    %p141 = scmp.ne.s32.totalorder %s127, %s128
    %p142 = scmp.eq.s32.totalorder %s16, 1
    %p143 = por %p141, %p142
    %p145 = scmp.ne.s32.totalorder %s128, %s144
    %p146 = scmp.eq.s32.totalorder %s16, 0
    %p147 = por %p145, %p146
    %p148 = scmp.le.s32.totalorder 1, %s10
    %p149 = scmp.lt.s32.totalorder %s10, 3
    %p150 = pnand %p148, %p149
    %p151 = pneg %p150
    // Predicated region
    $region9: #{forward.28} parent=5 // pred_check
      _
    $region10: #{forward.28} parent=5 // pred_check_branch
      %153 = sbr.rel (%p150) target = $region12
    $region11: #{forward.28} parent=5 // pred_region
      %s154 = ssub.s32 %s10, 1
    $region12: #{forward.28} parent=5 // pred_fallthru
      _
    %p155 = scmp.lt.s32.totalorder %s10, 2
    // Predicated region
    $region13: #{forward.28} parent=5 // pred_check
      %p156 = pneg %p155
    $region14: #{forward.28} parent=5 // pred_check_branch
      %158 = sbr.rel (%p156) target = $region16
    $region15: #{forward.28} parent=5 // pred_region
      // Predicated region
      $region17: #{forward.28} parent=15 // pred_check
        %p159 = pneg %p30
      $region18: #{forward.28} parent=15 // pred_check_branch
        %161 = sbr.rel (%p159) target = $region20
      $region19: #{forward.28} parent=15 // pred_region
        %p162 = scmp.lt.s32.totalorder %s10, 1
        %s163 = scalar_select %p162, %s10, 1
        %s164 = smul.addr %s163, 8
        %s165 = smul.addr %s164, 2
        %s166 = scalar_lea.vmem %s0, %s165
      $region20: #{forward.28} parent=15 // pred_fallthru
        _
      // Predicated region
      $region21: #{forward.28} parent=15 // pred_check
        %p167 = pneg %p56
      $region22: #{forward.28} parent=15 // pred_check_branch
        %169 = sbr.rel (%p167) target = $region24
      $region23: #{forward.28} parent=15 // pred_region
        %p170 = scmp.lt.s32.totalorder %s10, 1
        %s171 = scalar_select %p170, %s10, 1
        %s172 = smul.addr %s171, 8
        %s173 = smul.addr %s172, 2
        %s174 = scalar_lea.vmem %s1, %s173
      $region24: #{forward.28} parent=15 // pred_fallthru
        _
      // Predicated region
      $region25: #{forward.28} parent=15 // pred_check
        %p175 = pneg %p82
      $region26: #{forward.28} parent=15 // pred_check_branch
        %177 = sbr.rel (%p175) target = $region28
      $region27: #{forward.28} parent=15 // pred_region
        %p178 = scmp.lt.s32.totalorder %s10, 1
        %s179 = scalar_select %p178, %s10, 1
        %s180 = smul.addr %s179, 8
        %s181 = smul.addr %s180, 2
        %s182 = scalar_lea.vmem %s2, %s181
      $region28: #{forward.28} parent=15 // pred_fallthru
        _
      // Predicated region
      $region29: #{forward.28} parent=15 // pred_check
        %p183 = pneg %p108
      $region30: #{forward.28} parent=15 // pred_check_branch
        %185 = sbr.rel (%p183) target = $region32
      $region31: #{forward.28} parent=15 // pred_region
        %p186 = scmp.lt.s32.totalorder %s10, 1
        %s187 = scalar_select %p186, %s10, 1
        %s188 = smul.addr %s187, 8
        %s189 = smul.addr %s188, 2
        %s190 = scalar_lea.vmem %s3, %s189
      $region32: #{forward.28} parent=15 // pred_fallthru
        _
    $region16: #{forward.28} parent=5 // pred_fallthru
      _
    %p191 = scmp.le.s32.totalorder 1, %s10
    %p192 = scmp.lt.s32.totalorder %s10, 3
    %p193 = pnand %p191, %p192
    %p194 = pneg %p193
    // Predicated region
    $region33: #{forward.28} parent=5 // pred_check
      _
    $region34: #{forward.28} parent=5 // pred_check_branch
      %196 = sbr.rel (%p193) target = $region36
    $region35: #{forward.28} parent=5 // pred_region
      %s197 = ssub.s32 %s10, 1
      %p198 = scmp.lt.s32.totalorder %s15, 1
      %s199 = scalar_select %p198, %s15, 1
      %s200 = smul.addr %s199, 8
      %s201 = smul.addr %s200, 2
      %s202 = scalar_lea.vmem %s0, %s201
      %p203 = pneg %p36
      %p204 = pneg %p33
      %p205 = scmp.lt.s32.totalorder %s15, 1
      %s206 = scalar_select %p205, %s15, 1
      %s207 = smul.addr %s206, 8
      %s208 = smul.addr %s207, 2
      %s209 = scalar_lea.vmem %s1, %s208
      %p210 = pneg %p62
      %p211 = pneg %p59
      %p212 = scmp.lt.s32.totalorder %s15, 1
      %s213 = scalar_select %p212, %s15, 1
      %s214 = smul.addr %s213, 8
      %s215 = smul.addr %s214, 2
      %s216 = scalar_lea.vmem %s2, %s215
      %p217 = pneg %p88
      %p218 = pneg %p85
      %p219 = scmp.lt.s32.totalorder %s15, 1
      %s220 = scalar_select %p219, %s15, 1
      %s221 = smul.addr %s220, 8
      %s222 = smul.addr %s221, 2
      %s223 = scalar_lea.vmem %s3, %s222
      %p224 = pneg %p114
      %p225 = pneg %p111
      %p226 = pneg %p140
      %p227 = pneg %p137
      %p228 = scmp.lt.s32.totalorder %s15, 1
      %s229 = scalar_select %p228, %s15, 1
      %s230 = smul.addr %s229, 8
      %s231 = smul.addr %s230, 2
      %s232 = scalar_lea.vmem %s4, %s231
      %p233 = scmp.lt.s32.totalorder %s15, 1
      %s234 = scalar_select %p233, %s15, 1
      %s235 = smul.addr %s234, 8
      %s236 = smul.addr %s235, 2
      %s237 = scalar_lea.vmem %s0, %s236
      %p238 = scmp.lt.s32.totalorder %s15, 1
      %s239 = scalar_select %p238, %s15, 1
      %s240 = smul.addr %s239, 8
      %s241 = smul.addr %s240, 2
      %s242 = scalar_lea.vmem %s1, %s241
      %p243 = scmp.lt.s32.totalorder %s15, 1
      %s244 = scalar_select %p243, %s15, 1
      %s245 = smul.addr %s244, 8
      %s246 = smul.addr %s245, 2
      %s247 = scalar_lea.vmem %s2, %s246
      %p248 = scmp.lt.s32.totalorder %s15, 1
      %s249 = scalar_select %p248, %s15, 1
      %s250 = smul.addr %s249, 8
      %s251 = smul.addr %s250, 2
      %s252 = scalar_lea.vmem %s3, %s251
      %p253 = scmp.lt.s32.totalorder %s15, 1
      %s254 = scalar_select %p253, %s15, 1
      %s255 = smul.addr %s254, 8
      %s256 = smul.addr %s255, 2
      %s257 = scalar_lea.vmem %s4, %s256
      %v258 = vld [vmem:[%s237] sm:$0xff]
      %v259 = vld [vmem:[%s237 + $0x8] sm:$0xff]
      %v260 = vld [vmem:[%s242] sm:$0xff]
      %v261 = vld [vmem:[%s242 + $0x8] sm:$0xff]
      %v262 = vunpack.c.l.bf16 %v258
      %v263 = vunpack.c.h.bf16 %v258
      %v264 = vunpack.c.l.bf16 %v259
      %v265 = vunpack.c.h.bf16 %v259
      %v266 = vunpack.c.l.bf16 %v260
      %v267 = vunpack.c.h.bf16 %v260
      %v268 = vunpack.c.l.bf16 %v261
      %v269 = vunpack.c.h.bf16 %v261
      %v270 = vmax.f32 %v262, %v266
      %v271 = vmax.f32 %v263, %v267
      %v272 = vmax.f32 %v264, %v268
      %v273 = vmax.f32 %v265, %v269
      %278 = vst [vmem:[#allocation1] ss:$2 sm:$0xff] %v270
      %s279 = scalar_lea.vmem [#allocation1], 16
      %280 = vst [vmem:[%s279] ss:$2 sm:$0xff] %v271
      %s281 = scalar_lea.vmem [#allocation1], 32
      %282 = vst [vmem:[%s281] ss:$2 sm:$0xff] %v272
      %s283 = scalar_lea.vmem [#allocation1], 48
      %284 = vst [vmem:[%s283] ss:$2 sm:$0xff] %v273
      %v285 = vld.sshfl [vmem:[#allocation1] sm:$0xff pattern:$0x75316420]
      %v286 = vld.sshfl [vmem:[#allocation1 + $0x8] sm:$0xff pattern:$0x75316420]
      %v287 = vld.sshfl [vmem:[#allocation1 + $0x10] sm:$0xff pattern:$0x75316420]
      %v288 = vld.sshfl [vmem:[#allocation1 + $0x18] sm:$0xff pattern:$0x75316420]
      %v289 = vld.sshfl [vmem:[#allocation1 + $0x20] sm:$0xff pattern:$0x75316420]
      %v290 = vld.sshfl [vmem:[#allocation1 + $0x28] sm:$0xff pattern:$0x75316420]
      %v291 = vld.sshfl [vmem:[#allocation1 + $0x30] sm:$0xff pattern:$0x75316420]
      %v292 = vld.sshfl [vmem:[#allocation1 + $0x38] sm:$0xff pattern:$0x75316420]
      %v301 = vpack.c.bf16 %v286, %v285
      %v302 = vpack.c.bf16 %v288, %v287
      %v303 = vpack.c.bf16 %v290, %v289
      %v304 = vpack.c.bf16 %v292, %v291
      %v305 = vld [vmem:[%s247] sm:$0xff]
      %v306 = vld [vmem:[%s247 + $0x8] sm:$0xff]
      %v307 = vld [vmem:[%s252] sm:$0xff]
      %v308 = vld [vmem:[%s252 + $0x8] sm:$0xff]
      %v309 = vunpack.c.l.bf16 %v305
      %v310 = vunpack.c.h.bf16 %v305
      %v311 = vunpack.c.l.bf16 %v306
      %v312 = vunpack.c.h.bf16 %v306
      %v313 = vunpack.c.l.bf16 %v307
      %v314 = vunpack.c.h.bf16 %v307
      %v315 = vunpack.c.l.bf16 %v308
      %v316 = vunpack.c.h.bf16 %v308
      %v317 = vmax.f32 %v309, %v313
      %v318 = vmax.f32 %v310, %v314
      %v319 = vmax.f32 %v311, %v315
      %v320 = vmax.f32 %v312, %v316
      %325 = vst [vmem:[#allocation1] ss:$2 sm:$0xff] %v317
      %s326 = scalar_lea.vmem [#allocation1], 16
      %327 = vst [vmem:[%s326] ss:$2 sm:$0xff] %v318
      %s328 = scalar_lea.vmem [#allocation1], 32
      %329 = vst [vmem:[%s328] ss:$2 sm:$0xff] %v319
      %s330 = scalar_lea.vmem [#allocation1], 48
      %331 = vst [vmem:[%s330] ss:$2 sm:$0xff] %v320
      %v332 = vld.sshfl [vmem:[#allocation1] sm:$0xff pattern:$0x75316420]
      %v333 = vld.sshfl [vmem:[#allocation1 + $0x8] sm:$0xff pattern:$0x75316420]
      %v334 = vld.sshfl [vmem:[#allocation1 + $0x10] sm:$0xff pattern:$0x75316420]
      %v335 = vld.sshfl [vmem:[#allocation1 + $0x18] sm:$0xff pattern:$0x75316420]
      %v336 = vld.sshfl [vmem:[#allocation1 + $0x20] sm:$0xff pattern:$0x75316420]
      %v337 = vld.sshfl [vmem:[#allocation1 + $0x28] sm:$0xff pattern:$0x75316420]
      %v338 = vld.sshfl [vmem:[#allocation1 + $0x30] sm:$0xff pattern:$0x75316420]
      %v339 = vld.sshfl [vmem:[#allocation1 + $0x38] sm:$0xff pattern:$0x75316420]
      %v348 = vpack.c.bf16 %v333, %v332
      %v349 = vpack.c.bf16 %v335, %v334
      %v350 = vpack.c.bf16 %v337, %v336
      %v351 = vpack.c.bf16 %v339, %v338
      %v352 = vunpack.c.l.bf16 %v301
      %v353 = vunpack.c.h.bf16 %v301
      %v354 = vunpack.c.l.bf16 %v302
      %v355 = vunpack.c.h.bf16 %v302
      %v356 = vunpack.c.l.bf16 %v303
      %v357 = vunpack.c.h.bf16 %v303
      %v358 = vunpack.c.l.bf16 %v304
      %v359 = vunpack.c.h.bf16 %v304
      %v360 = vunpack.c.l.bf16 %v348
      %v361 = vunpack.c.h.bf16 %v348
      %v362 = vunpack.c.l.bf16 %v349
      %v363 = vunpack.c.h.bf16 %v349
      %v364 = vunpack.c.l.bf16 %v350
      %v365 = vunpack.c.h.bf16 %v350
      %v366 = vunpack.c.l.bf16 %v351
      %v367 = vunpack.c.h.bf16 %v351
      %v368 = vmax.f32 %v352, %v360
      %v369 = vmax.f32 %v353, %v361
      %v370 = vmax.f32 %v354, %v362
      %v371 = vmax.f32 %v355, %v363
      %v372 = vmax.f32 %v356, %v364
      %v373 = vmax.f32 %v357, %v365
      %v374 = vmax.f32 %v358, %v366
      %v375 = vmax.f32 %v359, %v367
      %v376 = vpack.c.bf16 %v369, %v368
      %v377 = vpack.c.bf16 %v371, %v370
      %v378 = vpack.c.bf16 %v373, %v372
      %v379 = vpack.c.bf16 %v375, %v374
      %v384 = vrot.slane %v376, 2
      %v385 = vrot.slane %v377, 4
      %v386 = vrot.slane %v377, 6
      %v387 = vrot.slane %v378, 2
      %v388 = vrot.slane %v379, 4
      %v389 = vrot.slane %v379, 6
      %vm390 = vcmask 1041408
      %v393 = vsel %vm390, %v376, %v384
      %vm394 = vcmask 1045508
      %v397 = vsel %vm394, %v385, %v386
      %vm398 = vcmask 1043456
      %v399 = vsel %vm398, %v393, %v397
      %v402 = vsel %vm390, %v378, %v387
      %v405 = vsel %vm394, %v388, %v389
      %v406 = vsel %vm398, %v402, %v405
      %409 = vst [vmem:[%s257] sm:$0xff] %v399
      %410 = vst [vmem:[%s257 + $0x8] sm:$0xff] %v406
      %p411 = scmp.lt.s32.totalorder %s15, 1
      %s412 = scalar_select %p411, %s15, 1
      %s413 = smul.addr %s412, 8
      %s414 = smul.addr %s413, 2
      %s415 = scalar_lea.vmem %s4, %s414
      // Predicated region
      $region37: #{forward.28} parent=35 // pred_check
        %p416 = pneg %p137
      $region38: #{forward.28} parent=35 // pred_check_branch
        %418 = sbr.rel (%p416) target = $region40
      $region39: #{forward.28} parent=35 // pred_region
        _
      $region40: #{forward.28} parent=35 // pred_fallthru
        _
    $region36: #{forward.28} parent=5 // pred_fallthru
      _
    %p419 = scmp.le.s32.totalorder 2, %s10
    // Predicated region
    $region41: #{forward.28} parent=5 // pred_check
      %p420 = pneg %p419
    $region42: #{forward.28} parent=5 // pred_check_branch
      %422 = sbr.rel (%p420) target = $region44
    $region43: #{forward.28} parent=5 // pred_region
      %s423 = ssub.s32 %s10, 2
      // Predicated region
      $region45: #{forward.28} parent=43 // pred_check
        %p424 = pneg %p143
      $region46: #{forward.28} parent=43 // pred_check_branch
        %426 = sbr.rel (%p424) target = $region48
      $region47: #{forward.28} parent=43 // pred_region
        %p427 = scmp.lt.s32.totalorder %s16, 1
        %s428 = scalar_select %p427, %s16, 1
        %s429 = smul.addr %s428, 8
        %s430 = smul.addr %s429, 2
        %s431 = scalar_lea.vmem %s4, %s430
      $region48: #{forward.28} parent=43 // pred_fallthru
        _
    $region44: #{forward.28} parent=5 // pred_fallthru
      _
  $region6: #{forward.28} parent=0 // loop_footer
    %s14 = sadd.s32 1, %s10
  $region7: #{forward.28} parent=0 // loop_footer_branch
    %9 = sbr.rel target = $region3
  $region8: #{forward.28} parent=0 // loop_exit
    _

// kernel: forward.29
$region0: #{forward.29}
  #allocation0 [shape = 'u32[]', space=smem, size = 0x4, offset = 0x4, fixed_abs, tag = 'smem constant byte address 0x4 - core index']
  #allocation1 [shape = 'u32[72,128]{1,0:T(1,128)}', space=vmem, size = 0x9000, scoped, tag = 'internal scratch']
  %s0 = inlined_call_operand.vmem [shape: bf16[2,36,1024], index: 0, kind: input, shape index: {}]
  %s1 = inlined_call_operand.vmem [shape: bf16[8,36], index: 1, kind: input, shape index: {}]
  %s2 = inlined_call_operand.vmem [shape: f32[8,1], index: 2, kind: input, shape index: {}]
  %s3 = inlined_call_operand.vmem [shape: bf16[2,8,1024], index: 3, kind: output, shape index: {}]
  %s4 = sld [smem:[#allocation0]]
  $region45: #{forward.29} parent=0
    _
  %s6 = ssub.s32 1, %s4
  %s7 = scalar_select 0, %s6, %s4
  loop: start=0, step=1, limit=4
  $region2: #{forward.29} parent=0 // loop_pre_header
    _
  $region3: #{forward.29} parent=0 // loop_header
    %s9 = sphi 0, %s13
    %p10 = scmp.ge.s32.totalorder %s9, 4
    %s19 = sphi 0, %s21
    %s22 = sphi 0, %s19
    %s23 = sphi 0, %s22
    %s39 = sphi 0, %s23
    %s43 = sphi 0, %s43
    %s45 = sphi 0, %s43
    %s46 = sphi 0, %s45
    %s60 = sphi 0, %s46
    %s64 = sphi 0, %s64
    %s66 = sphi 0, %s64
    %s67 = sphi 0, %s66
    %s81 = sphi 0, %s67
    %s87 = sphi 0, %s89
    %s90 = sphi 0, %s87
    %s91 = sphi 0, %s90
    %s107 = sphi 0, %s91
  $region4: #{forward.29} parent=0 // loop_header_branch
    %12 = sbr.rel (%p10) target = $region8
  $region5: #{forward.29} parent=0 // loop_body
    %s14 = ssub.s32 %s9, 1
    %s15 = ssub.s32 %s9, 2
    %s16 = sadd.s32 %s9, 1
    %s17 = ssub.s32 %s9, %s16
    %p18 = scmp.eq.s32.totalorder %s17, 0
    %s20 = sadd.s32 %s19, 1
    %s21 = scalar_select %p18, %s19, %s20
    %p24 = pneg %p18
    %p25 = scmp.eq.s32.totalorder %s9, 1
    %p26 = por %p24, %p25
    %p27 = scmp.ne.s32.totalorder %s19, %s22
    %p28 = scmp.eq.s32.totalorder %s9, 0
    %p29 = por %p27, %p28
    %p30 = scmp.ne.s32.totalorder %s19, %s22
    %p31 = scmp.eq.s32.totalorder %s14, 1
    %p32 = por %p30, %p31
    %p33 = scmp.ne.s32.totalorder %s22, %s23
    %p34 = scmp.eq.s32.totalorder %s14, 0
    %p35 = por %p33, %p34
    %p36 = scmp.ne.s32.totalorder %s22, %s23
    %p37 = scmp.eq.s32.totalorder %s15, 1
    %p38 = por %p36, %p37
    %p40 = scmp.ne.s32.totalorder %s23, %s39
    %p41 = scmp.eq.s32.totalorder %s15, 0
    %p42 = por %p40, %p41
    %s44 = sadd.s32 %s43, 1
    %p47 = scmp.eq.s32.totalorder %s9, 1
    %p48 = scmp.ne.s32.totalorder %s43, %s45
    %p49 = scmp.eq.s32.totalorder %s9, 0
    %p50 = por %p48, %p49
    %p51 = scmp.ne.s32.totalorder %s43, %s45
    %p52 = scmp.eq.s32.totalorder %s14, 1
    %p53 = por %p51, %p52
    %p54 = scmp.ne.s32.totalorder %s45, %s46
    %p55 = scmp.eq.s32.totalorder %s14, 0
    %p56 = por %p54, %p55
    %p57 = scmp.ne.s32.totalorder %s45, %s46
    %p58 = scmp.eq.s32.totalorder %s15, 1
    %p59 = por %p57, %p58
    %p61 = scmp.ne.s32.totalorder %s46, %s60
    %p62 = scmp.eq.s32.totalorder %s15, 0
    %p63 = por %p61, %p62
    %s65 = sadd.s32 %s64, 1
    %p68 = scmp.eq.s32.totalorder %s9, 1
    %p69 = scmp.ne.s32.totalorder %s64, %s66
    %p70 = scmp.eq.s32.totalorder %s9, 0
    %p71 = por %p69, %p70
    %p72 = scmp.ne.s32.totalorder %s64, %s66
    %p73 = scmp.eq.s32.totalorder %s14, 1
    %p74 = por %p72, %p73
    %p75 = scmp.ne.s32.totalorder %s66, %s67
    %p76 = scmp.eq.s32.totalorder %s14, 0
    %p77 = por %p75, %p76
    %p78 = scmp.ne.s32.totalorder %s66, %s67
    %p79 = scmp.eq.s32.totalorder %s15, 1
    %p80 = por %p78, %p79
    %p82 = scmp.ne.s32.totalorder %s67, %s81
    %p83 = scmp.eq.s32.totalorder %s15, 0
    %p84 = por %p82, %p83
    %s85 = ssub.s32 %s9, %s16
    %p86 = scmp.eq.s32.totalorder %s85, 0
    %s88 = sadd.s32 %s87, 1
    %s89 = scalar_select %p86, %s87, %s88
    %p92 = pneg %p86
    %p93 = scmp.eq.s32.totalorder %s9, 1
    %p94 = por %p92, %p93
    %p95 = scmp.ne.s32.totalorder %s87, %s90
    %p96 = scmp.eq.s32.totalorder %s9, 0
    %p97 = por %p95, %p96
    %p98 = scmp.ne.s32.totalorder %s87, %s90
    %p99 = scmp.eq.s32.totalorder %s14, 1
    %p100 = por %p98, %p99
    %p101 = scmp.ne.s32.totalorder %s90, %s91
    %p102 = scmp.eq.s32.totalorder %s14, 0
    %p103 = por %p101, %p102
    %p104 = scmp.ne.s32.totalorder %s90, %s91
    %p105 = scmp.eq.s32.totalorder %s15, 1
    %p106 = por %p104, %p105
    %p108 = scmp.ne.s32.totalorder %s91, %s107
    %p109 = scmp.eq.s32.totalorder %s15, 0
    %p110 = por %p108, %p109
    %p111 = scmp.le.s32.totalorder 1, %s9
    %p112 = scmp.lt.s32.totalorder %s9, 3
    %p113 = pnand %p111, %p112
    %p114 = pneg %p113
    // Predicated region
    $region9: #{forward.29} parent=5 // pred_check
      _
    $region10: #{forward.29} parent=5 // pred_check_branch
      %116 = sbr.rel (%p113) target = $region12
    $region11: #{forward.29} parent=5 // pred_region
      %s117 = ssub.s32 %s9, 1
      // Predicated region
      $region13: #{forward.29} parent=11 // pred_check
        %p118 = pneg %p56
      $region14: #{forward.29} parent=11 // pred_check_branch
        %120 = sbr.rel (%p118) target = $region16
      $region15: #{forward.29} parent=11 // pred_region
        _
      $region16: #{forward.29} parent=11 // pred_fallthru
        _
      // Predicated region
      $region17: #{forward.29} parent=11 // pred_check
        %p121 = pneg %p77
      $region18: #{forward.29} parent=11 // pred_check_branch
        %123 = sbr.rel (%p121) target = $region20
      $region19: #{forward.29} parent=11 // pred_region
        _
      $region20: #{forward.29} parent=11 // pred_fallthru
        _
    $region12: #{forward.29} parent=5 // pred_fallthru
      _
    %p124 = scmp.lt.s32.totalorder %s9, 2
    // Predicated region
    $region21: #{forward.29} parent=5 // pred_check
      %p125 = pneg %p124
    $region22: #{forward.29} parent=5 // pred_check_branch
      %127 = sbr.rel (%p125) target = $region24
    $region23: #{forward.29} parent=5 // pred_region
      // Predicated region
      $region25: #{forward.29} parent=23 // pred_check
        %p128 = pneg %p29
      $region26: #{forward.29} parent=23 // pred_check_branch
        %130 = sbr.rel (%p128) target = $region28
      $region27: #{forward.29} parent=23 // pred_region
        %p131 = scmp.lt.s32.totalorder %s9, 1
        %s132 = scalar_select %p131, %s9, 1
        %s133 = smul.addr %s132, 40
        %s134 = smul.addr %s133, 4
        %s135 = scalar_lea.vmem %s0, %s134
      $region28: #{forward.29} parent=23 // pred_fallthru
        _
    $region24: #{forward.29} parent=5 // pred_fallthru
      _
    %p136 = scmp.le.s32.totalorder 1, %s9
    %p137 = scmp.lt.s32.totalorder %s9, 3
    %p138 = pnand %p136, %p137
    %p139 = pneg %p138
    // Predicated region
    $region29: #{forward.29} parent=5 // pred_check
      _
    $region30: #{forward.29} parent=5 // pred_check_branch
      %141 = sbr.rel (%p138) target = $region32
    $region31: #{forward.29} parent=5 // pred_region
      %s142 = ssub.s32 %s9, 1
      %p143 = scmp.lt.s32.totalorder %s14, 1
      %s144 = scalar_select %p143, %s14, 1
      %s145 = smul.addr %s144, 40
      %s146 = smul.addr %s145, 4
      %s147 = scalar_lea.vmem %s0, %s146
      %p148 = pneg %p35
      %p149 = pneg %p32
      %p150 = pneg %p56
      %p151 = pneg %p53
      %p152 = pneg %p77
      %p153 = pneg %p74
      %p154 = pneg %p103
      %p155 = pneg %p100
      %p156 = scmp.lt.s32.totalorder %s14, 1
      %s157 = scalar_select %p156, %s14, 1
      %s158 = smul.addr %s157, 8
      %s159 = smul.addr %s158, 4
      %s160 = scalar_lea.vmem %s3, %s159
      %p161 = scmp.lt.s32.totalorder %s14, 1
      %s162 = scalar_select %p161, %s14, 1
      %s163 = smul.addr %s162, 40
      %s164 = smul.addr %s163, 4
      %s165 = scalar_lea.vmem %s0, %s164
      %p166 = scmp.lt.s32.totalorder %s14, 1
      %s167 = scalar_select %p166, %s14, 1
      %s168 = smul.addr %s167, 8
      %s169 = smul.addr %s168, 4
      %s170 = scalar_lea.vmem %s3, %s169
      %v172 = vld [vmem:[%s1] sm:$0xf]
      %v173 = vld [vmem:[%s165] sm:$0xff]
      %v174 = vld [vmem:[%s165 + $0x8] sm:$0xff]
      %v175 = vld [vmem:[%s165 + $0x10] sm:$0xff]
      %v176 = vld [vmem:[%s165 + $0x18] sm:$0xff]
      %v177 = vld [vmem:[%s165 + $0x20] sm:$0xff]
      %v178 = vld [vmem:[%s165 + $0x28] sm:$0xff]
      %v179 = vld [vmem:[%s165 + $0x30] sm:$0xff]
      %v180 = vld [vmem:[%s165 + $0x38] sm:$0xff]
      %v181 = vld [vmem:[%s165 + $0x40] sm:$0xff]
      %v182 = vld [vmem:[%s165 + $0x48] sm:$0xff]
      %v183 = vld [vmem:[%s165 + $0x50] sm:$0xff]
      %v184 = vld [vmem:[%s165 + $0x58] sm:$0xff]
      %v185 = vld [vmem:[%s165 + $0x60] sm:$0xff]
      %v186 = vld [vmem:[%s165 + $0x68] sm:$0xff]
      %v187 = vld [vmem:[%s165 + $0x70] sm:$0xff]
      %v188 = vld [vmem:[%s165 + $0x78] sm:$0xff]
      %v189 = vld [vmem:[%s165 + $0x80] sm:$0x33]
      %v190 = vld [vmem:[%s165 + $0x88] sm:$0x33]
      %v191 = vld [vmem:[%s165 + $0x90] sm:$0x33]
      %v192 = vld [vmem:[%s165 + $0x98] sm:$0x33]
      %v193 = vld [vmem:[%s2] sm:$0xff]
      %195 = vset.pattern.permute.xlu0 0
      %196 = vperm.xlu0 %195, %v193
      %v197 = vpop.permute.xlu0 %196
      %v219 = vunpack.c.l.b16 %v173
      %v220 = vunpack.c.h.b16 %v173
      %v221 = vunpack.c.l.b16 %v174
      %v222 = vunpack.c.h.b16 %v174
      %v223 = vunpack.c.l.b16 %v175
      %v224 = vunpack.c.h.b16 %v175
      %v225 = vunpack.c.l.b16 %v176
      %v226 = vunpack.c.h.b16 %v176
      %v227 = vunpack.c.l.b16 %v177
      %v228 = vunpack.c.h.b16 %v177
      %v229 = vunpack.c.l.b16 %v178
      %v230 = vunpack.c.h.b16 %v178
      %v231 = vunpack.c.l.b16 %v179
      %v232 = vunpack.c.h.b16 %v179
      %v233 = vunpack.c.l.b16 %v180
      %v234 = vunpack.c.h.b16 %v180
      %v235 = vunpack.c.l.b16 %v181
      %v236 = vunpack.c.h.b16 %v181
      %v237 = vunpack.c.l.b16 %v182
      %v238 = vunpack.c.h.b16 %v182
      %v239 = vunpack.c.l.b16 %v183
      %v240 = vunpack.c.h.b16 %v183
      %v241 = vunpack.c.l.b16 %v184
      %v242 = vunpack.c.h.b16 %v184
      %v243 = vunpack.c.l.b16 %v185
      %v244 = vunpack.c.h.b16 %v185
      %v245 = vunpack.c.l.b16 %v186
      %v246 = vunpack.c.h.b16 %v186
      %v247 = vunpack.c.l.b16 %v187
      %v248 = vunpack.c.h.b16 %v187
      %v249 = vunpack.c.l.b16 %v188
      %v250 = vunpack.c.h.b16 %v188
      %v251 = vunpack.c.l.b16 %v189
      %v252 = vunpack.c.h.b16 %v189
      %v253 = vunpack.c.l.b16 %v190
      %v254 = vunpack.c.h.b16 %v190
      %v255 = vunpack.c.l.b16 %v191
      %v256 = vunpack.c.h.b16 %v191
      %v257 = vunpack.c.l.b16 %v192
      %v258 = vunpack.c.h.b16 %v192
      %v259 = vpack.c.b16 %v227, %v219
      %v260 = vpack.c.b16 %v228, %v220
      %v261 = vpack.c.b16 %v229, %v221
      %v262 = vpack.c.b16 %v230, %v222
      %v263 = vpack.c.b16 %v231, %v223
      %v264 = vpack.c.b16 %v232, %v224
      %v265 = vpack.c.b16 %v233, %v225
      %v266 = vpack.c.b16 %v234, %v226
      %v267 = vpack.c.b16 %v243, %v235
      %v268 = vpack.c.b16 %v244, %v236
      %v269 = vpack.c.b16 %v245, %v237
      %v270 = vpack.c.b16 %v246, %v238
      %v271 = vpack.c.b16 %v247, %v239
      %v272 = vpack.c.b16 %v248, %v240
      %v273 = vpack.c.b16 %v249, %v241
      %v274 = vpack.c.b16 %v250, %v242
      %v275 = vpack.c.b16 %v251, %v251
      %v276 = vpack.c.b16 %v252, %v252
      %v277 = vpack.c.b16 %v253, %v253
      %v278 = vpack.c.b16 %v254, %v254
      %v279 = vpack.c.b16 %v255, %v255
      %v280 = vpack.c.b16 %v256, %v256
      %v281 = vpack.c.b16 %v257, %v257
      %v282 = vpack.c.b16 %v258, %v258
      %vm299 = vcmask 293888
      %v301 = vsel %vm299, %v172, 0
      %vm303 = vcmask 1041408
      %v305 = vsel %vm303, %v275, 0
      %v308 = vsel %vm303, %v276, 0
      %v311 = vsel %vm303, %v277, 0
      %v314 = vsel %vm303, %v278, 0
      %v317 = vsel %vm303, %v279, 0
      %v320 = vsel %vm303, %v280, 0
      %v323 = vsel %vm303, %v281, 0
      %v326 = vsel %vm303, %v282, 0
      %328 = vmatpush.bf16.msra.mxu0 0
      %329 = vmatpush.bf16.msra.mxu0 0
      %330 = vmatpush.bf16.msra.mxu0 0
      %331 = vmatpush.bf16.msra.mxu0 0
      %332 = vmatpush.bf16.msra.mxu0 0
      %333 = vmatpush.bf16.msra.mxu0 %v305
      %334 = vmatpush.bf16.msra.mxu0 %v267
      %335 = vmatpush.bf16.msra.mxu0 %v259
      %336 = vmatmul.bf16.gmra.mxu0 %v301
      %v337 = vpop.f32.mrf.mxu0
      %v338 = vadd.f32 %v197, %v337
      %v339 = vpop.f32.mrf.mxu0
      %340 = vdwg.mxu0
      %341 = vmatpush.bf16.msra.mxu0 0
      %342 = vmatpush.bf16.msra.mxu0 0
      %343 = vmatpush.bf16.msra.mxu0 0
      %344 = vmatpush.bf16.msra.mxu0 0
      %345 = vmatpush.bf16.msra.mxu0 0
      %346 = vmatpush.bf16.msra.mxu0 %v308
      %347 = vmatpush.bf16.msra.mxu0 %v268
      %348 = vmatpush.bf16.msra.mxu0 %v260
      %349 = vmatmul.bf16.gmra.mxu0 %v301
      %v350 = vpop.f32.mrf.mxu0
      %v351 = vadd.f32 %v197, %v350
      %v352 = vpop.f32.mrf.mxu0
      %353 = vdwg.mxu0
      %354 = vmatpush.bf16.msra.mxu0 0
      %355 = vmatpush.bf16.msra.mxu0 0
      %356 = vmatpush.bf16.msra.mxu0 0
      %357 = vmatpush.bf16.msra.mxu0 0
      %358 = vmatpush.bf16.msra.mxu0 0
      %359 = vmatpush.bf16.msra.mxu0 %v311
      %360 = vmatpush.bf16.msra.mxu0 %v269
      %361 = vmatpush.bf16.msra.mxu0 %v261
      %362 = vmatmul.bf16.gmra.mxu0 %v301
      %v363 = vpop.f32.mrf.mxu0
      %v364 = vadd.f32 %v197, %v363
      %v365 = vpop.f32.mrf.mxu0
      %366 = vdwg.mxu0
      %367 = vmatpush.bf16.msra.mxu0 0
      %368 = vmatpush.bf16.msra.mxu0 0
      %369 = vmatpush.bf16.msra.mxu0 0
      %370 = vmatpush.bf16.msra.mxu0 0
      %371 = vmatpush.bf16.msra.mxu0 0
      %372 = vmatpush.bf16.msra.mxu0 %v314
      %373 = vmatpush.bf16.msra.mxu0 %v270
      %374 = vmatpush.bf16.msra.mxu0 %v262
      %375 = vmatmul.bf16.gmra.mxu0 %v301
      %v376 = vpop.f32.mrf.mxu0
      %v377 = vadd.f32 %v197, %v376
      %v378 = vpop.f32.mrf.mxu0
      %379 = vdwg.mxu0
      %380 = vmatpush.bf16.msra.mxu0 0
      %381 = vmatpush.bf16.msra.mxu0 0
      %382 = vmatpush.bf16.msra.mxu0 0
      %383 = vmatpush.bf16.msra.mxu0 0
      %384 = vmatpush.bf16.msra.mxu0 0
      %385 = vmatpush.bf16.msra.mxu0 %v317
      %386 = vmatpush.bf16.msra.mxu0 %v271
      %387 = vmatpush.bf16.msra.mxu0 %v263
      %388 = vmatmul.bf16.gmra.mxu0 %v301
      %v389 = vpop.f32.mrf.mxu0
      %v390 = vadd.f32 %v197, %v389
      %v391 = vpop.f32.mrf.mxu0
      %392 = vdwg.mxu0
      %393 = vmatpush.bf16.msra.mxu0 0
      %394 = vmatpush.bf16.msra.mxu0 0
      %395 = vmatpush.bf16.msra.mxu0 0
      %396 = vmatpush.bf16.msra.mxu0 0
      %397 = vmatpush.bf16.msra.mxu0 0
      %398 = vmatpush.bf16.msra.mxu0 %v320
      %399 = vmatpush.bf16.msra.mxu0 %v272
      %400 = vmatpush.bf16.msra.mxu0 %v264
      %401 = vmatmul.bf16.gmra.mxu0 %v301
      %v402 = vpop.f32.mrf.mxu0
      %v403 = vadd.f32 %v197, %v402
      %v404 = vpop.f32.mrf.mxu0
      %405 = vdwg.mxu0
      %406 = vmatpush.bf16.msra.mxu0 0
      %407 = vmatpush.bf16.msra.mxu0 0
      %408 = vmatpush.bf16.msra.mxu0 0
      %409 = vmatpush.bf16.msra.mxu0 0
      %410 = vmatpush.bf16.msra.mxu0 0
      %411 = vmatpush.bf16.msra.mxu0 %v323
      %412 = vmatpush.bf16.msra.mxu0 %v273
      %413 = vmatpush.bf16.msra.mxu0 %v265
      %414 = vmatmul.bf16.gmra.mxu0 %v301
      %v415 = vpop.f32.mrf.mxu0
      %v416 = vadd.f32 %v197, %v415
      %v417 = vpop.f32.mrf.mxu0
      %418 = vdwg.mxu0
      %419 = vmatpush.bf16.msra.mxu0 0
      %420 = vmatpush.bf16.msra.mxu0 0
      %421 = vmatpush.bf16.msra.mxu0 0
      %422 = vmatpush.bf16.msra.mxu0 0
      %423 = vmatpush.bf16.msra.mxu0 0
      %424 = vmatpush.bf16.msra.mxu0 %v326
      %425 = vmatpush.bf16.msra.mxu0 %v274
      %426 = vmatpush.bf16.msra.mxu0 %v266
      %427 = vmatmul.bf16.gmra.mxu0 %v301
      %v428 = vpop.f32.mrf.mxu0
      %v429 = vadd.f32 %v197, %v428
      %v430 = vpop.f32.mrf.mxu0
      %431 = vdwg.mxu0
      %v432 = vmax.f32 %v338, 0.0
      %v433 = vmax.f32 %v351, 0.0
      %v434 = vmax.f32 %v364, 0.0
      %v435 = vmax.f32 %v377, 0.0
      %v436 = vmax.f32 %v390, 0.0
      %v437 = vmax.f32 %v403, 0.0
      %v438 = vmax.f32 %v416, 0.0
      %v439 = vmax.f32 %v429, 0.0
      %v440 = vpack.c.bf16 %v433, %v432
      %v441 = vpack.c.bf16 %v435, %v434
      %v442 = vpack.c.bf16 %v437, %v436
      %v443 = vpack.c.bf16 %v439, %v438
      %444 = vst [vmem:[%s170] sm:$0xff] %v440
      %445 = vst [vmem:[%s170 + $0x8] sm:$0xff] %v441
      %446 = vst [vmem:[%s170 + $0x10] sm:$0xff] %v442
      %447 = vst [vmem:[%s170 + $0x18] sm:$0xff] %v443
      %p448 = scmp.lt.s32.totalorder %s14, 1
      %s449 = scalar_select %p448, %s14, 1
      %s450 = smul.addr %s449, 8
      %s451 = smul.addr %s450, 4
      %s452 = scalar_lea.vmem %s3, %s451
      // Predicated region
      $region33: #{forward.29} parent=31 // pred_check
        %p453 = pneg %p100
      $region34: #{forward.29} parent=31 // pred_check_branch
        %455 = sbr.rel (%p453) target = $region36
      $region35: #{forward.29} parent=31 // pred_region
        _
      $region36: #{forward.29} parent=31 // pred_fallthru
        _
    $region32: #{forward.29} parent=5 // pred_fallthru
      _
    %p456 = scmp.le.s32.totalorder 2, %s9
    // Predicated region
    $region37: #{forward.29} parent=5 // pred_check
      %p457 = pneg %p456
    $region38: #{forward.29} parent=5 // pred_check_branch
      %459 = sbr.rel (%p457) target = $region40
    $region39: #{forward.29} parent=5 // pred_region
      %s460 = ssub.s32 %s9, 2
      // Predicated region
      $region41: #{forward.29} parent=39 // pred_check
        %p461 = pneg %p106
      $region42: #{forward.29} parent=39 // pred_check_branch
        %463 = sbr.rel (%p461) target = $region44
      $region43: #{forward.29} parent=39 // pred_region
        %p464 = scmp.lt.s32.totalorder %s15, 1
        %s465 = scalar_select %p464, %s15, 1
        %s466 = smul.addr %s465, 8
        %s467 = smul.addr %s466, 4
        %s468 = scalar_lea.vmem %s3, %s467
      $region44: #{forward.29} parent=39 // pred_fallthru
        _
    $region40: #{forward.29} parent=5 // pred_fallthru
      _
  $region6: #{forward.29} parent=0 // loop_footer
    %s13 = sadd.s32 1, %s9
  $region7: #{forward.29} parent=0 // loop_footer_branch
    %8 = sbr.rel target = $region3
  $region8: #{forward.29} parent=0 // loop_exit
    _

// kernel: forward.30
$region0: #{forward.30}
  #allocation0 [shape = 'u32[]', space=smem, size = 0x4, offset = 0x4, fixed_abs, tag = 'smem constant byte address 0x4 - core index']
  #allocation1 [shape = 'u32[72,128]{1,0:T(1,128)}', space=vmem, size = 0x9000, scoped, tag = 'internal scratch']
  %s0 = inlined_call_operand.vmem [shape: bf16[2,8,256], index: 0, kind: input, shape index: {}]
  %s1 = inlined_call_operand.vmem [shape: bf16[2,8,256], index: 1, kind: input, shape index: {}]
  %s2 = inlined_call_operand.vmem [shape: bf16[2,8,256], index: 2, kind: input, shape index: {}]
  %s3 = inlined_call_operand.vmem [shape: bf16[2,8,256], index: 3, kind: input, shape index: {}]
  %s4 = inlined_call_operand.vmem [shape: bf16[2,8,256], index: 4, kind: output, shape index: {}]
  %s5 = sld [smem:[#allocation0]]
  $region49: #{forward.30} parent=0
    _
  %s7 = ssub.s32 1, %s5
  %s8 = scalar_select 0, %s7, %s5
  loop: start=0, step=1, limit=4
  $region2: #{forward.30} parent=0 // loop_pre_header
    _
  $region3: #{forward.30} parent=0 // loop_header
    %s10 = sphi 0, %s14
    %p11 = scmp.ge.s32.totalorder %s10, 4
    %s20 = sphi 0, %s22
    %s23 = sphi 0, %s20
    %s24 = sphi 0, %s23
    %s40 = sphi 0, %s24
    %s46 = sphi 0, %s48
    %s49 = sphi 0, %s46
    %s50 = sphi 0, %s49
    %s66 = sphi 0, %s50
    %s72 = sphi 0, %s74
    %s75 = sphi 0, %s72
    %s76 = sphi 0, %s75
    %s92 = sphi 0, %s76
    %s98 = sphi 0, %s100
    %s101 = sphi 0, %s98
    %s102 = sphi 0, %s101
    %s118 = sphi 0, %s102
    %s124 = sphi 0, %s126
    %s127 = sphi 0, %s124
    %s128 = sphi 0, %s127
    %s144 = sphi 0, %s128
  $region4: #{forward.30} parent=0 // loop_header_branch
    %13 = sbr.rel (%p11) target = $region8
  $region5: #{forward.30} parent=0 // loop_body
    %s15 = ssub.s32 %s10, 1
    %s16 = ssub.s32 %s10, 2
    %s17 = sadd.s32 %s10, 1
    %s18 = ssub.s32 %s10, %s17
    %p19 = scmp.eq.s32.totalorder %s18, 0
    %s21 = sadd.s32 %s20, 1
    %s22 = scalar_select %p19, %s20, %s21
    %p25 = pneg %p19
    %p26 = scmp.eq.s32.totalorder %s10, 1
    %p27 = por %p25, %p26
    %p28 = scmp.ne.s32.totalorder %s20, %s23
    %p29 = scmp.eq.s32.totalorder %s10, 0
    %p30 = por %p28, %p29
    %p31 = scmp.ne.s32.totalorder %s20, %s23
    %p32 = scmp.eq.s32.totalorder %s15, 1
    %p33 = por %p31, %p32
    %p34 = scmp.ne.s32.totalorder %s23, %s24
    %p35 = scmp.eq.s32.totalorder %s15, 0
    %p36 = por %p34, %p35
    %p37 = scmp.ne.s32.totalorder %s23, %s24
    %p38 = scmp.eq.s32.totalorder %s16, 1
    %p39 = por %p37, %p38
    %p41 = scmp.ne.s32.totalorder %s24, %s40
    %p42 = scmp.eq.s32.totalorder %s16, 0
    %p43 = por %p41, %p42
    %s44 = ssub.s32 %s10, %s17
    %p45 = scmp.eq.s32.totalorder %s44, 0
    %s47 = sadd.s32 %s46, 1
    %s48 = scalar_select %p45, %s46, %s47
    %p51 = pneg %p45
    %p52 = scmp.eq.s32.totalorder %s10, 1
    %p53 = por %p51, %p52
    %p54 = scmp.ne.s32.totalorder %s46, %s49
    %p55 = scmp.eq.s32.totalorder %s10, 0
    %p56 = por %p54, %p55
    %p57 = scmp.ne.s32.totalorder %s46, %s49
    %p58 = scmp.eq.s32.totalorder %s15, 1
    %p59 = por %p57, %p58
    %p60 = scmp.ne.s32.totalorder %s49, %s50
    %p61 = scmp.eq.s32.totalorder %s15, 0
    %p62 = por %p60, %p61
    %p63 = scmp.ne.s32.totalorder %s49, %s50
    %p64 = scmp.eq.s32.totalorder %s16, 1
    %p65 = por %p63, %p64
    %p67 = scmp.ne.s32.totalorder %s50, %s66
    %p68 = scmp.eq.s32.totalorder %s16, 0
    %p69 = por %p67, %p68
    %s70 = ssub.s32 %s10, %s17
    %p71 = scmp.eq.s32.totalorder %s70, 0
    %s73 = sadd.s32 %s72, 1
    %s74 = scalar_select %p71, %s72, %s73
    %p77 = pneg %p71
    %p78 = scmp.eq.s32.totalorder %s10, 1
    %p79 = por %p77, %p78
    %p80 = scmp.ne.s32.totalorder %s72, %s75
    %p81 = scmp.eq.s32.totalorder %s10, 0
    %p82 = por %p80, %p81
    %p83 = scmp.ne.s32.totalorder %s72, %s75
    %p84 = scmp.eq.s32.totalorder %s15, 1
    %p85 = por %p83, %p84
    %p86 = scmp.ne.s32.totalorder %s75, %s76
    %p87 = scmp.eq.s32.totalorder %s15, 0
    %p88 = por %p86, %p87
    %p89 = scmp.ne.s32.totalorder %s75, %s76
    %p90 = scmp.eq.s32.totalorder %s16, 1
    %p91 = por %p89, %p90
    %p93 = scmp.ne.s32.totalorder %s76, %s92
    %p94 = scmp.eq.s32.totalorder %s16, 0
    %p95 = por %p93, %p94
    %s96 = ssub.s32 %s10, %s17
    %p97 = scmp.eq.s32.totalorder %s96, 0
    %s99 = sadd.s32 %s98, 1
    %s100 = scalar_select %p97, %s98, %s99
    %p103 = pneg %p97
    %p104 = scmp.eq.s32.totalorder %s10, 1
    %p105 = por %p103, %p104
    %p106 = scmp.ne.s32.totalorder %s98, %s101
    %p107 = scmp.eq.s32.totalorder %s10, 0
    %p108 = por %p106, %p107
    %p109 = scmp.ne.s32.totalorder %s98, %s101
    %p110 = scmp.eq.s32.totalorder %s15, 1
    %p111 = por %p109, %p110
    %p112 = scmp.ne.s32.totalorder %s101, %s102
    %p113 = scmp.eq.s32.totalorder %s15, 0
    %p114 = por %p112, %p113
    %p115 = scmp.ne.s32.totalorder %s101, %s102
    %p116 = scmp.eq.s32.totalorder %s16, 1
    %p117 = por %p115, %p116
    %p119 = scmp.ne.s32.totalorder %s102, %s118
    %p120 = scmp.eq.s32.totalorder %s16, 0
    %p121 = por %p119, %p120
    %s122 = ssub.s32 %s10, %s17
    %p123 = scmp.eq.s32.totalorder %s122, 0
    %s125 = sadd.s32 %s124, 1
    %s126 = scalar_select %p123, %s124, %s125
    %p129 = pneg %p123
    %p130 = scmp.eq.s32.totalorder %s10, 1
    %p131 = por %p129, %p130
    %p132 = scmp.ne.s32.totalorder %s124, %s127
    %p133 = scmp.eq.s32.totalorder %s10, 0
    %p134 = por %p132, %p133
    %p135 = scmp.ne.s32.totalorder %s124, %s127
    %p136 = scmp.eq.s32.totalorder %s15, 1
    %p137 = por %p135, %p136
    %p138 = scmp.ne.s32.totalorder %s127, %s128
    %p139 = scmp.eq.s32.totalorder %s15, 0
    %p140 = por %p138, %p139
    %p141 = scmp.ne.s32.totalorder %s127, %s128
    %p142 = scmp.eq.s32.totalorder %s16, 1
    %p143 = por %p141, %p142
    %p145 = scmp.ne.s32.totalorder %s128, %s144
    %p146 = scmp.eq.s32.totalorder %s16, 0
    %p147 = por %p145, %p146
    %p148 = scmp.le.s32.totalorder 1, %s10
    %p149 = scmp.lt.s32.totalorder %s10, 3
    %p150 = pnand %p148, %p149
    %p151 = pneg %p150
    // Predicated region
    $region9: #{forward.30} parent=5 // pred_check
      _
    $region10: #{forward.30} parent=5 // pred_check_branch
      %153 = sbr.rel (%p150) target = $region12
    $region11: #{forward.30} parent=5 // pred_region
      %s154 = ssub.s32 %s10, 1
    $region12: #{forward.30} parent=5 // pred_fallthru
      _
    %p155 = scmp.lt.s32.totalorder %s10, 2
    // Predicated region
    $region13: #{forward.30} parent=5 // pred_check
      %p156 = pneg %p155
    $region14: #{forward.30} parent=5 // pred_check_branch
      %158 = sbr.rel (%p156) target = $region16
    $region15: #{forward.30} parent=5 // pred_region
      // Predicated region
      $region17: #{forward.30} parent=15 // pred_check
        %p159 = pneg %p30
      $region18: #{forward.30} parent=15 // pred_check_branch
        %161 = sbr.rel (%p159) target = $region20
      $region19: #{forward.30} parent=15 // pred_region
        %p162 = scmp.lt.s32.totalorder %s10, 1
        %s163 = scalar_select %p162, %s10, 1
        %s164 = smul.addr %s163, 2
        %s165 = smul.addr %s164, 4
        %s166 = scalar_lea.vmem %s0, %s165
      $region20: #{forward.30} parent=15 // pred_fallthru
        _
      // Predicated region
      $region21: #{forward.30} parent=15 // pred_check
        %p167 = pneg %p56
      $region22: #{forward.30} parent=15 // pred_check_branch
        %169 = sbr.rel (%p167) target = $region24
      $region23: #{forward.30} parent=15 // pred_region
        %p170 = scmp.lt.s32.totalorder %s10, 1
        %s171 = scalar_select %p170, %s10, 1
        %s172 = smul.addr %s171, 2
        %s173 = smul.addr %s172, 4
        %s174 = scalar_lea.vmem %s1, %s173
      $region24: #{forward.30} parent=15 // pred_fallthru
        _
      // Predicated region
      $region25: #{forward.30} parent=15 // pred_check
        %p175 = pneg %p82
      $region26: #{forward.30} parent=15 // pred_check_branch
        %177 = sbr.rel (%p175) target = $region28
      $region27: #{forward.30} parent=15 // pred_region
        %p178 = scmp.lt.s32.totalorder %s10, 1
        %s179 = scalar_select %p178, %s10, 1
        %s180 = smul.addr %s179, 2
        %s181 = smul.addr %s180, 4
        %s182 = scalar_lea.vmem %s2, %s181
      $region28: #{forward.30} parent=15 // pred_fallthru
        _
      // Predicated region
      $region29: #{forward.30} parent=15 // pred_check
        %p183 = pneg %p108
      $region30: #{forward.30} parent=15 // pred_check_branch
        %185 = sbr.rel (%p183) target = $region32
      $region31: #{forward.30} parent=15 // pred_region
        %p186 = scmp.lt.s32.totalorder %s10, 1
        %s187 = scalar_select %p186, %s10, 1
        %s188 = smul.addr %s187, 2
        %s189 = smul.addr %s188, 4
        %s190 = scalar_lea.vmem %s3, %s189
      $region32: #{forward.30} parent=15 // pred_fallthru
        _
    $region16: #{forward.30} parent=5 // pred_fallthru
      _
    %p191 = scmp.le.s32.totalorder 1, %s10
    %p192 = scmp.lt.s32.totalorder %s10, 3
    %p193 = pnand %p191, %p192
    %p194 = pneg %p193
    // Predicated region
    $region33: #{forward.30} parent=5 // pred_check
      _
    $region34: #{forward.30} parent=5 // pred_check_branch
      %196 = sbr.rel (%p193) target = $region36
    $region35: #{forward.30} parent=5 // pred_region
      %s197 = ssub.s32 %s10, 1
      %p198 = scmp.lt.s32.totalorder %s15, 1
      %s199 = scalar_select %p198, %s15, 1
      %s200 = smul.addr %s199, 2
      %s201 = smul.addr %s200, 4
      %s202 = scalar_lea.vmem %s0, %s201
      %p203 = pneg %p36
      %p204 = pneg %p33
      %p205 = scmp.lt.s32.totalorder %s15, 1
      %s206 = scalar_select %p205, %s15, 1
      %s207 = smul.addr %s206, 2
      %s208 = smul.addr %s207, 4
      %s209 = scalar_lea.vmem %s1, %s208
      %p210 = pneg %p62
      %p211 = pneg %p59
      %p212 = scmp.lt.s32.totalorder %s15, 1
      %s213 = scalar_select %p212, %s15, 1
      %s214 = smul.addr %s213, 2
      %s215 = smul.addr %s214, 4
      %s216 = scalar_lea.vmem %s2, %s215
      %p217 = pneg %p88
      %p218 = pneg %p85
      %p219 = scmp.lt.s32.totalorder %s15, 1
      %s220 = scalar_select %p219, %s15, 1
      %s221 = smul.addr %s220, 2
      %s222 = smul.addr %s221, 4
      %s223 = scalar_lea.vmem %s3, %s222
      %p224 = pneg %p114
      %p225 = pneg %p111
      %p226 = pneg %p140
      %p227 = pneg %p137
      %p228 = scmp.lt.s32.totalorder %s15, 1
      %s229 = scalar_select %p228, %s15, 1
      %s230 = smul.addr %s229, 2
      %s231 = smul.addr %s230, 4
      %s232 = scalar_lea.vmem %s4, %s231
      %p233 = scmp.lt.s32.totalorder %s15, 1
      %s234 = scalar_select %p233, %s15, 1
      %s235 = smul.addr %s234, 2
      %s236 = smul.addr %s235, 4
      %s237 = scalar_lea.vmem %s0, %s236
      %p238 = scmp.lt.s32.totalorder %s15, 1
      %s239 = scalar_select %p238, %s15, 1
      %s240 = smul.addr %s239, 2
      %s241 = smul.addr %s240, 4
      %s242 = scalar_lea.vmem %s1, %s241
      %p243 = scmp.lt.s32.totalorder %s15, 1
      %s244 = scalar_select %p243, %s15, 1
      %s245 = smul.addr %s244, 2
      %s246 = smul.addr %s245, 4
      %s247 = scalar_lea.vmem %s2, %s246
      %p248 = scmp.lt.s32.totalorder %s15, 1
      %s249 = scalar_select %p248, %s15, 1
      %s250 = smul.addr %s249, 2
      %s251 = smul.addr %s250, 4
      %s252 = scalar_lea.vmem %s3, %s251
      %p253 = scmp.lt.s32.totalorder %s15, 1
      %s254 = scalar_select %p253, %s15, 1
      %s255 = smul.addr %s254, 2
      %s256 = smul.addr %s255, 4
      %s257 = scalar_lea.vmem %s4, %s256
      %v258 = vld [vmem:[%s237] sm:$0xff]
      %v259 = vld [vmem:[%s242] sm:$0xff]
      %v260 = vunpack.c.l.bf16 %v258
      %v261 = vunpack.c.h.bf16 %v258
      %v262 = vunpack.c.l.bf16 %v259
      %v263 = vunpack.c.h.bf16 %v259
      %v264 = vmax.f32 %v260, %v262
      %v265 = vmax.f32 %v261, %v263
      %v266 = vpack.c.bf16 %v265, %v264
      %v267 = vld [vmem:[%s247] sm:$0xff]
      %v268 = vld [vmem:[%s252] sm:$0xff]
      %v269 = vunpack.c.l.bf16 %v267
      %v270 = vunpack.c.h.bf16 %v267
      %v271 = vunpack.c.l.bf16 %v268
      %v272 = vunpack.c.h.bf16 %v268
      %v273 = vmax.f32 %v269, %v271
      %v274 = vmax.f32 %v270, %v272
      %v275 = vpack.c.bf16 %v274, %v273
      %v276 = vunpack.c.l.bf16 %v266
      %v277 = vunpack.c.h.bf16 %v266
      %v278 = vunpack.c.l.bf16 %v275
      %v279 = vunpack.c.h.bf16 %v275
      %v280 = vmax.f32 %v276, %v278
      %v281 = vmax.f32 %v277, %v279
      %v282 = vpack.c.bf16 %v281, %v280
      %283 = vst [vmem:[%s257] sm:$0xff] %v282
      %p284 = scmp.lt.s32.totalorder %s15, 1
      %s285 = scalar_select %p284, %s15, 1
      %s286 = smul.addr %s285, 2
      %s287 = smul.addr %s286, 4
      %s288 = scalar_lea.vmem %s4, %s287
      // Predicated region
      $region37: #{forward.30} parent=35 // pred_check
        %p289 = pneg %p137
      $region38: #{forward.30} parent=35 // pred_check_branch
        %291 = sbr.rel (%p289) target = $region40
      $region39: #{forward.30} parent=35 // pred_region
        _
      $region40: #{forward.30} parent=35 // pred_fallthru
        _
    $region36: #{forward.30} parent=5 // pred_fallthru
      _
    %p292 = scmp.le.s32.totalorder 2, %s10
    // Predicated region
    $region41: #{forward.30} parent=5 // pred_check
      %p293 = pneg %p292
    $region42: #{forward.30} parent=5 // pred_check_branch
      %295 = sbr.rel (%p293) target = $region44
    $region43: #{forward.30} parent=5 // pred_region
      %s296 = ssub.s32 %s10, 2
      // Predicated region
      $region45: #{forward.30} parent=43 // pred_check
        %p297 = pneg %p143
      $region46: #{forward.30} parent=43 // pred_check_branch
        %299 = sbr.rel (%p297) target = $region48
      $region47: #{forward.30} parent=43 // pred_region
        %p300 = scmp.lt.s32.totalorder %s16, 1
        %s301 = scalar_select %p300, %s16, 1
        %s302 = smul.addr %s301, 2
        %s303 = smul.addr %s302, 4
        %s304 = scalar_lea.vmem %s4, %s303
      $region48: #{forward.30} parent=43 // pred_fallthru
        _
    $region44: #{forward.30} parent=5 // pred_fallthru
      _
  $region6: #{forward.30} parent=0 // loop_footer
    %s14 = sadd.s32 1, %s10
  $region7: #{forward.30} parent=0 // loop_footer_branch
    %9 = sbr.rel target = $region3
  $region8: #{forward.30} parent=0 // loop_exit
    _

// kernel: forward.31
$region0: #{forward.31}
  #allocation0 [shape = 'u32[]', space=smem, size = 0x4, offset = 0x4, fixed_abs, tag = 'smem constant byte address 0x4 - core index']
  #allocation1 [shape = 'u32[72,128]{1,0:T(1,128)}', space=vmem, size = 0x9000, scoped, tag = 'internal scratch']
  %s0 = inlined_call_operand.vmem [shape: bf16[2,72,256], index: 0, kind: input, shape index: {}]
  %s1 = inlined_call_operand.vmem [shape: bf16[8,72], index: 1, kind: input, shape index: {}]
  %s2 = inlined_call_operand.vmem [shape: f32[8,1], index: 2, kind: input, shape index: {}]
  %s3 = inlined_call_operand.vmem [shape: bf16[2,8,256], index: 3, kind: output, shape index: {}]
  %s4 = sld [smem:[#allocation0]]
  $region45: #{forward.31} parent=0
    _
  %s6 = ssub.s32 1, %s4
  %s7 = scalar_select 0, %s6, %s4
  loop: start=0, step=1, limit=4
  $region2: #{forward.31} parent=0 // loop_pre_header
    _
  $region3: #{forward.31} parent=0 // loop_header
    %s9 = sphi 0, %s13
    %p10 = scmp.ge.s32.totalorder %s9, 4
    %s19 = sphi 0, %s21
    %s22 = sphi 0, %s19
    %s23 = sphi 0, %s22
    %s39 = sphi 0, %s23
    %s43 = sphi 0, %s43
    %s45 = sphi 0, %s43
    %s46 = sphi 0, %s45
    %s60 = sphi 0, %s46
    %s64 = sphi 0, %s64
    %s66 = sphi 0, %s64
    %s67 = sphi 0, %s66
    %s81 = sphi 0, %s67
    %s87 = sphi 0, %s89
    %s90 = sphi 0, %s87
    %s91 = sphi 0, %s90
    %s107 = sphi 0, %s91
  $region4: #{forward.31} parent=0 // loop_header_branch
    %12 = sbr.rel (%p10) target = $region8
  $region5: #{forward.31} parent=0 // loop_body
    %s14 = ssub.s32 %s9, 1
    %s15 = ssub.s32 %s9, 2
    %s16 = sadd.s32 %s9, 1
    %s17 = ssub.s32 %s9, %s16
    %p18 = scmp.eq.s32.totalorder %s17, 0
    %s20 = sadd.s32 %s19, 1
    %s21 = scalar_select %p18, %s19, %s20
    %p24 = pneg %p18
    %p25 = scmp.eq.s32.totalorder %s9, 1
    %p26 = por %p24, %p25
    %p27 = scmp.ne.s32.totalorder %s19, %s22
    %p28 = scmp.eq.s32.totalorder %s9, 0
    %p29 = por %p27, %p28
    %p30 = scmp.ne.s32.totalorder %s19, %s22
    %p31 = scmp.eq.s32.totalorder %s14, 1
    %p32 = por %p30, %p31
    %p33 = scmp.ne.s32.totalorder %s22, %s23
    %p34 = scmp.eq.s32.totalorder %s14, 0
    %p35 = por %p33, %p34
    %p36 = scmp.ne.s32.totalorder %s22, %s23
    %p37 = scmp.eq.s32.totalorder %s15, 1
    %p38 = por %p36, %p37
    %p40 = scmp.ne.s32.totalorder %s23, %s39
    %p41 = scmp.eq.s32.totalorder %s15, 0
    %p42 = por %p40, %p41
    %s44 = sadd.s32 %s43, 1
    %p47 = scmp.eq.s32.totalorder %s9, 1
    %p48 = scmp.ne.s32.totalorder %s43, %s45
    %p49 = scmp.eq.s32.totalorder %s9, 0
    %p50 = por %p48, %p49
    %p51 = scmp.ne.s32.totalorder %s43, %s45
    %p52 = scmp.eq.s32.totalorder %s14, 1
    %p53 = por %p51, %p52
    %p54 = scmp.ne.s32.totalorder %s45, %s46
    %p55 = scmp.eq.s32.totalorder %s14, 0
    %p56 = por %p54, %p55
    %p57 = scmp.ne.s32.totalorder %s45, %s46
    %p58 = scmp.eq.s32.totalorder %s15, 1
    %p59 = por %p57, %p58
    %p61 = scmp.ne.s32.totalorder %s46, %s60
    %p62 = scmp.eq.s32.totalorder %s15, 0
    %p63 = por %p61, %p62
    %s65 = sadd.s32 %s64, 1
    %p68 = scmp.eq.s32.totalorder %s9, 1
    %p69 = scmp.ne.s32.totalorder %s64, %s66
    %p70 = scmp.eq.s32.totalorder %s9, 0
    %p71 = por %p69, %p70
    %p72 = scmp.ne.s32.totalorder %s64, %s66
    %p73 = scmp.eq.s32.totalorder %s14, 1
    %p74 = por %p72, %p73
    %p75 = scmp.ne.s32.totalorder %s66, %s67
    %p76 = scmp.eq.s32.totalorder %s14, 0
    %p77 = por %p75, %p76
    %p78 = scmp.ne.s32.totalorder %s66, %s67
    %p79 = scmp.eq.s32.totalorder %s15, 1
    %p80 = por %p78, %p79
    %p82 = scmp.ne.s32.totalorder %s67, %s81
    %p83 = scmp.eq.s32.totalorder %s15, 0
    %p84 = por %p82, %p83
    %s85 = ssub.s32 %s9, %s16
    %p86 = scmp.eq.s32.totalorder %s85, 0
    %s88 = sadd.s32 %s87, 1
    %s89 = scalar_select %p86, %s87, %s88
    %p92 = pneg %p86
    %p93 = scmp.eq.s32.totalorder %s9, 1
    %p94 = por %p92, %p93
    %p95 = scmp.ne.s32.totalorder %s87, %s90
    %p96 = scmp.eq.s32.totalorder %s9, 0
    %p97 = por %p95, %p96
    %p98 = scmp.ne.s32.totalorder %s87, %s90
    %p99 = scmp.eq.s32.totalorder %s14, 1
    %p100 = por %p98, %p99
    %p101 = scmp.ne.s32.totalorder %s90, %s91
    %p102 = scmp.eq.s32.totalorder %s14, 0
    %p103 = por %p101, %p102
    %p104 = scmp.ne.s32.totalorder %s90, %s91
    %p105 = scmp.eq.s32.totalorder %s15, 1
    %p106 = por %p104, %p105
    %p108 = scmp.ne.s32.totalorder %s91, %s107
    %p109 = scmp.eq.s32.totalorder %s15, 0
    %p110 = por %p108, %p109
    %p111 = scmp.le.s32.totalorder 1, %s9
    %p112 = scmp.lt.s32.totalorder %s9, 3
    %p113 = pnand %p111, %p112
    %p114 = pneg %p113
    // Predicated region
    $region9: #{forward.31} parent=5 // pred_check
      _
    $region10: #{forward.31} parent=5 // pred_check_branch
      %116 = sbr.rel (%p113) target = $region12
    $region11: #{forward.31} parent=5 // pred_region
      %s117 = ssub.s32 %s9, 1
      // Predicated region
      $region13: #{forward.31} parent=11 // pred_check
        %p118 = pneg %p56
      $region14: #{forward.31} parent=11 // pred_check_branch
        %120 = sbr.rel (%p118) target = $region16
      $region15: #{forward.31} parent=11 // pred_region
        _
      $region16: #{forward.31} parent=11 // pred_fallthru
        _
      // Predicated region
      $region17: #{forward.31} parent=11 // pred_check
        %p121 = pneg %p77
      $region18: #{forward.31} parent=11 // pred_check_branch
        %123 = sbr.rel (%p121) target = $region20
      $region19: #{forward.31} parent=11 // pred_region
        _
      $region20: #{forward.31} parent=11 // pred_fallthru
        _
    $region12: #{forward.31} parent=5 // pred_fallthru
      _
    %p124 = scmp.lt.s32.totalorder %s9, 2
    // Predicated region
    $region21: #{forward.31} parent=5 // pred_check
      %p125 = pneg %p124
    $region22: #{forward.31} parent=5 // pred_check_branch
      %127 = sbr.rel (%p125) target = $region24
    $region23: #{forward.31} parent=5 // pred_region
      // Predicated region
      $region25: #{forward.31} parent=23 // pred_check
        %p128 = pneg %p29
      $region26: #{forward.31} parent=23 // pred_check_branch
        %130 = sbr.rel (%p128) target = $region28
      $region27: #{forward.31} parent=23 // pred_region
        %p131 = scmp.lt.s32.totalorder %s9, 1
        %s132 = scalar_select %p131, %s9, 1
        %s133 = smul.addr %s132, 18
        %s134 = smul.addr %s133, 4
        %s135 = scalar_lea.vmem %s0, %s134
      $region28: #{forward.31} parent=23 // pred_fallthru
        _
    $region24: #{forward.31} parent=5 // pred_fallthru
      _
    %p136 = scmp.le.s32.totalorder 1, %s9
    %p137 = scmp.lt.s32.totalorder %s9, 3
    %p138 = pnand %p136, %p137
    %p139 = pneg %p138
    // Predicated region
    $region29: #{forward.31} parent=5 // pred_check
      _
    $region30: #{forward.31} parent=5 // pred_check_branch
      %141 = sbr.rel (%p138) target = $region32
    $region31: #{forward.31} parent=5 // pred_region
      %s142 = ssub.s32 %s9, 1
      %p143 = scmp.lt.s32.totalorder %s14, 1
      %s144 = scalar_select %p143, %s14, 1
      %s145 = smul.addr %s144, 18
      %s146 = smul.addr %s145, 4
      %s147 = scalar_lea.vmem %s0, %s146
      %p148 = pneg %p35
      %p149 = pneg %p32
      %p150 = pneg %p56
      %p151 = pneg %p53
      %p152 = pneg %p77
      %p153 = pneg %p74
      %p154 = pneg %p103
      %p155 = pneg %p100
      %p156 = scmp.lt.s32.totalorder %s14, 1
      %s157 = scalar_select %p156, %s14, 1
      %s158 = smul.addr %s157, 2
      %s159 = smul.addr %s158, 4
      %s160 = scalar_lea.vmem %s3, %s159
      %p161 = scmp.lt.s32.totalorder %s14, 1
      %s162 = scalar_select %p161, %s14, 1
      %s163 = smul.addr %s162, 18
      %s164 = smul.addr %s163, 4
      %s165 = scalar_lea.vmem %s0, %s164
      %p166 = scmp.lt.s32.totalorder %s14, 1
      %s167 = scalar_select %p166, %s14, 1
      %s168 = smul.addr %s167, 2
      %s169 = smul.addr %s168, 4
      %s170 = scalar_lea.vmem %s3, %s169
      %v172 = vld [vmem:[%s1] sm:$0xf]
      %v173 = vld [vmem:[%s165] sm:$0xff]
      %v174 = vld [vmem:[%s165 + $0x8] sm:$0xff]
      %v175 = vld [vmem:[%s165 + $0x10] sm:$0xff]
      %v176 = vld [vmem:[%s165 + $0x18] sm:$0xff]
      %v177 = vld [vmem:[%s165 + $0x20] sm:$0xff]
      %v178 = vld [vmem:[%s165 + $0x28] sm:$0xff]
      %v179 = vld [vmem:[%s165 + $0x30] sm:$0xff]
      %v180 = vld [vmem:[%s165 + $0x38] sm:$0xff]
      %v181 = vld [vmem:[%s165 + $0x40] sm:$0xff]
      %v182 = vld [vmem:[%s2] sm:$0xff]
      %184 = vset.pattern.permute.xlu0 0
      %185 = vperm.xlu0 %184, %v182
      %v186 = vpop.permute.xlu0 %185
      %v197 = vunpack.c.l.b16 %v173
      %v198 = vunpack.c.h.b16 %v173
      %v199 = vunpack.c.l.b16 %v174
      %v200 = vunpack.c.h.b16 %v174
      %v201 = vunpack.c.l.b16 %v175
      %v202 = vunpack.c.h.b16 %v175
      %v203 = vunpack.c.l.b16 %v176
      %v204 = vunpack.c.h.b16 %v176
      %v205 = vunpack.c.l.b16 %v177
      %v206 = vunpack.c.h.b16 %v177
      %v207 = vunpack.c.l.b16 %v178
      %v208 = vunpack.c.h.b16 %v178
      %v209 = vunpack.c.l.b16 %v179
      %v210 = vunpack.c.h.b16 %v179
      %v211 = vunpack.c.l.b16 %v180
      %v212 = vunpack.c.h.b16 %v180
      %v213 = vunpack.c.l.b16 %v181
      %v214 = vunpack.c.h.b16 %v181
      %v215 = vpack.c.b16 %v199, %v197
      %v216 = vpack.c.b16 %v200, %v198
      %v217 = vpack.c.b16 %v203, %v201
      %v218 = vpack.c.b16 %v204, %v202
      %v219 = vpack.c.b16 %v207, %v205
      %v220 = vpack.c.b16 %v208, %v206
      %v221 = vpack.c.b16 %v211, %v209
      %v222 = vpack.c.b16 %v212, %v210
      %v223 = vpack.c.b16 %v213, %v213
      %v224 = vpack.c.b16 %v214, %v214
      %vm233 = vcmask 588800
      %v235 = vsel %vm233, %v172, 0
      %vm237 = vcmask 1043456
      %v239 = vsel %vm237, %v223, 0
      %v242 = vsel %vm237, %v224, 0
      %244 = vmatpush.bf16.msra.mxu0 0
      %245 = vmatpush.bf16.msra.mxu0 0
      %246 = vmatpush.bf16.msra.mxu0 0
      %247 = vmatpush.bf16.msra.mxu0 %v239
      %248 = vmatpush.bf16.msra.mxu0 %v221
      %249 = vmatpush.bf16.msra.mxu0 %v219
      %250 = vmatpush.bf16.msra.mxu0 %v217
      %251 = vmatpush.bf16.msra.mxu0 %v215
      %252 = vmatmul.bf16.gmra.mxu0 %v235
      %v253 = vpop.f32.mrf.mxu0
      %v254 = vadd.f32 %v186, %v253
      %v255 = vpop.f32.mrf.mxu0
      %256 = vdwg.mxu0
      %257 = vmatpush.bf16.msra.mxu0 0
      %258 = vmatpush.bf16.msra.mxu0 0
      %259 = vmatpush.bf16.msra.mxu0 0
      %260 = vmatpush.bf16.msra.mxu0 %v242
      %261 = vmatpush.bf16.msra.mxu0 %v222
      %262 = vmatpush.bf16.msra.mxu0 %v220
      %263 = vmatpush.bf16.msra.mxu0 %v218
      %264 = vmatpush.bf16.msra.mxu0 %v216
      %265 = vmatmul.bf16.gmra.mxu0 %v235
      %v266 = vpop.f32.mrf.mxu0
      %v267 = vadd.f32 %v186, %v266
      %v268 = vpop.f32.mrf.mxu0
      %269 = vdwg.mxu0
      %v270 = vmax.f32 %v254, 0.0
      %v271 = vmax.f32 %v267, 0.0
      %v272 = vpack.c.bf16 %v271, %v270
      %273 = vst [vmem:[%s170] sm:$0xff] %v272
      %p274 = scmp.lt.s32.totalorder %s14, 1
      %s275 = scalar_select %p274, %s14, 1
      %s276 = smul.addr %s275, 2
      %s277 = smul.addr %s276, 4
      %s278 = scalar_lea.vmem %s3, %s277
      // Predicated region
      $region33: #{forward.31} parent=31 // pred_check
        %p279 = pneg %p100
      $region34: #{forward.31} parent=31 // pred_check_branch
        %281 = sbr.rel (%p279) target = $region36
      $region35: #{forward.31} parent=31 // pred_region
        _
      $region36: #{forward.31} parent=31 // pred_fallthru
        _
    $region32: #{forward.31} parent=5 // pred_fallthru
      _
    %p282 = scmp.le.s32.totalorder 2, %s9
    // Predicated region
    $region37: #{forward.31} parent=5 // pred_check
      %p283 = pneg %p282
    $region38: #{forward.31} parent=5 // pred_check_branch
      %285 = sbr.rel (%p283) target = $region40
    $region39: #{forward.31} parent=5 // pred_region
      %s286 = ssub.s32 %s9, 2
      // Predicated region
      $region41: #{forward.31} parent=39 // pred_check
        %p287 = pneg %p106
      $region42: #{forward.31} parent=39 // pred_check_branch
        %289 = sbr.rel (%p287) target = $region44
      $region43: #{forward.31} parent=39 // pred_region
        %p290 = scmp.lt.s32.totalorder %s15, 1
        %s291 = scalar_select %p290, %s15, 1
        %s292 = smul.addr %s291, 2
        %s293 = smul.addr %s292, 4
        %s294 = scalar_lea.vmem %s3, %s293
      $region44: #{forward.31} parent=39 // pred_fallthru
        _
    $region40: #{forward.31} parent=5 // pred_fallthru
      _
  $region6: #{forward.31} parent=0 // loop_footer
    %s13 = sadd.s32 1, %s9
  $region7: #{forward.31} parent=0 // loop_footer_branch
    %8 = sbr.rel target = $region3
  $region8: #{forward.31} parent=0 // loop_exit
    _

// kernel: forward.33
$region0: #{forward.33}
  #allocation0 [shape = 'u32[]', space=smem, size = 0x4, offset = 0x4, fixed_abs, tag = 'smem constant byte address 0x4 - core index']
  #allocation1 [shape = 'u32[72,128]{1,0:T(1,128)}', space=vmem, size = 0x9000, scoped, tag = 'internal scratch']
  %s0 = inlined_call_operand.vmem [shape: bf16[2,8,64], index: 0, kind: input, shape index: {}]
  %s1 = inlined_call_operand.vmem [shape: bf16[2,8,64], index: 1, kind: input, shape index: {}]
  %s2 = inlined_call_operand.vmem [shape: bf16[2,8,64], index: 2, kind: input, shape index: {}]
  %s3 = inlined_call_operand.vmem [shape: bf16[2,8,64], index: 3, kind: input, shape index: {}]
  %s4 = inlined_call_operand.vmem [shape: bf16[2,8,64], index: 4, kind: output, shape index: {}]
  %s5 = sld [smem:[#allocation0]]
  $region49: #{forward.33} parent=0
    _
  %s7 = ssub.s32 1, %s5
  %s8 = scalar_select 0, %s7, %s5
  loop: start=0, step=1, limit=4
  $region2: #{forward.33} parent=0 // loop_pre_header
    _
  $region3: #{forward.33} parent=0 // loop_header
    %s10 = sphi 0, %s14
    %p11 = scmp.ge.s32.totalorder %s10, 4
    %s20 = sphi 0, %s22
    %s23 = sphi 0, %s20
    %s24 = sphi 0, %s23
    %s40 = sphi 0, %s24
    %s46 = sphi 0, %s48
    %s49 = sphi 0, %s46
    %s50 = sphi 0, %s49
    %s66 = sphi 0, %s50
    %s72 = sphi 0, %s74
    %s75 = sphi 0, %s72
    %s76 = sphi 0, %s75
    %s92 = sphi 0, %s76
    %s98 = sphi 0, %s100
    %s101 = sphi 0, %s98
    %s102 = sphi 0, %s101
    %s118 = sphi 0, %s102
    %s124 = sphi 0, %s126
    %s127 = sphi 0, %s124
    %s128 = sphi 0, %s127
    %s144 = sphi 0, %s128
  $region4: #{forward.33} parent=0 // loop_header_branch
    %13 = sbr.rel (%p11) target = $region8
  $region5: #{forward.33} parent=0 // loop_body
    %s15 = ssub.s32 %s10, 1
    %s16 = ssub.s32 %s10, 2
    %s17 = sadd.s32 %s10, 1
    %s18 = ssub.s32 %s10, %s17
    %p19 = scmp.eq.s32.totalorder %s18, 0
    %s21 = sadd.s32 %s20, 1
    %s22 = scalar_select %p19, %s20, %s21
    %p25 = pneg %p19
    %p26 = scmp.eq.s32.totalorder %s10, 1
    %p27 = por %p25, %p26
    %p28 = scmp.ne.s32.totalorder %s20, %s23
    %p29 = scmp.eq.s32.totalorder %s10, 0
    %p30 = por %p28, %p29
    %p31 = scmp.ne.s32.totalorder %s20, %s23
    %p32 = scmp.eq.s32.totalorder %s15, 1
    %p33 = por %p31, %p32
    %p34 = scmp.ne.s32.totalorder %s23, %s24
    %p35 = scmp.eq.s32.totalorder %s15, 0
    %p36 = por %p34, %p35
    %p37 = scmp.ne.s32.totalorder %s23, %s24
    %p38 = scmp.eq.s32.totalorder %s16, 1
    %p39 = por %p37, %p38
    %p41 = scmp.ne.s32.totalorder %s24, %s40
    %p42 = scmp.eq.s32.totalorder %s16, 0
    %p43 = por %p41, %p42
    %s44 = ssub.s32 %s10, %s17
    %p45 = scmp.eq.s32.totalorder %s44, 0
    %s47 = sadd.s32 %s46, 1
    %s48 = scalar_select %p45, %s46, %s47
    %p51 = pneg %p45
    %p52 = scmp.eq.s32.totalorder %s10, 1
    %p53 = por %p51, %p52
    %p54 = scmp.ne.s32.totalorder %s46, %s49
    %p55 = scmp.eq.s32.totalorder %s10, 0
    %p56 = por %p54, %p55
    %p57 = scmp.ne.s32.totalorder %s46, %s49
    %p58 = scmp.eq.s32.totalorder %s15, 1
    %p59 = por %p57, %p58
    %p60 = scmp.ne.s32.totalorder %s49, %s50
    %p61 = scmp.eq.s32.totalorder %s15, 0
    %p62 = por %p60, %p61
    %p63 = scmp.ne.s32.totalorder %s49, %s50
    %p64 = scmp.eq.s32.totalorder %s16, 1
    %p65 = por %p63, %p64
    %p67 = scmp.ne.s32.totalorder %s50, %s66
    %p68 = scmp.eq.s32.totalorder %s16, 0
    %p69 = por %p67, %p68
    %s70 = ssub.s32 %s10, %s17
    %p71 = scmp.eq.s32.totalorder %s70, 0
    %s73 = sadd.s32 %s72, 1
    %s74 = scalar_select %p71, %s72, %s73
    %p77 = pneg %p71
    %p78 = scmp.eq.s32.totalorder %s10, 1
    %p79 = por %p77, %p78
    %p80 = scmp.ne.s32.totalorder %s72, %s75
    %p81 = scmp.eq.s32.totalorder %s10, 0
    %p82 = por %p80, %p81
    %p83 = scmp.ne.s32.totalorder %s72, %s75
    %p84 = scmp.eq.s32.totalorder %s15, 1
    %p85 = por %p83, %p84
    %p86 = scmp.ne.s32.totalorder %s75, %s76
    %p87 = scmp.eq.s32.totalorder %s15, 0
    %p88 = por %p86, %p87
    %p89 = scmp.ne.s32.totalorder %s75, %s76
    %p90 = scmp.eq.s32.totalorder %s16, 1
    %p91 = por %p89, %p90
    %p93 = scmp.ne.s32.totalorder %s76, %s92
    %p94 = scmp.eq.s32.totalorder %s16, 0
    %p95 = por %p93, %p94
    %s96 = ssub.s32 %s10, %s17
    %p97 = scmp.eq.s32.totalorder %s96, 0
    %s99 = sadd.s32 %s98, 1
    %s100 = scalar_select %p97, %s98, %s99
    %p103 = pneg %p97
    %p104 = scmp.eq.s32.totalorder %s10, 1
    %p105 = por %p103, %p104
    %p106 = scmp.ne.s32.totalorder %s98, %s101
    %p107 = scmp.eq.s32.totalorder %s10, 0
    %p108 = por %p106, %p107
    %p109 = scmp.ne.s32.totalorder %s98, %s101
    %p110 = scmp.eq.s32.totalorder %s15, 1
    %p111 = por %p109, %p110
    %p112 = scmp.ne.s32.totalorder %s101, %s102
    %p113 = scmp.eq.s32.totalorder %s15, 0
    %p114 = por %p112, %p113
    %p115 = scmp.ne.s32.totalorder %s101, %s102
    %p116 = scmp.eq.s32.totalorder %s16, 1
    %p117 = por %p115, %p116
    %p119 = scmp.ne.s32.totalorder %s102, %s118
    %p120 = scmp.eq.s32.totalorder %s16, 0
    %p121 = por %p119, %p120
    %s122 = ssub.s32 %s10, %s17
    %p123 = scmp.eq.s32.totalorder %s122, 0
    %s125 = sadd.s32 %s124, 1
    %s126 = scalar_select %p123, %s124, %s125
    %p129 = pneg %p123
    %p130 = scmp.eq.s32.totalorder %s10, 1
    %p131 = por %p129, %p130
    %p132 = scmp.ne.s32.totalorder %s124, %s127
    %p133 = scmp.eq.s32.totalorder %s10, 0
    %p134 = por %p132, %p133
    %p135 = scmp.ne.s32.totalorder %s124, %s127
    %p136 = scmp.eq.s32.totalorder %s15, 1
    %p137 = por %p135, %p136
    %p138 = scmp.ne.s32.totalorder %s127, %s128
    %p139 = scmp.eq.s32.totalorder %s15, 0
    %p140 = por %p138, %p139
    %p141 = scmp.ne.s32.totalorder %s127, %s128
    %p142 = scmp.eq.s32.totalorder %s16, 1
    %p143 = por %p141, %p142
    %p145 = scmp.ne.s32.totalorder %s128, %s144
    %p146 = scmp.eq.s32.totalorder %s16, 0
    %p147 = por %p145, %p146
    %p148 = scmp.le.s32.totalorder 1, %s10
    %p149 = scmp.lt.s32.totalorder %s10, 3
    %p150 = pnand %p148, %p149
    %p151 = pneg %p150
    // Predicated region
    $region9: #{forward.33} parent=5 // pred_check
      _
    $region10: #{forward.33} parent=5 // pred_check_branch
      %153 = sbr.rel (%p150) target = $region12
    $region11: #{forward.33} parent=5 // pred_region
      %s154 = ssub.s32 %s10, 1
    $region12: #{forward.33} parent=5 // pred_fallthru
      _
    %p155 = scmp.lt.s32.totalorder %s10, 2
    // Predicated region
    $region13: #{forward.33} parent=5 // pred_check
      %p156 = pneg %p155
    $region14: #{forward.33} parent=5 // pred_check_branch
      %158 = sbr.rel (%p156) target = $region16
    $region15: #{forward.33} parent=5 // pred_region
      // Predicated region
      $region17: #{forward.33} parent=15 // pred_check
        %p159 = pneg %p30
      $region18: #{forward.33} parent=15 // pred_check_branch
        %161 = sbr.rel (%p159) target = $region20
      $region19: #{forward.33} parent=15 // pred_region
        %p162 = scmp.lt.s32.totalorder %s10, 1
        %s163 = scalar_select %p162, %s10, 1
        %s164 = smul.addr %s163, 4
        %s165 = scalar_lea.vmem %s0, %s164
      $region20: #{forward.33} parent=15 // pred_fallthru
        _
      // Predicated region
      $region21: #{forward.33} parent=15 // pred_check
        %p166 = pneg %p56
      $region22: #{forward.33} parent=15 // pred_check_branch
        %168 = sbr.rel (%p166) target = $region24
      $region23: #{forward.33} parent=15 // pred_region
        %p169 = scmp.lt.s32.totalorder %s10, 1
        %s170 = scalar_select %p169, %s10, 1
        %s171 = smul.addr %s170, 4
        %s172 = scalar_lea.vmem %s1, %s171
      $region24: #{forward.33} parent=15 // pred_fallthru
        _
      // Predicated region
      $region25: #{forward.33} parent=15 // pred_check
        %p173 = pneg %p82
      $region26: #{forward.33} parent=15 // pred_check_branch
        %175 = sbr.rel (%p173) target = $region28
      $region27: #{forward.33} parent=15 // pred_region
        %p176 = scmp.lt.s32.totalorder %s10, 1
        %s177 = scalar_select %p176, %s10, 1
        %s178 = smul.addr %s177, 4
        %s179 = scalar_lea.vmem %s2, %s178
      $region28: #{forward.33} parent=15 // pred_fallthru
        _
      // Predicated region
      $region29: #{forward.33} parent=15 // pred_check
        %p180 = pneg %p108
      $region30: #{forward.33} parent=15 // pred_check_branch
        %182 = sbr.rel (%p180) target = $region32
      $region31: #{forward.33} parent=15 // pred_region
        %p183 = scmp.lt.s32.totalorder %s10, 1
        %s184 = scalar_select %p183, %s10, 1
        %s185 = smul.addr %s184, 4
        %s186 = scalar_lea.vmem %s3, %s185
      $region32: #{forward.33} parent=15 // pred_fallthru
        _
    $region16: #{forward.33} parent=5 // pred_fallthru
      _
    %p187 = scmp.le.s32.totalorder 1, %s10
    %p188 = scmp.lt.s32.totalorder %s10, 3
    %p189 = pnand %p187, %p188
    %p190 = pneg %p189
    // Predicated region
    $region33: #{forward.33} parent=5 // pred_check
      _
    $region34: #{forward.33} parent=5 // pred_check_branch
      %192 = sbr.rel (%p189) target = $region36
    $region35: #{forward.33} parent=5 // pred_region
      %s193 = ssub.s32 %s10, 1
      %p194 = scmp.lt.s32.totalorder %s15, 1
      %s195 = scalar_select %p194, %s15, 1
      %s196 = smul.addr %s195, 4
      %s197 = scalar_lea.vmem %s0, %s196
      %p198 = pneg %p36
      %p199 = pneg %p33
      %p200 = scmp.lt.s32.totalorder %s15, 1
      %s201 = scalar_select %p200, %s15, 1
      %s202 = smul.addr %s201, 4
      %s203 = scalar_lea.vmem %s1, %s202
      %p204 = pneg %p62
      %p205 = pneg %p59
      %p206 = scmp.lt.s32.totalorder %s15, 1
      %s207 = scalar_select %p206, %s15, 1
      %s208 = smul.addr %s207, 4
      %s209 = scalar_lea.vmem %s2, %s208
      %p210 = pneg %p88
      %p211 = pneg %p85
      %p212 = scmp.lt.s32.totalorder %s15, 1
      %s213 = scalar_select %p212, %s15, 1
      %s214 = smul.addr %s213, 4
      %s215 = scalar_lea.vmem %s3, %s214
      %p216 = pneg %p114
      %p217 = pneg %p111
      %p218 = pneg %p140
      %p219 = pneg %p137
      %p220 = scmp.lt.s32.totalorder %s15, 1
      %s221 = scalar_select %p220, %s15, 1
      %s222 = smul.addr %s221, 4
      %s223 = scalar_lea.vmem %s4, %s222
      %p224 = scmp.lt.s32.totalorder %s15, 1
      %s225 = scalar_select %p224, %s15, 1
      %s226 = smul.addr %s225, 4
      %s227 = scalar_lea.vmem %s0, %s226
      %p228 = scmp.lt.s32.totalorder %s15, 1
      %s229 = scalar_select %p228, %s15, 1
      %s230 = smul.addr %s229, 4
      %s231 = scalar_lea.vmem %s1, %s230
      %p232 = scmp.lt.s32.totalorder %s15, 1
      %s233 = scalar_select %p232, %s15, 1
      %s234 = smul.addr %s233, 4
      %s235 = scalar_lea.vmem %s2, %s234
      %p236 = scmp.lt.s32.totalorder %s15, 1
      %s237 = scalar_select %p236, %s15, 1
      %s238 = smul.addr %s237, 4
      %s239 = scalar_lea.vmem %s3, %s238
      %p240 = scmp.lt.s32.totalorder %s15, 1
      %s241 = scalar_select %p240, %s15, 1
      %s242 = smul.addr %s241, 4
      %s243 = scalar_lea.vmem %s4, %s242
      %v244 = vld [vmem:[%s227] sm:$0xf]
      %v245 = vld [vmem:[%s231] sm:$0xf]
      %v246 = vunpack.c.l.bf16 %v244
      %v247 = vunpack.c.l.bf16 %v245
      %v248 = vmax.f32 %v246, %v247
      %v249 = vpack.c.bf16 %v248, %v248
      %v250 = vld [vmem:[%s235] sm:$0xf]
      %v251 = vld [vmem:[%s239] sm:$0xf]
      %v252 = vunpack.c.l.bf16 %v250
      %v253 = vunpack.c.l.bf16 %v251
      %v254 = vmax.f32 %v252, %v253
      %v255 = vpack.c.bf16 %v254, %v254
      %v256 = vunpack.c.l.bf16 %v249
      %v257 = vunpack.c.l.bf16 %v255
      %v258 = vmax.f32 %v256, %v257
      %v259 = vpack.c.bf16 %v258, %v258
      %vm260 = vcmask 519168
      %261 = vst.msk [vmem:[%s243] sm:$0xf] %vm260, %v259
      %p262 = scmp.lt.s32.totalorder %s15, 1
      %s263 = scalar_select %p262, %s15, 1
      %s264 = smul.addr %s263, 4
      %s265 = scalar_lea.vmem %s4, %s264
      // Predicated region
      $region37: #{forward.33} parent=35 // pred_check
        %p266 = pneg %p137
      $region38: #{forward.33} parent=35 // pred_check_branch
        %268 = sbr.rel (%p266) target = $region40
      $region39: #{forward.33} parent=35 // pred_region
        _
      $region40: #{forward.33} parent=35 // pred_fallthru
        _
    $region36: #{forward.33} parent=5 // pred_fallthru
      _
    %p269 = scmp.le.s32.totalorder 2, %s10
    // Predicated region
    $region41: #{forward.33} parent=5 // pred_check
      %p270 = pneg %p269
    $region42: #{forward.33} parent=5 // pred_check_branch
      %272 = sbr.rel (%p270) target = $region44
    $region43: #{forward.33} parent=5 // pred_region
      %s273 = ssub.s32 %s10, 2
      // Predicated region
      $region45: #{forward.33} parent=43 // pred_check
        %p274 = pneg %p143
      $region46: #{forward.33} parent=43 // pred_check_branch
        %276 = sbr.rel (%p274) target = $region48
      $region47: #{forward.33} parent=43 // pred_region
        %p277 = scmp.lt.s32.totalorder %s16, 1
        %s278 = scalar_select %p277, %s16, 1
        %s279 = smul.addr %s278, 4
        %s280 = scalar_lea.vmem %s4, %s279
      $region48: #{forward.33} parent=43 // pred_fallthru
        _
    $region44: #{forward.33} parent=5 // pred_fallthru
      _
  $region6: #{forward.33} parent=0 // loop_footer
    %s14 = sadd.s32 1, %s10
  $region7: #{forward.33} parent=0 // loop_footer_branch
    %9 = sbr.rel target = $region3
  $region8: #{forward.33} parent=0 // loop_exit
    _

// kernel: forward.34
$region0: #{forward.34}
  #allocation0 [shape = 'u32[]', space=smem, size = 0x4, offset = 0x4, fixed_abs, tag = 'smem constant byte address 0x4 - core index']
  #allocation1 [shape = 'u32[72,128]{1,0:T(1,128)}', space=vmem, size = 0x9000, scoped, tag = 'internal scratch']
  %s0 = inlined_call_operand.vmem [shape: bf16[2,72,64], index: 0, kind: input, shape index: {}]
  %s1 = inlined_call_operand.vmem [shape: bf16[8,72], index: 1, kind: input, shape index: {}]
  %s2 = inlined_call_operand.vmem [shape: f32[8,1], index: 2, kind: input, shape index: {}]
  %s3 = inlined_call_operand.vmem [shape: bf16[2,8,64], index: 3, kind: output, shape index: {}]
  %s4 = sld [smem:[#allocation0]]
  $region45: #{forward.34} parent=0
    _
  %s6 = ssub.s32 1, %s4
  %s7 = scalar_select 0, %s6, %s4
  loop: start=0, step=1, limit=4
  $region2: #{forward.34} parent=0 // loop_pre_header
    _
  $region3: #{forward.34} parent=0 // loop_header
    %s9 = sphi 0, %s13
    %p10 = scmp.ge.s32.totalorder %s9, 4
    %s19 = sphi 0, %s21
    %s22 = sphi 0, %s19
    %s23 = sphi 0, %s22
    %s39 = sphi 0, %s23
    %s43 = sphi 0, %s43
    %s45 = sphi 0, %s43
    %s46 = sphi 0, %s45
    %s60 = sphi 0, %s46
    %s64 = sphi 0, %s64
    %s66 = sphi 0, %s64
    %s67 = sphi 0, %s66
    %s81 = sphi 0, %s67
    %s87 = sphi 0, %s89
    %s90 = sphi 0, %s87
    %s91 = sphi 0, %s90
    %s107 = sphi 0, %s91
  $region4: #{forward.34} parent=0 // loop_header_branch
    %12 = sbr.rel (%p10) target = $region8
  $region5: #{forward.34} parent=0 // loop_body
    %s14 = ssub.s32 %s9, 1
    %s15 = ssub.s32 %s9, 2
    %s16 = sadd.s32 %s9, 1
    %s17 = ssub.s32 %s9, %s16
    %p18 = scmp.eq.s32.totalorder %s17, 0
    %s20 = sadd.s32 %s19, 1
    %s21 = scalar_select %p18, %s19, %s20
    %p24 = pneg %p18
    %p25 = scmp.eq.s32.totalorder %s9, 1
    %p26 = por %p24, %p25
    %p27 = scmp.ne.s32.totalorder %s19, %s22
    %p28 = scmp.eq.s32.totalorder %s9, 0
    %p29 = por %p27, %p28
    %p30 = scmp.ne.s32.totalorder %s19, %s22
    %p31 = scmp.eq.s32.totalorder %s14, 1
    %p32 = por %p30, %p31
    %p33 = scmp.ne.s32.totalorder %s22, %s23
    %p34 = scmp.eq.s32.totalorder %s14, 0
    %p35 = por %p33, %p34
    %p36 = scmp.ne.s32.totalorder %s22, %s23
    %p37 = scmp.eq.s32.totalorder %s15, 1
    %p38 = por %p36, %p37
    %p40 = scmp.ne.s32.totalorder %s23, %s39
    %p41 = scmp.eq.s32.totalorder %s15, 0
    %p42 = por %p40, %p41
    %s44 = sadd.s32 %s43, 1
    %p47 = scmp.eq.s32.totalorder %s9, 1
    %p48 = scmp.ne.s32.totalorder %s43, %s45
    %p49 = scmp.eq.s32.totalorder %s9, 0
    %p50 = por %p48, %p49
    %p51 = scmp.ne.s32.totalorder %s43, %s45
    %p52 = scmp.eq.s32.totalorder %s14, 1
    %p53 = por %p51, %p52
    %p54 = scmp.ne.s32.totalorder %s45, %s46
    %p55 = scmp.eq.s32.totalorder %s14, 0
    %p56 = por %p54, %p55
    %p57 = scmp.ne.s32.totalorder %s45, %s46
    %p58 = scmp.eq.s32.totalorder %s15, 1
    %p59 = por %p57, %p58
    %p61 = scmp.ne.s32.totalorder %s46, %s60
    %p62 = scmp.eq.s32.totalorder %s15, 0
    %p63 = por %p61, %p62
    %s65 = sadd.s32 %s64, 1
    %p68 = scmp.eq.s32.totalorder %s9, 1
    %p69 = scmp.ne.s32.totalorder %s64, %s66
    %p70 = scmp.eq.s32.totalorder %s9, 0
    %p71 = por %p69, %p70
    %p72 = scmp.ne.s32.totalorder %s64, %s66
    %p73 = scmp.eq.s32.totalorder %s14, 1
    %p74 = por %p72, %p73
    %p75 = scmp.ne.s32.totalorder %s66, %s67
    %p76 = scmp.eq.s32.totalorder %s14, 0
    %p77 = por %p75, %p76
    %p78 = scmp.ne.s32.totalorder %s66, %s67
    %p79 = scmp.eq.s32.totalorder %s15, 1
    %p80 = por %p78, %p79
    %p82 = scmp.ne.s32.totalorder %s67, %s81
    %p83 = scmp.eq.s32.totalorder %s15, 0
    %p84 = por %p82, %p83
    %s85 = ssub.s32 %s9, %s16
    %p86 = scmp.eq.s32.totalorder %s85, 0
    %s88 = sadd.s32 %s87, 1
    %s89 = scalar_select %p86, %s87, %s88
    %p92 = pneg %p86
    %p93 = scmp.eq.s32.totalorder %s9, 1
    %p94 = por %p92, %p93
    %p95 = scmp.ne.s32.totalorder %s87, %s90
    %p96 = scmp.eq.s32.totalorder %s9, 0
    %p97 = por %p95, %p96
    %p98 = scmp.ne.s32.totalorder %s87, %s90
    %p99 = scmp.eq.s32.totalorder %s14, 1
    %p100 = por %p98, %p99
    %p101 = scmp.ne.s32.totalorder %s90, %s91
    %p102 = scmp.eq.s32.totalorder %s14, 0
    %p103 = por %p101, %p102
    %p104 = scmp.ne.s32.totalorder %s90, %s91
    %p105 = scmp.eq.s32.totalorder %s15, 1
    %p106 = por %p104, %p105
    %p108 = scmp.ne.s32.totalorder %s91, %s107
    %p109 = scmp.eq.s32.totalorder %s15, 0
    %p110 = por %p108, %p109
    %p111 = scmp.le.s32.totalorder 1, %s9
    %p112 = scmp.lt.s32.totalorder %s9, 3
    %p113 = pnand %p111, %p112
    %p114 = pneg %p113
    // Predicated region
    $region9: #{forward.34} parent=5 // pred_check
      _
    $region10: #{forward.34} parent=5 // pred_check_branch
      %116 = sbr.rel (%p113) target = $region12
    $region11: #{forward.34} parent=5 // pred_region
      %s117 = ssub.s32 %s9, 1
      // Predicated region
      $region13: #{forward.34} parent=11 // pred_check
        %p118 = pneg %p56
      $region14: #{forward.34} parent=11 // pred_check_branch
        %120 = sbr.rel (%p118) target = $region16
      $region15: #{forward.34} parent=11 // pred_region
        _
      $region16: #{forward.34} parent=11 // pred_fallthru
        _
      // Predicated region
      $region17: #{forward.34} parent=11 // pred_check
        %p121 = pneg %p77
      $region18: #{forward.34} parent=11 // pred_check_branch
        %123 = sbr.rel (%p121) target = $region20
      $region19: #{forward.34} parent=11 // pred_region
        _
      $region20: #{forward.34} parent=11 // pred_fallthru
        _
    $region12: #{forward.34} parent=5 // pred_fallthru
      _
    %p124 = scmp.lt.s32.totalorder %s9, 2
    // Predicated region
    $region21: #{forward.34} parent=5 // pred_check
      %p125 = pneg %p124
    $region22: #{forward.34} parent=5 // pred_check_branch
      %127 = sbr.rel (%p125) target = $region24
    $region23: #{forward.34} parent=5 // pred_region
      // Predicated region
      $region25: #{forward.34} parent=23 // pred_check
        %p128 = pneg %p29
      $region26: #{forward.34} parent=23 // pred_check_branch
        %130 = sbr.rel (%p128) target = $region28
      $region27: #{forward.34} parent=23 // pred_region
        %p131 = scmp.lt.s32.totalorder %s9, 1
        %s132 = scalar_select %p131, %s9, 1
        %s133 = smul.addr %s132, 9
        %s134 = smul.addr %s133, 4
        %s135 = scalar_lea.vmem %s0, %s134
      $region28: #{forward.34} parent=23 // pred_fallthru
        _
    $region24: #{forward.34} parent=5 // pred_fallthru
      _
    %p136 = scmp.le.s32.totalorder 1, %s9
    %p137 = scmp.lt.s32.totalorder %s9, 3
    %p138 = pnand %p136, %p137
    %p139 = pneg %p138
    // Predicated region
    $region29: #{forward.34} parent=5 // pred_check
      _
    $region30: #{forward.34} parent=5 // pred_check_branch
      %141 = sbr.rel (%p138) target = $region32
    $region31: #{forward.34} parent=5 // pred_region
      %s142 = ssub.s32 %s9, 1
      %p143 = scmp.lt.s32.totalorder %s14, 1
      %s144 = scalar_select %p143, %s14, 1
      %s145 = smul.addr %s144, 9
      %s146 = smul.addr %s145, 4
      %s147 = scalar_lea.vmem %s0, %s146
      %p148 = pneg %p35
      %p149 = pneg %p32
      %p150 = pneg %p56
      %p151 = pneg %p53
      %p152 = pneg %p77
      %p153 = pneg %p74
      %p154 = pneg %p103
      %p155 = pneg %p100
      %p156 = scmp.lt.s32.totalorder %s14, 1
      %s157 = scalar_select %p156, %s14, 1
      %s158 = smul.addr %s157, 4
      %s159 = scalar_lea.vmem %s3, %s158
      %p160 = scmp.lt.s32.totalorder %s14, 1
      %s161 = scalar_select %p160, %s14, 1
      %s162 = smul.addr %s161, 9
      %s163 = smul.addr %s162, 4
      %s164 = scalar_lea.vmem %s0, %s163
      %p165 = scmp.lt.s32.totalorder %s14, 1
      %s166 = scalar_select %p165, %s14, 1
      %s167 = smul.addr %s166, 4
      %s168 = scalar_lea.vmem %s3, %s167
      %v170 = vld [vmem:[%s1] sm:$0xf]
      %v171 = vld [vmem:[%s164] sm:$0xf]
      %v172 = vld [vmem:[%s164 + $0x4] sm:$0xf]
      %v173 = vld [vmem:[%s164 + $0x8] sm:$0xf]
      %v174 = vld [vmem:[%s164 + $0xc] sm:$0xf]
      %v175 = vld [vmem:[%s164 + $0x10] sm:$0xf]
      %v176 = vld [vmem:[%s164 + $0x14] sm:$0xf]
      %v177 = vld [vmem:[%s164 + $0x18] sm:$0xf]
      %v178 = vld [vmem:[%s164 + $0x1c] sm:$0xf]
      %v179 = vld [vmem:[%s164 + $0x20] sm:$0xf]
      %v180 = vld [vmem:[%s2] sm:$0xff]
      %182 = vset.pattern.permute.xlu0 0
      %183 = vperm.xlu0 %182, %v180
      %v184 = vpop.permute.xlu0 %183
      %v195 = vunpack.c.l.b16 %v171
      %v196 = vunpack.c.l.b16 %v172
      %v197 = vunpack.c.l.b16 %v173
      %v198 = vunpack.c.l.b16 %v174
      %v199 = vunpack.c.l.b16 %v175
      %v200 = vunpack.c.l.b16 %v176
      %v201 = vunpack.c.l.b16 %v177
      %v202 = vunpack.c.l.b16 %v178
      %v203 = vunpack.c.l.b16 %v179
      %v204 = vpack.c.b16 %v196, %v195
      %v205 = vpack.c.b16 %v198, %v197
      %v206 = vpack.c.b16 %v200, %v199
      %v207 = vpack.c.b16 %v202, %v201
      %v208 = vpack.c.b16 %v203, %v203
      %vm213 = vcmask 588800
      %v215 = vsel %vm213, %v170, 0
      %vm217 = vcmask 1043456
      %v219 = vsel %vm217, %v208, 0
      %221 = vmatpush.bf16.msra.mxu0 0
      %222 = vmatpush.bf16.msra.mxu0 0
      %223 = vmatpush.bf16.msra.mxu0 0
      %224 = vmatpush.bf16.msra.mxu0 %v219
      %225 = vmatpush.bf16.msra.mxu0 %v207
      %226 = vmatpush.bf16.msra.mxu0 %v206
      %227 = vmatpush.bf16.msra.mxu0 %v205
      %228 = vmatpush.bf16.msra.mxu0 %v204
      %229 = vmatmul.bf16.gmra.mxu0 %v215
      %v230 = vpop.f32.mrf.mxu0
      %v231 = vadd.f32 %v184, %v230
      %v232 = vpop.f32.mrf.mxu0
      %233 = vdwg.mxu0
      %v234 = vmax.f32 %v231, 0.0
      %v235 = vpack.c.bf16 %v234, %v234
      %vm236 = vcmask 519168
      %237 = vst.msk [vmem:[%s168] sm:$0xf] %vm236, %v235
      %p238 = scmp.lt.s32.totalorder %s14, 1
      %s239 = scalar_select %p238, %s14, 1
      %s240 = smul.addr %s239, 4
      %s241 = scalar_lea.vmem %s3, %s240
      // Predicated region
      $region33: #{forward.34} parent=31 // pred_check
        %p242 = pneg %p100
      $region34: #{forward.34} parent=31 // pred_check_branch
        %244 = sbr.rel (%p242) target = $region36
      $region35: #{forward.34} parent=31 // pred_region
        _
      $region36: #{forward.34} parent=31 // pred_fallthru
        _
    $region32: #{forward.34} parent=5 // pred_fallthru
      _
    %p245 = scmp.le.s32.totalorder 2, %s9
    // Predicated region
    $region37: #{forward.34} parent=5 // pred_check
      %p246 = pneg %p245
    $region38: #{forward.34} parent=5 // pred_check_branch
      %248 = sbr.rel (%p246) target = $region40
    $region39: #{forward.34} parent=5 // pred_region
      %s249 = ssub.s32 %s9, 2
      // Predicated region
      $region41: #{forward.34} parent=39 // pred_check
        %p250 = pneg %p106
      $region42: #{forward.34} parent=39 // pred_check_branch
        %252 = sbr.rel (%p250) target = $region44
      $region43: #{forward.34} parent=39 // pred_region
        %p253 = scmp.lt.s32.totalorder %s15, 1
        %s254 = scalar_select %p253, %s15, 1
        %s255 = smul.addr %s254, 4
        %s256 = scalar_lea.vmem %s3, %s255
      $region44: #{forward.34} parent=39 // pred_fallthru
        _
    $region40: #{forward.34} parent=5 // pred_fallthru
      _
  $region6: #{forward.34} parent=0 // loop_footer
    %s13 = sadd.s32 1, %s9
  $region7: #{forward.34} parent=0 // loop_footer_branch
    %8 = sbr.rel target = $region3
  $region8: #{forward.34} parent=0 // loop_exit
    _

// kernel: forward.36
$region0: #{forward.36}
  #allocation0 [shape = 'u32[]', space=smem, size = 0x4, offset = 0x4, fixed_abs, tag = 'smem constant byte address 0x4 - core index']
  #allocation1 [shape = 'u32[72,128]{1,0:T(1,128)}', space=vmem, size = 0x9000, scoped, tag = 'internal scratch']
  %s0 = inlined_call_operand.vmem [shape: bf16[2,8,16], index: 0, kind: input, shape index: {}]
  %s1 = inlined_call_operand.vmem [shape: bf16[2,8,16], index: 1, kind: input, shape index: {}]
  %s2 = inlined_call_operand.vmem [shape: bf16[2,8,16], index: 2, kind: input, shape index: {}]
  %s3 = inlined_call_operand.vmem [shape: bf16[2,8,16], index: 3, kind: input, shape index: {}]
  %s4 = inlined_call_operand.vmem [shape: bf16[2,8,16], index: 4, kind: output, shape index: {}]
  %s5 = sld [smem:[#allocation0]]
  $region49: #{forward.36} parent=0
    _
  %s7 = ssub.s32 1, %s5
  %s8 = scalar_select 0, %s7, %s5
  loop: start=0, step=1, limit=4
  $region2: #{forward.36} parent=0 // loop_pre_header
    _
  $region3: #{forward.36} parent=0 // loop_header
    %s10 = sphi 0, %s14
    %p11 = scmp.ge.s32.totalorder %s10, 4
    %s20 = sphi 0, %s22
    %s23 = sphi 0, %s20
    %s24 = sphi 0, %s23
    %s40 = sphi 0, %s24
    %s46 = sphi 0, %s48
    %s49 = sphi 0, %s46
    %s50 = sphi 0, %s49
    %s66 = sphi 0, %s50
    %s72 = sphi 0, %s74
    %s75 = sphi 0, %s72
    %s76 = sphi 0, %s75
    %s92 = sphi 0, %s76
    %s98 = sphi 0, %s100
    %s101 = sphi 0, %s98
    %s102 = sphi 0, %s101
    %s118 = sphi 0, %s102
    %s124 = sphi 0, %s126
    %s127 = sphi 0, %s124
    %s128 = sphi 0, %s127
    %s144 = sphi 0, %s128
  $region4: #{forward.36} parent=0 // loop_header_branch
    %13 = sbr.rel (%p11) target = $region8
  $region5: #{forward.36} parent=0 // loop_body
    %s15 = ssub.s32 %s10, 1
    %s16 = ssub.s32 %s10, 2
    %s17 = sadd.s32 %s10, 1
    %s18 = ssub.s32 %s10, %s17
    %p19 = scmp.eq.s32.totalorder %s18, 0
    %s21 = sadd.s32 %s20, 1
    %s22 = scalar_select %p19, %s20, %s21
    %p25 = pneg %p19
    %p26 = scmp.eq.s32.totalorder %s10, 1
    %p27 = por %p25, %p26
    %p28 = scmp.ne.s32.totalorder %s20, %s23
    %p29 = scmp.eq.s32.totalorder %s10, 0
    %p30 = por %p28, %p29
    %p31 = scmp.ne.s32.totalorder %s20, %s23
    %p32 = scmp.eq.s32.totalorder %s15, 1
    %p33 = por %p31, %p32
    %p34 = scmp.ne.s32.totalorder %s23, %s24
    %p35 = scmp.eq.s32.totalorder %s15, 0
    %p36 = por %p34, %p35
    %p37 = scmp.ne.s32.totalorder %s23, %s24
    %p38 = scmp.eq.s32.totalorder %s16, 1
    %p39 = por %p37, %p38
    %p41 = scmp.ne.s32.totalorder %s24, %s40
    %p42 = scmp.eq.s32.totalorder %s16, 0
    %p43 = por %p41, %p42
    %s44 = ssub.s32 %s10, %s17
    %p45 = scmp.eq.s32.totalorder %s44, 0
    %s47 = sadd.s32 %s46, 1
    %s48 = scalar_select %p45, %s46, %s47
    %p51 = pneg %p45
    %p52 = scmp.eq.s32.totalorder %s10, 1
    %p53 = por %p51, %p52
    %p54 = scmp.ne.s32.totalorder %s46, %s49
    %p55 = scmp.eq.s32.totalorder %s10, 0
    %p56 = por %p54, %p55
    %p57 = scmp.ne.s32.totalorder %s46, %s49
    %p58 = scmp.eq.s32.totalorder %s15, 1
    %p59 = por %p57, %p58
    %p60 = scmp.ne.s32.totalorder %s49, %s50
    %p61 = scmp.eq.s32.totalorder %s15, 0
    %p62 = por %p60, %p61
    %p63 = scmp.ne.s32.totalorder %s49, %s50
    %p64 = scmp.eq.s32.totalorder %s16, 1
    %p65 = por %p63, %p64
    %p67 = scmp.ne.s32.totalorder %s50, %s66
    %p68 = scmp.eq.s32.totalorder %s16, 0
    %p69 = por %p67, %p68
    %s70 = ssub.s32 %s10, %s17
    %p71 = scmp.eq.s32.totalorder %s70, 0
    %s73 = sadd.s32 %s72, 1
    %s74 = scalar_select %p71, %s72, %s73
    %p77 = pneg %p71
    %p78 = scmp.eq.s32.totalorder %s10, 1
    %p79 = por %p77, %p78
    %p80 = scmp.ne.s32.totalorder %s72, %s75
    %p81 = scmp.eq.s32.totalorder %s10, 0
    %p82 = por %p80, %p81
    %p83 = scmp.ne.s32.totalorder %s72, %s75
    %p84 = scmp.eq.s32.totalorder %s15, 1
    %p85 = por %p83, %p84
    %p86 = scmp.ne.s32.totalorder %s75, %s76
    %p87 = scmp.eq.s32.totalorder %s15, 0
    %p88 = por %p86, %p87
    %p89 = scmp.ne.s32.totalorder %s75, %s76
    %p90 = scmp.eq.s32.totalorder %s16, 1
    %p91 = por %p89, %p90
    %p93 = scmp.ne.s32.totalorder %s76, %s92
    %p94 = scmp.eq.s32.totalorder %s16, 0
    %p95 = por %p93, %p94
    %s96 = ssub.s32 %s10, %s17
    %p97 = scmp.eq.s32.totalorder %s96, 0
    %s99 = sadd.s32 %s98, 1
    %s100 = scalar_select %p97, %s98, %s99
    %p103 = pneg %p97
    %p104 = scmp.eq.s32.totalorder %s10, 1
    %p105 = por %p103, %p104
    %p106 = scmp.ne.s32.totalorder %s98, %s101
    %p107 = scmp.eq.s32.totalorder %s10, 0
    %p108 = por %p106, %p107
    %p109 = scmp.ne.s32.totalorder %s98, %s101
    %p110 = scmp.eq.s32.totalorder %s15, 1
    %p111 = por %p109, %p110
    %p112 = scmp.ne.s32.totalorder %s101, %s102
    %p113 = scmp.eq.s32.totalorder %s15, 0
    %p114 = por %p112, %p113
    %p115 = scmp.ne.s32.totalorder %s101, %s102
    %p116 = scmp.eq.s32.totalorder %s16, 1
    %p117 = por %p115, %p116
    %p119 = scmp.ne.s32.totalorder %s102, %s118
    %p120 = scmp.eq.s32.totalorder %s16, 0
    %p121 = por %p119, %p120
    %s122 = ssub.s32 %s10, %s17
    %p123 = scmp.eq.s32.totalorder %s122, 0
    %s125 = sadd.s32 %s124, 1
    %s126 = scalar_select %p123, %s124, %s125
    %p129 = pneg %p123
    %p130 = scmp.eq.s32.totalorder %s10, 1
    %p131 = por %p129, %p130
    %p132 = scmp.ne.s32.totalorder %s124, %s127
    %p133 = scmp.eq.s32.totalorder %s10, 0
    %p134 = por %p132, %p133
    %p135 = scmp.ne.s32.totalorder %s124, %s127
    %p136 = scmp.eq.s32.totalorder %s15, 1
    %p137 = por %p135, %p136
    %p138 = scmp.ne.s32.totalorder %s127, %s128
    %p139 = scmp.eq.s32.totalorder %s15, 0
    %p140 = por %p138, %p139
    %p141 = scmp.ne.s32.totalorder %s127, %s128
    %p142 = scmp.eq.s32.totalorder %s16, 1
    %p143 = por %p141, %p142
    %p145 = scmp.ne.s32.totalorder %s128, %s144
    %p146 = scmp.eq.s32.totalorder %s16, 0
    %p147 = por %p145, %p146
    %p148 = scmp.le.s32.totalorder 1, %s10
    %p149 = scmp.lt.s32.totalorder %s10, 3
    %p150 = pnand %p148, %p149
    %p151 = pneg %p150
    // Predicated region
    $region9: #{forward.36} parent=5 // pred_check
      _
    $region10: #{forward.36} parent=5 // pred_check_branch
      %153 = sbr.rel (%p150) target = $region12
    $region11: #{forward.36} parent=5 // pred_region
      %s154 = ssub.s32 %s10, 1
    $region12: #{forward.36} parent=5 // pred_fallthru
      _
    %p155 = scmp.lt.s32.totalorder %s10, 2
    // Predicated region
    $region13: #{forward.36} parent=5 // pred_check
      %p156 = pneg %p155
    $region14: #{forward.36} parent=5 // pred_check_branch
      %158 = sbr.rel (%p156) target = $region16
    $region15: #{forward.36} parent=5 // pred_region
      // Predicated region
      $region17: #{forward.36} parent=15 // pred_check
        %p159 = pneg %p30
      $region18: #{forward.36} parent=15 // pred_check_branch
        %161 = sbr.rel (%p159) target = $region20
      $region19: #{forward.36} parent=15 // pred_region
        %p162 = scmp.lt.s32.totalorder %s10, 1
        %s163 = scalar_select %p162, %s10, 1
        %s164 = smul.addr %s163, 4
        %s165 = scalar_lea.vmem %s0, %s164
      $region20: #{forward.36} parent=15 // pred_fallthru
        _
      // Predicated region
      $region21: #{forward.36} parent=15 // pred_check
        %p166 = pneg %p56
      $region22: #{forward.36} parent=15 // pred_check_branch
        %168 = sbr.rel (%p166) target = $region24
      $region23: #{forward.36} parent=15 // pred_region
        %p169 = scmp.lt.s32.totalorder %s10, 1
        %s170 = scalar_select %p169, %s10, 1
        %s171 = smul.addr %s170, 4
        %s172 = scalar_lea.vmem %s1, %s171
      $region24: #{forward.36} parent=15 // pred_fallthru
        _
      // Predicated region
      $region25: #{forward.36} parent=15 // pred_check
        %p173 = pneg %p82
      $region26: #{forward.36} parent=15 // pred_check_branch
        %175 = sbr.rel (%p173) target = $region28
      $region27: #{forward.36} parent=15 // pred_region
        %p176 = scmp.lt.s32.totalorder %s10, 1
        %s177 = scalar_select %p176, %s10, 1
        %s178 = smul.addr %s177, 4
        %s179 = scalar_lea.vmem %s2, %s178
      $region28: #{forward.36} parent=15 // pred_fallthru
        _
      // Predicated region
      $region29: #{forward.36} parent=15 // pred_check
        %p180 = pneg %p108
      $region30: #{forward.36} parent=15 // pred_check_branch
        %182 = sbr.rel (%p180) target = $region32
      $region31: #{forward.36} parent=15 // pred_region
        %p183 = scmp.lt.s32.totalorder %s10, 1
        %s184 = scalar_select %p183, %s10, 1
        %s185 = smul.addr %s184, 4
        %s186 = scalar_lea.vmem %s3, %s185
      $region32: #{forward.36} parent=15 // pred_fallthru
        _
    $region16: #{forward.36} parent=5 // pred_fallthru
      _
    %p187 = scmp.le.s32.totalorder 1, %s10
    %p188 = scmp.lt.s32.totalorder %s10, 3
    %p189 = pnand %p187, %p188
    %p190 = pneg %p189
    // Predicated region
    $region33: #{forward.36} parent=5 // pred_check
      _
    $region34: #{forward.36} parent=5 // pred_check_branch
      %192 = sbr.rel (%p189) target = $region36
    $region35: #{forward.36} parent=5 // pred_region
      %s193 = ssub.s32 %s10, 1
      %p194 = scmp.lt.s32.totalorder %s15, 1
      %s195 = scalar_select %p194, %s15, 1
      %s196 = smul.addr %s195, 4
      %s197 = scalar_lea.vmem %s0, %s196
      %p198 = pneg %p36
      %p199 = pneg %p33
      %p200 = scmp.lt.s32.totalorder %s15, 1
      %s201 = scalar_select %p200, %s15, 1
      %s202 = smul.addr %s201, 4
      %s203 = scalar_lea.vmem %s1, %s202
      %p204 = pneg %p62
      %p205 = pneg %p59
      %p206 = scmp.lt.s32.totalorder %s15, 1
      %s207 = scalar_select %p206, %s15, 1
      %s208 = smul.addr %s207, 4
      %s209 = scalar_lea.vmem %s2, %s208
      %p210 = pneg %p88
      %p211 = pneg %p85
      %p212 = scmp.lt.s32.totalorder %s15, 1
      %s213 = scalar_select %p212, %s15, 1
      %s214 = smul.addr %s213, 4
      %s215 = scalar_lea.vmem %s3, %s214
      %p216 = pneg %p114
      %p217 = pneg %p111
      %p218 = pneg %p140
      %p219 = pneg %p137
      %p220 = scmp.lt.s32.totalorder %s15, 1
      %s221 = scalar_select %p220, %s15, 1
      %s222 = smul.addr %s221, 4
      %s223 = scalar_lea.vmem %s4, %s222
      %p224 = scmp.lt.s32.totalorder %s15, 1
      %s225 = scalar_select %p224, %s15, 1
      %s226 = smul.addr %s225, 4
      %s227 = scalar_lea.vmem %s0, %s226
      %p228 = scmp.lt.s32.totalorder %s15, 1
      %s229 = scalar_select %p228, %s15, 1
      %s230 = smul.addr %s229, 4
      %s231 = scalar_lea.vmem %s1, %s230
      %p232 = scmp.lt.s32.totalorder %s15, 1
      %s233 = scalar_select %p232, %s15, 1
      %s234 = smul.addr %s233, 4
      %s235 = scalar_lea.vmem %s2, %s234
      %p236 = scmp.lt.s32.totalorder %s15, 1
      %s237 = scalar_select %p236, %s15, 1
      %s238 = smul.addr %s237, 4
      %s239 = scalar_lea.vmem %s3, %s238
      %p240 = scmp.lt.s32.totalorder %s15, 1
      %s241 = scalar_select %p240, %s15, 1
      %s242 = smul.addr %s241, 4
      %s243 = scalar_lea.vmem %s4, %s242
      %v244 = vld [vmem:[%s227] sm:$0xf]
      %v245 = vld [vmem:[%s231] sm:$0xf]
      %v246 = vunpack.c.l.bf16 %v244
      %v247 = vunpack.c.l.bf16 %v245
      %v248 = vmax.f32 %v246, %v247
      %v249 = vpack.c.bf16 %v248, %v248
      %v250 = vld [vmem:[%s235] sm:$0xf]
      %v251 = vld [vmem:[%s239] sm:$0xf]
      %v252 = vunpack.c.l.bf16 %v250
      %v253 = vunpack.c.l.bf16 %v251
      %v254 = vmax.f32 %v252, %v253
      %v255 = vpack.c.bf16 %v254, %v254
      %v256 = vunpack.c.l.bf16 %v249
      %v257 = vunpack.c.l.bf16 %v255
      %v258 = vmax.f32 %v256, %v257
      %v259 = vpack.c.bf16 %v258, %v258
      %vm260 = vcmask 125952
      %261 = vst.msk [vmem:[%s243] sm:$0xf] %vm260, %v259
      %p262 = scmp.lt.s32.totalorder %s15, 1
      %s263 = scalar_select %p262, %s15, 1
      %s264 = smul.addr %s263, 4
      %s265 = scalar_lea.vmem %s4, %s264
      // Predicated region
      $region37: #{forward.36} parent=35 // pred_check
        %p266 = pneg %p137
      $region38: #{forward.36} parent=35 // pred_check_branch
        %268 = sbr.rel (%p266) target = $region40
      $region39: #{forward.36} parent=35 // pred_region
        _
      $region40: #{forward.36} parent=35 // pred_fallthru
        _
    $region36: #{forward.36} parent=5 // pred_fallthru
      _
    %p269 = scmp.le.s32.totalorder 2, %s10
    // Predicated region
    $region41: #{forward.36} parent=5 // pred_check
      %p270 = pneg %p269
    $region42: #{forward.36} parent=5 // pred_check_branch
      %272 = sbr.rel (%p270) target = $region44
    $region43: #{forward.36} parent=5 // pred_region
      %s273 = ssub.s32 %s10, 2
      // Predicated region
      $region45: #{forward.36} parent=43 // pred_check
        %p274 = pneg %p143
      $region46: #{forward.36} parent=43 // pred_check_branch
        %276 = sbr.rel (%p274) target = $region48
      $region47: #{forward.36} parent=43 // pred_region
        %p277 = scmp.lt.s32.totalorder %s16, 1
        %s278 = scalar_select %p277, %s16, 1
        %s279 = smul.addr %s278, 4
        %s280 = scalar_lea.vmem %s4, %s279
      $region48: #{forward.36} parent=43 // pred_fallthru
        _
    $region44: #{forward.36} parent=5 // pred_fallthru
      _
  $region6: #{forward.36} parent=0 // loop_footer
    %s14 = sadd.s32 1, %s10
  $region7: #{forward.36} parent=0 // loop_footer_branch
    %9 = sbr.rel target = $region3
  $region8: #{forward.36} parent=0 // loop_exit
    _

// kernel: forward.37
$region0: #{forward.37}
  #allocation0 [shape = 'u32[]', space=smem, size = 0x4, offset = 0x4, fixed_abs, tag = 'smem constant byte address 0x4 - core index']
  #allocation1 [shape = 'u32[72,128]{1,0:T(1,128)}', space=vmem, size = 0x9000, scoped, tag = 'internal scratch']
  %s0 = inlined_call_operand.vmem [shape: bf16[2,72,16], index: 0, kind: input, shape index: {}]
  %s1 = inlined_call_operand.vmem [shape: bf16[8,72], index: 1, kind: input, shape index: {}]
  %s2 = inlined_call_operand.vmem [shape: f32[8,1], index: 2, kind: input, shape index: {}]
  %s3 = inlined_call_operand.vmem [shape: bf16[2,8,16], index: 3, kind: output, shape index: {}]
  %s4 = sld [smem:[#allocation0]]
  $region45: #{forward.37} parent=0
    _
  %s6 = ssub.s32 1, %s4
  %s7 = scalar_select 0, %s6, %s4
  loop: start=0, step=1, limit=4
  $region2: #{forward.37} parent=0 // loop_pre_header
    _
  $region3: #{forward.37} parent=0 // loop_header
    %s9 = sphi 0, %s13
    %p10 = scmp.ge.s32.totalorder %s9, 4
    %s19 = sphi 0, %s21
    %s22 = sphi 0, %s19
    %s23 = sphi 0, %s22
    %s39 = sphi 0, %s23
    %s43 = sphi 0, %s43
    %s45 = sphi 0, %s43
    %s46 = sphi 0, %s45
    %s60 = sphi 0, %s46
    %s64 = sphi 0, %s64
    %s66 = sphi 0, %s64
    %s67 = sphi 0, %s66
    %s81 = sphi 0, %s67
    %s87 = sphi 0, %s89
    %s90 = sphi 0, %s87
    %s91 = sphi 0, %s90
    %s107 = sphi 0, %s91
  $region4: #{forward.37} parent=0 // loop_header_branch
    %12 = sbr.rel (%p10) target = $region8
  $region5: #{forward.37} parent=0 // loop_body
    %s14 = ssub.s32 %s9, 1
    %s15 = ssub.s32 %s9, 2
    %s16 = sadd.s32 %s9, 1
    %s17 = ssub.s32 %s9, %s16
    %p18 = scmp.eq.s32.totalorder %s17, 0
    %s20 = sadd.s32 %s19, 1
    %s21 = scalar_select %p18, %s19, %s20
    %p24 = pneg %p18
    %p25 = scmp.eq.s32.totalorder %s9, 1
    %p26 = por %p24, %p25
    %p27 = scmp.ne.s32.totalorder %s19, %s22
    %p28 = scmp.eq.s32.totalorder %s9, 0
    %p29 = por %p27, %p28
    %p30 = scmp.ne.s32.totalorder %s19, %s22
    %p31 = scmp.eq.s32.totalorder %s14, 1
    %p32 = por %p30, %p31
    %p33 = scmp.ne.s32.totalorder %s22, %s23
    %p34 = scmp.eq.s32.totalorder %s14, 0
    %p35 = por %p33, %p34
    %p36 = scmp.ne.s32.totalorder %s22, %s23
    %p37 = scmp.eq.s32.totalorder %s15, 1
    %p38 = por %p36, %p37
    %p40 = scmp.ne.s32.totalorder %s23, %s39
    %p41 = scmp.eq.s32.totalorder %s15, 0
    %p42 = por %p40, %p41
    %s44 = sadd.s32 %s43, 1
    %p47 = scmp.eq.s32.totalorder %s9, 1
    %p48 = scmp.ne.s32.totalorder %s43, %s45
    %p49 = scmp.eq.s32.totalorder %s9, 0
    %p50 = por %p48, %p49
    %p51 = scmp.ne.s32.totalorder %s43, %s45
    %p52 = scmp.eq.s32.totalorder %s14, 1
    %p53 = por %p51, %p52
    %p54 = scmp.ne.s32.totalorder %s45, %s46
    %p55 = scmp.eq.s32.totalorder %s14, 0
    %p56 = por %p54, %p55
    %p57 = scmp.ne.s32.totalorder %s45, %s46
    %p58 = scmp.eq.s32.totalorder %s15, 1
    %p59 = por %p57, %p58
    %p61 = scmp.ne.s32.totalorder %s46, %s60
    %p62 = scmp.eq.s32.totalorder %s15, 0
    %p63 = por %p61, %p62
    %s65 = sadd.s32 %s64, 1
    %p68 = scmp.eq.s32.totalorder %s9, 1
    %p69 = scmp.ne.s32.totalorder %s64, %s66
    %p70 = scmp.eq.s32.totalorder %s9, 0
    %p71 = por %p69, %p70
    %p72 = scmp.ne.s32.totalorder %s64, %s66
    %p73 = scmp.eq.s32.totalorder %s14, 1
    %p74 = por %p72, %p73
    %p75 = scmp.ne.s32.totalorder %s66, %s67
    %p76 = scmp.eq.s32.totalorder %s14, 0
    %p77 = por %p75, %p76
    %p78 = scmp.ne.s32.totalorder %s66, %s67
    %p79 = scmp.eq.s32.totalorder %s15, 1
    %p80 = por %p78, %p79
    %p82 = scmp.ne.s32.totalorder %s67, %s81
    %p83 = scmp.eq.s32.totalorder %s15, 0
    %p84 = por %p82, %p83
    %s85 = ssub.s32 %s9, %s16
    %p86 = scmp.eq.s32.totalorder %s85, 0
    %s88 = sadd.s32 %s87, 1
    %s89 = scalar_select %p86, %s87, %s88
    %p92 = pneg %p86
    %p93 = scmp.eq.s32.totalorder %s9, 1
    %p94 = por %p92, %p93
    %p95 = scmp.ne.s32.totalorder %s87, %s90
    %p96 = scmp.eq.s32.totalorder %s9, 0
    %p97 = por %p95, %p96
    %p98 = scmp.ne.s32.totalorder %s87, %s90
    %p99 = scmp.eq.s32.totalorder %s14, 1
    %p100 = por %p98, %p99
    %p101 = scmp.ne.s32.totalorder %s90, %s91
    %p102 = scmp.eq.s32.totalorder %s14, 0
    %p103 = por %p101, %p102
    %p104 = scmp.ne.s32.totalorder %s90, %s91
    %p105 = scmp.eq.s32.totalorder %s15, 1
    %p106 = por %p104, %p105
    %p108 = scmp.ne.s32.totalorder %s91, %s107
    %p109 = scmp.eq.s32.totalorder %s15, 0
    %p110 = por %p108, %p109
    %p111 = scmp.le.s32.totalorder 1, %s9
    %p112 = scmp.lt.s32.totalorder %s9, 3
    %p113 = pnand %p111, %p112
    %p114 = pneg %p113
    // Predicated region
    $region9: #{forward.37} parent=5 // pred_check
      _
    $region10: #{forward.37} parent=5 // pred_check_branch
      %116 = sbr.rel (%p113) target = $region12
    $region11: #{forward.37} parent=5 // pred_region
      %s117 = ssub.s32 %s9, 1
      // Predicated region
      $region13: #{forward.37} parent=11 // pred_check
        %p118 = pneg %p56
      $region14: #{forward.37} parent=11 // pred_check_branch
        %120 = sbr.rel (%p118) target = $region16
      $region15: #{forward.37} parent=11 // pred_region
        _
      $region16: #{forward.37} parent=11 // pred_fallthru
        _
      // Predicated region
      $region17: #{forward.37} parent=11 // pred_check
        %p121 = pneg %p77
      $region18: #{forward.37} parent=11 // pred_check_branch
        %123 = sbr.rel (%p121) target = $region20
      $region19: #{forward.37} parent=11 // pred_region
        _
      $region20: #{forward.37} parent=11 // pred_fallthru
        _
    $region12: #{forward.37} parent=5 // pred_fallthru
      _
    %p124 = scmp.lt.s32.totalorder %s9, 2
    // Predicated region
    $region21: #{forward.37} parent=5 // pred_check
      %p125 = pneg %p124
    $region22: #{forward.37} parent=5 // pred_check_branch
      %127 = sbr.rel (%p125) target = $region24
    $region23: #{forward.37} parent=5 // pred_region
      // Predicated region
      $region25: #{forward.37} parent=23 // pred_check
        %p128 = pneg %p29
      $region26: #{forward.37} parent=23 // pred_check_branch
        %130 = sbr.rel (%p128) target = $region28
      $region27: #{forward.37} parent=23 // pred_region
        %p131 = scmp.lt.s32.totalorder %s9, 1
        %s132 = scalar_select %p131, %s9, 1
        %s133 = smul.addr %s132, 9
        %s134 = smul.addr %s133, 4
        %s135 = scalar_lea.vmem %s0, %s134
      $region28: #{forward.37} parent=23 // pred_fallthru
        _
    $region24: #{forward.37} parent=5 // pred_fallthru
      _
    %p136 = scmp.le.s32.totalorder 1, %s9
    %p137 = scmp.lt.s32.totalorder %s9, 3
    %p138 = pnand %p136, %p137
    %p139 = pneg %p138
    // Predicated region
    $region29: #{forward.37} parent=5 // pred_check
      _
    $region30: #{forward.37} parent=5 // pred_check_branch
      %141 = sbr.rel (%p138) target = $region32
    $region31: #{forward.37} parent=5 // pred_region
      %s142 = ssub.s32 %s9, 1
      %p143 = scmp.lt.s32.totalorder %s14, 1
      %s144 = scalar_select %p143, %s14, 1
      %s145 = smul.addr %s144, 9
      %s146 = smul.addr %s145, 4
      %s147 = scalar_lea.vmem %s0, %s146
      %p148 = pneg %p35
      %p149 = pneg %p32
      %p150 = pneg %p56
      %p151 = pneg %p53
      %p152 = pneg %p77
      %p153 = pneg %p74
      %p154 = pneg %p103
      %p155 = pneg %p100
      %p156 = scmp.lt.s32.totalorder %s14, 1
      %s157 = scalar_select %p156, %s14, 1
      %s158 = smul.addr %s157, 4
      %s159 = scalar_lea.vmem %s3, %s158
      %p160 = scmp.lt.s32.totalorder %s14, 1
      %s161 = scalar_select %p160, %s14, 1
      %s162 = smul.addr %s161, 9
      %s163 = smul.addr %s162, 4
      %s164 = scalar_lea.vmem %s0, %s163
      %p165 = scmp.lt.s32.totalorder %s14, 1
      %s166 = scalar_select %p165, %s14, 1
      %s167 = smul.addr %s166, 4
      %s168 = scalar_lea.vmem %s3, %s167
      %v170 = vld [vmem:[%s1] sm:$0xf]
      %v171 = vld [vmem:[%s164] sm:$0xf]
      %v172 = vld [vmem:[%s164 + $0x4] sm:$0xf]
      %v173 = vld [vmem:[%s164 + $0x8] sm:$0xf]
      %v174 = vld [vmem:[%s164 + $0xc] sm:$0xf]
      %v175 = vld [vmem:[%s164 + $0x10] sm:$0xf]
      %v176 = vld [vmem:[%s164 + $0x14] sm:$0xf]
      %v177 = vld [vmem:[%s164 + $0x18] sm:$0xf]
      %v178 = vld [vmem:[%s164 + $0x1c] sm:$0xf]
      %v179 = vld [vmem:[%s164 + $0x20] sm:$0xf]
      %v180 = vld [vmem:[%s2] sm:$0xff]
      %182 = vset.pattern.permute.xlu0 0
      %183 = vperm.xlu0 %182, %v180
      %v184 = vpop.permute.xlu0 %183
      %v195 = vunpack.c.l.b16 %v171
      %v196 = vunpack.c.l.b16 %v172
      %v197 = vunpack.c.l.b16 %v173
      %v198 = vunpack.c.l.b16 %v174
      %v199 = vunpack.c.l.b16 %v175
      %v200 = vunpack.c.l.b16 %v176
      %v201 = vunpack.c.l.b16 %v177
      %v202 = vunpack.c.l.b16 %v178
      %v203 = vunpack.c.l.b16 %v179
      %v204 = vpack.c.b16 %v196, %v195
      %v205 = vpack.c.b16 %v198, %v197
      %v206 = vpack.c.b16 %v200, %v199
      %v207 = vpack.c.b16 %v202, %v201
      %v208 = vpack.c.b16 %v203, %v203
      %vm213 = vcmask 588800
      %v215 = vsel %vm213, %v170, 0
      %vm217 = vcmask 1043456
      %v219 = vsel %vm217, %v208, 0
      %221 = vmatpush.bf16.msra.mxu0 0
      %222 = vmatpush.bf16.msra.mxu0 0
      %223 = vmatpush.bf16.msra.mxu0 0
      %224 = vmatpush.bf16.msra.mxu0 %v219
      %225 = vmatpush.bf16.msra.mxu0 %v207
      %226 = vmatpush.bf16.msra.mxu0 %v206
      %227 = vmatpush.bf16.msra.mxu0 %v205
      %228 = vmatpush.bf16.msra.mxu0 %v204
      %229 = vmatmul.bf16.gmra.mxu0 %v215
      %v230 = vpop.f32.mrf.mxu0
      %v231 = vadd.f32 %v184, %v230
      %v232 = vpop.f32.mrf.mxu0
      %233 = vdwg.mxu0
      %v234 = vmax.f32 %v231, 0.0
      %v235 = vpack.c.bf16 %v234, %v234
      %vm236 = vcmask 125952
      %237 = vst.msk [vmem:[%s168] sm:$0xf] %vm236, %v235
      %p238 = scmp.lt.s32.totalorder %s14, 1
      %s239 = scalar_select %p238, %s14, 1
      %s240 = smul.addr %s239, 4
      %s241 = scalar_lea.vmem %s3, %s240
      // Predicated region
      $region33: #{forward.37} parent=31 // pred_check
        %p242 = pneg %p100
      $region34: #{forward.37} parent=31 // pred_check_branch
        %244 = sbr.rel (%p242) target = $region36
      $region35: #{forward.37} parent=31 // pred_region
        _
      $region36: #{forward.37} parent=31 // pred_fallthru
        _
    $region32: #{forward.37} parent=5 // pred_fallthru
      _
    %p245 = scmp.le.s32.totalorder 2, %s9
    // Predicated region
    $region37: #{forward.37} parent=5 // pred_check
      %p246 = pneg %p245
    $region38: #{forward.37} parent=5 // pred_check_branch
      %248 = sbr.rel (%p246) target = $region40
    $region39: #{forward.37} parent=5 // pred_region
      %s249 = ssub.s32 %s9, 2
      // Predicated region
      $region41: #{forward.37} parent=39 // pred_check
        %p250 = pneg %p106
      $region42: #{forward.37} parent=39 // pred_check_branch
        %252 = sbr.rel (%p250) target = $region44
      $region43: #{forward.37} parent=39 // pred_region
        %p253 = scmp.lt.s32.totalorder %s15, 1
        %s254 = scalar_select %p253, %s15, 1
        %s255 = smul.addr %s254, 4
        %s256 = scalar_lea.vmem %s3, %s255
      $region44: #{forward.37} parent=39 // pred_fallthru
        _
    $region40: #{forward.37} parent=5 // pred_fallthru
      _
  $region6: #{forward.37} parent=0 // loop_footer
    %s13 = sadd.s32 1, %s9
  $region7: #{forward.37} parent=0 // loop_footer_branch
    %8 = sbr.rel target = $region3
  $region8: #{forward.37} parent=0 // loop_exit
    _

// kernel: forward.39
$region0: #{forward.39}
  #allocation0 [shape = 'u32[]', space=smem, size = 0x4, offset = 0x4, fixed_abs, tag = 'smem constant byte address 0x4 - core index']
  #allocation1 [shape = 'u32[72,128]{1,0:T(1,128)}', space=vmem, size = 0x9000, scoped, tag = 'internal scratch']
  %s0 = inlined_call_operand.vmem [shape: bf16[2,8,4], index: 0, kind: input, shape index: {}]
  %s1 = inlined_call_operand.vmem [shape: bf16[2,8,4], index: 1, kind: input, shape index: {}]
  %s2 = inlined_call_operand.vmem [shape: bf16[2,8,4], index: 2, kind: input, shape index: {}]
  %s3 = inlined_call_operand.vmem [shape: bf16[2,8,4], index: 3, kind: input, shape index: {}]
  %s4 = inlined_call_operand.vmem [shape: bf16[2,8,4], index: 4, kind: output, shape index: {}]
  %s5 = sld [smem:[#allocation0]]
  $region49: #{forward.39} parent=0
    _
  %s7 = ssub.s32 1, %s5
  %s8 = scalar_select 0, %s7, %s5
  loop: start=0, step=1, limit=4
  $region2: #{forward.39} parent=0 // loop_pre_header
    _
  $region3: #{forward.39} parent=0 // loop_header
    %s10 = sphi 0, %s14
    %p11 = scmp.ge.s32.totalorder %s10, 4
    %s20 = sphi 0, %s22
    %s23 = sphi 0, %s20
    %s24 = sphi 0, %s23
    %s40 = sphi 0, %s24
    %s46 = sphi 0, %s48
    %s49 = sphi 0, %s46
    %s50 = sphi 0, %s49
    %s66 = sphi 0, %s50
    %s72 = sphi 0, %s74
    %s75 = sphi 0, %s72
    %s76 = sphi 0, %s75
    %s92 = sphi 0, %s76
    %s98 = sphi 0, %s100
    %s101 = sphi 0, %s98
    %s102 = sphi 0, %s101
    %s118 = sphi 0, %s102
    %s124 = sphi 0, %s126
    %s127 = sphi 0, %s124
    %s128 = sphi 0, %s127
    %s144 = sphi 0, %s128
  $region4: #{forward.39} parent=0 // loop_header_branch
    %13 = sbr.rel (%p11) target = $region8
  $region5: #{forward.39} parent=0 // loop_body
    %s15 = ssub.s32 %s10, 1
    %s16 = ssub.s32 %s10, 2
    %s17 = sadd.s32 %s10, 1
    %s18 = ssub.s32 %s10, %s17
    %p19 = scmp.eq.s32.totalorder %s18, 0
    %s21 = sadd.s32 %s20, 1
    %s22 = scalar_select %p19, %s20, %s21
    %p25 = pneg %p19
    %p26 = scmp.eq.s32.totalorder %s10, 1
    %p27 = por %p25, %p26
    %p28 = scmp.ne.s32.totalorder %s20, %s23
    %p29 = scmp.eq.s32.totalorder %s10, 0
    %p30 = por %p28, %p29
    %p31 = scmp.ne.s32.totalorder %s20, %s23
    %p32 = scmp.eq.s32.totalorder %s15, 1
    %p33 = por %p31, %p32
    %p34 = scmp.ne.s32.totalorder %s23, %s24
    %p35 = scmp.eq.s32.totalorder %s15, 0
    %p36 = por %p34, %p35
    %p37 = scmp.ne.s32.totalorder %s23, %s24
    %p38 = scmp.eq.s32.totalorder %s16, 1
    %p39 = por %p37, %p38
    %p41 = scmp.ne.s32.totalorder %s24, %s40
    %p42 = scmp.eq.s32.totalorder %s16, 0
    %p43 = por %p41, %p42
    %s44 = ssub.s32 %s10, %s17
    %p45 = scmp.eq.s32.totalorder %s44, 0
    %s47 = sadd.s32 %s46, 1
    %s48 = scalar_select %p45, %s46, %s47
    %p51 = pneg %p45
    %p52 = scmp.eq.s32.totalorder %s10, 1
    %p53 = por %p51, %p52
    %p54 = scmp.ne.s32.totalorder %s46, %s49
    %p55 = scmp.eq.s32.totalorder %s10, 0
    %p56 = por %p54, %p55
    %p57 = scmp.ne.s32.totalorder %s46, %s49
    %p58 = scmp.eq.s32.totalorder %s15, 1
    %p59 = por %p57, %p58
    %p60 = scmp.ne.s32.totalorder %s49, %s50
    %p61 = scmp.eq.s32.totalorder %s15, 0
    %p62 = por %p60, %p61
    %p63 = scmp.ne.s32.totalorder %s49, %s50
    %p64 = scmp.eq.s32.totalorder %s16, 1
    %p65 = por %p63, %p64
    %p67 = scmp.ne.s32.totalorder %s50, %s66
    %p68 = scmp.eq.s32.totalorder %s16, 0
    %p69 = por %p67, %p68
    %s70 = ssub.s32 %s10, %s17
    %p71 = scmp.eq.s32.totalorder %s70, 0
    %s73 = sadd.s32 %s72, 1
    %s74 = scalar_select %p71, %s72, %s73
    %p77 = pneg %p71
    %p78 = scmp.eq.s32.totalorder %s10, 1
    %p79 = por %p77, %p78
    %p80 = scmp.ne.s32.totalorder %s72, %s75
    %p81 = scmp.eq.s32.totalorder %s10, 0
    %p82 = por %p80, %p81
    %p83 = scmp.ne.s32.totalorder %s72, %s75
    %p84 = scmp.eq.s32.totalorder %s15, 1
    %p85 = por %p83, %p84
    %p86 = scmp.ne.s32.totalorder %s75, %s76
    %p87 = scmp.eq.s32.totalorder %s15, 0
    %p88 = por %p86, %p87
    %p89 = scmp.ne.s32.totalorder %s75, %s76
    %p90 = scmp.eq.s32.totalorder %s16, 1
    %p91 = por %p89, %p90
    %p93 = scmp.ne.s32.totalorder %s76, %s92
    %p94 = scmp.eq.s32.totalorder %s16, 0
    %p95 = por %p93, %p94
    %s96 = ssub.s32 %s10, %s17
    %p97 = scmp.eq.s32.totalorder %s96, 0
    %s99 = sadd.s32 %s98, 1
    %s100 = scalar_select %p97, %s98, %s99
    %p103 = pneg %p97
    %p104 = scmp.eq.s32.totalorder %s10, 1
    %p105 = por %p103, %p104
    %p106 = scmp.ne.s32.totalorder %s98, %s101
    %p107 = scmp.eq.s32.totalorder %s10, 0
    %p108 = por %p106, %p107
    %p109 = scmp.ne.s32.totalorder %s98, %s101
    %p110 = scmp.eq.s32.totalorder %s15, 1
    %p111 = por %p109, %p110
    %p112 = scmp.ne.s32.totalorder %s101, %s102
    %p113 = scmp.eq.s32.totalorder %s15, 0
    %p114 = por %p112, %p113
    %p115 = scmp.ne.s32.totalorder %s101, %s102
    %p116 = scmp.eq.s32.totalorder %s16, 1
    %p117 = por %p115, %p116
    %p119 = scmp.ne.s32.totalorder %s102, %s118
    %p120 = scmp.eq.s32.totalorder %s16, 0
    %p121 = por %p119, %p120
    %s122 = ssub.s32 %s10, %s17
    %p123 = scmp.eq.s32.totalorder %s122, 0
    %s125 = sadd.s32 %s124, 1
    %s126 = scalar_select %p123, %s124, %s125
    %p129 = pneg %p123
    %p130 = scmp.eq.s32.totalorder %s10, 1
    %p131 = por %p129, %p130
    %p132 = scmp.ne.s32.totalorder %s124, %s127
    %p133 = scmp.eq.s32.totalorder %s10, 0
    %p134 = por %p132, %p133
    %p135 = scmp.ne.s32.totalorder %s124, %s127
    %p136 = scmp.eq.s32.totalorder %s15, 1
    %p137 = por %p135, %p136
    %p138 = scmp.ne.s32.totalorder %s127, %s128
    %p139 = scmp.eq.s32.totalorder %s15, 0
    %p140 = por %p138, %p139
    %p141 = scmp.ne.s32.totalorder %s127, %s128
    %p142 = scmp.eq.s32.totalorder %s16, 1
    %p143 = por %p141, %p142
    %p145 = scmp.ne.s32.totalorder %s128, %s144
    %p146 = scmp.eq.s32.totalorder %s16, 0
    %p147 = por %p145, %p146
    %p148 = scmp.le.s32.totalorder 1, %s10
    %p149 = scmp.lt.s32.totalorder %s10, 3
    %p150 = pnand %p148, %p149
    %p151 = pneg %p150
    // Predicated region
    $region9: #{forward.39} parent=5 // pred_check
      _
    $region10: #{forward.39} parent=5 // pred_check_branch
      %153 = sbr.rel (%p150) target = $region12
    $region11: #{forward.39} parent=5 // pred_region
      %s154 = ssub.s32 %s10, 1
    $region12: #{forward.39} parent=5 // pred_fallthru
      _
    %p155 = scmp.lt.s32.totalorder %s10, 2
    // Predicated region
    $region13: #{forward.39} parent=5 // pred_check
      %p156 = pneg %p155
    $region14: #{forward.39} parent=5 // pred_check_branch
      %158 = sbr.rel (%p156) target = $region16
    $region15: #{forward.39} parent=5 // pred_region
      // Predicated region
      $region17: #{forward.39} parent=15 // pred_check
        %p159 = pneg %p30
      $region18: #{forward.39} parent=15 // pred_check_branch
        %161 = sbr.rel (%p159) target = $region20
      $region19: #{forward.39} parent=15 // pred_region
        %p162 = scmp.lt.s32.totalorder %s10, 1
        %s163 = scalar_select %p162, %s10, 1
        %s164 = smul.addr %s163, 4
        %s165 = scalar_lea.vmem %s0, %s164
      $region20: #{forward.39} parent=15 // pred_fallthru
        _
      // Predicated region
      $region21: #{forward.39} parent=15 // pred_check
        %p166 = pneg %p56
      $region22: #{forward.39} parent=15 // pred_check_branch
        %168 = sbr.rel (%p166) target = $region24
      $region23: #{forward.39} parent=15 // pred_region
        %p169 = scmp.lt.s32.totalorder %s10, 1
        %s170 = scalar_select %p169, %s10, 1
        %s171 = smul.addr %s170, 4
        %s172 = scalar_lea.vmem %s1, %s171
      $region24: #{forward.39} parent=15 // pred_fallthru
        _
      // Predicated region
      $region25: #{forward.39} parent=15 // pred_check
        %p173 = pneg %p82
      $region26: #{forward.39} parent=15 // pred_check_branch
        %175 = sbr.rel (%p173) target = $region28
      $region27: #{forward.39} parent=15 // pred_region
        %p176 = scmp.lt.s32.totalorder %s10, 1
        %s177 = scalar_select %p176, %s10, 1
        %s178 = smul.addr %s177, 4
        %s179 = scalar_lea.vmem %s2, %s178
      $region28: #{forward.39} parent=15 // pred_fallthru
        _
      // Predicated region
      $region29: #{forward.39} parent=15 // pred_check
        %p180 = pneg %p108
      $region30: #{forward.39} parent=15 // pred_check_branch
        %182 = sbr.rel (%p180) target = $region32
      $region31: #{forward.39} parent=15 // pred_region
        %p183 = scmp.lt.s32.totalorder %s10, 1
        %s184 = scalar_select %p183, %s10, 1
        %s185 = smul.addr %s184, 4
        %s186 = scalar_lea.vmem %s3, %s185
      $region32: #{forward.39} parent=15 // pred_fallthru
        _
    $region16: #{forward.39} parent=5 // pred_fallthru
      _
    %p187 = scmp.le.s32.totalorder 1, %s10
    %p188 = scmp.lt.s32.totalorder %s10, 3
    %p189 = pnand %p187, %p188
    %p190 = pneg %p189
    // Predicated region
    $region33: #{forward.39} parent=5 // pred_check
      _
    $region34: #{forward.39} parent=5 // pred_check_branch
      %192 = sbr.rel (%p189) target = $region36
    $region35: #{forward.39} parent=5 // pred_region
      %s193 = ssub.s32 %s10, 1
      %p194 = scmp.lt.s32.totalorder %s15, 1
      %s195 = scalar_select %p194, %s15, 1
      %s196 = smul.addr %s195, 4
      %s197 = scalar_lea.vmem %s0, %s196
      %p198 = pneg %p36
      %p199 = pneg %p33
      %p200 = scmp.lt.s32.totalorder %s15, 1
      %s201 = scalar_select %p200, %s15, 1
      %s202 = smul.addr %s201, 4
      %s203 = scalar_lea.vmem %s1, %s202
      %p204 = pneg %p62
      %p205 = pneg %p59
      %p206 = scmp.lt.s32.totalorder %s15, 1
      %s207 = scalar_select %p206, %s15, 1
      %s208 = smul.addr %s207, 4
      %s209 = scalar_lea.vmem %s2, %s208
      %p210 = pneg %p88
      %p211 = pneg %p85
      %p212 = scmp.lt.s32.totalorder %s15, 1
      %s213 = scalar_select %p212, %s15, 1
      %s214 = smul.addr %s213, 4
      %s215 = scalar_lea.vmem %s3, %s214
      %p216 = pneg %p114
      %p217 = pneg %p111
      %p218 = pneg %p140
      %p219 = pneg %p137
      %p220 = scmp.lt.s32.totalorder %s15, 1
      %s221 = scalar_select %p220, %s15, 1
      %s222 = smul.addr %s221, 4
      %s223 = scalar_lea.vmem %s4, %s222
      %p224 = scmp.lt.s32.totalorder %s15, 1
      %s225 = scalar_select %p224, %s15, 1
      %s226 = smul.addr %s225, 4
      %s227 = scalar_lea.vmem %s0, %s226
      %p228 = scmp.lt.s32.totalorder %s15, 1
      %s229 = scalar_select %p228, %s15, 1
      %s230 = smul.addr %s229, 4
      %s231 = scalar_lea.vmem %s1, %s230
      %p232 = scmp.lt.s32.totalorder %s15, 1
      %s233 = scalar_select %p232, %s15, 1
      %s234 = smul.addr %s233, 4
      %s235 = scalar_lea.vmem %s2, %s234
      %p236 = scmp.lt.s32.totalorder %s15, 1
      %s237 = scalar_select %p236, %s15, 1
      %s238 = smul.addr %s237, 4
      %s239 = scalar_lea.vmem %s3, %s238
      %p240 = scmp.lt.s32.totalorder %s15, 1
      %s241 = scalar_select %p240, %s15, 1
      %s242 = smul.addr %s241, 4
      %s243 = scalar_lea.vmem %s4, %s242
      %v244 = vld [vmem:[%s227] sm:$0xf]
      %v245 = vld [vmem:[%s231] sm:$0xf]
      %v246 = vunpack.c.l.bf16 %v244
      %v247 = vunpack.c.l.bf16 %v245
      %v248 = vmax.f32 %v246, %v247
      %v249 = vpack.c.bf16 %v248, %v248
      %v250 = vld [vmem:[%s235] sm:$0xf]
      %v251 = vld [vmem:[%s239] sm:$0xf]
      %v252 = vunpack.c.l.bf16 %v250
      %v253 = vunpack.c.l.bf16 %v251
      %v254 = vmax.f32 %v252, %v253
      %v255 = vpack.c.bf16 %v254, %v254
      %v256 = vunpack.c.l.bf16 %v249
      %v257 = vunpack.c.l.bf16 %v255
      %v258 = vmax.f32 %v256, %v257
      %v259 = vpack.c.bf16 %v258, %v258
      %vm260 = vcmask 27648
      %261 = vst.msk [vmem:[%s243] sm:$0xf] %vm260, %v259
      %p262 = scmp.lt.s32.totalorder %s15, 1
      %s263 = scalar_select %p262, %s15, 1
      %s264 = smul.addr %s263, 4
      %s265 = scalar_lea.vmem %s4, %s264
      // Predicated region
      $region37: #{forward.39} parent=35 // pred_check
        %p266 = pneg %p137
      $region38: #{forward.39} parent=35 // pred_check_branch
        %268 = sbr.rel (%p266) target = $region40
      $region39: #{forward.39} parent=35 // pred_region
        _
      $region40: #{forward.39} parent=35 // pred_fallthru
        _
    $region36: #{forward.39} parent=5 // pred_fallthru
      _
    %p269 = scmp.le.s32.totalorder 2, %s10
    // Predicated region
    $region41: #{forward.39} parent=5 // pred_check
      %p270 = pneg %p269
    $region42: #{forward.39} parent=5 // pred_check_branch
      %272 = sbr.rel (%p270) target = $region44
    $region43: #{forward.39} parent=5 // pred_region
      %s273 = ssub.s32 %s10, 2
      // Predicated region
      $region45: #{forward.39} parent=43 // pred_check
        %p274 = pneg %p143
      $region46: #{forward.39} parent=43 // pred_check_branch
        %276 = sbr.rel (%p274) target = $region48
      $region47: #{forward.39} parent=43 // pred_region
        %p277 = scmp.lt.s32.totalorder %s16, 1
        %s278 = scalar_select %p277, %s16, 1
        %s279 = smul.addr %s278, 4
        %s280 = scalar_lea.vmem %s4, %s279
      $region48: #{forward.39} parent=43 // pred_fallthru
        _
    $region44: #{forward.39} parent=5 // pred_fallthru
      _
  $region6: #{forward.39} parent=0 // loop_footer
    %s14 = sadd.s32 1, %s10
  $region7: #{forward.39} parent=0 // loop_footer_branch
    %9 = sbr.rel target = $region3
  $region8: #{forward.39} parent=0 // loop_exit
    _

// kernel: mul.8
$region0: #{mul.8}
  %s0 = inlined_call_operand.vmem [shape: f32[2,7,7], index: 0, kind: input, shape index: {}]
  %s1 = inlined_call_operand.vmem [shape: f32[2,49], index: 1, kind: output, shape index: {}]
  $region1: #{mul.8} parent=0
    #allocation0 [shape = 'u8[4096]{0}', space=vmem, size = 0x1000, scoped, tag = 'scoped mem for output reshape']
    %s2 = smov 3
    %v3 = vld [vmem:[%s0] ss:$8 sm:%s2]
    %vm4 = vcmask 56320
    %5 = vst.msk [vmem:[#allocation0] sm:$0x3] %vm4, %v3
    %s6 = scalar_lea.vmem %s0, 6
    %s7 = smov 3
    %v8 = vld [vmem:[%s6] ss:$8 sm:%s7]
    %9 = vrot.lane.b32.xlu0 %v8, 42
    %v10 = vpop.permute.xlu0 %9
    %vm11 = vcmask 400720
    %12 = vst.msk [vmem:[#allocation0] sm:$0x3] %vm11, %v10
    %s13 = scalar_lea.vmem %s0, 5
    %s14 = smov 3
    %v15 = vld [vmem:[%s13] ss:$8 sm:%s14]
    %16 = vrot.lane.b32.xlu0 %v15, 35
    %v17 = vpop.permute.xlu0 %16
    %vm18 = vcmask 343320
    %19 = vst.msk [vmem:[#allocation0] sm:$0x3] %vm18, %v17
    %s20 = scalar_lea.vmem %s0, 4
    %s21 = smov 3
    %v22 = vld [vmem:[%s20] ss:$8 sm:%s21]
    %23 = vrot.lane.b32.xlu0 %v22, 28
    %v24 = vpop.permute.xlu0 %23
    %vm25 = vcmask 285920
    %26 = vst.msk [vmem:[#allocation0] sm:$0x3] %vm25, %v24
    %s27 = scalar_lea.vmem %s0, 3
    %s28 = smov 3
    %v29 = vld [vmem:[%s27] ss:$8 sm:%s28]
    %30 = vrot.lane.b32.xlu0 %v29, 21
    %v31 = vpop.permute.xlu0 %30
    %vm32 = vcmask 228520
    %33 = vst.msk [vmem:[#allocation0] sm:$0x3] %vm32, %v31
    %s34 = scalar_lea.vmem %s0, 2
    %s35 = smov 3
    %v36 = vld [vmem:[%s34] ss:$8 sm:%s35]
    %37 = vrot.lane.b32.xlu0 %v36, 14
    %v38 = vpop.permute.xlu0 %37
    %vm39 = vcmask 171120
    %40 = vst.msk [vmem:[#allocation0] sm:$0x3] %vm39, %v38
    %s41 = scalar_lea.vmem %s0, 1
    %s42 = smov 3
    %v43 = vld [vmem:[%s41] ss:$8 sm:%s42]
    %44 = vrot.lane.b32.xlu0 %v43, 7
    %v45 = vpop.permute.xlu0 %44
    %vm46 = vcmask 113720
    %47 = vst.msk [vmem:[#allocation0] sm:$0x3] %vm46, %v45
    %s49 = ssub.s32 4, 1
    %v50 = vld [vmem:[#allocation0] sm:%s49]
    %s52 = ssub.s32 4, 1
    %53 = vst [vmem:[%s1] sm:%s52] %v50

// kernel: forward.21
$region0: #{forward.21}
  #allocation0 [shape = 'u32[]', space=smem, size = 0x4, offset = 0x4, fixed_abs, tag = 'smem constant byte address 0x4 - core index']
  #allocation1 [shape = 'u32[72,128]{1,0:T(1,128)}', space=vmem, size = 0x9000, scoped, tag = 'internal scratch']
  %s0 = inlined_call_operand.vmem [shape: f32[32,20], index: 0, kind: input, shape index: {}]
  %s1 = inlined_call_operand.vmem [shape: f32[20,60], index: 1, kind: input, shape index: {}]
  %s2 = inlined_call_operand.vmem [shape: f32[1,60], index: 2, kind: input, shape index: {}]
  %s3 = inlined_call_operand.vmem [shape: f32[32,60], index: 3, kind: output, shape index: {}]
  %s4 = sld [smem:[#allocation0]]
  $region45: #{forward.21} parent=0
    _
  %s6 = ssub.s32 1, %s4
  %s7 = scalar_select 0, %s6, %s4
  loop: start=0, step=1, limit=4
  $region2: #{forward.21} parent=0 // loop_pre_header
    _
  $region3: #{forward.21} parent=0 // loop_header
    %s9 = sphi 0, %s13
    %p10 = scmp.ge.s32.totalorder %s9, 4
    %s19 = sphi 0, %s21
    %s22 = sphi 0, %s19
    %s23 = sphi 0, %s22
    %s39 = sphi 0, %s23
    %s43 = sphi 0, %s43
    %s45 = sphi 0, %s43
    %s46 = sphi 0, %s45
    %s60 = sphi 0, %s46
    %s64 = sphi 0, %s64
    %s66 = sphi 0, %s64
    %s67 = sphi 0, %s66
    %s81 = sphi 0, %s67
    %s87 = sphi 0, %s89
    %s90 = sphi 0, %s87
    %s91 = sphi 0, %s90
    %s107 = sphi 0, %s91
  $region4: #{forward.21} parent=0 // loop_header_branch
    %12 = sbr.rel (%p10) target = $region8
  $region5: #{forward.21} parent=0 // loop_body
    %s14 = ssub.s32 %s9, 1
    %s15 = ssub.s32 %s9, 2
    %s16 = sadd.s32 %s9, 1
    %s17 = ssub.s32 %s9, %s16
    %p18 = scmp.eq.s32.totalorder %s17, 0
    %s20 = sadd.s32 %s19, 1
    %s21 = scalar_select %p18, %s19, %s20
    %p24 = pneg %p18
    %p25 = scmp.eq.s32.totalorder %s9, 1
    %p26 = por %p24, %p25
    %p27 = scmp.ne.s32.totalorder %s19, %s22
    %p28 = scmp.eq.s32.totalorder %s9, 0
    %p29 = por %p27, %p28
    %p30 = scmp.ne.s32.totalorder %s19, %s22
    %p31 = scmp.eq.s32.totalorder %s14, 1
    %p32 = por %p30, %p31
    %p33 = scmp.ne.s32.totalorder %s22, %s23
    %p34 = scmp.eq.s32.totalorder %s14, 0
    %p35 = por %p33, %p34
    %p36 = scmp.ne.s32.totalorder %s22, %s23
    %p37 = scmp.eq.s32.totalorder %s15, 1
    %p38 = por %p36, %p37
    %p40 = scmp.ne.s32.totalorder %s23, %s39
    %p41 = scmp.eq.s32.totalorder %s15, 0
    %p42 = por %p40, %p41
    %s44 = sadd.s32 %s43, 1
    %p47 = scmp.eq.s32.totalorder %s9, 1
    %p48 = scmp.ne.s32.totalorder %s43, %s45
    %p49 = scmp.eq.s32.totalorder %s9, 0
    %p50 = por %p48, %p49
    %p51 = scmp.ne.s32.totalorder %s43, %s45
    %p52 = scmp.eq.s32.totalorder %s14, 1
    %p53 = por %p51, %p52
    %p54 = scmp.ne.s32.totalorder %s45, %s46
    %p55 = scmp.eq.s32.totalorder %s14, 0
    %p56 = por %p54, %p55
    %p57 = scmp.ne.s32.totalorder %s45, %s46
    %p58 = scmp.eq.s32.totalorder %s15, 1
    %p59 = por %p57, %p58
    %p61 = scmp.ne.s32.totalorder %s46, %s60
    %p62 = scmp.eq.s32.totalorder %s15, 0
    %p63 = por %p61, %p62
    %s65 = sadd.s32 %s64, 1
    %p68 = scmp.eq.s32.totalorder %s9, 1
    %p69 = scmp.ne.s32.totalorder %s64, %s66
    %p70 = scmp.eq.s32.totalorder %s9, 0
    %p71 = por %p69, %p70
    %p72 = scmp.ne.s32.totalorder %s64, %s66
    %p73 = scmp.eq.s32.totalorder %s14, 1
    %p74 = por %p72, %p73
    %p75 = scmp.ne.s32.totalorder %s66, %s67
    %p76 = scmp.eq.s32.totalorder %s14, 0
    %p77 = por %p75, %p76
    %p78 = scmp.ne.s32.totalorder %s66, %s67
    %p79 = scmp.eq.s32.totalorder %s15, 1
    %p80 = por %p78, %p79
    %p82 = scmp.ne.s32.totalorder %s67, %s81
    %p83 = scmp.eq.s32.totalorder %s15, 0
    %p84 = por %p82, %p83
    %s85 = ssub.s32 %s9, %s16
    %p86 = scmp.eq.s32.totalorder %s85, 0
    %s88 = sadd.s32 %s87, 1
    %s89 = scalar_select %p86, %s87, %s88
    %p92 = pneg %p86
    %p93 = scmp.eq.s32.totalorder %s9, 1
    %p94 = por %p92, %p93
    %p95 = scmp.ne.s32.totalorder %s87, %s90
    %p96 = scmp.eq.s32.totalorder %s9, 0
    %p97 = por %p95, %p96
    %p98 = scmp.ne.s32.totalorder %s87, %s90
    %p99 = scmp.eq.s32.totalorder %s14, 1
    %p100 = por %p98, %p99
    %p101 = scmp.ne.s32.totalorder %s90, %s91
    %p102 = scmp.eq.s32.totalorder %s14, 0
    %p103 = por %p101, %p102
    %p104 = scmp.ne.s32.totalorder %s90, %s91
    %p105 = scmp.eq.s32.totalorder %s15, 1
    %p106 = por %p104, %p105
    %p108 = scmp.ne.s32.totalorder %s91, %s107
    %p109 = scmp.eq.s32.totalorder %s15, 0
    %p110 = por %p108, %p109
    %p111 = scmp.le.s32.totalorder 1, %s9
    %p112 = scmp.lt.s32.totalorder %s9, 3
    %p113 = pnand %p111, %p112
    %p114 = pneg %p113
    // Predicated region
    $region9: #{forward.21} parent=5 // pred_check
      _
    $region10: #{forward.21} parent=5 // pred_check_branch
      %116 = sbr.rel (%p113) target = $region12
    $region11: #{forward.21} parent=5 // pred_region
      %s117 = ssub.s32 %s9, 1
      // Predicated region
      $region13: #{forward.21} parent=11 // pred_check
        %p118 = pneg %p56
      $region14: #{forward.21} parent=11 // pred_check_branch
        %120 = sbr.rel (%p118) target = $region16
      $region15: #{forward.21} parent=11 // pred_region
        _
      $region16: #{forward.21} parent=11 // pred_fallthru
        _
      // Predicated region
      $region17: #{forward.21} parent=11 // pred_check
        %p121 = pneg %p77
      $region18: #{forward.21} parent=11 // pred_check_branch
        %123 = sbr.rel (%p121) target = $region20
      $region19: #{forward.21} parent=11 // pred_region
        _
      $region20: #{forward.21} parent=11 // pred_fallthru
        _
    $region12: #{forward.21} parent=5 // pred_fallthru
      _
    %p124 = scmp.lt.s32.totalorder %s9, 2
    // Predicated region
    $region21: #{forward.21} parent=5 // pred_check
      %p125 = pneg %p124
    $region22: #{forward.21} parent=5 // pred_check_branch
      %127 = sbr.rel (%p125) target = $region24
    $region23: #{forward.21} parent=5 // pred_region
      // Predicated region
      $region25: #{forward.21} parent=23 // pred_check
        %p128 = pneg %p29
      $region26: #{forward.21} parent=23 // pred_check_branch
        %130 = sbr.rel (%p128) target = $region28
      $region27: #{forward.21} parent=23 // pred_region
        %s131 = smul.u32 2, %s9
        %p132 = scmp.lt.s32.totalorder %s131, 3
        %s133 = scalar_select %p132, %s131, 3
        %s134 = smul.addr %s133, 8
        %s135 = scalar_lea.vmem %s0, %s134
        %s136 = smul.u32 2, %s9
      $region28: #{forward.21} parent=23 // pred_fallthru
        _
    $region24: #{forward.21} parent=5 // pred_fallthru
      _
    %p137 = scmp.le.s32.totalorder 1, %s9
    %p138 = scmp.lt.s32.totalorder %s9, 3
    %p139 = pnand %p137, %p138
    %p140 = pneg %p139
    // Predicated region
    $region29: #{forward.21} parent=5 // pred_check
      _
    $region30: #{forward.21} parent=5 // pred_check_branch
      %142 = sbr.rel (%p139) target = $region32
    $region31: #{forward.21} parent=5 // pred_region
      %s143 = ssub.s32 %s9, 1
      %s144 = smul.u32 2, %s14
      %p145 = scmp.lt.s32.totalorder %s144, 3
      %s146 = scalar_select %p145, %s144, 3
      %s147 = smul.addr %s146, 8
      %s148 = scalar_lea.vmem %s0, %s147
      %p149 = pneg %p35
      %p150 = pneg %p32
      %p151 = pneg %p56
      %p152 = pneg %p53
      %p153 = pneg %p77
      %p154 = pneg %p74
      %p155 = pneg %p103
      %p156 = pneg %p100
      %s157 = smul.u32 2, %s14
      %p158 = scmp.lt.s32.totalorder %s157, 3
      %s159 = scalar_select %p158, %s157, 3
      %s160 = smul.addr %s159, 8
      %s161 = scalar_lea.vmem %s3, %s160
      %s162 = smul.u32 2, %s14
      %p163 = scmp.lt.s32.totalorder %s162, 3
      %s164 = scalar_select %p163, %s162, 3
      %s165 = smul.addr %s164, 8
      %s166 = scalar_lea.vmem %s0, %s165
      %s167 = smul.u32 2, %s14
      %s168 = smul.u32 2, %s14
      %p169 = scmp.lt.s32.totalorder %s168, 3
      %s170 = scalar_select %p169, %s168, 3
      %s171 = smul.addr %s170, 8
      %s172 = scalar_lea.vmem %s3, %s171
      %s173 = smul.u32 2, %s14
      %v174 = vld [vmem:[%s166] sm:$0xff]
      %v175 = vld [vmem:[%s166 + $0x8] sm:$0xff]
      %v176 = vld [vmem:[%s1] sm:$0xff]
      %v177 = vld [vmem:[%s1 + $0x8] sm:$0xff]
      %v178 = vld [vmem:[%s1 + $0x10] sm:$0xf]
      %v179 = vld [vmem:[%s2] sm:$0x1]
      %v181 = vperm.slane %v179, 0
      %vm183 = vcmask 162816
      %v185 = vsel %vm183, %v174, 0
      %v188 = vsel %vm183, %v175, 0
      %vm190 = vcmask 1043456
      %v192 = vsel %vm190, %v178, 0
      %194 = vmatpush.msra.mxu0 0.0
      %195 = vmatpush.msra.mxu0 0.0
      %196 = vmatpush.msra.mxu0 0.0
      %197 = vmatpush.msra.mxu0 0.0
      %198 = vmatpush.msra.mxu0 0.0
      %199 = vmatpush.msra.mxu0 0.0
      %200 = vmatpush.msra.mxu0 0.0
      %201 = vmatpush.msra.mxu0 0.0
      %202 = vmatpush.msra.mxu0 0.0
      %203 = vmatpush.msra.mxu0 0.0
      %204 = vmatpush.msra.mxu0 0.0
      %205 = vmatpush.msra.mxu0 0.0
      %206 = vmatpush.msra.mxu0 0.0
      %207 = vmatpush.msra.mxu0 %v192
      %208 = vmatpush.msra.mxu0 %v177
      %209 = vmatpush.msra.mxu0 %v176
      %210 = vmatmul.f32.gmra.mxu0 %v185
      %v211 = vpop.f32.mrf.mxu0
      %v212 = vadd.f32 %v181, %v211
      %213 = vmatmul.f32.gmra.mxu0 %v188
      %v214 = vpop.f32.mrf.mxu0
      %v215 = vadd.f32 %v181, %v214
      %216 = vdwg.mxu0
      %vm217 = vcmask 490496
      %218 = vst.msk [vmem:[%s172] sm:$0xff] %vm217, %v212
      %219 = vst.msk [vmem:[%s172 + $0x8] sm:$0xff] %vm217, %v215
      %s220 = smul.u32 2, %s14
      %p221 = scmp.lt.s32.totalorder %s220, 3
      %s222 = scalar_select %p221, %s220, 3
      %s223 = smul.addr %s222, 8
      %s224 = scalar_lea.vmem %s3, %s223
      // Predicated region
      $region33: #{forward.21} parent=31 // pred_check
        %p225 = pneg %p100
      $region34: #{forward.21} parent=31 // pred_check_branch
        %227 = sbr.rel (%p225) target = $region36
      $region35: #{forward.21} parent=31 // pred_region
        %s228 = smul.u32 2, %s14
      $region36: #{forward.21} parent=31 // pred_fallthru
        _
    $region32: #{forward.21} parent=5 // pred_fallthru
      _
    %p229 = scmp.le.s32.totalorder 2, %s9
    // Predicated region
    $region37: #{forward.21} parent=5 // pred_check
      %p230 = pneg %p229
    $region38: #{forward.21} parent=5 // pred_check_branch
      %232 = sbr.rel (%p230) target = $region40
    $region39: #{forward.21} parent=5 // pred_region
      %s233 = ssub.s32 %s9, 2
      // Predicated region
      $region41: #{forward.21} parent=39 // pred_check
        %p234 = pneg %p106
      $region42: #{forward.21} parent=39 // pred_check_branch
        %236 = sbr.rel (%p234) target = $region44
      $region43: #{forward.21} parent=39 // pred_region
        %s237 = smul.u32 2, %s15
        %p238 = scmp.lt.s32.totalorder %s237, 3
        %s239 = scalar_select %p238, %s237, 3
        %s240 = smul.addr %s239, 8
        %s241 = scalar_lea.vmem %s3, %s240
      $region44: #{forward.21} parent=39 // pred_fallthru
        _
    $region40: #{forward.21} parent=5 // pred_fallthru
      _
  $region6: #{forward.21} parent=0 // loop_footer
    %s13 = sadd.s32 1, %s9
  $region7: #{forward.21} parent=0 // loop_footer_branch
    %8 = sbr.rel target = $region3
  $region8: #{forward.21} parent=0 // loop_exit
    _

// kernel: forward.22
$region0: #{forward.22}
  #allocation0 [shape = 'u32[]', space=smem, size = 0x4, offset = 0x4, fixed_abs, tag = 'smem constant byte address 0x4 - core index']
  #allocation1 [shape = 'u32[72,128]{1,0:T(1,128)}', space=vmem, size = 0x9000, scoped, tag = 'internal scratch']
  %s0 = inlined_call_operand.vmem [shape: f32[10,16,4], index: 0, kind: input, shape index: {}]
  %s1 = inlined_call_operand.vmem [shape: f32[10,16,4], index: 1, kind: input, shape index: {}]
  %s2 = inlined_call_operand.vmem [shape: f32[10,16,4], index: 2, kind: input, shape index: {}]
  %s3 = inlined_call_operand.vmem [shape: f32[10,16,4], index: 3, kind: output, shape index: {}]
  %s4 = sld [smem:[#allocation0]]
  $region45: #{forward.22} parent=0
    _
  %s6 = ssub.s32 1, %s4
  %s7 = scalar_select 0, %s6, %s4
  loop: start=0, step=1, limit=4
  $region2: #{forward.22} parent=0 // loop_pre_header
    _
  $region3: #{forward.22} parent=0 // loop_header
    %s9 = sphi 0, %s13
    %p10 = scmp.ge.s32.totalorder %s9, 4
    %s19 = sphi 0, %s21
    %s22 = sphi 0, %s19
    %s23 = sphi 0, %s22
    %s39 = sphi 0, %s23
    %s45 = sphi 0, %s47
    %s48 = sphi 0, %s45
    %s49 = sphi 0, %s48
    %s65 = sphi 0, %s49
    %s71 = sphi 0, %s73
    %s74 = sphi 0, %s71
    %s75 = sphi 0, %s74
    %s91 = sphi 0, %s75
    %s97 = sphi 0, %s99
    %s100 = sphi 0, %s97
    %s101 = sphi 0, %s100
    %s117 = sphi 0, %s101
  $region4: #{forward.22} parent=0 // loop_header_branch
    %12 = sbr.rel (%p10) target = $region8
  $region5: #{forward.22} parent=0 // loop_body
    %s14 = ssub.s32 %s9, 1
    %s15 = ssub.s32 %s9, 2
    %s16 = sadd.s32 %s9, 1
    %s17 = ssub.s32 %s9, %s16
    %p18 = scmp.eq.s32.totalorder %s17, 0
    %s20 = sadd.s32 %s19, 1
    %s21 = scalar_select %p18, %s19, %s20
    %p24 = pneg %p18
    %p25 = scmp.eq.s32.totalorder %s9, 1
    %p26 = por %p24, %p25
    %p27 = scmp.ne.s32.totalorder %s19, %s22
    %p28 = scmp.eq.s32.totalorder %s9, 0
    %p29 = por %p27, %p28
    %p30 = scmp.ne.s32.totalorder %s19, %s22
    %p31 = scmp.eq.s32.totalorder %s14, 1
    %p32 = por %p30, %p31
    %p33 = scmp.ne.s32.totalorder %s22, %s23
    %p34 = scmp.eq.s32.totalorder %s14, 0
    %p35 = por %p33, %p34
    %p36 = scmp.ne.s32.totalorder %s22, %s23
    %p37 = scmp.eq.s32.totalorder %s15, 1
    %p38 = por %p36, %p37
    %p40 = scmp.ne.s32.totalorder %s23, %s39
    %p41 = scmp.eq.s32.totalorder %s15, 0
    %p42 = por %p40, %p41
    %s43 = ssub.s32 %s9, %s16
    %p44 = scmp.eq.s32.totalorder %s43, 0
    %s46 = sadd.s32 %s45, 1
    %s47 = scalar_select %p44, %s45, %s46
    %p50 = pneg %p44
    %p51 = scmp.eq.s32.totalorder %s9, 1
    %p52 = por %p50, %p51
    %p53 = scmp.ne.s32.totalorder %s45, %s48
    %p54 = scmp.eq.s32.totalorder %s9, 0
    %p55 = por %p53, %p54
    %p56 = scmp.ne.s32.totalorder %s45, %s48
    %p57 = scmp.eq.s32.totalorder %s14, 1
    %p58 = por %p56, %p57
    %p59 = scmp.ne.s32.totalorder %s48, %s49
    %p60 = scmp.eq.s32.totalorder %s14, 0
    %p61 = por %p59, %p60
    %p62 = scmp.ne.s32.totalorder %s48, %s49
    %p63 = scmp.eq.s32.totalorder %s15, 1
    %p64 = por %p62, %p63
    %p66 = scmp.ne.s32.totalorder %s49, %s65
    %p67 = scmp.eq.s32.totalorder %s15, 0
    %p68 = por %p66, %p67
    %s69 = ssub.s32 %s9, %s16
    %p70 = scmp.eq.s32.totalorder %s69, 0
    %s72 = sadd.s32 %s71, 1
    %s73 = scalar_select %p70, %s71, %s72
    %p76 = pneg %p70
    %p77 = scmp.eq.s32.totalorder %s9, 1
    %p78 = por %p76, %p77
    %p79 = scmp.ne.s32.totalorder %s71, %s74
    %p80 = scmp.eq.s32.totalorder %s9, 0
    %p81 = por %p79, %p80
    %p82 = scmp.ne.s32.totalorder %s71, %s74
    %p83 = scmp.eq.s32.totalorder %s14, 1
    %p84 = por %p82, %p83
    %p85 = scmp.ne.s32.totalorder %s74, %s75
    %p86 = scmp.eq.s32.totalorder %s14, 0
    %p87 = por %p85, %p86
    %p88 = scmp.ne.s32.totalorder %s74, %s75
    %p89 = scmp.eq.s32.totalorder %s15, 1
    %p90 = por %p88, %p89
    %p92 = scmp.ne.s32.totalorder %s75, %s91
    %p93 = scmp.eq.s32.totalorder %s15, 0
    %p94 = por %p92, %p93
    %s95 = ssub.s32 %s9, %s16
    %p96 = scmp.eq.s32.totalorder %s95, 0
    %s98 = sadd.s32 %s97, 1
    %s99 = scalar_select %p96, %s97, %s98
    %p102 = pneg %p96
    %p103 = scmp.eq.s32.totalorder %s9, 1
    %p104 = por %p102, %p103
    %p105 = scmp.ne.s32.totalorder %s97, %s100
    %p106 = scmp.eq.s32.totalorder %s9, 0
    %p107 = por %p105, %p106
    %p108 = scmp.ne.s32.totalorder %s97, %s100
    %p109 = scmp.eq.s32.totalorder %s14, 1
    %p110 = por %p108, %p109
    %p111 = scmp.ne.s32.totalorder %s100, %s101
    %p112 = scmp.eq.s32.totalorder %s14, 0
    %p113 = por %p111, %p112
    %p114 = scmp.ne.s32.totalorder %s100, %s101
    %p115 = scmp.eq.s32.totalorder %s15, 1
    %p116 = por %p114, %p115
    %p118 = scmp.ne.s32.totalorder %s101, %s117
    %p119 = scmp.eq.s32.totalorder %s15, 0
    %p120 = por %p118, %p119
    %p121 = scmp.le.s32.totalorder 1, %s9
    %p122 = scmp.lt.s32.totalorder %s9, 3
    %p123 = pnand %p121, %p122
    %p124 = pneg %p123
    // Predicated region
    $region9: #{forward.22} parent=5 // pred_check
      _
    $region10: #{forward.22} parent=5 // pred_check_branch
      %126 = sbr.rel (%p123) target = $region12
    $region11: #{forward.22} parent=5 // pred_region
      %s127 = ssub.s32 %s9, 1
    $region12: #{forward.22} parent=5 // pred_fallthru
      _
    %p128 = scmp.lt.s32.totalorder %s9, 2
    // Predicated region
    $region13: #{forward.22} parent=5 // pred_check
      %p129 = pneg %p128
    $region14: #{forward.22} parent=5 // pred_check_branch
      %131 = sbr.rel (%p129) target = $region16
    $region15: #{forward.22} parent=5 // pred_region
      // Predicated region
      $region17: #{forward.22} parent=15 // pred_check
        %p132 = pneg %p29
      $region18: #{forward.22} parent=15 // pred_check_branch
        %134 = sbr.rel (%p132) target = $region20
      $region19: #{forward.22} parent=15 // pred_region
        %s135 = smul.u32 5, %s9
        %p136 = scmp.lt.s32.totalorder %s135, 9
        %s137 = scalar_select %p136, %s135, 9
        %s138 = smul.addr %s137, 2
        %s139 = smul.addr %s138, 8
        %s140 = scalar_lea.vmem %s0, %s139
        %s141 = smul.u32 5, %s9
      $region20: #{forward.22} parent=15 // pred_fallthru
        _
      // Predicated region
      $region21: #{forward.22} parent=15 // pred_check
        %p142 = pneg %p55
      $region22: #{forward.22} parent=15 // pred_check_branch
        %144 = sbr.rel (%p142) target = $region24
      $region23: #{forward.22} parent=15 // pred_region
        %s145 = smul.u32 5, %s9
        %p146 = scmp.lt.s32.totalorder %s145, 9
        %s147 = scalar_select %p146, %s145, 9
        %s148 = smul.addr %s147, 2
        %s149 = smul.addr %s148, 8
        %s150 = scalar_lea.vmem %s1, %s149
        %s151 = smul.u32 5, %s9
      $region24: #{forward.22} parent=15 // pred_fallthru
        _
      // Predicated region
      $region25: #{forward.22} parent=15 // pred_check
        %p152 = pneg %p81
      $region26: #{forward.22} parent=15 // pred_check_branch
        %154 = sbr.rel (%p152) target = $region28
      $region27: #{forward.22} parent=15 // pred_region
        %s155 = smul.u32 5, %s9
        %p156 = scmp.lt.s32.totalorder %s155, 9
        %s157 = scalar_select %p156, %s155, 9
        %s158 = smul.addr %s157, 2
        %s159 = smul.addr %s158, 8
        %s160 = scalar_lea.vmem %s2, %s159
        %s161 = smul.u32 5, %s9
      $region28: #{forward.22} parent=15 // pred_fallthru
        _
    $region16: #{forward.22} parent=5 // pred_fallthru
      _
    %p162 = scmp.le.s32.totalorder 1, %s9
    %p163 = scmp.lt.s32.totalorder %s9, 3
    %p164 = pnand %p162, %p163
    %p165 = pneg %p164
    // Predicated region
    $region29: #{forward.22} parent=5 // pred_check
      _
    $region30: #{forward.22} parent=5 // pred_check_branch
      %167 = sbr.rel (%p164) target = $region32
    $region31: #{forward.22} parent=5 // pred_region
      %s168 = ssub.s32 %s9, 1
      %s169 = smul.u32 5, %s14
      %p170 = scmp.lt.s32.totalorder %s169, 9
      %s171 = scalar_select %p170, %s169, 9
      %s172 = smul.addr %s171, 2
      %s173 = smul.addr %s172, 8
      %s174 = scalar_lea.vmem %s0, %s173
      %p175 = pneg %p35
      %p176 = pneg %p32
      %s177 = smul.u32 5, %s14
      %p178 = scmp.lt.s32.totalorder %s177, 9
      %s179 = scalar_select %p178, %s177, 9
      %s180 = smul.addr %s179, 2
      %s181 = smul.addr %s180, 8
      %s182 = scalar_lea.vmem %s1, %s181
      %p183 = pneg %p61
      %p184 = pneg %p58
      %s185 = smul.u32 5, %s14
      %p186 = scmp.lt.s32.totalorder %s185, 9
      %s187 = scalar_select %p186, %s185, 9
      %s188 = smul.addr %s187, 2
      %s189 = smul.addr %s188, 8
      %s190 = scalar_lea.vmem %s2, %s189
      %p191 = pneg %p87
      %p192 = pneg %p84
      %p193 = pneg %p113
      %p194 = pneg %p110
      %s195 = smul.u32 5, %s14
      %p196 = scmp.lt.s32.totalorder %s195, 9
      %s197 = scalar_select %p196, %s195, 9
      %s198 = smul.addr %s197, 2
      %s199 = smul.addr %s198, 8
      %s200 = scalar_lea.vmem %s3, %s199
      %s201 = smul.u32 5, %s14
      %p202 = scmp.lt.s32.totalorder %s201, 9
      %s203 = scalar_select %p202, %s201, 9
      %s204 = smul.addr %s203, 2
      %s205 = smul.addr %s204, 8
      %s206 = scalar_lea.vmem %s0, %s205
      %s207 = smul.u32 5, %s14
      %s208 = smul.u32 5, %s14
      %p209 = scmp.lt.s32.totalorder %s208, 9
      %s210 = scalar_select %p209, %s208, 9
      %s211 = smul.addr %s210, 2
      %s212 = smul.addr %s211, 8
      %s213 = scalar_lea.vmem %s1, %s212
      %s214 = smul.u32 5, %s14
      %s215 = smul.u32 5, %s14
      %p216 = scmp.lt.s32.totalorder %s215, 9
      %s217 = scalar_select %p216, %s215, 9
      %s218 = smul.addr %s217, 2
      %s219 = smul.addr %s218, 8
      %s220 = scalar_lea.vmem %s2, %s219
      %s221 = smul.u32 5, %s14
      %s222 = smul.u32 5, %s14
      %p223 = scmp.lt.s32.totalorder %s222, 9
      %s224 = scalar_select %p223, %s222, 9
      %s225 = smul.addr %s224, 2
      %s226 = smul.addr %s225, 8
      %s227 = scalar_lea.vmem %s3, %s226
      %s228 = smul.u32 5, %s14
      %v229 = vld [vmem:[%s206] sm:$0xff]
      %v230 = vld [vmem:[%s206 + $0x8] sm:$0xff]
      %v231 = vld [vmem:[%s206 + $0x10] sm:$0xff]
      %v232 = vld [vmem:[%s206 + $0x18] sm:$0xff]
      %v233 = vld [vmem:[%s206 + $0x20] sm:$0xff]
      %v234 = vld [vmem:[%s206 + $0x28] sm:$0xff]
      %v235 = vld [vmem:[%s206 + $0x30] sm:$0xff]
      %v236 = vld [vmem:[%s206 + $0x38] sm:$0xff]
      %v237 = vld [vmem:[%s206 + $0x40] sm:$0xff]
      %v238 = vld [vmem:[%s206 + $0x48] sm:$0xff]
      %v239 = vld [vmem:[%s213] sm:$0xff]
      %v240 = vld [vmem:[%s213 + $0x8] sm:$0xff]
      %v241 = vld [vmem:[%s213 + $0x10] sm:$0xff]
      %v242 = vld [vmem:[%s213 + $0x18] sm:$0xff]
      %v243 = vld [vmem:[%s213 + $0x20] sm:$0xff]
      %v244 = vld [vmem:[%s213 + $0x28] sm:$0xff]
      %v245 = vld [vmem:[%s213 + $0x30] sm:$0xff]
      %v246 = vld [vmem:[%s213 + $0x38] sm:$0xff]
      %v247 = vld [vmem:[%s213 + $0x40] sm:$0xff]
      %v248 = vld [vmem:[%s213 + $0x48] sm:$0xff]
      %v249 = vld [vmem:[%s220] sm:$0xff]
      %v250 = vld [vmem:[%s220 + $0x8] sm:$0xff]
      %v251 = vld [vmem:[%s220 + $0x10] sm:$0xff]
      %v252 = vld [vmem:[%s220 + $0x18] sm:$0xff]
      %v253 = vld [vmem:[%s220 + $0x20] sm:$0xff]
      %v254 = vld [vmem:[%s220 + $0x28] sm:$0xff]
      %v255 = vld [vmem:[%s220 + $0x30] sm:$0xff]
      %v256 = vld [vmem:[%s220 + $0x38] sm:$0xff]
      %v257 = vld [vmem:[%s220 + $0x40] sm:$0xff]
      %v258 = vld [vmem:[%s220 + $0x48] sm:$0xff]
      %vm259 = vcmask 31744
      %v261 = vsel %vm259, %v229, 0
      %v264 = vsel %vm259, %v230, 0
      %v267 = vsel %vm259, %v239, 0
      %v270 = vsel %vm259, %v240, 0
      %272 = vmatpush.xpose.msra.mxu0 0.0
      %273 = vmatpush.xpose.msra.mxu0 0.0
      %274 = vmatpush.xpose.msra.mxu0 0.0
      %275 = vmatpush.xpose.msra.mxu0 0.0
      %276 = vmatpush.xpose.msra.mxu0 0.0
      %277 = vmatpush.xpose.msra.mxu0 0.0
      %278 = vmatpush.xpose.msra.mxu0 0.0
      %279 = vmatpush.xpose.msra.mxu0 0.0
      %280 = vmatpush.xpose.msra.mxu0 0.0
      %281 = vmatpush.xpose.msra.mxu0 0.0
      %282 = vmatpush.xpose.msra.mxu0 0.0
      %283 = vmatpush.xpose.msra.mxu0 0.0
      %284 = vmatpush.xpose.msra.mxu0 0.0
      %285 = vmatpush.xpose.msra.mxu0 0.0
      %286 = vmatpush.xpose.msra.mxu0 %v270
      %287 = vmatpush.xpose.msra.mxu0 %v267
      %288 = vmatmul.f32.gmra.mxu0 %v261
      %v289 = vpop.f32.mrf.mxu0
      %v290 = vadd.f32 0.0, %v289
      %291 = vmatmul.f32.gmra.mxu0 %v264
      %v292 = vpop.f32.mrf.mxu0
      %v293 = vadd.f32 0.0, %v292
      %294 = vdwg.mxu0
      %v296 = vsel %vm259, %v231, 0
      %v299 = vsel %vm259, %v232, 0
      %v302 = vsel %vm259, %v241, 0
      %v305 = vsel %vm259, %v242, 0
      %307 = vmatpush.xpose.msra.mxu0 0.0
      %308 = vmatpush.xpose.msra.mxu0 0.0
      %309 = vmatpush.xpose.msra.mxu0 0.0
      %310 = vmatpush.xpose.msra.mxu0 0.0
      %311 = vmatpush.xpose.msra.mxu0 0.0
      %312 = vmatpush.xpose.msra.mxu0 0.0
      %313 = vmatpush.xpose.msra.mxu0 0.0
      %314 = vmatpush.xpose.msra.mxu0 0.0
      %315 = vmatpush.xpose.msra.mxu0 0.0
      %316 = vmatpush.xpose.msra.mxu0 0.0
      %317 = vmatpush.xpose.msra.mxu0 0.0
      %318 = vmatpush.xpose.msra.mxu0 0.0
      %319 = vmatpush.xpose.msra.mxu0 0.0
      %320 = vmatpush.xpose.msra.mxu0 0.0
      %321 = vmatpush.xpose.msra.mxu0 %v305
      %322 = vmatpush.xpose.msra.mxu0 %v302
      %323 = vmatmul.f32.gmra.mxu0 %v296
      %v324 = vpop.f32.mrf.mxu0
      %v325 = vadd.f32 0.0, %v324
      %326 = vmatmul.f32.gmra.mxu0 %v299
      %v327 = vpop.f32.mrf.mxu0
      %v328 = vadd.f32 0.0, %v327
      %329 = vdwg.mxu0
      %v331 = vsel %vm259, %v233, 0
      %v334 = vsel %vm259, %v234, 0
      %v337 = vsel %vm259, %v243, 0
      %v340 = vsel %vm259, %v244, 0
      %342 = vmatpush.xpose.msra.mxu0 0.0
      %343 = vmatpush.xpose.msra.mxu0 0.0
      %344 = vmatpush.xpose.msra.mxu0 0.0
      %345 = vmatpush.xpose.msra.mxu0 0.0
      %346 = vmatpush.xpose.msra.mxu0 0.0
      %347 = vmatpush.xpose.msra.mxu0 0.0
      %348 = vmatpush.xpose.msra.mxu0 0.0
      %349 = vmatpush.xpose.msra.mxu0 0.0
      %350 = vmatpush.xpose.msra.mxu0 0.0
      %351 = vmatpush.xpose.msra.mxu0 0.0
      %352 = vmatpush.xpose.msra.mxu0 0.0
      %353 = vmatpush.xpose.msra.mxu0 0.0
      %354 = vmatpush.xpose.msra.mxu0 0.0
      %355 = vmatpush.xpose.msra.mxu0 0.0
      %356 = vmatpush.xpose.msra.mxu0 %v340
      %357 = vmatpush.xpose.msra.mxu0 %v337
      %358 = vmatmul.f32.gmra.mxu0 %v331
      %v359 = vpop.f32.mrf.mxu0
      %v360 = vadd.f32 0.0, %v359
      %361 = vmatmul.f32.gmra.mxu0 %v334
      %v362 = vpop.f32.mrf.mxu0
      %v363 = vadd.f32 0.0, %v362
      %364 = vdwg.mxu0
      %v366 = vsel %vm259, %v235, 0
      %v369 = vsel %vm259, %v236, 0
      %v372 = vsel %vm259, %v245, 0
      %v375 = vsel %vm259, %v246, 0
      %377 = vmatpush.xpose.msra.mxu0 0.0
      %378 = vmatpush.xpose.msra.mxu0 0.0
      %379 = vmatpush.xpose.msra.mxu0 0.0
      %380 = vmatpush.xpose.msra.mxu0 0.0
      %381 = vmatpush.xpose.msra.mxu0 0.0
      %382 = vmatpush.xpose.msra.mxu0 0.0
      %383 = vmatpush.xpose.msra.mxu0 0.0
      %384 = vmatpush.xpose.msra.mxu0 0.0
      %385 = vmatpush.xpose.msra.mxu0 0.0
      %386 = vmatpush.xpose.msra.mxu0 0.0
      %387 = vmatpush.xpose.msra.mxu0 0.0
      %388 = vmatpush.xpose.msra.mxu0 0.0
      %389 = vmatpush.xpose.msra.mxu0 0.0
      %390 = vmatpush.xpose.msra.mxu0 0.0
      %391 = vmatpush.xpose.msra.mxu0 %v375
      %392 = vmatpush.xpose.msra.mxu0 %v372
      %393 = vmatmul.f32.gmra.mxu0 %v366
      %v394 = vpop.f32.mrf.mxu0
      %v395 = vadd.f32 0.0, %v394
      %396 = vmatmul.f32.gmra.mxu0 %v369
      %v397 = vpop.f32.mrf.mxu0
      %v398 = vadd.f32 0.0, %v397
      %399 = vdwg.mxu0
      %v401 = vsel %vm259, %v237, 0
      %v404 = vsel %vm259, %v238, 0
      %v407 = vsel %vm259, %v247, 0
      %v410 = vsel %vm259, %v248, 0
      %412 = vmatpush.xpose.msra.mxu0 0.0
      %413 = vmatpush.xpose.msra.mxu0 0.0
      %414 = vmatpush.xpose.msra.mxu0 0.0
      %415 = vmatpush.xpose.msra.mxu0 0.0
      %416 = vmatpush.xpose.msra.mxu0 0.0
      %417 = vmatpush.xpose.msra.mxu0 0.0
      %418 = vmatpush.xpose.msra.mxu0 0.0
      %419 = vmatpush.xpose.msra.mxu0 0.0
      %420 = vmatpush.xpose.msra.mxu0 0.0
      %421 = vmatpush.xpose.msra.mxu0 0.0
      %422 = vmatpush.xpose.msra.mxu0 0.0
      %423 = vmatpush.xpose.msra.mxu0 0.0
      %424 = vmatpush.xpose.msra.mxu0 0.0
      %425 = vmatpush.xpose.msra.mxu0 0.0
      %426 = vmatpush.xpose.msra.mxu0 %v410
      %427 = vmatpush.xpose.msra.mxu0 %v407
      %428 = vmatmul.f32.gmra.mxu0 %v401
      %v429 = vpop.f32.mrf.mxu0
      %v430 = vadd.f32 0.0, %v429
      %431 = vmatmul.f32.gmra.mxu0 %v404
      %v432 = vpop.f32.mrf.mxu0
      %v433 = vadd.f32 0.0, %v432
      %434 = vdwg.mxu0
      %v435 = vmul.f32 %v290, 0.5
      %v436 = vmul.f32 %v293, 0.5
      %v437 = vmul.f32 %v325, 0.5
      %v438 = vmul.f32 %v328, 0.5
      %v439 = vmul.f32 %v360, 0.5
      %v440 = vmul.f32 %v363, 0.5
      %v441 = vmul.f32 %v395, 0.5
      %v442 = vmul.f32 %v398, 0.5
      %v443 = vmul.f32 %v430, 0.5
      %v444 = vmul.f32 %v433, 0.5
      %vm445 = vcmask 130048
      %v446 = vsel %vm445, %v435, -inf
      %447 = vmax.xlane.f32.xlu0 %v446
      %v448 = vpop.xlane.xlu0 %447
      %v449 = vsel %vm445, %v436, -inf
      %450 = vmax.xlane.f32.xlu0 %v449
      %v451 = vpop.xlane.xlu0 %450
      %v452 = vsel %vm445, %v437, -inf
      %453 = vmax.xlane.f32.xlu0 %v452
      %v454 = vpop.xlane.xlu0 %453
      %v455 = vsel %vm445, %v438, -inf
      %456 = vmax.xlane.f32.xlu0 %v455
      %v457 = vpop.xlane.xlu0 %456
      %v458 = vsel %vm445, %v439, -inf
      %459 = vmax.xlane.f32.xlu0 %v458
      %v460 = vpop.xlane.xlu0 %459
      %v461 = vsel %vm445, %v440, -inf
      %462 = vmax.xlane.f32.xlu0 %v461
      %v463 = vpop.xlane.xlu0 %462
      %v464 = vsel %vm445, %v441, -inf
      %465 = vmax.xlane.f32.xlu0 %v464
      %v466 = vpop.xlane.xlu0 %465
      %v467 = vsel %vm445, %v442, -inf
      %468 = vmax.xlane.f32.xlu0 %v467
      %v469 = vpop.xlane.xlu0 %468
      %v470 = vsel %vm445, %v443, -inf
      %471 = vmax.xlane.f32.xlu0 %v470
      %v472 = vpop.xlane.xlu0 %471
      %v473 = vsel %vm445, %v444, -inf
      %474 = vmax.xlane.f32.xlu0 %v473
      %v475 = vpop.xlane.xlu0 %474
      %v476 = vsub.f32 %v435, %v448
      %v477 = vsub.f32 %v436, %v451
      %v478 = vsub.f32 %v437, %v454
      %v479 = vsub.f32 %v438, %v457
      %v480 = vsub.f32 %v439, %v460
      %v481 = vsub.f32 %v440, %v463
      %v482 = vsub.f32 %v441, %v466
      %v483 = vsub.f32 %v442, %v469
      %v484 = vsub.f32 %v443, %v472
      %v485 = vsub.f32 %v444, %v475
      %v486 = vmul.f32 %v476, 1.442695
      %v487 = vpow.pop %v486
      %v488 = vmul.f32 %v477, 1.442695
      %v489 = vpow.pop %v488
      %v490 = vmul.f32 %v478, 1.442695
      %v491 = vpow.pop %v490
      %v492 = vmul.f32 %v479, 1.442695
      %v493 = vpow.pop %v492
      %v494 = vmul.f32 %v480, 1.442695
      %v495 = vpow.pop %v494
      %v496 = vmul.f32 %v481, 1.442695
      %v497 = vpow.pop %v496
      %v498 = vmul.f32 %v482, 1.442695
      %v499 = vpow.pop %v498
      %v500 = vmul.f32 %v483, 1.442695
      %v501 = vpow.pop %v500
      %v502 = vmul.f32 %v484, 1.442695
      %v503 = vpow.pop %v502
      %v504 = vmul.f32 %v485, 1.442695
      %v505 = vpow.pop %v504
      %v506 = vsel %vm445, %v487, 0.0
      %507 = vadd.xlane.f32.xlu0 %v506
      %v508 = vpop.xlane.xlu0 %507
      %v509 = vsel %vm445, %v489, 0.0
      %510 = vadd.xlane.f32.xlu0 %v509
      %v511 = vpop.xlane.xlu0 %510
      %v512 = vsel %vm445, %v491, 0.0
      %513 = vadd.xlane.f32.xlu0 %v512
      %v514 = vpop.xlane.xlu0 %513
      %v515 = vsel %vm445, %v493, 0.0
      %516 = vadd.xlane.f32.xlu0 %v515
      %v517 = vpop.xlane.xlu0 %516
      %v518 = vsel %vm445, %v495, 0.0
      %519 = vadd.xlane.f32.xlu0 %v518
      %v520 = vpop.xlane.xlu0 %519
      %v521 = vsel %vm445, %v497, 0.0
      %522 = vadd.xlane.f32.xlu0 %v521
      %v523 = vpop.xlane.xlu0 %522
      %v524 = vsel %vm445, %v499, 0.0
      %525 = vadd.xlane.f32.xlu0 %v524
      %v526 = vpop.xlane.xlu0 %525
      %v527 = vsel %vm445, %v501, 0.0
      %528 = vadd.xlane.f32.xlu0 %v527
      %v529 = vpop.xlane.xlu0 %528
      %v530 = vsel %vm445, %v503, 0.0
      %531 = vadd.xlane.f32.xlu0 %v530
      %v532 = vpop.xlane.xlu0 %531
      %v533 = vsel %vm445, %v505, 0.0
      %534 = vadd.xlane.f32.xlu0 %v533
      %v535 = vpop.xlane.xlu0 %534
      %v536 = vrcp.pop %v508
      %v537 = vrcp.pop %v511
      %v538 = vrcp.pop %v514
      %v539 = vrcp.pop %v517
      %v540 = vrcp.pop %v520
      %v541 = vrcp.pop %v523
      %v542 = vrcp.pop %v526
      %v543 = vrcp.pop %v529
      %v544 = vrcp.pop %v532
      %v545 = vrcp.pop %v535
      %v546 = vmul.f32 %v487, %v536
      %v547 = vmul.f32 %v489, %v537
      %v548 = vmul.f32 %v491, %v538
      %v549 = vmul.f32 %v493, %v539
      %v550 = vmul.f32 %v495, %v540
      %v551 = vmul.f32 %v497, %v541
      %v552 = vmul.f32 %v499, %v542
      %v553 = vmul.f32 %v501, %v543
      %v554 = vmul.f32 %v503, %v544
      %v555 = vmul.f32 %v505, %v545
      %v557 = vsel %vm445, %v546, 0
      %v560 = vsel %vm445, %v547, 0
      %562 = vmatpush.msra.mxu0 0.0
      %563 = vmatpush.msra.mxu0 0.0
      %564 = vmatpush.msra.mxu0 0.0
      %565 = vmatpush.msra.mxu0 0.0
      %566 = vmatpush.msra.mxu0 0.0
      %567 = vmatpush.msra.mxu0 0.0
      %568 = vmatpush.msra.mxu0 0.0
      %569 = vmatpush.msra.mxu0 0.0
      %570 = vmatpush.msra.mxu0 0.0
      %571 = vmatpush.msra.mxu0 0.0
      %572 = vmatpush.msra.mxu0 0.0
      %573 = vmatpush.msra.mxu0 0.0
      %574 = vmatpush.msra.mxu0 0.0
      %575 = vmatpush.msra.mxu0 0.0
      %576 = vmatpush.msra.mxu0 %v250
      %577 = vmatpush.msra.mxu0 %v249
      %578 = vmatmul.f32.gmra.mxu0 %v557
      %v579 = vpop.f32.mrf.mxu0
      %v580 = vadd.f32 0.0, %v579
      %581 = vmatmul.f32.gmra.mxu0 %v560
      %v582 = vpop.f32.mrf.mxu0
      %v583 = vadd.f32 0.0, %v582
      %584 = vdwg.mxu0
      %v586 = vsel %vm445, %v548, 0
      %v589 = vsel %vm445, %v549, 0
      %591 = vmatpush.msra.mxu0 0.0
      %592 = vmatpush.msra.mxu0 0.0
      %593 = vmatpush.msra.mxu0 0.0
      %594 = vmatpush.msra.mxu0 0.0
      %595 = vmatpush.msra.mxu0 0.0
      %596 = vmatpush.msra.mxu0 0.0
      %597 = vmatpush.msra.mxu0 0.0
      %598 = vmatpush.msra.mxu0 0.0
      %599 = vmatpush.msra.mxu0 0.0
      %600 = vmatpush.msra.mxu0 0.0
      %601 = vmatpush.msra.mxu0 0.0
      %602 = vmatpush.msra.mxu0 0.0
      %603 = vmatpush.msra.mxu0 0.0
      %604 = vmatpush.msra.mxu0 0.0
      %605 = vmatpush.msra.mxu0 %v252
      %606 = vmatpush.msra.mxu0 %v251
      %607 = vmatmul.f32.gmra.mxu0 %v586
      %v608 = vpop.f32.mrf.mxu0
      %v609 = vadd.f32 0.0, %v608
      %610 = vmatmul.f32.gmra.mxu0 %v589
      %v611 = vpop.f32.mrf.mxu0
      %v612 = vadd.f32 0.0, %v611
      %613 = vdwg.mxu0
      %v615 = vsel %vm445, %v550, 0
      %v618 = vsel %vm445, %v551, 0
      %620 = vmatpush.msra.mxu0 0.0
      %621 = vmatpush.msra.mxu0 0.0
      %622 = vmatpush.msra.mxu0 0.0
      %623 = vmatpush.msra.mxu0 0.0
      %624 = vmatpush.msra.mxu0 0.0
      %625 = vmatpush.msra.mxu0 0.0
      %626 = vmatpush.msra.mxu0 0.0
      %627 = vmatpush.msra.mxu0 0.0
      %628 = vmatpush.msra.mxu0 0.0
      %629 = vmatpush.msra.mxu0 0.0
      %630 = vmatpush.msra.mxu0 0.0
      %631 = vmatpush.msra.mxu0 0.0
      %632 = vmatpush.msra.mxu0 0.0
      %633 = vmatpush.msra.mxu0 0.0
      %634 = vmatpush.msra.mxu0 %v254
      %635 = vmatpush.msra.mxu0 %v253
      %636 = vmatmul.f32.gmra.mxu0 %v615
      %v637 = vpop.f32.mrf.mxu0
      %v638 = vadd.f32 0.0, %v637
      %639 = vmatmul.f32.gmra.mxu0 %v618
      %v640 = vpop.f32.mrf.mxu0
      %v641 = vadd.f32 0.0, %v640
      %642 = vdwg.mxu0
      %v644 = vsel %vm445, %v552, 0
      %v647 = vsel %vm445, %v553, 0
      %649 = vmatpush.msra.mxu0 0.0
      %650 = vmatpush.msra.mxu0 0.0
      %651 = vmatpush.msra.mxu0 0.0
      %652 = vmatpush.msra.mxu0 0.0
      %653 = vmatpush.msra.mxu0 0.0
      %654 = vmatpush.msra.mxu0 0.0
      %655 = vmatpush.msra.mxu0 0.0
      %656 = vmatpush.msra.mxu0 0.0
      %657 = vmatpush.msra.mxu0 0.0
      %658 = vmatpush.msra.mxu0 0.0
      %659 = vmatpush.msra.mxu0 0.0
      %660 = vmatpush.msra.mxu0 0.0
      %661 = vmatpush.msra.mxu0 0.0
      %662 = vmatpush.msra.mxu0 0.0
      %663 = vmatpush.msra.mxu0 %v256
      %664 = vmatpush.msra.mxu0 %v255
      %665 = vmatmul.f32.gmra.mxu0 %v644
      %v666 = vpop.f32.mrf.mxu0
      %v667 = vadd.f32 0.0, %v666
      %668 = vmatmul.f32.gmra.mxu0 %v647
      %v669 = vpop.f32.mrf.mxu0
      %v670 = vadd.f32 0.0, %v669
      %671 = vdwg.mxu0
      %v673 = vsel %vm445, %v554, 0
      %v676 = vsel %vm445, %v555, 0
      %678 = vmatpush.msra.mxu0 0.0
      %679 = vmatpush.msra.mxu0 0.0
      %680 = vmatpush.msra.mxu0 0.0
      %681 = vmatpush.msra.mxu0 0.0
      %682 = vmatpush.msra.mxu0 0.0
      %683 = vmatpush.msra.mxu0 0.0
      %684 = vmatpush.msra.mxu0 0.0
      %685 = vmatpush.msra.mxu0 0.0
      %686 = vmatpush.msra.mxu0 0.0
      %687 = vmatpush.msra.mxu0 0.0
      %688 = vmatpush.msra.mxu0 0.0
      %689 = vmatpush.msra.mxu0 0.0
      %690 = vmatpush.msra.mxu0 0.0
      %691 = vmatpush.msra.mxu0 0.0
      %692 = vmatpush.msra.mxu0 %v258
      %693 = vmatpush.msra.mxu0 %v257
      %694 = vmatmul.f32.gmra.mxu0 %v673
      %v695 = vpop.f32.mrf.mxu0
      %v696 = vadd.f32 0.0, %v695
      %697 = vmatmul.f32.gmra.mxu0 %v676
      %v698 = vpop.f32.mrf.mxu0
      %v699 = vadd.f32 0.0, %v698
      %700 = vdwg.mxu0
      %701 = vst.msk [vmem:[%s227] sm:$0xff] %vm259, %v580
      %702 = vst.msk [vmem:[%s227 + $0x8] sm:$0xff] %vm259, %v583
      %703 = vst.msk [vmem:[%s227 + $0x10] sm:$0xff] %vm259, %v609
      %704 = vst.msk [vmem:[%s227 + $0x18] sm:$0xff] %vm259, %v612
      %705 = vst.msk [vmem:[%s227 + $0x20] sm:$0xff] %vm259, %v638
      %706 = vst.msk [vmem:[%s227 + $0x28] sm:$0xff] %vm259, %v641
      %707 = vst.msk [vmem:[%s227 + $0x30] sm:$0xff] %vm259, %v667
      %708 = vst.msk [vmem:[%s227 + $0x38] sm:$0xff] %vm259, %v670
      %709 = vst.msk [vmem:[%s227 + $0x40] sm:$0xff] %vm259, %v696
      %710 = vst.msk [vmem:[%s227 + $0x48] sm:$0xff] %vm259, %v699
      %s711 = smul.u32 5, %s14
      %p712 = scmp.lt.s32.totalorder %s711, 9
      %s713 = scalar_select %p712, %s711, 9
      %s714 = smul.addr %s713, 2
      %s715 = smul.addr %s714, 8
      %s716 = scalar_lea.vmem %s3, %s715
      // Predicated region
      $region33: #{forward.22} parent=31 // pred_check
        %p717 = pneg %p110
      $region34: #{forward.22} parent=31 // pred_check_branch
        %719 = sbr.rel (%p717) target = $region36
      $region35: #{forward.22} parent=31 // pred_region
        %s720 = smul.u32 5, %s14
      $region36: #{forward.22} parent=31 // pred_fallthru
        _
    $region32: #{forward.22} parent=5 // pred_fallthru
      _
    %p721 = scmp.le.s32.totalorder 2, %s9
    // Predicated region
    $region37: #{forward.22} parent=5 // pred_check
      %p722 = pneg %p721
    $region38: #{forward.22} parent=5 // pred_check_branch
      %724 = sbr.rel (%p722) target = $region40
    $region39: #{forward.22} parent=5 // pred_region
      %s725 = ssub.s32 %s9, 2
      // Predicated region
      $region41: #{forward.22} parent=39 // pred_check
        %p726 = pneg %p116
      $region42: #{forward.22} parent=39 // pred_check_branch
        %728 = sbr.rel (%p726) target = $region44
      $region43: #{forward.22} parent=39 // pred_region
        %s729 = smul.u32 5, %s15
        %p730 = scmp.lt.s32.totalorder %s729, 9
        %s731 = scalar_select %p730, %s729, 9
        %s732 = smul.addr %s731, 2
        %s733 = smul.addr %s732, 8
        %s734 = scalar_lea.vmem %s3, %s733
      $region44: #{forward.22} parent=39 // pred_fallthru
        _
    $region40: #{forward.22} parent=5 // pred_fallthru
      _
  $region6: #{forward.22} parent=0 // loop_footer
    %s13 = sadd.s32 1, %s9
  $region7: #{forward.22} parent=0 // loop_footer_branch
    %8 = sbr.rel target = $region3
  $region8: #{forward.22} parent=0 // loop_exit
    _

// kernel: forward.40
$region0: #{forward.40}
  #allocation0 [shape = 'u32[]', space=smem, size = 0x4, offset = 0x4, fixed_abs, tag = 'smem constant byte address 0x4 - core index']
  #allocation1 [shape = 'u32[72,128]{1,0:T(1,128)}', space=vmem, size = 0x9000, scoped, tag = 'internal scratch']
  %s0 = inlined_call_operand.vmem [shape: f32[32,49], index: 0, kind: input, shape index: {}]
  %s1 = inlined_call_operand.vmem [shape: f32[49,49], index: 1, kind: input, shape index: {}]
  %s2 = inlined_call_operand.vmem [shape: f32[1,49], index: 2, kind: input, shape index: {}]
  %s3 = inlined_call_operand.vmem [shape: f32[32,49], index: 3, kind: output, shape index: {}]
  %s4 = sld [smem:[#allocation0]]
  $region45: #{forward.40} parent=0
    _
  %s6 = ssub.s32 1, %s4
  %s7 = scalar_select 0, %s6, %s4
  loop: start=0, step=1, limit=4
  $region2: #{forward.40} parent=0 // loop_pre_header
    _
  $region3: #{forward.40} parent=0 // loop_header
    %s9 = sphi 0, %s13
    %p10 = scmp.ge.s32.totalorder %s9, 4
    %s19 = sphi 0, %s21
    %s22 = sphi 0, %s19
    %s23 = sphi 0, %s22
    %s39 = sphi 0, %s23
    %s43 = sphi 0, %s43
    %s45 = sphi 0, %s43
    %s46 = sphi 0, %s45
    %s60 = sphi 0, %s46
    %s64 = sphi 0, %s64
    %s66 = sphi 0, %s64
    %s67 = sphi 0, %s66
    %s81 = sphi 0, %s67
    %s87 = sphi 0, %s89
    %s90 = sphi 0, %s87
    %s91 = sphi 0, %s90
    %s107 = sphi 0, %s91
  $region4: #{forward.40} parent=0 // loop_header_branch
    %12 = sbr.rel (%p10) target = $region8
  $region5: #{forward.40} parent=0 // loop_body
    %s14 = ssub.s32 %s9, 1
    %s15 = ssub.s32 %s9, 2
    %s16 = sadd.s32 %s9, 1
    %s17 = ssub.s32 %s9, %s16
    %p18 = scmp.eq.s32.totalorder %s17, 0
    %s20 = sadd.s32 %s19, 1
    %s21 = scalar_select %p18, %s19, %s20
    %p24 = pneg %p18
    %p25 = scmp.eq.s32.totalorder %s9, 1
    %p26 = por %p24, %p25
    %p27 = scmp.ne.s32.totalorder %s19, %s22
    %p28 = scmp.eq.s32.totalorder %s9, 0
    %p29 = por %p27, %p28
    %p30 = scmp.ne.s32.totalorder %s19, %s22
    %p31 = scmp.eq.s32.totalorder %s14, 1
    %p32 = por %p30, %p31
    %p33 = scmp.ne.s32.totalorder %s22, %s23
    %p34 = scmp.eq.s32.totalorder %s14, 0
    %p35 = por %p33, %p34
    %p36 = scmp.ne.s32.totalorder %s22, %s23
    %p37 = scmp.eq.s32.totalorder %s15, 1
    %p38 = por %p36, %p37
    %p40 = scmp.ne.s32.totalorder %s23, %s39
    %p41 = scmp.eq.s32.totalorder %s15, 0
    %p42 = por %p40, %p41
    %s44 = sadd.s32 %s43, 1
    %p47 = scmp.eq.s32.totalorder %s9, 1
    %p48 = scmp.ne.s32.totalorder %s43, %s45
    %p49 = scmp.eq.s32.totalorder %s9, 0
    %p50 = por %p48, %p49
    %p51 = scmp.ne.s32.totalorder %s43, %s45
    %p52 = scmp.eq.s32.totalorder %s14, 1
    %p53 = por %p51, %p52
    %p54 = scmp.ne.s32.totalorder %s45, %s46
    %p55 = scmp.eq.s32.totalorder %s14, 0
    %p56 = por %p54, %p55
    %p57 = scmp.ne.s32.totalorder %s45, %s46
    %p58 = scmp.eq.s32.totalorder %s15, 1
    %p59 = por %p57, %p58
    %p61 = scmp.ne.s32.totalorder %s46, %s60
    %p62 = scmp.eq.s32.totalorder %s15, 0
    %p63 = por %p61, %p62
    %s65 = sadd.s32 %s64, 1
    %p68 = scmp.eq.s32.totalorder %s9, 1
    %p69 = scmp.ne.s32.totalorder %s64, %s66
    %p70 = scmp.eq.s32.totalorder %s9, 0
    %p71 = por %p69, %p70
    %p72 = scmp.ne.s32.totalorder %s64, %s66
    %p73 = scmp.eq.s32.totalorder %s14, 1
    %p74 = por %p72, %p73
    %p75 = scmp.ne.s32.totalorder %s66, %s67
    %p76 = scmp.eq.s32.totalorder %s14, 0
    %p77 = por %p75, %p76
    %p78 = scmp.ne.s32.totalorder %s66, %s67
    %p79 = scmp.eq.s32.totalorder %s15, 1
    %p80 = por %p78, %p79
    %p82 = scmp.ne.s32.totalorder %s67, %s81
    %p83 = scmp.eq.s32.totalorder %s15, 0
    %p84 = por %p82, %p83
    %s85 = ssub.s32 %s9, %s16
    %p86 = scmp.eq.s32.totalorder %s85, 0
    %s88 = sadd.s32 %s87, 1
    %s89 = scalar_select %p86, %s87, %s88
    %p92 = pneg %p86
    %p93 = scmp.eq.s32.totalorder %s9, 1
    %p94 = por %p92, %p93
    %p95 = scmp.ne.s32.totalorder %s87, %s90
    %p96 = scmp.eq.s32.totalorder %s9, 0
    %p97 = por %p95, %p96
    %p98 = scmp.ne.s32.totalorder %s87, %s90
    %p99 = scmp.eq.s32.totalorder %s14, 1
    %p100 = por %p98, %p99
    %p101 = scmp.ne.s32.totalorder %s90, %s91
    %p102 = scmp.eq.s32.totalorder %s14, 0
    %p103 = por %p101, %p102
    %p104 = scmp.ne.s32.totalorder %s90, %s91
    %p105 = scmp.eq.s32.totalorder %s15, 1
    %p106 = por %p104, %p105
    %p108 = scmp.ne.s32.totalorder %s91, %s107
    %p109 = scmp.eq.s32.totalorder %s15, 0
    %p110 = por %p108, %p109
    %p111 = scmp.le.s32.totalorder 1, %s9
    %p112 = scmp.lt.s32.totalorder %s9, 3
    %p113 = pnand %p111, %p112
    %p114 = pneg %p113
    // Predicated region
    $region9: #{forward.40} parent=5 // pred_check
      _
    $region10: #{forward.40} parent=5 // pred_check_branch
      %116 = sbr.rel (%p113) target = $region12
    $region11: #{forward.40} parent=5 // pred_region
      %s117 = ssub.s32 %s9, 1
      // Predicated region
      $region13: #{forward.40} parent=11 // pred_check
        %p118 = pneg %p56
      $region14: #{forward.40} parent=11 // pred_check_branch
        %120 = sbr.rel (%p118) target = $region16
      $region15: #{forward.40} parent=11 // pred_region
        _
      $region16: #{forward.40} parent=11 // pred_fallthru
        _
      // Predicated region
      $region17: #{forward.40} parent=11 // pred_check
        %p121 = pneg %p77
      $region18: #{forward.40} parent=11 // pred_check_branch
        %123 = sbr.rel (%p121) target = $region20
      $region19: #{forward.40} parent=11 // pred_region
        _
      $region20: #{forward.40} parent=11 // pred_fallthru
        _
    $region12: #{forward.40} parent=5 // pred_fallthru
      _
    %p124 = scmp.lt.s32.totalorder %s9, 2
    // Predicated region
    $region21: #{forward.40} parent=5 // pred_check
      %p125 = pneg %p124
    $region22: #{forward.40} parent=5 // pred_check_branch
      %127 = sbr.rel (%p125) target = $region24
    $region23: #{forward.40} parent=5 // pred_region
      // Predicated region
      $region25: #{forward.40} parent=23 // pred_check
        %p128 = pneg %p29
      $region26: #{forward.40} parent=23 // pred_check_branch
        %130 = sbr.rel (%p128) target = $region28
      $region27: #{forward.40} parent=23 // pred_region
        %s131 = smul.u32 2, %s9
        %p132 = scmp.lt.s32.totalorder %s131, 3
        %s133 = scalar_select %p132, %s131, 3
        %s134 = smul.addr %s133, 8
        %s135 = scalar_lea.vmem %s0, %s134
        %s136 = smul.u32 2, %s9
      $region28: #{forward.40} parent=23 // pred_fallthru
        _
    $region24: #{forward.40} parent=5 // pred_fallthru
      _
    %p137 = scmp.le.s32.totalorder 1, %s9
    %p138 = scmp.lt.s32.totalorder %s9, 3
    %p139 = pnand %p137, %p138
    %p140 = pneg %p139
    // Predicated region
    $region29: #{forward.40} parent=5 // pred_check
      _
    $region30: #{forward.40} parent=5 // pred_check_branch
      %142 = sbr.rel (%p139) target = $region32
    $region31: #{forward.40} parent=5 // pred_region
      %s143 = ssub.s32 %s9, 1
      %s144 = smul.u32 2, %s14
      %p145 = scmp.lt.s32.totalorder %s144, 3
      %s146 = scalar_select %p145, %s144, 3
      %s147 = smul.addr %s146, 8
      %s148 = scalar_lea.vmem %s0, %s147
      %p149 = pneg %p35
      %p150 = pneg %p32
      %p151 = pneg %p56
      %p152 = pneg %p53
      %p153 = pneg %p77
      %p154 = pneg %p74
      %p155 = pneg %p103
      %p156 = pneg %p100
      %s157 = smul.u32 2, %s14
      %p158 = scmp.lt.s32.totalorder %s157, 3
      %s159 = scalar_select %p158, %s157, 3
      %s160 = smul.addr %s159, 8
      %s161 = scalar_lea.vmem %s3, %s160
      %s162 = smul.u32 2, %s14
      %p163 = scmp.lt.s32.totalorder %s162, 3
      %s164 = scalar_select %p163, %s162, 3
      %s165 = smul.addr %s164, 8
      %s166 = scalar_lea.vmem %s0, %s165
      %s167 = smul.u32 2, %s14
      %s168 = smul.u32 2, %s14
      %p169 = scmp.lt.s32.totalorder %s168, 3
      %s170 = scalar_select %p169, %s168, 3
      %s171 = smul.addr %s170, 8
      %s172 = scalar_lea.vmem %s3, %s171
      %s173 = smul.u32 2, %s14
      %v174 = vld [vmem:[%s166] sm:$0xff]
      %v175 = vld [vmem:[%s166 + $0x8] sm:$0xff]
      %v176 = vld [vmem:[%s1] sm:$0xff]
      %v177 = vld [vmem:[%s1 + $0x8] sm:$0xff]
      %v178 = vld [vmem:[%s1 + $0x10] sm:$0xff]
      %v179 = vld [vmem:[%s1 + $0x18] sm:$0xff]
      %v180 = vld [vmem:[%s1 + $0x20] sm:$0xff]
      %v181 = vld [vmem:[%s1 + $0x28] sm:$0xff]
      %v182 = vld [vmem:[%s1 + $0x30] sm:$0x1]
      %v183 = vld [vmem:[%s2] sm:$0x1]
      %v185 = vperm.slane %v183, 0
      %vm187 = vcmask 400384
      %v189 = vsel %vm187, %v174, 0
      %v192 = vsel %vm187, %v175, 0
      %vm194 = vcmask 1040384
      %v196 = vsel %vm194, %v182, 0
      %198 = vmatpush.msra.mxu0 0.0
      %199 = vmatpush.msra.mxu0 0.0
      %200 = vmatpush.msra.mxu0 0.0
      %201 = vmatpush.msra.mxu0 0.0
      %202 = vmatpush.msra.mxu0 0.0
      %203 = vmatpush.msra.mxu0 0.0
      %204 = vmatpush.msra.mxu0 0.0
      %205 = vmatpush.msra.mxu0 0.0
      %206 = vmatpush.msra.mxu0 0.0
      %207 = vmatpush.msra.mxu0 %v196
      %208 = vmatpush.msra.mxu0 %v181
      %209 = vmatpush.msra.mxu0 %v180
      %210 = vmatpush.msra.mxu0 %v179
      %211 = vmatpush.msra.mxu0 %v178
      %212 = vmatpush.msra.mxu0 %v177
      %213 = vmatpush.msra.mxu0 %v176
      %214 = vmatmul.f32.gmra.mxu0 %v189
      %v215 = vpop.f32.mrf.mxu0
      %v216 = vadd.f32 %v185, %v215
      %217 = vmatmul.f32.gmra.mxu0 %v192
      %v218 = vpop.f32.mrf.mxu0
      %v219 = vadd.f32 %v185, %v218
      %220 = vdwg.mxu0
      %221 = vst.msk [vmem:[%s172] sm:$0xff] %vm187, %v216
      %222 = vst.msk [vmem:[%s172 + $0x8] sm:$0xff] %vm187, %v219
      %s223 = smul.u32 2, %s14
      %p224 = scmp.lt.s32.totalorder %s223, 3
      %s225 = scalar_select %p224, %s223, 3
      %s226 = smul.addr %s225, 8
      %s227 = scalar_lea.vmem %s3, %s226
      // Predicated region
      $region33: #{forward.40} parent=31 // pred_check
        %p228 = pneg %p100
      $region34: #{forward.40} parent=31 // pred_check_branch
        %230 = sbr.rel (%p228) target = $region36
      $region35: #{forward.40} parent=31 // pred_region
        %s231 = smul.u32 2, %s14
      $region36: #{forward.40} parent=31 // pred_fallthru
        _
    $region32: #{forward.40} parent=5 // pred_fallthru
      _
    %p232 = scmp.le.s32.totalorder 2, %s9
    // Predicated region
    $region37: #{forward.40} parent=5 // pred_check
      %p233 = pneg %p232
    $region38: #{forward.40} parent=5 // pred_check_branch
      %235 = sbr.rel (%p233) target = $region40
    $region39: #{forward.40} parent=5 // pred_region
      %s236 = ssub.s32 %s9, 2
      // Predicated region
      $region41: #{forward.40} parent=39 // pred_check
        %p237 = pneg %p106
      $region42: #{forward.40} parent=39 // pred_check_branch
        %239 = sbr.rel (%p237) target = $region44
      $region43: #{forward.40} parent=39 // pred_region
        %s240 = smul.u32 2, %s15
        %p241 = scmp.lt.s32.totalorder %s240, 3
        %s242 = scalar_select %p241, %s240, 3
        %s243 = smul.addr %s242, 8
        %s244 = scalar_lea.vmem %s3, %s243
      $region44: #{forward.40} parent=39 // pred_fallthru
        _
    $region40: #{forward.40} parent=5 // pred_fallthru
      _
  $region6: #{forward.40} parent=0 // loop_footer
    %s13 = sadd.s32 1, %s9
  $region7: #{forward.40} parent=0 // loop_footer_branch
    %8 = sbr.rel target = $region3
  $region8: #{forward.40} parent=0 // loop_exit
    _

// kernel: forward.23
$region0: #{forward.23}
  #allocation0 [shape = 'u32[]', space=smem, size = 0x4, offset = 0x4, fixed_abs, tag = 'smem constant byte address 0x4 - core index']
  #allocation1 [shape = 'u32[72,128]{1,0:T(1,128)}', space=vmem, size = 0x9000, scoped, tag = 'internal scratch']
  %s0 = inlined_call_operand.vmem [shape: f32[32,20], index: 0, kind: input, shape index: {}]
  %s1 = inlined_call_operand.vmem [shape: f32[32,20], index: 1, kind: input, shape index: {}]
  %s2 = inlined_call_operand.vmem [shape: f32[20,20], index: 2, kind: input, shape index: {}]
  %s3 = inlined_call_operand.vmem [shape: f32[1,20], index: 3, kind: input, shape index: {}]
  %s4 = inlined_call_operand.vmem [shape: f32[1,20], index: 4, kind: input, shape index: {}]
  %s5 = inlined_call_operand.vmem [shape: f32[1,20], index: 5, kind: input, shape index: {}]
  %s6 = inlined_call_operand.vmem [shape: f32[20,32], index: 6, kind: input, shape index: {}]
  %s7 = inlined_call_operand.vmem [shape: f32[1,32], index: 7, kind: input, shape index: {}]
  %s8 = inlined_call_operand.vmem [shape: f32[32,20], index: 8, kind: input, shape index: {}]
  %s9 = inlined_call_operand.vmem [shape: f32[1,20], index: 9, kind: input, shape index: {}]
  %s10 = inlined_call_operand.vmem [shape: f32[1,20], index: 10, kind: input, shape index: {}]
  %s11 = inlined_call_operand.vmem [shape: f32[1,20], index: 11, kind: input, shape index: {}]
  %s12 = inlined_call_operand.vmem [shape: f32[32,20], index: 12, kind: output, shape index: {}]
  %s13 = sld [smem:[#allocation0]]
  $region81: #{forward.23} parent=0
    _
  %s15 = ssub.s32 1, %s13
  %s16 = scalar_select 0, %s15, %s13
  loop: start=0, step=1, limit=4
  $region2: #{forward.23} parent=0 // loop_pre_header
    _
  $region3: #{forward.23} parent=0 // loop_header
    %s18 = sphi 0, %s22
    %p19 = scmp.ge.s32.totalorder %s18, 4
    %s28 = sphi 0, %s30
    %s31 = sphi 0, %s28
    %s32 = sphi 0, %s31
    %s48 = sphi 0, %s32
    %s54 = sphi 0, %s56
    %s57 = sphi 0, %s54
    %s58 = sphi 0, %s57
    %s74 = sphi 0, %s58
    %s78 = sphi 0, %s78
    %s80 = sphi 0, %s78
    %s81 = sphi 0, %s80
    %s95 = sphi 0, %s81
    %s99 = sphi 0, %s99
    %s101 = sphi 0, %s99
    %s102 = sphi 0, %s101
    %s116 = sphi 0, %s102
    %s120 = sphi 0, %s120
    %s122 = sphi 0, %s120
    %s123 = sphi 0, %s122
    %s137 = sphi 0, %s123
    %s141 = sphi 0, %s141
    %s143 = sphi 0, %s141
    %s144 = sphi 0, %s143
    %s158 = sphi 0, %s144
    %s162 = sphi 0, %s162
    %s164 = sphi 0, %s162
    %s165 = sphi 0, %s164
    %s179 = sphi 0, %s165
    %s183 = sphi 0, %s183
    %s185 = sphi 0, %s183
    %s186 = sphi 0, %s185
    %s200 = sphi 0, %s186
    %s204 = sphi 0, %s204
    %s206 = sphi 0, %s204
    %s207 = sphi 0, %s206
    %s221 = sphi 0, %s207
    %s225 = sphi 0, %s225
    %s227 = sphi 0, %s225
    %s228 = sphi 0, %s227
    %s242 = sphi 0, %s228
    %s246 = sphi 0, %s246
    %s248 = sphi 0, %s246
    %s249 = sphi 0, %s248
    %s263 = sphi 0, %s249
    %s267 = sphi 0, %s267
    %s269 = sphi 0, %s267
    %s270 = sphi 0, %s269
    %s284 = sphi 0, %s270
    %s290 = sphi 0, %s292
    %s293 = sphi 0, %s290
    %s294 = sphi 0, %s293
    %s310 = sphi 0, %s294
  $region4: #{forward.23} parent=0 // loop_header_branch
    %21 = sbr.rel (%p19) target = $region8
  $region5: #{forward.23} parent=0 // loop_body
    %s23 = ssub.s32 %s18, 1
    %s24 = ssub.s32 %s18, 2
    %s25 = sadd.s32 %s18, 1
    %s26 = ssub.s32 %s18, %s25
    %p27 = scmp.eq.s32.totalorder %s26, 0
    %s29 = sadd.s32 %s28, 1
    %s30 = scalar_select %p27, %s28, %s29
    %p33 = pneg %p27
    %p34 = scmp.eq.s32.totalorder %s18, 1
    %p35 = por %p33, %p34
    %p36 = scmp.ne.s32.totalorder %s28, %s31
    %p37 = scmp.eq.s32.totalorder %s18, 0
    %p38 = por %p36, %p37
    %p39 = scmp.ne.s32.totalorder %s28, %s31
    %p40 = scmp.eq.s32.totalorder %s23, 1
    %p41 = por %p39, %p40
    %p42 = scmp.ne.s32.totalorder %s31, %s32
    %p43 = scmp.eq.s32.totalorder %s23, 0
    %p44 = por %p42, %p43
    %p45 = scmp.ne.s32.totalorder %s31, %s32
    %p46 = scmp.eq.s32.totalorder %s24, 1
    %p47 = por %p45, %p46
    %p49 = scmp.ne.s32.totalorder %s32, %s48
    %p50 = scmp.eq.s32.totalorder %s24, 0
    %p51 = por %p49, %p50
    %s52 = ssub.s32 %s18, %s25
    %p53 = scmp.eq.s32.totalorder %s52, 0
    %s55 = sadd.s32 %s54, 1
    %s56 = scalar_select %p53, %s54, %s55
    %p59 = pneg %p53
    %p60 = scmp.eq.s32.totalorder %s18, 1
    %p61 = por %p59, %p60
    %p62 = scmp.ne.s32.totalorder %s54, %s57
    %p63 = scmp.eq.s32.totalorder %s18, 0
    %p64 = por %p62, %p63
    %p65 = scmp.ne.s32.totalorder %s54, %s57
    %p66 = scmp.eq.s32.totalorder %s23, 1
    %p67 = por %p65, %p66
    %p68 = scmp.ne.s32.totalorder %s57, %s58
    %p69 = scmp.eq.s32.totalorder %s23, 0
    %p70 = por %p68, %p69
    %p71 = scmp.ne.s32.totalorder %s57, %s58
    %p72 = scmp.eq.s32.totalorder %s24, 1
    %p73 = por %p71, %p72
    %p75 = scmp.ne.s32.totalorder %s58, %s74
    %p76 = scmp.eq.s32.totalorder %s24, 0
    %p77 = por %p75, %p76
    %s79 = sadd.s32 %s78, 1
    %p82 = scmp.eq.s32.totalorder %s18, 1
    %p83 = scmp.ne.s32.totalorder %s78, %s80
    %p84 = scmp.eq.s32.totalorder %s18, 0
    %p85 = por %p83, %p84
    %p86 = scmp.ne.s32.totalorder %s78, %s80
    %p87 = scmp.eq.s32.totalorder %s23, 1
    %p88 = por %p86, %p87
    %p89 = scmp.ne.s32.totalorder %s80, %s81
    %p90 = scmp.eq.s32.totalorder %s23, 0
    %p91 = por %p89, %p90
    %p92 = scmp.ne.s32.totalorder %s80, %s81
    %p93 = scmp.eq.s32.totalorder %s24, 1
    %p94 = por %p92, %p93
    %p96 = scmp.ne.s32.totalorder %s81, %s95
    %p97 = scmp.eq.s32.totalorder %s24, 0
    %p98 = por %p96, %p97
    %s100 = sadd.s32 %s99, 1
    %p103 = scmp.eq.s32.totalorder %s18, 1
    %p104 = scmp.ne.s32.totalorder %s99, %s101
    %p105 = scmp.eq.s32.totalorder %s18, 0
    %p106 = por %p104, %p105
    %p107 = scmp.ne.s32.totalorder %s99, %s101
    %p108 = scmp.eq.s32.totalorder %s23, 1
    %p109 = por %p107, %p108
    %p110 = scmp.ne.s32.totalorder %s101, %s102
    %p111 = scmp.eq.s32.totalorder %s23, 0
    %p112 = por %p110, %p111
    %p113 = scmp.ne.s32.totalorder %s101, %s102
    %p114 = scmp.eq.s32.totalorder %s24, 1
    %p115 = por %p113, %p114
    %p117 = scmp.ne.s32.totalorder %s102, %s116
    %p118 = scmp.eq.s32.totalorder %s24, 0
    %p119 = por %p117, %p118
    %s121 = sadd.s32 %s120, 1
    %p124 = scmp.eq.s32.totalorder %s18, 1
    %p125 = scmp.ne.s32.totalorder %s120, %s122
    %p126 = scmp.eq.s32.totalorder %s18, 0
    %p127 = por %p125, %p126
    %p128 = scmp.ne.s32.totalorder %s120, %s122
    %p129 = scmp.eq.s32.totalorder %s23, 1
    %p130 = por %p128, %p129
    %p131 = scmp.ne.s32.totalorder %s122, %s123
    %p132 = scmp.eq.s32.totalorder %s23, 0
    %p133 = por %p131, %p132
    %p134 = scmp.ne.s32.totalorder %s122, %s123
    %p135 = scmp.eq.s32.totalorder %s24, 1
    %p136 = por %p134, %p135
    %p138 = scmp.ne.s32.totalorder %s123, %s137
    %p139 = scmp.eq.s32.totalorder %s24, 0
    %p140 = por %p138, %p139
    %s142 = sadd.s32 %s141, 1
    %p145 = scmp.eq.s32.totalorder %s18, 1
    %p146 = scmp.ne.s32.totalorder %s141, %s143
    %p147 = scmp.eq.s32.totalorder %s18, 0
    %p148 = por %p146, %p147
    %p149 = scmp.ne.s32.totalorder %s141, %s143
    %p150 = scmp.eq.s32.totalorder %s23, 1
    %p151 = por %p149, %p150
    %p152 = scmp.ne.s32.totalorder %s143, %s144
    %p153 = scmp.eq.s32.totalorder %s23, 0
    %p154 = por %p152, %p153
    %p155 = scmp.ne.s32.totalorder %s143, %s144
    %p156 = scmp.eq.s32.totalorder %s24, 1
    %p157 = por %p155, %p156
    %p159 = scmp.ne.s32.totalorder %s144, %s158
    %p160 = scmp.eq.s32.totalorder %s24, 0
    %p161 = por %p159, %p160
    %s163 = sadd.s32 %s162, 1
    %p166 = scmp.eq.s32.totalorder %s18, 1
    %p167 = scmp.ne.s32.totalorder %s162, %s164
    %p168 = scmp.eq.s32.totalorder %s18, 0
    %p169 = por %p167, %p168
    %p170 = scmp.ne.s32.totalorder %s162, %s164
    %p171 = scmp.eq.s32.totalorder %s23, 1
    %p172 = por %p170, %p171
    %p173 = scmp.ne.s32.totalorder %s164, %s165
    %p174 = scmp.eq.s32.totalorder %s23, 0
    %p175 = por %p173, %p174
    %p176 = scmp.ne.s32.totalorder %s164, %s165
    %p177 = scmp.eq.s32.totalorder %s24, 1
    %p178 = por %p176, %p177
    %p180 = scmp.ne.s32.totalorder %s165, %s179
    %p181 = scmp.eq.s32.totalorder %s24, 0
    %p182 = por %p180, %p181
    %s184 = sadd.s32 %s183, 1
    %p187 = scmp.eq.s32.totalorder %s18, 1
    %p188 = scmp.ne.s32.totalorder %s183, %s185
    %p189 = scmp.eq.s32.totalorder %s18, 0
    %p190 = por %p188, %p189
    %p191 = scmp.ne.s32.totalorder %s183, %s185
    %p192 = scmp.eq.s32.totalorder %s23, 1
    %p193 = por %p191, %p192
    %p194 = scmp.ne.s32.totalorder %s185, %s186
    %p195 = scmp.eq.s32.totalorder %s23, 0
    %p196 = por %p194, %p195
    %p197 = scmp.ne.s32.totalorder %s185, %s186
    %p198 = scmp.eq.s32.totalorder %s24, 1
    %p199 = por %p197, %p198
    %p201 = scmp.ne.s32.totalorder %s186, %s200
    %p202 = scmp.eq.s32.totalorder %s24, 0
    %p203 = por %p201, %p202
    %s205 = sadd.s32 %s204, 1
    %p208 = scmp.eq.s32.totalorder %s18, 1
    %p209 = scmp.ne.s32.totalorder %s204, %s206
    %p210 = scmp.eq.s32.totalorder %s18, 0
    %p211 = por %p209, %p210
    %p212 = scmp.ne.s32.totalorder %s204, %s206
    %p213 = scmp.eq.s32.totalorder %s23, 1
    %p214 = por %p212, %p213
    %p215 = scmp.ne.s32.totalorder %s206, %s207
    %p216 = scmp.eq.s32.totalorder %s23, 0
    %p217 = por %p215, %p216
    %p218 = scmp.ne.s32.totalorder %s206, %s207
    %p219 = scmp.eq.s32.totalorder %s24, 1
    %p220 = por %p218, %p219
    %p222 = scmp.ne.s32.totalorder %s207, %s221
    %p223 = scmp.eq.s32.totalorder %s24, 0
    %p224 = por %p222, %p223
    %s226 = sadd.s32 %s225, 1
    %p229 = scmp.eq.s32.totalorder %s18, 1
    %p230 = scmp.ne.s32.totalorder %s225, %s227
    %p231 = scmp.eq.s32.totalorder %s18, 0
    %p232 = por %p230, %p231
    %p233 = scmp.ne.s32.totalorder %s225, %s227
    %p234 = scmp.eq.s32.totalorder %s23, 1
    %p235 = por %p233, %p234
    %p236 = scmp.ne.s32.totalorder %s227, %s228
    %p237 = scmp.eq.s32.totalorder %s23, 0
    %p238 = por %p236, %p237
    %p239 = scmp.ne.s32.totalorder %s227, %s228
    %p240 = scmp.eq.s32.totalorder %s24, 1
    %p241 = por %p239, %p240
    %p243 = scmp.ne.s32.totalorder %s228, %s242
    %p244 = scmp.eq.s32.totalorder %s24, 0
    %p245 = por %p243, %p244
    %s247 = sadd.s32 %s246, 1
    %p250 = scmp.eq.s32.totalorder %s18, 1
    %p251 = scmp.ne.s32.totalorder %s246, %s248
    %p252 = scmp.eq.s32.totalorder %s18, 0
    %p253 = por %p251, %p252
    %p254 = scmp.ne.s32.totalorder %s246, %s248
    %p255 = scmp.eq.s32.totalorder %s23, 1
    %p256 = por %p254, %p255
    %p257 = scmp.ne.s32.totalorder %s248, %s249
    %p258 = scmp.eq.s32.totalorder %s23, 0
    %p259 = por %p257, %p258
    %p260 = scmp.ne.s32.totalorder %s248, %s249
    %p261 = scmp.eq.s32.totalorder %s24, 1
    %p262 = por %p260, %p261
    %p264 = scmp.ne.s32.totalorder %s249, %s263
    %p265 = scmp.eq.s32.totalorder %s24, 0
    %p266 = por %p264, %p265
    %s268 = sadd.s32 %s267, 1
    %p271 = scmp.eq.s32.totalorder %s18, 1
    %p272 = scmp.ne.s32.totalorder %s267, %s269
    %p273 = scmp.eq.s32.totalorder %s18, 0
    %p274 = por %p272, %p273
    %p275 = scmp.ne.s32.totalorder %s267, %s269
    %p276 = scmp.eq.s32.totalorder %s23, 1
    %p277 = por %p275, %p276
    %p278 = scmp.ne.s32.totalorder %s269, %s270
    %p279 = scmp.eq.s32.totalorder %s23, 0
    %p280 = por %p278, %p279
    %p281 = scmp.ne.s32.totalorder %s269, %s270
    %p282 = scmp.eq.s32.totalorder %s24, 1
    %p283 = por %p281, %p282
    %p285 = scmp.ne.s32.totalorder %s270, %s284
    %p286 = scmp.eq.s32.totalorder %s24, 0
    %p287 = por %p285, %p286
    %s288 = ssub.s32 %s18, %s25
    %p289 = scmp.eq.s32.totalorder %s288, 0
    %s291 = sadd.s32 %s290, 1
    %s292 = scalar_select %p289, %s290, %s291
    %p295 = pneg %p289
    %p296 = scmp.eq.s32.totalorder %s18, 1
    %p297 = por %p295, %p296
    %p298 = scmp.ne.s32.totalorder %s290, %s293
    %p299 = scmp.eq.s32.totalorder %s18, 0
    %p300 = por %p298, %p299
    %p301 = scmp.ne.s32.totalorder %s290, %s293
    %p302 = scmp.eq.s32.totalorder %s23, 1
    %p303 = por %p301, %p302
    %p304 = scmp.ne.s32.totalorder %s293, %s294
    %p305 = scmp.eq.s32.totalorder %s23, 0
    %p306 = por %p304, %p305
    %p307 = scmp.ne.s32.totalorder %s293, %s294
    %p308 = scmp.eq.s32.totalorder %s24, 1
    %p309 = por %p307, %p308
    %p311 = scmp.ne.s32.totalorder %s294, %s310
    %p312 = scmp.eq.s32.totalorder %s24, 0
    %p313 = por %p311, %p312
    %p314 = scmp.le.s32.totalorder 1, %s18
    %p315 = scmp.lt.s32.totalorder %s18, 3
    %p316 = pnand %p314, %p315
    %p317 = pneg %p316
    // Predicated region
    $region9: #{forward.23} parent=5 // pred_check
      _
    $region10: #{forward.23} parent=5 // pred_check_branch
      %319 = sbr.rel (%p316) target = $region12
    $region11: #{forward.23} parent=5 // pred_region
      %s320 = ssub.s32 %s18, 1
      // Predicated region
      $region13: #{forward.23} parent=11 // pred_check
        %p321 = pneg %p91
      $region14: #{forward.23} parent=11 // pred_check_branch
        %323 = sbr.rel (%p321) target = $region16
      $region15: #{forward.23} parent=11 // pred_region
        _
      $region16: #{forward.23} parent=11 // pred_fallthru
        _
      // Predicated region
      $region17: #{forward.23} parent=11 // pred_check
        %p324 = pneg %p112
      $region18: #{forward.23} parent=11 // pred_check_branch
        %326 = sbr.rel (%p324) target = $region20
      $region19: #{forward.23} parent=11 // pred_region
        _
      $region20: #{forward.23} parent=11 // pred_fallthru
        _
      // Predicated region
      $region21: #{forward.23} parent=11 // pred_check
        %p327 = pneg %p133
      $region22: #{forward.23} parent=11 // pred_check_branch
        %329 = sbr.rel (%p327) target = $region24
      $region23: #{forward.23} parent=11 // pred_region
        _
      $region24: #{forward.23} parent=11 // pred_fallthru
        _
      // Predicated region
      $region25: #{forward.23} parent=11 // pred_check
        %p330 = pneg %p154
      $region26: #{forward.23} parent=11 // pred_check_branch
        %332 = sbr.rel (%p330) target = $region28
      $region27: #{forward.23} parent=11 // pred_region
        _
      $region28: #{forward.23} parent=11 // pred_fallthru
        _
      // Predicated region
      $region29: #{forward.23} parent=11 // pred_check
        %p333 = pneg %p175
      $region30: #{forward.23} parent=11 // pred_check_branch
        %335 = sbr.rel (%p333) target = $region32
      $region31: #{forward.23} parent=11 // pred_region
        _
      $region32: #{forward.23} parent=11 // pred_fallthru
        _
      // Predicated region
      $region33: #{forward.23} parent=11 // pred_check
        %p336 = pneg %p196
      $region34: #{forward.23} parent=11 // pred_check_branch
        %338 = sbr.rel (%p336) target = $region36
      $region35: #{forward.23} parent=11 // pred_region
        _
      $region36: #{forward.23} parent=11 // pred_fallthru
        _
      // Predicated region
      $region37: #{forward.23} parent=11 // pred_check
        %p339 = pneg %p217
      $region38: #{forward.23} parent=11 // pred_check_branch
        %341 = sbr.rel (%p339) target = $region40
      $region39: #{forward.23} parent=11 // pred_region
        _
      $region40: #{forward.23} parent=11 // pred_fallthru
        _
      // Predicated region
      $region41: #{forward.23} parent=11 // pred_check
        %p342 = pneg %p238
      $region42: #{forward.23} parent=11 // pred_check_branch
        %344 = sbr.rel (%p342) target = $region44
      $region43: #{forward.23} parent=11 // pred_region
        _
      $region44: #{forward.23} parent=11 // pred_fallthru
        _
      // Predicated region
      $region45: #{forward.23} parent=11 // pred_check
        %p345 = pneg %p259
      $region46: #{forward.23} parent=11 // pred_check_branch
        %347 = sbr.rel (%p345) target = $region48
      $region47: #{forward.23} parent=11 // pred_region
        _
      $region48: #{forward.23} parent=11 // pred_fallthru
        _
      // Predicated region
      $region49: #{forward.23} parent=11 // pred_check
        %p348 = pneg %p280
      $region50: #{forward.23} parent=11 // pred_check_branch
        %350 = sbr.rel (%p348) target = $region52
      $region51: #{forward.23} parent=11 // pred_region
        _
      $region52: #{forward.23} parent=11 // pred_fallthru
        _
    $region12: #{forward.23} parent=5 // pred_fallthru
      _
    %p351 = scmp.lt.s32.totalorder %s18, 2
    // Predicated region
    $region53: #{forward.23} parent=5 // pred_check
      %p352 = pneg %p351
    $region54: #{forward.23} parent=5 // pred_check_branch
      %354 = sbr.rel (%p352) target = $region56
    $region55: #{forward.23} parent=5 // pred_region
      // Predicated region
      $region57: #{forward.23} parent=55 // pred_check
        %p355 = pneg %p38
      $region58: #{forward.23} parent=55 // pred_check_branch
        %357 = sbr.rel (%p355) target = $region60
      $region59: #{forward.23} parent=55 // pred_region
        %s358 = smul.u32 2, %s18
        %p359 = scmp.lt.s32.totalorder %s358, 3
        %s360 = scalar_select %p359, %s358, 3
        %s361 = smul.addr %s360, 8
        %s362 = scalar_lea.vmem %s0, %s361
        %s363 = smul.u32 2, %s18
      $region60: #{forward.23} parent=55 // pred_fallthru
        _
      // Predicated region
      $region61: #{forward.23} parent=55 // pred_check
        %p364 = pneg %p64
      $region62: #{forward.23} parent=55 // pred_check_branch
        %366 = sbr.rel (%p364) target = $region64
      $region63: #{forward.23} parent=55 // pred_region
        %s367 = smul.u32 2, %s18
        %p368 = scmp.lt.s32.totalorder %s367, 3
        %s369 = scalar_select %p368, %s367, 3
        %s370 = smul.addr %s369, 8
        %s371 = scalar_lea.vmem %s1, %s370
        %s372 = smul.u32 2, %s18
      $region64: #{forward.23} parent=55 // pred_fallthru
        _
    $region56: #{forward.23} parent=5 // pred_fallthru
      _
    %p373 = scmp.le.s32.totalorder 1, %s18
    %p374 = scmp.lt.s32.totalorder %s18, 3
    %p375 = pnand %p373, %p374
    %p376 = pneg %p375
    // Predicated region
    $region65: #{forward.23} parent=5 // pred_check
      _
    $region66: #{forward.23} parent=5 // pred_check_branch
      %378 = sbr.rel (%p375) target = $region68
    $region67: #{forward.23} parent=5 // pred_region
      %s379 = ssub.s32 %s18, 1
      %s380 = smul.u32 2, %s23
      %p381 = scmp.lt.s32.totalorder %s380, 3
      %s382 = scalar_select %p381, %s380, 3
      %s383 = smul.addr %s382, 8
      %s384 = scalar_lea.vmem %s0, %s383
      %p385 = pneg %p44
      %p386 = pneg %p41
      %s387 = smul.u32 2, %s23
      %p388 = scmp.lt.s32.totalorder %s387, 3
      %s389 = scalar_select %p388, %s387, 3
      %s390 = smul.addr %s389, 8
      %s391 = scalar_lea.vmem %s1, %s390
      %p392 = pneg %p70
      %p393 = pneg %p67
      %p394 = pneg %p91
      %p395 = pneg %p88
      %p396 = pneg %p112
      %p397 = pneg %p109
      %p398 = pneg %p133
      %p399 = pneg %p130
      %p400 = pneg %p154
      %p401 = pneg %p151
      %p402 = pneg %p175
      %p403 = pneg %p172
      %p404 = pneg %p196
      %p405 = pneg %p193
      %p406 = pneg %p217
      %p407 = pneg %p214
      %p408 = pneg %p238
      %p409 = pneg %p235
      %p410 = pneg %p259
      %p411 = pneg %p256
      %p412 = pneg %p280
      %p413 = pneg %p277
      %p414 = pneg %p306
      %p415 = pneg %p303
      %s416 = smul.u32 2, %s23
      %p417 = scmp.lt.s32.totalorder %s416, 3
      %s418 = scalar_select %p417, %s416, 3
      %s419 = smul.addr %s418, 8
      %s420 = scalar_lea.vmem %s12, %s419
      %s421 = smul.u32 2, %s23
      %p422 = scmp.lt.s32.totalorder %s421, 3
      %s423 = scalar_select %p422, %s421, 3
      %s424 = smul.addr %s423, 8
      %s425 = scalar_lea.vmem %s0, %s424
      %s426 = smul.u32 2, %s23
      %s427 = smul.u32 2, %s23
      %p428 = scmp.lt.s32.totalorder %s427, 3
      %s429 = scalar_select %p428, %s427, 3
      %s430 = smul.addr %s429, 8
      %s431 = scalar_lea.vmem %s1, %s430
      %s432 = smul.u32 2, %s23
      %s433 = smul.u32 2, %s23
      %p434 = scmp.lt.s32.totalorder %s433, 3
      %s435 = scalar_select %p434, %s433, 3
      %s436 = smul.addr %s435, 8
      %s437 = scalar_lea.vmem %s12, %s436
      %s438 = smul.u32 2, %s23
      %v439 = vld [vmem:[%s431] sm:$0xff]
      %v440 = vld [vmem:[%s431 + $0x8] sm:$0xff]
      %v441 = vld [vmem:[%s425] sm:$0xff]
      %v442 = vld [vmem:[%s425 + $0x8] sm:$0xff]
      %v443 = vld [vmem:[%s2] sm:$0xff]
      %v444 = vld [vmem:[%s2 + $0x8] sm:$0xff]
      %v445 = vld [vmem:[%s2 + $0x10] sm:$0xf]
      %v446 = vld [vmem:[%s3] sm:$0x1]
      %v448 = vperm.slane %v446, 0
      %vm450 = vcmask 162816
      %v452 = vsel %vm450, %v441, 0
      %v455 = vsel %vm450, %v442, 0
      %vm457 = vcmask 1043456
      %v459 = vsel %vm457, %v445, 0
      %461 = vmatpush.msra.mxu0 0.0
      %462 = vmatpush.msra.mxu0 0.0
      %463 = vmatpush.msra.mxu0 0.0
      %464 = vmatpush.msra.mxu0 0.0
      %465 = vmatpush.msra.mxu0 0.0
      %466 = vmatpush.msra.mxu0 0.0
      %467 = vmatpush.msra.mxu0 0.0
      %468 = vmatpush.msra.mxu0 0.0
      %469 = vmatpush.msra.mxu0 0.0
      %470 = vmatpush.msra.mxu0 0.0
      %471 = vmatpush.msra.mxu0 0.0
      %472 = vmatpush.msra.mxu0 0.0
      %473 = vmatpush.msra.mxu0 0.0
      %474 = vmatpush.msra.mxu0 %v459
      %475 = vmatpush.msra.mxu0 %v444
      %476 = vmatpush.msra.mxu0 %v443
      %477 = vmatmul.f32.gmra.mxu0 %v452
      %v478 = vpop.f32.mrf.mxu0
      %v479 = vadd.f32 %v448, %v478
      %480 = vmatmul.f32.gmra.mxu0 %v455
      %v481 = vpop.f32.mrf.mxu0
      %v482 = vadd.f32 %v448, %v481
      %483 = vdwg.mxu0
      %v484 = vadd.f32 %v479, %v439
      %v485 = vadd.f32 %v482, %v440
      %v486 = vsel %vm450, %v484, 0.0
      %487 = vadd.xlane.f32.xlu0 %v486
      %v488 = vpop.xlane.xlu0 %487
      %v489 = vsel %vm450, %v485, 0.0
      %490 = vadd.xlane.f32.xlu0 %v489
      %v491 = vpop.xlane.xlu0 %490
      %v492 = vrcp.pop 20.0
      %v493 = vmul.f32 20.0, %v492
      %v494 = vsub.f32 1.0, %v493
      %v495 = vmul.f32 %v492, %v494
      %v496 = vadd.f32 %v492, %v495
      %vm497 = vweird.f32 %v492
      %v498 = vsel %vm497, %v492, %v496
      %v499 = vmul.f32 %v488, %v498
      %v500 = vmul.f32 %v491, %v498
      %v501 = vsub.f32 %v484, %v499
      %v502 = vsub.f32 %v485, %v500
      %v503 = vmul.f32 %v501, %v501
      %v504 = vmul.f32 %v502, %v502
      %v505 = vsel %vm450, %v503, 0.0
      %506 = vadd.xlane.f32.xlu0 %v505
      %v507 = vpop.xlane.xlu0 %506
      %v508 = vsel %vm450, %v504, 0.0
      %509 = vadd.xlane.f32.xlu0 %v508
      %v510 = vpop.xlane.xlu0 %509
      %v511 = vmul.f32 %v507, %v498
      %v512 = vmul.f32 %v510, %v498
      %v513 = vadd.f32 %v511, 1e-05
      %v514 = vadd.f32 %v512, 1e-05
      %v515 = vrsqrt.pop %v513
      %v516 = vmul.f32 %v515, %v513
      %v517 = vmul.f32 %v516, %v515
      %v518 = vmul.f32 0.5, %v517
      %v519 = vsub.f32 1.5, %v518
      %v520 = vmul.f32 %v515, %v519
      %vm521 = vweird.f32 %v513
      %vm522 = vweird.f32 %v515
      %vm523 = vmor %vm521, %vm522
      %v524 = vsel %vm523, %v515, %v520
      %v525 = vrsqrt.pop %v514
      %v526 = vmul.f32 %v525, %v514
      %v527 = vmul.f32 %v526, %v525
      %v528 = vmul.f32 0.5, %v527
      %v529 = vsub.f32 1.5, %v528
      %v530 = vmul.f32 %v525, %v529
      %vm531 = vweird.f32 %v514
      %vm532 = vweird.f32 %v525
      %vm533 = vmor %vm531, %vm532
      %v534 = vsel %vm533, %v525, %v530
      %v535 = vmul.f32 %v501, %v524
      %v536 = vmul.f32 %v502, %v534
      %v537 = vld [vmem:[%s4] sm:$0x1]
      %v539 = vperm.slane %v537, 0
      %v541 = vmul.f32 %v535, %v539
      %v542 = vmul.f32 %v536, %v539
      %v543 = vld [vmem:[%s5] sm:$0x1]
      %v545 = vperm.slane %v543, 0
      %v547 = vadd.f32 %v541, %v545
      %v548 = vadd.f32 %v542, %v545
      %v549 = vld [vmem:[%s6] sm:$0xff]
      %v550 = vld [vmem:[%s6 + $0x8] sm:$0xff]
      %v551 = vld [vmem:[%s6 + $0x10] sm:$0xf]
      %v552 = vld [vmem:[%s7] sm:$0x1]
      %v554 = vperm.slane %v552, 0
      %v557 = vsel %vm450, %v547, 0
      %v560 = vsel %vm450, %v548, 0
      %v563 = vsel %vm457, %v551, 0
      %565 = vmatpush.msra.mxu0 0.0
      %566 = vmatpush.msra.mxu0 0.0
      %567 = vmatpush.msra.mxu0 0.0
      %568 = vmatpush.msra.mxu0 0.0
      %569 = vmatpush.msra.mxu0 0.0
      %570 = vmatpush.msra.mxu0 0.0
      %571 = vmatpush.msra.mxu0 0.0
      %572 = vmatpush.msra.mxu0 0.0
      %573 = vmatpush.msra.mxu0 0.0
      %574 = vmatpush.msra.mxu0 0.0
      %575 = vmatpush.msra.mxu0 0.0
      %576 = vmatpush.msra.mxu0 0.0
      %577 = vmatpush.msra.mxu0 0.0
      %578 = vmatpush.msra.mxu0 %v563
      %579 = vmatpush.msra.mxu0 %v550
      %580 = vmatpush.msra.mxu0 %v549
      %581 = vmatmul.f32.gmra.mxu0 %v557
      %v582 = vpop.f32.mrf.mxu0
      %v583 = vadd.f32 %v554, %v582
      %584 = vmatmul.f32.gmra.mxu0 %v560
      %v585 = vpop.f32.mrf.mxu0
      %v586 = vadd.f32 %v554, %v585
      %587 = vdwg.mxu0
      %v588 = vmax.f32 %v583, 0.0
      %v589 = vmax.f32 %v586, 0.0
      %v590 = vld [vmem:[%s8] sm:$0xff]
      %v591 = vld [vmem:[%s8 + $0x8] sm:$0xff]
      %v592 = vld [vmem:[%s8 + $0x10] sm:$0xff]
      %v593 = vld [vmem:[%s8 + $0x18] sm:$0xff]
      %v594 = vld [vmem:[%s9] sm:$0x1]
      %v596 = vperm.slane %v594, 0
      %vm598 = vcmask 261120
      %v600 = vsel %vm598, %v588, 0
      %v603 = vsel %vm598, %v589, 0
      %605 = vmatpush.msra.mxu0 0.0
      %606 = vmatpush.msra.mxu0 0.0
      %607 = vmatpush.msra.mxu0 0.0
      %608 = vmatpush.msra.mxu0 0.0
      %609 = vmatpush.msra.mxu0 0.0
      %610 = vmatpush.msra.mxu0 0.0
      %611 = vmatpush.msra.mxu0 0.0
      %612 = vmatpush.msra.mxu0 0.0
      %613 = vmatpush.msra.mxu0 0.0
      %614 = vmatpush.msra.mxu0 0.0
      %615 = vmatpush.msra.mxu0 0.0
      %616 = vmatpush.msra.mxu0 0.0
      %617 = vmatpush.msra.mxu0 %v593
      %618 = vmatpush.msra.mxu0 %v592
      %619 = vmatpush.msra.mxu0 %v591
      %620 = vmatpush.msra.mxu0 %v590
      %621 = vmatmul.f32.gmra.mxu0 %v600
      %v622 = vpop.f32.mrf.mxu0
      %v623 = vadd.f32 %v596, %v622
      %624 = vmatmul.f32.gmra.mxu0 %v603
      %v625 = vpop.f32.mrf.mxu0
      %v626 = vadd.f32 %v596, %v625
      %627 = vdwg.mxu0
      %v628 = vadd.f32 %v623, %v547
      %v629 = vadd.f32 %v626, %v548
      %v630 = vsel %vm450, %v628, 0.0
      %631 = vadd.xlane.f32.xlu0 %v630
      %v632 = vpop.xlane.xlu0 %631
      %v633 = vsel %vm450, %v629, 0.0
      %634 = vadd.xlane.f32.xlu0 %v633
      %v635 = vpop.xlane.xlu0 %634
      %v636 = vmul.f32 %v632, %v498
      %v637 = vmul.f32 %v635, %v498
      %v638 = vsub.f32 %v628, %v636
      %v639 = vsub.f32 %v629, %v637
      %v640 = vmul.f32 %v638, %v638
      %v641 = vmul.f32 %v639, %v639
      %v642 = vsel %vm450, %v640, 0.0
      %643 = vadd.xlane.f32.xlu0 %v642
      %v644 = vpop.xlane.xlu0 %643
      %v645 = vsel %vm450, %v641, 0.0
      %646 = vadd.xlane.f32.xlu0 %v645
      %v647 = vpop.xlane.xlu0 %646
      %v648 = vmul.f32 %v644, %v498
      %v649 = vmul.f32 %v647, %v498
      %v650 = vadd.f32 %v648, 1e-05
      %v651 = vadd.f32 %v649, 1e-05
      %v652 = vrsqrt.pop %v650
      %v653 = vmul.f32 %v652, %v650
      %v654 = vmul.f32 %v653, %v652
      %v655 = vmul.f32 0.5, %v654
      %v656 = vsub.f32 1.5, %v655
      %v657 = vmul.f32 %v652, %v656
      %vm658 = vweird.f32 %v650
      %vm659 = vweird.f32 %v652
      %vm660 = vmor %vm658, %vm659
      %v661 = vsel %vm660, %v652, %v657
      %v662 = vrsqrt.pop %v651
      %v663 = vmul.f32 %v662, %v651
      %v664 = vmul.f32 %v663, %v662
      %v665 = vmul.f32 0.5, %v664
      %v666 = vsub.f32 1.5, %v665
      %v667 = vmul.f32 %v662, %v666
      %vm668 = vweird.f32 %v651
      %vm669 = vweird.f32 %v662
      %vm670 = vmor %vm668, %vm669
      %v671 = vsel %vm670, %v662, %v667
      %v672 = vmul.f32 %v638, %v661
      %v673 = vmul.f32 %v639, %v671
      %v674 = vld [vmem:[%s10] sm:$0x1]
      %v676 = vperm.slane %v674, 0
      %v678 = vmul.f32 %v672, %v676
      %v679 = vmul.f32 %v673, %v676
      %v680 = vld [vmem:[%s11] sm:$0x1]
      %v682 = vperm.slane %v680, 0
      %v684 = vadd.f32 %v678, %v682
      %v685 = vadd.f32 %v679, %v682
      %686 = vst.msk [vmem:[%s437] sm:$0xff] %vm450, %v684
      %687 = vst.msk [vmem:[%s437 + $0x8] sm:$0xff] %vm450, %v685
      %s688 = smul.u32 2, %s23
      %p689 = scmp.lt.s32.totalorder %s688, 3
      %s690 = scalar_select %p689, %s688, 3
      %s691 = smul.addr %s690, 8
      %s692 = scalar_lea.vmem %s12, %s691
      // Predicated region
      $region69: #{forward.23} parent=67 // pred_check
        %p693 = pneg %p303
      $region70: #{forward.23} parent=67 // pred_check_branch
        %695 = sbr.rel (%p693) target = $region72
      $region71: #{forward.23} parent=67 // pred_region
        %s696 = smul.u32 2, %s23
      $region72: #{forward.23} parent=67 // pred_fallthru
        _
    $region68: #{forward.23} parent=5 // pred_fallthru
      _
    %p697 = scmp.le.s32.totalorder 2, %s18
    // Predicated region
    $region73: #{forward.23} parent=5 // pred_check
      %p698 = pneg %p697
    $region74: #{forward.23} parent=5 // pred_check_branch
      %700 = sbr.rel (%p698) target = $region76
    $region75: #{forward.23} parent=5 // pred_region
      %s701 = ssub.s32 %s18, 2
      // Predicated region
      $region77: #{forward.23} parent=75 // pred_check
        %p702 = pneg %p309
      $region78: #{forward.23} parent=75 // pred_check_branch
        %704 = sbr.rel (%p702) target = $region80
      $region79: #{forward.23} parent=75 // pred_region
        %s705 = smul.u32 2, %s24
        %p706 = scmp.lt.s32.totalorder %s705, 3
        %s707 = scalar_select %p706, %s705, 3
        %s708 = smul.addr %s707, 8
        %s709 = scalar_lea.vmem %s12, %s708
      $region80: #{forward.23} parent=75 // pred_fallthru
        _
    $region76: #{forward.23} parent=5 // pred_fallthru
      _
  $region6: #{forward.23} parent=0 // loop_footer
    %s22 = sadd.s32 1, %s18
  $region7: #{forward.23} parent=0 // loop_footer_branch
    %17 = sbr.rel target = $region3
  $region8: #{forward.23} parent=0 // loop_exit
    _

// kernel: forward.41
$region0: #{forward.41}
  #allocation0 [shape = 'u32[]', space=smem, size = 0x4, offset = 0x4, fixed_abs, tag = 'smem constant byte address 0x4 - core index']
  #allocation1 [shape = 'u32[72,128]{1,0:T(1,128)}', space=vmem, size = 0x9000, scoped, tag = 'internal scratch']
  %s0 = inlined_call_operand.vmem [shape: f32[2,392,1], index: 0, kind: input, shape index: {}]
  %s1 = inlined_call_operand.vmem [shape: f32[2,1,392], index: 1, kind: input, shape index: {}]
  %s2 = inlined_call_operand.vmem [shape: f32[392,128], index: 2, kind: input, shape index: {}]
  %s3 = inlined_call_operand.vmem [shape: f32[392,128], index: 3, kind: input, shape index: {}]
  %s4 = inlined_call_operand.vmem [shape: f32[1,128], index: 4, kind: input, shape index: {}]
  %s5 = inlined_call_operand.vmem [shape: f32[1,128], index: 5, kind: input, shape index: {}]
  %s6 = inlined_call_operand.vmem [shape: f32[128,64], index: 6, kind: input, shape index: {}]
  %s7 = inlined_call_operand.vmem [shape: f32[1,64], index: 7, kind: input, shape index: {}]
  %s8 = inlined_call_operand.vmem [shape: f32[1,64], index: 8, kind: input, shape index: {}]
  %s9 = inlined_call_operand.vmem [shape: f32[64,13], index: 9, kind: input, shape index: {}]
  %s10 = inlined_call_operand.vmem [shape: f32[1,13], index: 10, kind: input, shape index: {}]
  %s11 = inlined_call_operand.vmem [shape: f32[1,13], index: 11, kind: input, shape index: {}]
  %s12 = inlined_call_operand.hbm [shape: f32[2,1,13], index: 12, kind: output, shape index: {}]
  %s13 = sld [smem:[#allocation0]]
  $region81: #{forward.41} parent=0
    _
  %s15 = ssub.s32 1, %s13
  %s16 = scalar_select 0, %s15, %s13
  $region1: #{forward.41} parent=0
    #allocation2 [shape = 'u8[1024]{0}', space=vmem, size = 0x400, scoped, tag = 'output window, operand 0']
    #allocation3 [shape = 's32[2]{0}', space=sflag, size = 0x8, scoped, tag = 'scoped memory for forward.41']
    %17 = vsyncpa [#allocation3], 0
    %s18 = scalar_lea.sflag [#allocation3], 1
    %19 = vsyncpa %s18, 0
    loop: start=0, step=1, limit=4
    $region2: #{forward.41} parent=1 // loop_pre_header
      _
    $region3: #{forward.41} parent=1 // loop_header
      %s21 = sphi 0, %s25
      %p22 = scmp.ge.s32.totalorder %s21, 4
      %s31 = sphi 0, %s33
      %s34 = sphi 0, %s31
      %s35 = sphi 0, %s34
      %s51 = sphi 0, %s35
      %s57 = sphi 0, %s59
      %s60 = sphi 0, %s57
      %s61 = sphi 0, %s60
      %s77 = sphi 0, %s61
      %s81 = sphi 0, %s81
      %s83 = sphi 0, %s81
      %s84 = sphi 0, %s83
      %s98 = sphi 0, %s84
      %s102 = sphi 0, %s102
      %s104 = sphi 0, %s102
      %s105 = sphi 0, %s104
      %s119 = sphi 0, %s105
      %s123 = sphi 0, %s123
      %s125 = sphi 0, %s123
      %s126 = sphi 0, %s125
      %s140 = sphi 0, %s126
      %s144 = sphi 0, %s144
      %s146 = sphi 0, %s144
      %s147 = sphi 0, %s146
      %s161 = sphi 0, %s147
      %s165 = sphi 0, %s165
      %s167 = sphi 0, %s165
      %s168 = sphi 0, %s167
      %s182 = sphi 0, %s168
      %s186 = sphi 0, %s186
      %s188 = sphi 0, %s186
      %s189 = sphi 0, %s188
      %s203 = sphi 0, %s189
      %s207 = sphi 0, %s207
      %s209 = sphi 0, %s207
      %s210 = sphi 0, %s209
      %s224 = sphi 0, %s210
      %s228 = sphi 0, %s228
      %s230 = sphi 0, %s228
      %s231 = sphi 0, %s230
      %s245 = sphi 0, %s231
      %s249 = sphi 0, %s249
      %s251 = sphi 0, %s249
      %s252 = sphi 0, %s251
      %s266 = sphi 0, %s252
      %s270 = sphi 0, %s270
      %s272 = sphi 0, %s270
      %s273 = sphi 0, %s272
      %s287 = sphi 0, %s273
      %s293 = sphi 0, %s295
      %s296 = sphi 0, %s293
      %s297 = sphi 0, %s296
      %s313 = sphi 0, %s297
    $region4: #{forward.41} parent=1 // loop_header_branch
      %24 = sbr.rel (%p22) target = $region8
    $region5: #{forward.41} parent=1 // loop_body
      %s26 = ssub.s32 %s21, 1
      %s27 = ssub.s32 %s21, 2
      %s28 = sadd.s32 %s21, 1
      %s29 = ssub.s32 %s21, %s28
      %p30 = scmp.eq.s32.totalorder %s29, 0
      %s32 = sadd.s32 %s31, 1
      %s33 = scalar_select %p30, %s31, %s32
      %p36 = pneg %p30
      %p37 = scmp.eq.s32.totalorder %s21, 1
      %p38 = por %p36, %p37
      %p39 = scmp.ne.s32.totalorder %s31, %s34
      %p40 = scmp.eq.s32.totalorder %s21, 0
      %p41 = por %p39, %p40
      %p42 = scmp.ne.s32.totalorder %s31, %s34
      %p43 = scmp.eq.s32.totalorder %s26, 1
      %p44 = por %p42, %p43
      %p45 = scmp.ne.s32.totalorder %s34, %s35
      %p46 = scmp.eq.s32.totalorder %s26, 0
      %p47 = por %p45, %p46
      %p48 = scmp.ne.s32.totalorder %s34, %s35
      %p49 = scmp.eq.s32.totalorder %s27, 1
      %p50 = por %p48, %p49
      %p52 = scmp.ne.s32.totalorder %s35, %s51
      %p53 = scmp.eq.s32.totalorder %s27, 0
      %p54 = por %p52, %p53
      %s55 = ssub.s32 %s21, %s28
      %p56 = scmp.eq.s32.totalorder %s55, 0
      %s58 = sadd.s32 %s57, 1
      %s59 = scalar_select %p56, %s57, %s58
      %p62 = pneg %p56
      %p63 = scmp.eq.s32.totalorder %s21, 1
      %p64 = por %p62, %p63
      %p65 = scmp.ne.s32.totalorder %s57, %s60
      %p66 = scmp.eq.s32.totalorder %s21, 0
      %p67 = por %p65, %p66
      %p68 = scmp.ne.s32.totalorder %s57, %s60
      %p69 = scmp.eq.s32.totalorder %s26, 1
      %p70 = por %p68, %p69
      %p71 = scmp.ne.s32.totalorder %s60, %s61
      %p72 = scmp.eq.s32.totalorder %s26, 0
      %p73 = por %p71, %p72
      %p74 = scmp.ne.s32.totalorder %s60, %s61
      %p75 = scmp.eq.s32.totalorder %s27, 1
      %p76 = por %p74, %p75
      %p78 = scmp.ne.s32.totalorder %s61, %s77
      %p79 = scmp.eq.s32.totalorder %s27, 0
      %p80 = por %p78, %p79
      %s82 = sadd.s32 %s81, 1
      %p85 = scmp.eq.s32.totalorder %s21, 1
      %p86 = scmp.ne.s32.totalorder %s81, %s83
      %p87 = scmp.eq.s32.totalorder %s21, 0
      %p88 = por %p86, %p87
      %p89 = scmp.ne.s32.totalorder %s81, %s83
      %p90 = scmp.eq.s32.totalorder %s26, 1
      %p91 = por %p89, %p90
      %p92 = scmp.ne.s32.totalorder %s83, %s84
      %p93 = scmp.eq.s32.totalorder %s26, 0
      %p94 = por %p92, %p93
      %p95 = scmp.ne.s32.totalorder %s83, %s84
      %p96 = scmp.eq.s32.totalorder %s27, 1
      %p97 = por %p95, %p96
      %p99 = scmp.ne.s32.totalorder %s84, %s98
      %p100 = scmp.eq.s32.totalorder %s27, 0
      %p101 = por %p99, %p100
      %s103 = sadd.s32 %s102, 1
      %p106 = scmp.eq.s32.totalorder %s21, 1
      %p107 = scmp.ne.s32.totalorder %s102, %s104
      %p108 = scmp.eq.s32.totalorder %s21, 0
      %p109 = por %p107, %p108
      %p110 = scmp.ne.s32.totalorder %s102, %s104
      %p111 = scmp.eq.s32.totalorder %s26, 1
      %p112 = por %p110, %p111
      %p113 = scmp.ne.s32.totalorder %s104, %s105
      %p114 = scmp.eq.s32.totalorder %s26, 0
      %p115 = por %p113, %p114
      %p116 = scmp.ne.s32.totalorder %s104, %s105
      %p117 = scmp.eq.s32.totalorder %s27, 1
      %p118 = por %p116, %p117
      %p120 = scmp.ne.s32.totalorder %s105, %s119
      %p121 = scmp.eq.s32.totalorder %s27, 0
      %p122 = por %p120, %p121
      %s124 = sadd.s32 %s123, 1
      %p127 = scmp.eq.s32.totalorder %s21, 1
      %p128 = scmp.ne.s32.totalorder %s123, %s125
      %p129 = scmp.eq.s32.totalorder %s21, 0
      %p130 = por %p128, %p129
      %p131 = scmp.ne.s32.totalorder %s123, %s125
      %p132 = scmp.eq.s32.totalorder %s26, 1
      %p133 = por %p131, %p132
      %p134 = scmp.ne.s32.totalorder %s125, %s126
      %p135 = scmp.eq.s32.totalorder %s26, 0
      %p136 = por %p134, %p135
      %p137 = scmp.ne.s32.totalorder %s125, %s126
      %p138 = scmp.eq.s32.totalorder %s27, 1
      %p139 = por %p137, %p138
      %p141 = scmp.ne.s32.totalorder %s126, %s140
      %p142 = scmp.eq.s32.totalorder %s27, 0
      %p143 = por %p141, %p142
      %s145 = sadd.s32 %s144, 1
      %p148 = scmp.eq.s32.totalorder %s21, 1
      %p149 = scmp.ne.s32.totalorder %s144, %s146
      %p150 = scmp.eq.s32.totalorder %s21, 0
      %p151 = por %p149, %p150
      %p152 = scmp.ne.s32.totalorder %s144, %s146
      %p153 = scmp.eq.s32.totalorder %s26, 1
      %p154 = por %p152, %p153
      %p155 = scmp.ne.s32.totalorder %s146, %s147
      %p156 = scmp.eq.s32.totalorder %s26, 0
      %p157 = por %p155, %p156
      %p158 = scmp.ne.s32.totalorder %s146, %s147
      %p159 = scmp.eq.s32.totalorder %s27, 1
      %p160 = por %p158, %p159
      %p162 = scmp.ne.s32.totalorder %s147, %s161
      %p163 = scmp.eq.s32.totalorder %s27, 0
      %p164 = por %p162, %p163
      %s166 = sadd.s32 %s165, 1
      %p169 = scmp.eq.s32.totalorder %s21, 1
      %p170 = scmp.ne.s32.totalorder %s165, %s167
      %p171 = scmp.eq.s32.totalorder %s21, 0
      %p172 = por %p170, %p171
      %p173 = scmp.ne.s32.totalorder %s165, %s167
      %p174 = scmp.eq.s32.totalorder %s26, 1
      %p175 = por %p173, %p174
      %p176 = scmp.ne.s32.totalorder %s167, %s168
      %p177 = scmp.eq.s32.totalorder %s26, 0
      %p178 = por %p176, %p177
      %p179 = scmp.ne.s32.totalorder %s167, %s168
      %p180 = scmp.eq.s32.totalorder %s27, 1
      %p181 = por %p179, %p180
      %p183 = scmp.ne.s32.totalorder %s168, %s182
      %p184 = scmp.eq.s32.totalorder %s27, 0
      %p185 = por %p183, %p184
      %s187 = sadd.s32 %s186, 1
      %p190 = scmp.eq.s32.totalorder %s21, 1
      %p191 = scmp.ne.s32.totalorder %s186, %s188
      %p192 = scmp.eq.s32.totalorder %s21, 0
      %p193 = por %p191, %p192
      %p194 = scmp.ne.s32.totalorder %s186, %s188
      %p195 = scmp.eq.s32.totalorder %s26, 1
      %p196 = por %p194, %p195
      %p197 = scmp.ne.s32.totalorder %s188, %s189
      %p198 = scmp.eq.s32.totalorder %s26, 0
      %p199 = por %p197, %p198
      %p200 = scmp.ne.s32.totalorder %s188, %s189
      %p201 = scmp.eq.s32.totalorder %s27, 1
      %p202 = por %p200, %p201
      %p204 = scmp.ne.s32.totalorder %s189, %s203
      %p205 = scmp.eq.s32.totalorder %s27, 0
      %p206 = por %p204, %p205
      %s208 = sadd.s32 %s207, 1
      %p211 = scmp.eq.s32.totalorder %s21, 1
      %p212 = scmp.ne.s32.totalorder %s207, %s209
      %p213 = scmp.eq.s32.totalorder %s21, 0
      %p214 = por %p212, %p213
      %p215 = scmp.ne.s32.totalorder %s207, %s209
      %p216 = scmp.eq.s32.totalorder %s26, 1
      %p217 = por %p215, %p216
      %p218 = scmp.ne.s32.totalorder %s209, %s210
      %p219 = scmp.eq.s32.totalorder %s26, 0
      %p220 = por %p218, %p219
      %p221 = scmp.ne.s32.totalorder %s209, %s210
      %p222 = scmp.eq.s32.totalorder %s27, 1
      %p223 = por %p221, %p222
      %p225 = scmp.ne.s32.totalorder %s210, %s224
      %p226 = scmp.eq.s32.totalorder %s27, 0
      %p227 = por %p225, %p226
      %s229 = sadd.s32 %s228, 1
      %p232 = scmp.eq.s32.totalorder %s21, 1
      %p233 = scmp.ne.s32.totalorder %s228, %s230
      %p234 = scmp.eq.s32.totalorder %s21, 0
      %p235 = por %p233, %p234
      %p236 = scmp.ne.s32.totalorder %s228, %s230
      %p237 = scmp.eq.s32.totalorder %s26, 1
      %p238 = por %p236, %p237
      %p239 = scmp.ne.s32.totalorder %s230, %s231
      %p240 = scmp.eq.s32.totalorder %s26, 0
      %p241 = por %p239, %p240
      %p242 = scmp.ne.s32.totalorder %s230, %s231
      %p243 = scmp.eq.s32.totalorder %s27, 1
      %p244 = por %p242, %p243
      %p246 = scmp.ne.s32.totalorder %s231, %s245
      %p247 = scmp.eq.s32.totalorder %s27, 0
      %p248 = por %p246, %p247
      %s250 = sadd.s32 %s249, 1
      %p253 = scmp.eq.s32.totalorder %s21, 1
      %p254 = scmp.ne.s32.totalorder %s249, %s251
      %p255 = scmp.eq.s32.totalorder %s21, 0
      %p256 = por %p254, %p255
      %p257 = scmp.ne.s32.totalorder %s249, %s251
      %p258 = scmp.eq.s32.totalorder %s26, 1
      %p259 = por %p257, %p258
      %p260 = scmp.ne.s32.totalorder %s251, %s252
      %p261 = scmp.eq.s32.totalorder %s26, 0
      %p262 = por %p260, %p261
      %p263 = scmp.ne.s32.totalorder %s251, %s252
      %p264 = scmp.eq.s32.totalorder %s27, 1
      %p265 = por %p263, %p264
      %p267 = scmp.ne.s32.totalorder %s252, %s266
      %p268 = scmp.eq.s32.totalorder %s27, 0
      %p269 = por %p267, %p268
      %s271 = sadd.s32 %s270, 1
      %p274 = scmp.eq.s32.totalorder %s21, 1
      %p275 = scmp.ne.s32.totalorder %s270, %s272
      %p276 = scmp.eq.s32.totalorder %s21, 0
      %p277 = por %p275, %p276
      %p278 = scmp.ne.s32.totalorder %s270, %s272
      %p279 = scmp.eq.s32.totalorder %s26, 1
      %p280 = por %p278, %p279
      %p281 = scmp.ne.s32.totalorder %s272, %s273
      %p282 = scmp.eq.s32.totalorder %s26, 0
      %p283 = por %p281, %p282
      %p284 = scmp.ne.s32.totalorder %s272, %s273
      %p285 = scmp.eq.s32.totalorder %s27, 1
      %p286 = por %p284, %p285
      %p288 = scmp.ne.s32.totalorder %s273, %s287
      %p289 = scmp.eq.s32.totalorder %s27, 0
      %p290 = por %p288, %p289
      %s291 = ssub.s32 %s21, %s28
      %p292 = scmp.eq.s32.totalorder %s291, 0
      %s294 = sadd.s32 %s293, 1
      %s295 = scalar_select %p292, %s293, %s294
      %p298 = pneg %p292
      %p299 = scmp.eq.s32.totalorder %s21, 1
      %p300 = por %p298, %p299
      %p301 = scmp.ne.s32.totalorder %s293, %s296
      %p302 = scmp.eq.s32.totalorder %s21, 0
      %p303 = por %p301, %p302
      %p304 = scmp.ne.s32.totalorder %s293, %s296
      %p305 = scmp.eq.s32.totalorder %s26, 1
      %p306 = por %p304, %p305
      %p307 = scmp.ne.s32.totalorder %s296, %s297
      %p308 = scmp.eq.s32.totalorder %s26, 0
      %p309 = por %p307, %p308
      %p310 = scmp.ne.s32.totalorder %s296, %s297
      %p311 = scmp.eq.s32.totalorder %s27, 1
      %p312 = por %p310, %p311
      %p314 = scmp.ne.s32.totalorder %s297, %s313
      %p315 = scmp.eq.s32.totalorder %s27, 0
      %p316 = por %p314, %p315
      %p317 = scmp.le.s32.totalorder 1, %s21
      %p318 = scmp.lt.s32.totalorder %s21, 3
      %p319 = pnand %p317, %p318
      %p320 = pneg %p319
      // Predicated region
      $region9: #{forward.41} parent=5 // pred_check
        _
      $region10: #{forward.41} parent=5 // pred_check_branch
        %322 = sbr.rel (%p319) target = $region12
      $region11: #{forward.41} parent=5 // pred_region
        %s323 = ssub.s32 %s21, 1
        // Predicated region
        $region13: #{forward.41} parent=11 // pred_check
          %p324 = pneg %p94
        $region14: #{forward.41} parent=11 // pred_check_branch
          %326 = sbr.rel (%p324) target = $region16
        $region15: #{forward.41} parent=11 // pred_region
          _
        $region16: #{forward.41} parent=11 // pred_fallthru
          _
        // Predicated region
        $region17: #{forward.41} parent=11 // pred_check
          %p327 = pneg %p115
        $region18: #{forward.41} parent=11 // pred_check_branch
          %329 = sbr.rel (%p327) target = $region20
        $region19: #{forward.41} parent=11 // pred_region
          _
        $region20: #{forward.41} parent=11 // pred_fallthru
          _
        // Predicated region
        $region21: #{forward.41} parent=11 // pred_check
          %p330 = pneg %p136
        $region22: #{forward.41} parent=11 // pred_check_branch
          %332 = sbr.rel (%p330) target = $region24
        $region23: #{forward.41} parent=11 // pred_region
          _
        $region24: #{forward.41} parent=11 // pred_fallthru
          _
        // Predicated region
        $region25: #{forward.41} parent=11 // pred_check
          %p333 = pneg %p157
        $region26: #{forward.41} parent=11 // pred_check_branch
          %335 = sbr.rel (%p333) target = $region28
        $region27: #{forward.41} parent=11 // pred_region
          _
        $region28: #{forward.41} parent=11 // pred_fallthru
          _
        // Predicated region
        $region29: #{forward.41} parent=11 // pred_check
          %p336 = pneg %p178
        $region30: #{forward.41} parent=11 // pred_check_branch
          %338 = sbr.rel (%p336) target = $region32
        $region31: #{forward.41} parent=11 // pred_region
          _
        $region32: #{forward.41} parent=11 // pred_fallthru
          _
        // Predicated region
        $region33: #{forward.41} parent=11 // pred_check
          %p339 = pneg %p199
        $region34: #{forward.41} parent=11 // pred_check_branch
          %341 = sbr.rel (%p339) target = $region36
        $region35: #{forward.41} parent=11 // pred_region
          _
        $region36: #{forward.41} parent=11 // pred_fallthru
          _
        // Predicated region
        $region37: #{forward.41} parent=11 // pred_check
          %p342 = pneg %p220
        $region38: #{forward.41} parent=11 // pred_check_branch
          %344 = sbr.rel (%p342) target = $region40
        $region39: #{forward.41} parent=11 // pred_region
          _
        $region40: #{forward.41} parent=11 // pred_fallthru
          _
        // Predicated region
        $region41: #{forward.41} parent=11 // pred_check
          %p345 = pneg %p241
        $region42: #{forward.41} parent=11 // pred_check_branch
          %347 = sbr.rel (%p345) target = $region44
        $region43: #{forward.41} parent=11 // pred_region
          _
        $region44: #{forward.41} parent=11 // pred_fallthru
          _
        // Predicated region
        $region45: #{forward.41} parent=11 // pred_check
          %p348 = pneg %p262
        $region46: #{forward.41} parent=11 // pred_check_branch
          %350 = sbr.rel (%p348) target = $region48
        $region47: #{forward.41} parent=11 // pred_region
          _
        $region48: #{forward.41} parent=11 // pred_fallthru
          _
        // Predicated region
        $region49: #{forward.41} parent=11 // pred_check
          %p351 = pneg %p283
        $region50: #{forward.41} parent=11 // pred_check_branch
          %353 = sbr.rel (%p351) target = $region52
        $region51: #{forward.41} parent=11 // pred_region
          _
        $region52: #{forward.41} parent=11 // pred_fallthru
          _
      $region12: #{forward.41} parent=5 // pred_fallthru
        _
      %p354 = scmp.lt.s32.totalorder %s21, 2
      // Predicated region
      $region53: #{forward.41} parent=5 // pred_check
        %p355 = pneg %p354
      $region54: #{forward.41} parent=5 // pred_check_branch
        %357 = sbr.rel (%p355) target = $region56
      $region55: #{forward.41} parent=5 // pred_region
        // Predicated region
        $region57: #{forward.41} parent=55 // pred_check
          %p358 = pneg %p41
        $region58: #{forward.41} parent=55 // pred_check_branch
          %360 = sbr.rel (%p358) target = $region60
        $region59: #{forward.41} parent=55 // pred_region
          %p361 = scmp.lt.s32.totalorder %s21, 1
          %s362 = scalar_select %p361, %s21, 1
          %s363 = smul.addr %s362, 49
          %s364 = smul.addr %s363, 8
          %s365 = scalar_lea.vmem %s0, %s364
        $region60: #{forward.41} parent=55 // pred_fallthru
          _
        // Predicated region
        $region61: #{forward.41} parent=55 // pred_check
          %p366 = pneg %p67
        $region62: #{forward.41} parent=55 // pred_check_branch
          %368 = sbr.rel (%p366) target = $region64
        $region63: #{forward.41} parent=55 // pred_region
          %p369 = scmp.lt.s32.totalorder %s21, 1
          %s370 = scalar_select %p369, %s21, 1
          %s371 = smul.addr %s370, 4
          %s372 = scalar_lea.vmem %s1, %s371
        $region64: #{forward.41} parent=55 // pred_fallthru
          _
      $region56: #{forward.41} parent=5 // pred_fallthru
        _
      %p373 = scmp.le.s32.totalorder 1, %s21
      %p374 = scmp.lt.s32.totalorder %s21, 3
      %p375 = pnand %p373, %p374
      %p376 = pneg %p375
      // Predicated region
      $region65: #{forward.41} parent=5 // pred_check
        _
      $region66: #{forward.41} parent=5 // pred_check_branch
        %378 = sbr.rel (%p375) target = $region68
      $region67: #{forward.41} parent=5 // pred_region
        %s379 = ssub.s32 %s21, 1
        %p380 = scmp.lt.s32.totalorder %s26, 1
        %s381 = scalar_select %p380, %s26, 1
        %s382 = smul.addr %s381, 49
        %s383 = smul.addr %s382, 8
        %s384 = scalar_lea.vmem %s0, %s383
        %p385 = pneg %p47
        %p386 = pneg %p44
        %p387 = scmp.lt.s32.totalorder %s26, 1
        %s388 = scalar_select %p387, %s26, 1
        %s389 = smul.addr %s388, 4
        %s390 = scalar_lea.vmem %s1, %s389
        %p391 = pneg %p73
        %p392 = pneg %p70
        %p393 = pneg %p94
        %p394 = pneg %p91
        %p395 = pneg %p115
        %p396 = pneg %p112
        %p397 = pneg %p136
        %p398 = pneg %p133
        %p399 = pneg %p157
        %p400 = pneg %p154
        %p401 = pneg %p178
        %p402 = pneg %p175
        %p403 = pneg %p199
        %p404 = pneg %p196
        %p405 = pneg %p220
        %p406 = pneg %p217
        %p407 = pneg %p241
        %p408 = pneg %p238
        %p409 = pneg %p262
        %p410 = pneg %p259
        %p411 = pneg %p283
        %p412 = pneg %p280
        %p413 = pneg %p309
        %p414 = pneg %p306
        %s415 = sand.u32 %s296, 1
        %s416 = scalar_lea.sflag [#allocation3], %s415
        %s417 = sand.u32 %s296, 1
        %s418 = scalar_lea.vmem [#allocation2], %s417
        %p419 = scmp.lt.s32.totalorder %s26, 1
        %s420 = scalar_select %p419, %s26, 1
        %s421 = smul.addr %s420, 49
        %s422 = smul.addr %s421, 8
        %s423 = scalar_lea.vmem %s0, %s422
        %p424 = scmp.lt.s32.totalorder %s26, 1
        %s425 = scalar_select %p424, %s26, 1
        %s426 = smul.addr %s425, 4
        %s427 = scalar_lea.vmem %s1, %s426
        %v428 = vld [vmem:[%s423] sm:$0xff]
        %v429 = vld [vmem:[%s423 + $0x8] sm:$0xff]
        %v430 = vld [vmem:[%s423 + $0x10] sm:$0xff]
        %v431 = vld [vmem:[%s423 + $0x18] sm:$0xff]
        %v432 = vld [vmem:[%s423 + $0x20] sm:$0xff]
        %v433 = vld [vmem:[%s423 + $0x28] sm:$0xff]
        %v434 = vld [vmem:[%s423 + $0x30] sm:$0xff]
        %v435 = vld [vmem:[%s423 + $0x38] sm:$0xff]
        %v436 = vld [vmem:[%s423 + $0x40] sm:$0xff]
        %v437 = vld [vmem:[%s423 + $0x48] sm:$0xff]
        %v438 = vld [vmem:[%s423 + $0x50] sm:$0xff]
        %v439 = vld [vmem:[%s423 + $0x58] sm:$0xff]
        %v440 = vld [vmem:[%s423 + $0x60] sm:$0xff]
        %v441 = vld [vmem:[%s423 + $0x68] sm:$0xff]
        %v442 = vld [vmem:[%s423 + $0x70] sm:$0xff]
        %v443 = vld [vmem:[%s423 + $0x78] sm:$0xff]
        %v444 = vld [vmem:[%s423 + $0x80] sm:$0xff]
        %v445 = vld [vmem:[%s423 + $0x88] sm:$0xff]
        %v446 = vld [vmem:[%s423 + $0x90] sm:$0xff]
        %v447 = vld [vmem:[%s423 + $0x98] sm:$0xff]
        %v448 = vld [vmem:[%s423 + $0xa0] sm:$0xff]
        %v449 = vld [vmem:[%s423 + $0xa8] sm:$0xff]
        %v450 = vld [vmem:[%s423 + $0xb0] sm:$0xff]
        %v451 = vld [vmem:[%s423 + $0xb8] sm:$0xff]
        %v452 = vld [vmem:[%s423 + $0xc0] sm:$0xff]
        %v453 = vld [vmem:[%s423 + $0xc8] sm:$0xff]
        %v454 = vld [vmem:[%s423 + $0xd0] sm:$0xff]
        %v455 = vld [vmem:[%s423 + $0xd8] sm:$0xff]
        %v456 = vld [vmem:[%s423 + $0xe0] sm:$0xff]
        %v457 = vld [vmem:[%s423 + $0xe8] sm:$0xff]
        %v458 = vld [vmem:[%s423 + $0xf0] sm:$0xff]
        %v459 = vld [vmem:[%s423 + $0xf8] sm:$0xff]
        %v460 = vld [vmem:[%s423 + $0x100] sm:$0xff]
        %v461 = vld [vmem:[%s423 + $0x108] sm:$0xff]
        %v462 = vld [vmem:[%s423 + $0x110] sm:$0xff]
        %v463 = vld [vmem:[%s423 + $0x118] sm:$0xff]
        %v464 = vld [vmem:[%s423 + $0x120] sm:$0xff]
        %v465 = vld [vmem:[%s423 + $0x128] sm:$0xff]
        %v466 = vld [vmem:[%s423 + $0x130] sm:$0xff]
        %v467 = vld [vmem:[%s423 + $0x138] sm:$0xff]
        %v468 = vld [vmem:[%s423 + $0x140] sm:$0xff]
        %v469 = vld [vmem:[%s423 + $0x148] sm:$0xff]
        %v470 = vld [vmem:[%s423 + $0x150] sm:$0xff]
        %v471 = vld [vmem:[%s423 + $0x158] sm:$0xff]
        %v472 = vld [vmem:[%s423 + $0x160] sm:$0xff]
        %v473 = vld [vmem:[%s423 + $0x168] sm:$0xff]
        %v474 = vld [vmem:[%s423 + $0x170] sm:$0xff]
        %v475 = vld [vmem:[%s423 + $0x178] sm:$0xff]
        %v476 = vld [vmem:[%s423 + $0x180] sm:$0xff]
        %v477 = vld [vmem:[%s427] sm:$0xf]
        %v478 = vmul.f32 %v428, 0.35355338
        %v479 = vmul.f32 %v429, 0.35355338
        %v480 = vmul.f32 %v430, 0.35355338
        %v481 = vmul.f32 %v431, 0.35355338
        %v482 = vmul.f32 %v432, 0.35355338
        %v483 = vmul.f32 %v433, 0.35355338
        %v484 = vmul.f32 %v434, 0.35355338
        %v485 = vmul.f32 %v435, 0.35355338
        %v486 = vmul.f32 %v436, 0.35355338
        %v487 = vmul.f32 %v437, 0.35355338
        %v488 = vmul.f32 %v438, 0.35355338
        %v489 = vmul.f32 %v439, 0.35355338
        %v490 = vmul.f32 %v440, 0.35355338
        %v491 = vmul.f32 %v441, 0.35355338
        %v492 = vmul.f32 %v442, 0.35355338
        %v493 = vmul.f32 %v443, 0.35355338
        %v494 = vmul.f32 %v444, 0.35355338
        %v495 = vmul.f32 %v445, 0.35355338
        %v496 = vmul.f32 %v446, 0.35355338
        %v497 = vmul.f32 %v447, 0.35355338
        %v498 = vmul.f32 %v448, 0.35355338
        %v499 = vmul.f32 %v449, 0.35355338
        %v500 = vmul.f32 %v450, 0.35355338
        %v501 = vmul.f32 %v451, 0.35355338
        %v502 = vmul.f32 %v452, 0.35355338
        %v503 = vmul.f32 %v453, 0.35355338
        %v504 = vmul.f32 %v454, 0.35355338
        %v505 = vmul.f32 %v455, 0.35355338
        %v506 = vmul.f32 %v456, 0.35355338
        %v507 = vmul.f32 %v457, 0.35355338
        %v508 = vmul.f32 %v458, 0.35355338
        %v509 = vmul.f32 %v459, 0.35355338
        %v510 = vmul.f32 %v460, 0.35355338
        %v511 = vmul.f32 %v461, 0.35355338
        %v512 = vmul.f32 %v462, 0.35355338
        %v513 = vmul.f32 %v463, 0.35355338
        %v514 = vmul.f32 %v464, 0.35355338
        %v515 = vmul.f32 %v465, 0.35355338
        %v516 = vmul.f32 %v466, 0.35355338
        %v517 = vmul.f32 %v467, 0.35355338
        %v518 = vmul.f32 %v468, 0.35355338
        %v519 = vmul.f32 %v469, 0.35355338
        %v520 = vmul.f32 %v470, 0.35355338
        %v521 = vmul.f32 %v471, 0.35355338
        %v522 = vmul.f32 %v472, 0.35355338
        %v523 = vmul.f32 %v473, 0.35355338
        %v524 = vmul.f32 %v474, 0.35355338
        %v525 = vmul.f32 %v475, 0.35355338
        %v526 = vmul.f32 %v476, 0.35355338
        %528 = vset.pattern.permute.xlu0 0
        %529 = vperm.xlu0 %528, %v478
        %v530 = vpop.permute.xlu0 %529
        %533 = vset.pattern.permute.xlu0 0
        %534 = vperm.xlu0 %533, %v479
        %v535 = vpop.permute.xlu0 %534
        %538 = vset.pattern.permute.xlu0 0
        %539 = vperm.xlu0 %538, %v480
        %v540 = vpop.permute.xlu0 %539
        %543 = vset.pattern.permute.xlu0 0
        %544 = vperm.xlu0 %543, %v481
        %v545 = vpop.permute.xlu0 %544
        %548 = vset.pattern.permute.xlu0 0
        %549 = vperm.xlu0 %548, %v482
        %v550 = vpop.permute.xlu0 %549
        %553 = vset.pattern.permute.xlu0 0
        %554 = vperm.xlu0 %553, %v483
        %v555 = vpop.permute.xlu0 %554
        %558 = vset.pattern.permute.xlu0 0
        %559 = vperm.xlu0 %558, %v484
        %v560 = vpop.permute.xlu0 %559
        %563 = vset.pattern.permute.xlu0 0
        %564 = vperm.xlu0 %563, %v485
        %v565 = vpop.permute.xlu0 %564
        %568 = vset.pattern.permute.xlu0 0
        %569 = vperm.xlu0 %568, %v486
        %v570 = vpop.permute.xlu0 %569
        %573 = vset.pattern.permute.xlu0 0
        %574 = vperm.xlu0 %573, %v487
        %v575 = vpop.permute.xlu0 %574
        %578 = vset.pattern.permute.xlu0 0
        %579 = vperm.xlu0 %578, %v488
        %v580 = vpop.permute.xlu0 %579
        %583 = vset.pattern.permute.xlu0 0
        %584 = vperm.xlu0 %583, %v489
        %v585 = vpop.permute.xlu0 %584
        %588 = vset.pattern.permute.xlu0 0
        %589 = vperm.xlu0 %588, %v490
        %v590 = vpop.permute.xlu0 %589
        %593 = vset.pattern.permute.xlu0 0
        %594 = vperm.xlu0 %593, %v491
        %v595 = vpop.permute.xlu0 %594
        %598 = vset.pattern.permute.xlu0 0
        %599 = vperm.xlu0 %598, %v492
        %v600 = vpop.permute.xlu0 %599
        %603 = vset.pattern.permute.xlu0 0
        %604 = vperm.xlu0 %603, %v493
        %v605 = vpop.permute.xlu0 %604
        %608 = vset.pattern.permute.xlu0 0
        %609 = vperm.xlu0 %608, %v494
        %v610 = vpop.permute.xlu0 %609
        %613 = vset.pattern.permute.xlu0 0
        %614 = vperm.xlu0 %613, %v495
        %v615 = vpop.permute.xlu0 %614
        %618 = vset.pattern.permute.xlu0 0
        %619 = vperm.xlu0 %618, %v496
        %v620 = vpop.permute.xlu0 %619
        %623 = vset.pattern.permute.xlu0 0
        %624 = vperm.xlu0 %623, %v497
        %v625 = vpop.permute.xlu0 %624
        %628 = vset.pattern.permute.xlu0 0
        %629 = vperm.xlu0 %628, %v498
        %v630 = vpop.permute.xlu0 %629
        %633 = vset.pattern.permute.xlu0 0
        %634 = vperm.xlu0 %633, %v499
        %v635 = vpop.permute.xlu0 %634
        %638 = vset.pattern.permute.xlu0 0
        %639 = vperm.xlu0 %638, %v500
        %v640 = vpop.permute.xlu0 %639
        %643 = vset.pattern.permute.xlu0 0
        %644 = vperm.xlu0 %643, %v501
        %v645 = vpop.permute.xlu0 %644
        %648 = vset.pattern.permute.xlu0 0
        %649 = vperm.xlu0 %648, %v502
        %v650 = vpop.permute.xlu0 %649
        %653 = vset.pattern.permute.xlu0 0
        %654 = vperm.xlu0 %653, %v503
        %v655 = vpop.permute.xlu0 %654
        %658 = vset.pattern.permute.xlu0 0
        %659 = vperm.xlu0 %658, %v504
        %v660 = vpop.permute.xlu0 %659
        %663 = vset.pattern.permute.xlu0 0
        %664 = vperm.xlu0 %663, %v505
        %v665 = vpop.permute.xlu0 %664
        %668 = vset.pattern.permute.xlu0 0
        %669 = vperm.xlu0 %668, %v506
        %v670 = vpop.permute.xlu0 %669
        %673 = vset.pattern.permute.xlu0 0
        %674 = vperm.xlu0 %673, %v507
        %v675 = vpop.permute.xlu0 %674
        %678 = vset.pattern.permute.xlu0 0
        %679 = vperm.xlu0 %678, %v508
        %v680 = vpop.permute.xlu0 %679
        %683 = vset.pattern.permute.xlu0 0
        %684 = vperm.xlu0 %683, %v509
        %v685 = vpop.permute.xlu0 %684
        %688 = vset.pattern.permute.xlu0 0
        %689 = vperm.xlu0 %688, %v510
        %v690 = vpop.permute.xlu0 %689
        %693 = vset.pattern.permute.xlu0 0
        %694 = vperm.xlu0 %693, %v511
        %v695 = vpop.permute.xlu0 %694
        %698 = vset.pattern.permute.xlu0 0
        %699 = vperm.xlu0 %698, %v512
        %v700 = vpop.permute.xlu0 %699
        %703 = vset.pattern.permute.xlu0 0
        %704 = vperm.xlu0 %703, %v513
        %v705 = vpop.permute.xlu0 %704
        %708 = vset.pattern.permute.xlu0 0
        %709 = vperm.xlu0 %708, %v514
        %v710 = vpop.permute.xlu0 %709
        %713 = vset.pattern.permute.xlu0 0
        %714 = vperm.xlu0 %713, %v515
        %v715 = vpop.permute.xlu0 %714
        %718 = vset.pattern.permute.xlu0 0
        %719 = vperm.xlu0 %718, %v516
        %v720 = vpop.permute.xlu0 %719
        %723 = vset.pattern.permute.xlu0 0
        %724 = vperm.xlu0 %723, %v517
        %v725 = vpop.permute.xlu0 %724
        %728 = vset.pattern.permute.xlu0 0
        %729 = vperm.xlu0 %728, %v518
        %v730 = vpop.permute.xlu0 %729
        %733 = vset.pattern.permute.xlu0 0
        %734 = vperm.xlu0 %733, %v519
        %v735 = vpop.permute.xlu0 %734
        %738 = vset.pattern.permute.xlu0 0
        %739 = vperm.xlu0 %738, %v520
        %v740 = vpop.permute.xlu0 %739
        %743 = vset.pattern.permute.xlu0 0
        %744 = vperm.xlu0 %743, %v521
        %v745 = vpop.permute.xlu0 %744
        %748 = vset.pattern.permute.xlu0 0
        %749 = vperm.xlu0 %748, %v522
        %v750 = vpop.permute.xlu0 %749
        %753 = vset.pattern.permute.xlu0 0
        %754 = vperm.xlu0 %753, %v523
        %v755 = vpop.permute.xlu0 %754
        %758 = vset.pattern.permute.xlu0 0
        %759 = vperm.xlu0 %758, %v524
        %v760 = vpop.permute.xlu0 %759
        %763 = vset.pattern.permute.xlu0 0
        %764 = vperm.xlu0 %763, %v525
        %v765 = vpop.permute.xlu0 %764
        %768 = vset.pattern.permute.xlu0 0
        %769 = vperm.xlu0 %768, %v526
        %v770 = vpop.permute.xlu0 %769
        %v773 = vperm.slane %v477, 0
        %v774 = vperm.slane %v477, 1
        %v775 = vperm.slane %v477, 2
        %v776 = vperm.slane %v477, 3
        %v781 = vmul.f32 %v530, %v773
        %v782 = vmul.f32 %v530, %v774
        %v783 = vmul.f32 %v530, %v775
        %v784 = vmul.f32 %v530, %v776
        %v785 = vmul.f32 %v535, %v773
        %v786 = vmul.f32 %v535, %v774
        %v787 = vmul.f32 %v535, %v775
        %v788 = vmul.f32 %v535, %v776
        %v789 = vmul.f32 %v540, %v773
        %v790 = vmul.f32 %v540, %v774
        %v791 = vmul.f32 %v540, %v775
        %v792 = vmul.f32 %v540, %v776
        %v793 = vmul.f32 %v545, %v773
        %v794 = vmul.f32 %v545, %v774
        %v795 = vmul.f32 %v545, %v775
        %v796 = vmul.f32 %v545, %v776
        %v797 = vmul.f32 %v550, %v773
        %v798 = vmul.f32 %v550, %v774
        %v799 = vmul.f32 %v550, %v775
        %v800 = vmul.f32 %v550, %v776
        %v801 = vmul.f32 %v555, %v773
        %v802 = vmul.f32 %v555, %v774
        %v803 = vmul.f32 %v555, %v775
        %v804 = vmul.f32 %v555, %v776
        %v805 = vmul.f32 %v560, %v773
        %v806 = vmul.f32 %v560, %v774
        %v807 = vmul.f32 %v560, %v775
        %v808 = vmul.f32 %v560, %v776
        %v809 = vmul.f32 %v565, %v773
        %v810 = vmul.f32 %v565, %v774
        %v811 = vmul.f32 %v565, %v775
        %v812 = vmul.f32 %v565, %v776
        %v813 = vmul.f32 %v570, %v773
        %v814 = vmul.f32 %v570, %v774
        %v815 = vmul.f32 %v570, %v775
        %v816 = vmul.f32 %v570, %v776
        %v817 = vmul.f32 %v575, %v773
        %v818 = vmul.f32 %v575, %v774
        %v819 = vmul.f32 %v575, %v775
        %v820 = vmul.f32 %v575, %v776
        %v821 = vmul.f32 %v580, %v773
        %v822 = vmul.f32 %v580, %v774
        %v823 = vmul.f32 %v580, %v775
        %v824 = vmul.f32 %v580, %v776
        %v825 = vmul.f32 %v585, %v773
        %v826 = vmul.f32 %v585, %v774
        %v827 = vmul.f32 %v585, %v775
        %v828 = vmul.f32 %v585, %v776
        %v829 = vmul.f32 %v590, %v773
        %v830 = vmul.f32 %v590, %v774
        %v831 = vmul.f32 %v590, %v775
        %v832 = vmul.f32 %v590, %v776
        %v833 = vmul.f32 %v595, %v773
        %v834 = vmul.f32 %v595, %v774
        %v835 = vmul.f32 %v595, %v775
        %v836 = vmul.f32 %v595, %v776
        %v837 = vmul.f32 %v600, %v773
        %v838 = vmul.f32 %v600, %v774
        %v839 = vmul.f32 %v600, %v775
        %v840 = vmul.f32 %v600, %v776
        %v841 = vmul.f32 %v605, %v773
        %v842 = vmul.f32 %v605, %v774
        %v843 = vmul.f32 %v605, %v775
        %v844 = vmul.f32 %v605, %v776
        %v845 = vmul.f32 %v610, %v773
        %v846 = vmul.f32 %v610, %v774
        %v847 = vmul.f32 %v610, %v775
        %v848 = vmul.f32 %v610, %v776
        %v849 = vmul.f32 %v615, %v773
        %v850 = vmul.f32 %v615, %v774
        %v851 = vmul.f32 %v615, %v775
        %v852 = vmul.f32 %v615, %v776
        %v853 = vmul.f32 %v620, %v773
        %v854 = vmul.f32 %v620, %v774
        %v855 = vmul.f32 %v620, %v775
        %v856 = vmul.f32 %v620, %v776
        %v857 = vmul.f32 %v625, %v773
        %v858 = vmul.f32 %v625, %v774
        %v859 = vmul.f32 %v625, %v775
        %v860 = vmul.f32 %v625, %v776
        %v861 = vmul.f32 %v630, %v773
        %v862 = vmul.f32 %v630, %v774
        %v863 = vmul.f32 %v630, %v775
        %v864 = vmul.f32 %v630, %v776
        %v865 = vmul.f32 %v635, %v773
        %v866 = vmul.f32 %v635, %v774
        %v867 = vmul.f32 %v635, %v775
        %v868 = vmul.f32 %v635, %v776
        %v869 = vmul.f32 %v640, %v773
        %v870 = vmul.f32 %v640, %v774
        %v871 = vmul.f32 %v640, %v775
        %v872 = vmul.f32 %v640, %v776
        %v873 = vmul.f32 %v645, %v773
        %v874 = vmul.f32 %v645, %v774
        %v875 = vmul.f32 %v645, %v775
        %v876 = vmul.f32 %v645, %v776
        %v877 = vmul.f32 %v650, %v773
        %v878 = vmul.f32 %v650, %v774
        %v879 = vmul.f32 %v650, %v775
        %v880 = vmul.f32 %v650, %v776
        %v881 = vmul.f32 %v655, %v773
        %v882 = vmul.f32 %v655, %v774
        %v883 = vmul.f32 %v655, %v775
        %v884 = vmul.f32 %v655, %v776
        %v885 = vmul.f32 %v660, %v773
        %v886 = vmul.f32 %v660, %v774
        %v887 = vmul.f32 %v660, %v775
        %v888 = vmul.f32 %v660, %v776
        %v889 = vmul.f32 %v665, %v773
        %v890 = vmul.f32 %v665, %v774
        %v891 = vmul.f32 %v665, %v775
        %v892 = vmul.f32 %v665, %v776
        %v893 = vmul.f32 %v670, %v773
        %v894 = vmul.f32 %v670, %v774
        %v895 = vmul.f32 %v670, %v775
        %v896 = vmul.f32 %v670, %v776
        %v897 = vmul.f32 %v675, %v773
        %v898 = vmul.f32 %v675, %v774
        %v899 = vmul.f32 %v675, %v775
        %v900 = vmul.f32 %v675, %v776
        %v901 = vmul.f32 %v680, %v773
        %v902 = vmul.f32 %v680, %v774
        %v903 = vmul.f32 %v680, %v775
        %v904 = vmul.f32 %v680, %v776
        %v905 = vmul.f32 %v685, %v773
        %v906 = vmul.f32 %v685, %v774
        %v907 = vmul.f32 %v685, %v775
        %v908 = vmul.f32 %v685, %v776
        %v909 = vmul.f32 %v690, %v773
        %v910 = vmul.f32 %v690, %v774
        %v911 = vmul.f32 %v690, %v775
        %v912 = vmul.f32 %v690, %v776
        %v913 = vmul.f32 %v695, %v773
        %v914 = vmul.f32 %v695, %v774
        %v915 = vmul.f32 %v695, %v775
        %v916 = vmul.f32 %v695, %v776
        %v917 = vmul.f32 %v700, %v773
        %v918 = vmul.f32 %v700, %v774
        %v919 = vmul.f32 %v700, %v775
        %v920 = vmul.f32 %v700, %v776
        %v921 = vmul.f32 %v705, %v773
        %v922 = vmul.f32 %v705, %v774
        %v923 = vmul.f32 %v705, %v775
        %v924 = vmul.f32 %v705, %v776
        %v925 = vmul.f32 %v710, %v773
        %v926 = vmul.f32 %v710, %v774
        %v927 = vmul.f32 %v710, %v775
        %v928 = vmul.f32 %v710, %v776
        %v929 = vmul.f32 %v715, %v773
        %v930 = vmul.f32 %v715, %v774
        %v931 = vmul.f32 %v715, %v775
        %v932 = vmul.f32 %v715, %v776
        %v933 = vmul.f32 %v720, %v773
        %v934 = vmul.f32 %v720, %v774
        %v935 = vmul.f32 %v720, %v775
        %v936 = vmul.f32 %v720, %v776
        %v937 = vmul.f32 %v725, %v773
        %v938 = vmul.f32 %v725, %v774
        %v939 = vmul.f32 %v725, %v775
        %v940 = vmul.f32 %v725, %v776
        %v941 = vmul.f32 %v730, %v773
        %v942 = vmul.f32 %v730, %v774
        %v943 = vmul.f32 %v730, %v775
        %v944 = vmul.f32 %v730, %v776
        %v945 = vmul.f32 %v735, %v773
        %v946 = vmul.f32 %v735, %v774
        %v947 = vmul.f32 %v735, %v775
        %v948 = vmul.f32 %v735, %v776
        %v949 = vmul.f32 %v740, %v773
        %v950 = vmul.f32 %v740, %v774
        %v951 = vmul.f32 %v740, %v775
        %v952 = vmul.f32 %v740, %v776
        %v953 = vmul.f32 %v745, %v773
        %v954 = vmul.f32 %v745, %v774
        %v955 = vmul.f32 %v745, %v775
        %v956 = vmul.f32 %v745, %v776
        %v957 = vmul.f32 %v750, %v773
        %v958 = vmul.f32 %v750, %v774
        %v959 = vmul.f32 %v750, %v775
        %v960 = vmul.f32 %v750, %v776
        %v961 = vmul.f32 %v755, %v773
        %v962 = vmul.f32 %v755, %v774
        %v963 = vmul.f32 %v755, %v775
        %v964 = vmul.f32 %v755, %v776
        %v965 = vmul.f32 %v760, %v773
        %v966 = vmul.f32 %v760, %v774
        %v967 = vmul.f32 %v760, %v775
        %v968 = vmul.f32 %v760, %v776
        %v969 = vmul.f32 %v765, %v773
        %v970 = vmul.f32 %v765, %v774
        %v971 = vmul.f32 %v765, %v775
        %v972 = vmul.f32 %v765, %v776
        %v973 = vmul.f32 %v770, %v773
        %v974 = vmul.f32 %v770, %v774
        %v975 = vmul.f32 %v770, %v775
        %v976 = vmul.f32 %v770, %v776
        %v977 = vmax.f32 %v781, %v782
        %v978 = vmax.f32 %v977, %v783
        %vm979 = vcmask 64512
        %v980 = vsel %vm979, %v784, -inf
        %v981 = vmax.f32 %v978, %v980
        %982 = vmax.xlane.f32.xlu0 %v981
        %v983 = vpop.xlane.xlu0 %982
        %v984 = vmax.f32 %v785, %v786
        %v985 = vmax.f32 %v984, %v787
        %v986 = vsel %vm979, %v788, -inf
        %v987 = vmax.f32 %v985, %v986
        %988 = vmax.xlane.f32.xlu0 %v987
        %v989 = vpop.xlane.xlu0 %988
        %v990 = vmax.f32 %v789, %v790
        %v991 = vmax.f32 %v990, %v791
        %v992 = vsel %vm979, %v792, -inf
        %v993 = vmax.f32 %v991, %v992
        %994 = vmax.xlane.f32.xlu0 %v993
        %v995 = vpop.xlane.xlu0 %994
        %v996 = vmax.f32 %v793, %v794
        %v997 = vmax.f32 %v996, %v795
        %v998 = vsel %vm979, %v796, -inf
        %v999 = vmax.f32 %v997, %v998
        %1000 = vmax.xlane.f32.xlu0 %v999
        %v1001 = vpop.xlane.xlu0 %1000
        %v1002 = vmax.f32 %v797, %v798
        %v1003 = vmax.f32 %v1002, %v799
        %v1004 = vsel %vm979, %v800, -inf
        %v1005 = vmax.f32 %v1003, %v1004
        %1006 = vmax.xlane.f32.xlu0 %v1005
        %v1007 = vpop.xlane.xlu0 %1006
        %v1008 = vmax.f32 %v801, %v802
        %v1009 = vmax.f32 %v1008, %v803
        %v1010 = vsel %vm979, %v804, -inf
        %v1011 = vmax.f32 %v1009, %v1010
        %1012 = vmax.xlane.f32.xlu0 %v1011
        %v1013 = vpop.xlane.xlu0 %1012
        %v1014 = vmax.f32 %v805, %v806
        %v1015 = vmax.f32 %v1014, %v807
        %v1016 = vsel %vm979, %v808, -inf
        %v1017 = vmax.f32 %v1015, %v1016
        %1018 = vmax.xlane.f32.xlu0 %v1017
        %v1019 = vpop.xlane.xlu0 %1018
        %v1020 = vmax.f32 %v809, %v810
        %v1021 = vmax.f32 %v1020, %v811
        %v1022 = vsel %vm979, %v812, -inf
        %v1023 = vmax.f32 %v1021, %v1022
        %1024 = vmax.xlane.f32.xlu0 %v1023
        %v1025 = vpop.xlane.xlu0 %1024
        %v1026 = vmax.f32 %v813, %v814
        %v1027 = vmax.f32 %v1026, %v815
        %v1028 = vsel %vm979, %v816, -inf
        %v1029 = vmax.f32 %v1027, %v1028
        %1030 = vmax.xlane.f32.xlu0 %v1029
        %v1031 = vpop.xlane.xlu0 %1030
        %v1032 = vmax.f32 %v817, %v818
        %v1033 = vmax.f32 %v1032, %v819
        %v1034 = vsel %vm979, %v820, -inf
        %v1035 = vmax.f32 %v1033, %v1034
        %1036 = vmax.xlane.f32.xlu0 %v1035
        %v1037 = vpop.xlane.xlu0 %1036
        %v1038 = vmax.f32 %v821, %v822
        %v1039 = vmax.f32 %v1038, %v823
        %v1040 = vsel %vm979, %v824, -inf
        %v1041 = vmax.f32 %v1039, %v1040
        %1042 = vmax.xlane.f32.xlu0 %v1041
        %v1043 = vpop.xlane.xlu0 %1042
        %v1044 = vmax.f32 %v825, %v826
        %v1045 = vmax.f32 %v1044, %v827
        %v1046 = vsel %vm979, %v828, -inf
        %v1047 = vmax.f32 %v1045, %v1046
        %1048 = vmax.xlane.f32.xlu0 %v1047
        %v1049 = vpop.xlane.xlu0 %1048
        %v1050 = vmax.f32 %v829, %v830
        %v1051 = vmax.f32 %v1050, %v831
        %v1052 = vsel %vm979, %v832, -inf
        %v1053 = vmax.f32 %v1051, %v1052
        %1054 = vmax.xlane.f32.xlu0 %v1053
        %v1055 = vpop.xlane.xlu0 %1054
        %v1056 = vmax.f32 %v833, %v834
        %v1057 = vmax.f32 %v1056, %v835
        %v1058 = vsel %vm979, %v836, -inf
        %v1059 = vmax.f32 %v1057, %v1058
        %1060 = vmax.xlane.f32.xlu0 %v1059
        %v1061 = vpop.xlane.xlu0 %1060
        %v1062 = vmax.f32 %v837, %v838
        %v1063 = vmax.f32 %v1062, %v839
        %v1064 = vsel %vm979, %v840, -inf
        %v1065 = vmax.f32 %v1063, %v1064
        %1066 = vmax.xlane.f32.xlu0 %v1065
        %v1067 = vpop.xlane.xlu0 %1066
        %v1068 = vmax.f32 %v841, %v842
        %v1069 = vmax.f32 %v1068, %v843
        %v1070 = vsel %vm979, %v844, -inf
        %v1071 = vmax.f32 %v1069, %v1070
        %1072 = vmax.xlane.f32.xlu0 %v1071
        %v1073 = vpop.xlane.xlu0 %1072
        %v1074 = vmax.f32 %v845, %v846
        %v1075 = vmax.f32 %v1074, %v847
        %v1076 = vsel %vm979, %v848, -inf
        %v1077 = vmax.f32 %v1075, %v1076
        %1078 = vmax.xlane.f32.xlu0 %v1077
        %v1079 = vpop.xlane.xlu0 %1078
        %v1080 = vmax.f32 %v849, %v850
        %v1081 = vmax.f32 %v1080, %v851
        %v1082 = vsel %vm979, %v852, -inf
        %v1083 = vmax.f32 %v1081, %v1082
        %1084 = vmax.xlane.f32.xlu0 %v1083
        %v1085 = vpop.xlane.xlu0 %1084
        %v1086 = vmax.f32 %v853, %v854
        %v1087 = vmax.f32 %v1086, %v855
        %v1088 = vsel %vm979, %v856, -inf
        %v1089 = vmax.f32 %v1087, %v1088
        %1090 = vmax.xlane.f32.xlu0 %v1089
        %v1091 = vpop.xlane.xlu0 %1090
        %v1092 = vmax.f32 %v857, %v858
        %v1093 = vmax.f32 %v1092, %v859
        %v1094 = vsel %vm979, %v860, -inf
        %v1095 = vmax.f32 %v1093, %v1094
        %1096 = vmax.xlane.f32.xlu0 %v1095
        %v1097 = vpop.xlane.xlu0 %1096
        %v1098 = vmax.f32 %v861, %v862
        %v1099 = vmax.f32 %v1098, %v863
        %v1100 = vsel %vm979, %v864, -inf
        %v1101 = vmax.f32 %v1099, %v1100
        %1102 = vmax.xlane.f32.xlu0 %v1101
        %v1103 = vpop.xlane.xlu0 %1102
        %v1104 = vmax.f32 %v865, %v866
        %v1105 = vmax.f32 %v1104, %v867
        %v1106 = vsel %vm979, %v868, -inf
        %v1107 = vmax.f32 %v1105, %v1106
        %1108 = vmax.xlane.f32.xlu0 %v1107
        %v1109 = vpop.xlane.xlu0 %1108
        %v1110 = vmax.f32 %v869, %v870
        %v1111 = vmax.f32 %v1110, %v871
        %v1112 = vsel %vm979, %v872, -inf
        %v1113 = vmax.f32 %v1111, %v1112
        %1114 = vmax.xlane.f32.xlu0 %v1113
        %v1115 = vpop.xlane.xlu0 %1114
        %v1116 = vmax.f32 %v873, %v874
        %v1117 = vmax.f32 %v1116, %v875
        %v1118 = vsel %vm979, %v876, -inf
        %v1119 = vmax.f32 %v1117, %v1118
        %1120 = vmax.xlane.f32.xlu0 %v1119
        %v1121 = vpop.xlane.xlu0 %1120
        %v1122 = vmax.f32 %v877, %v878
        %v1123 = vmax.f32 %v1122, %v879
        %v1124 = vsel %vm979, %v880, -inf
        %v1125 = vmax.f32 %v1123, %v1124
        %1126 = vmax.xlane.f32.xlu0 %v1125
        %v1127 = vpop.xlane.xlu0 %1126
        %v1128 = vmax.f32 %v881, %v882
        %v1129 = vmax.f32 %v1128, %v883
        %v1130 = vsel %vm979, %v884, -inf
        %v1131 = vmax.f32 %v1129, %v1130
        %1132 = vmax.xlane.f32.xlu0 %v1131
        %v1133 = vpop.xlane.xlu0 %1132
        %v1134 = vmax.f32 %v885, %v886
        %v1135 = vmax.f32 %v1134, %v887
        %v1136 = vsel %vm979, %v888, -inf
        %v1137 = vmax.f32 %v1135, %v1136
        %1138 = vmax.xlane.f32.xlu0 %v1137
        %v1139 = vpop.xlane.xlu0 %1138
        %v1140 = vmax.f32 %v889, %v890
        %v1141 = vmax.f32 %v1140, %v891
        %v1142 = vsel %vm979, %v892, -inf
        %v1143 = vmax.f32 %v1141, %v1142
        %1144 = vmax.xlane.f32.xlu0 %v1143
        %v1145 = vpop.xlane.xlu0 %1144
        %v1146 = vmax.f32 %v893, %v894
        %v1147 = vmax.f32 %v1146, %v895
        %v1148 = vsel %vm979, %v896, -inf
        %v1149 = vmax.f32 %v1147, %v1148
        %1150 = vmax.xlane.f32.xlu0 %v1149
        %v1151 = vpop.xlane.xlu0 %1150
        %v1152 = vmax.f32 %v897, %v898
        %v1153 = vmax.f32 %v1152, %v899
        %v1154 = vsel %vm979, %v900, -inf
        %v1155 = vmax.f32 %v1153, %v1154
        %1156 = vmax.xlane.f32.xlu0 %v1155
        %v1157 = vpop.xlane.xlu0 %1156
        %v1158 = vmax.f32 %v901, %v902
        %v1159 = vmax.f32 %v1158, %v903
        %v1160 = vsel %vm979, %v904, -inf
        %v1161 = vmax.f32 %v1159, %v1160
        %1162 = vmax.xlane.f32.xlu0 %v1161
        %v1163 = vpop.xlane.xlu0 %1162
        %v1164 = vmax.f32 %v905, %v906
        %v1165 = vmax.f32 %v1164, %v907
        %v1166 = vsel %vm979, %v908, -inf
        %v1167 = vmax.f32 %v1165, %v1166
        %1168 = vmax.xlane.f32.xlu0 %v1167
        %v1169 = vpop.xlane.xlu0 %1168
        %v1170 = vmax.f32 %v909, %v910
        %v1171 = vmax.f32 %v1170, %v911
        %v1172 = vsel %vm979, %v912, -inf
        %v1173 = vmax.f32 %v1171, %v1172
        %1174 = vmax.xlane.f32.xlu0 %v1173
        %v1175 = vpop.xlane.xlu0 %1174
        %v1176 = vmax.f32 %v913, %v914
        %v1177 = vmax.f32 %v1176, %v915
        %v1178 = vsel %vm979, %v916, -inf
        %v1179 = vmax.f32 %v1177, %v1178
        %1180 = vmax.xlane.f32.xlu0 %v1179
        %v1181 = vpop.xlane.xlu0 %1180
        %v1182 = vmax.f32 %v917, %v918
        %v1183 = vmax.f32 %v1182, %v919
        %v1184 = vsel %vm979, %v920, -inf
        %v1185 = vmax.f32 %v1183, %v1184
        %1186 = vmax.xlane.f32.xlu0 %v1185
        %v1187 = vpop.xlane.xlu0 %1186
        %v1188 = vmax.f32 %v921, %v922
        %v1189 = vmax.f32 %v1188, %v923
        %v1190 = vsel %vm979, %v924, -inf
        %v1191 = vmax.f32 %v1189, %v1190
        %1192 = vmax.xlane.f32.xlu0 %v1191
        %v1193 = vpop.xlane.xlu0 %1192
        %v1194 = vmax.f32 %v925, %v926
        %v1195 = vmax.f32 %v1194, %v927
        %v1196 = vsel %vm979, %v928, -inf
        %v1197 = vmax.f32 %v1195, %v1196
        %1198 = vmax.xlane.f32.xlu0 %v1197
        %v1199 = vpop.xlane.xlu0 %1198
        %v1200 = vmax.f32 %v929, %v930
        %v1201 = vmax.f32 %v1200, %v931
        %v1202 = vsel %vm979, %v932, -inf
        %v1203 = vmax.f32 %v1201, %v1202
        %1204 = vmax.xlane.f32.xlu0 %v1203
        %v1205 = vpop.xlane.xlu0 %1204
        %v1206 = vmax.f32 %v933, %v934
        %v1207 = vmax.f32 %v1206, %v935
        %v1208 = vsel %vm979, %v936, -inf
        %v1209 = vmax.f32 %v1207, %v1208
        %1210 = vmax.xlane.f32.xlu0 %v1209
        %v1211 = vpop.xlane.xlu0 %1210
        %v1212 = vmax.f32 %v937, %v938
        %v1213 = vmax.f32 %v1212, %v939
        %v1214 = vsel %vm979, %v940, -inf
        %v1215 = vmax.f32 %v1213, %v1214
        %1216 = vmax.xlane.f32.xlu0 %v1215
        %v1217 = vpop.xlane.xlu0 %1216
        %v1218 = vmax.f32 %v941, %v942
        %v1219 = vmax.f32 %v1218, %v943
        %v1220 = vsel %vm979, %v944, -inf
        %v1221 = vmax.f32 %v1219, %v1220
        %1222 = vmax.xlane.f32.xlu0 %v1221
        %v1223 = vpop.xlane.xlu0 %1222
        %v1224 = vmax.f32 %v945, %v946
        %v1225 = vmax.f32 %v1224, %v947
        %v1226 = vsel %vm979, %v948, -inf
        %v1227 = vmax.f32 %v1225, %v1226
        %1228 = vmax.xlane.f32.xlu0 %v1227
        %v1229 = vpop.xlane.xlu0 %1228
        %v1230 = vmax.f32 %v949, %v950
        %v1231 = vmax.f32 %v1230, %v951
        %v1232 = vsel %vm979, %v952, -inf
        %v1233 = vmax.f32 %v1231, %v1232
        %1234 = vmax.xlane.f32.xlu0 %v1233
        %v1235 = vpop.xlane.xlu0 %1234
        %v1236 = vmax.f32 %v953, %v954
        %v1237 = vmax.f32 %v1236, %v955
        %v1238 = vsel %vm979, %v956, -inf
        %v1239 = vmax.f32 %v1237, %v1238
        %1240 = vmax.xlane.f32.xlu0 %v1239
        %v1241 = vpop.xlane.xlu0 %1240
        %v1242 = vmax.f32 %v957, %v958
        %v1243 = vmax.f32 %v1242, %v959
        %v1244 = vsel %vm979, %v960, -inf
        %v1245 = vmax.f32 %v1243, %v1244
        %1246 = vmax.xlane.f32.xlu0 %v1245
        %v1247 = vpop.xlane.xlu0 %1246
        %v1248 = vmax.f32 %v961, %v962
        %v1249 = vmax.f32 %v1248, %v963
        %v1250 = vsel %vm979, %v964, -inf
        %v1251 = vmax.f32 %v1249, %v1250
        %1252 = vmax.xlane.f32.xlu0 %v1251
        %v1253 = vpop.xlane.xlu0 %1252
        %v1254 = vmax.f32 %v965, %v966
        %v1255 = vmax.f32 %v1254, %v967
        %v1256 = vsel %vm979, %v968, -inf
        %v1257 = vmax.f32 %v1255, %v1256
        %1258 = vmax.xlane.f32.xlu0 %v1257
        %v1259 = vpop.xlane.xlu0 %1258
        %v1260 = vmax.f32 %v969, %v970
        %v1261 = vmax.f32 %v1260, %v971
        %v1262 = vsel %vm979, %v972, -inf
        %v1263 = vmax.f32 %v1261, %v1262
        %1264 = vmax.xlane.f32.xlu0 %v1263
        %v1265 = vpop.xlane.xlu0 %1264
        %v1266 = vmax.f32 %v973, %v974
        %v1267 = vmax.f32 %v1266, %v975
        %v1268 = vsel %vm979, %v976, -inf
        %v1269 = vmax.f32 %v1267, %v1268
        %1270 = vmax.xlane.f32.xlu0 %v1269
        %v1271 = vpop.xlane.xlu0 %1270
        %v1272 = vsub.f32 %v781, %v983
        %v1273 = vsub.f32 %v782, %v983
        %v1274 = vsub.f32 %v783, %v983
        %v1275 = vsub.f32 %v784, %v983
        %v1276 = vsub.f32 %v785, %v989
        %v1277 = vsub.f32 %v786, %v989
        %v1278 = vsub.f32 %v787, %v989
        %v1279 = vsub.f32 %v788, %v989
        %v1280 = vsub.f32 %v789, %v995
        %v1281 = vsub.f32 %v790, %v995
        %v1282 = vsub.f32 %v791, %v995
        %v1283 = vsub.f32 %v792, %v995
        %v1284 = vsub.f32 %v793, %v1001
        %v1285 = vsub.f32 %v794, %v1001
        %v1286 = vsub.f32 %v795, %v1001
        %v1287 = vsub.f32 %v796, %v1001
        %v1288 = vsub.f32 %v797, %v1007
        %v1289 = vsub.f32 %v798, %v1007
        %v1290 = vsub.f32 %v799, %v1007
        %v1291 = vsub.f32 %v800, %v1007
        %v1292 = vsub.f32 %v801, %v1013
        %v1293 = vsub.f32 %v802, %v1013
        %v1294 = vsub.f32 %v803, %v1013
        %v1295 = vsub.f32 %v804, %v1013
        %v1296 = vsub.f32 %v805, %v1019
        %v1297 = vsub.f32 %v806, %v1019
        %v1298 = vsub.f32 %v807, %v1019
        %v1299 = vsub.f32 %v808, %v1019
        %v1300 = vsub.f32 %v809, %v1025
        %v1301 = vsub.f32 %v810, %v1025
        %v1302 = vsub.f32 %v811, %v1025
        %v1303 = vsub.f32 %v812, %v1025
        %v1304 = vsub.f32 %v813, %v1031
        %v1305 = vsub.f32 %v814, %v1031
        %v1306 = vsub.f32 %v815, %v1031
        %v1307 = vsub.f32 %v816, %v1031
        %v1308 = vsub.f32 %v817, %v1037
        %v1309 = vsub.f32 %v818, %v1037
        %v1310 = vsub.f32 %v819, %v1037
        %v1311 = vsub.f32 %v820, %v1037
        %v1312 = vsub.f32 %v821, %v1043
        %v1313 = vsub.f32 %v822, %v1043
        %v1314 = vsub.f32 %v823, %v1043
        %v1315 = vsub.f32 %v824, %v1043
        %v1316 = vsub.f32 %v825, %v1049
        %v1317 = vsub.f32 %v826, %v1049
        %v1318 = vsub.f32 %v827, %v1049
        %v1319 = vsub.f32 %v828, %v1049
        %v1320 = vsub.f32 %v829, %v1055
        %v1321 = vsub.f32 %v830, %v1055
        %v1322 = vsub.f32 %v831, %v1055
        %v1323 = vsub.f32 %v832, %v1055
        %v1324 = vsub.f32 %v833, %v1061
        %v1325 = vsub.f32 %v834, %v1061
        %v1326 = vsub.f32 %v835, %v1061
        %v1327 = vsub.f32 %v836, %v1061
        %v1328 = vsub.f32 %v837, %v1067
        %v1329 = vsub.f32 %v838, %v1067
        %v1330 = vsub.f32 %v839, %v1067
        %v1331 = vsub.f32 %v840, %v1067
        %v1332 = vsub.f32 %v841, %v1073
        %v1333 = vsub.f32 %v842, %v1073
        %v1334 = vsub.f32 %v843, %v1073
        %v1335 = vsub.f32 %v844, %v1073
        %v1336 = vsub.f32 %v845, %v1079
        %v1337 = vsub.f32 %v846, %v1079
        %v1338 = vsub.f32 %v847, %v1079
        %v1339 = vsub.f32 %v848, %v1079
        %v1340 = vsub.f32 %v849, %v1085
        %v1341 = vsub.f32 %v850, %v1085
        %v1342 = vsub.f32 %v851, %v1085
        %v1343 = vsub.f32 %v852, %v1085
        %v1344 = vsub.f32 %v853, %v1091
        %v1345 = vsub.f32 %v854, %v1091
        %v1346 = vsub.f32 %v855, %v1091
        %v1347 = vsub.f32 %v856, %v1091
        %v1348 = vsub.f32 %v857, %v1097
        %v1349 = vsub.f32 %v858, %v1097
        %v1350 = vsub.f32 %v859, %v1097
        %v1351 = vsub.f32 %v860, %v1097
        %v1352 = vsub.f32 %v861, %v1103
        %v1353 = vsub.f32 %v862, %v1103
        %v1354 = vsub.f32 %v863, %v1103
        %v1355 = vsub.f32 %v864, %v1103
        %v1356 = vsub.f32 %v865, %v1109
        %v1357 = vsub.f32 %v866, %v1109
        %v1358 = vsub.f32 %v867, %v1109
        %v1359 = vsub.f32 %v868, %v1109
        %v1360 = vsub.f32 %v869, %v1115
        %v1361 = vsub.f32 %v870, %v1115
        %v1362 = vsub.f32 %v871, %v1115
        %v1363 = vsub.f32 %v872, %v1115
        %v1364 = vsub.f32 %v873, %v1121
        %v1365 = vsub.f32 %v874, %v1121
        %v1366 = vsub.f32 %v875, %v1121
        %v1367 = vsub.f32 %v876, %v1121
        %v1368 = vsub.f32 %v877, %v1127
        %v1369 = vsub.f32 %v878, %v1127
        %v1370 = vsub.f32 %v879, %v1127
        %v1371 = vsub.f32 %v880, %v1127
        %v1372 = vsub.f32 %v881, %v1133
        %v1373 = vsub.f32 %v882, %v1133
        %v1374 = vsub.f32 %v883, %v1133
        %v1375 = vsub.f32 %v884, %v1133
        %v1376 = vsub.f32 %v885, %v1139
        %v1377 = vsub.f32 %v886, %v1139
        %v1378 = vsub.f32 %v887, %v1139
        %v1379 = vsub.f32 %v888, %v1139
        %v1380 = vsub.f32 %v889, %v1145
        %v1381 = vsub.f32 %v890, %v1145
        %v1382 = vsub.f32 %v891, %v1145
        %v1383 = vsub.f32 %v892, %v1145
        %v1384 = vsub.f32 %v893, %v1151
        %v1385 = vsub.f32 %v894, %v1151
        %v1386 = vsub.f32 %v895, %v1151
        %v1387 = vsub.f32 %v896, %v1151
        %v1388 = vsub.f32 %v897, %v1157
        %v1389 = vsub.f32 %v898, %v1157
        %v1390 = vsub.f32 %v899, %v1157
        %v1391 = vsub.f32 %v900, %v1157
        %v1392 = vsub.f32 %v901, %v1163
        %v1393 = vsub.f32 %v902, %v1163
        %v1394 = vsub.f32 %v903, %v1163
        %v1395 = vsub.f32 %v904, %v1163
        %v1396 = vsub.f32 %v905, %v1169
        %v1397 = vsub.f32 %v906, %v1169
        %v1398 = vsub.f32 %v907, %v1169
        %v1399 = vsub.f32 %v908, %v1169
        %v1400 = vsub.f32 %v909, %v1175
        %v1401 = vsub.f32 %v910, %v1175
        %v1402 = vsub.f32 %v911, %v1175
        %v1403 = vsub.f32 %v912, %v1175
        %v1404 = vsub.f32 %v913, %v1181
        %v1405 = vsub.f32 %v914, %v1181
        %v1406 = vsub.f32 %v915, %v1181
        %v1407 = vsub.f32 %v916, %v1181
        %v1408 = vsub.f32 %v917, %v1187
        %v1409 = vsub.f32 %v918, %v1187
        %v1410 = vsub.f32 %v919, %v1187
        %v1411 = vsub.f32 %v920, %v1187
        %v1412 = vsub.f32 %v921, %v1193
        %v1413 = vsub.f32 %v922, %v1193
        %v1414 = vsub.f32 %v923, %v1193
        %v1415 = vsub.f32 %v924, %v1193
        %v1416 = vsub.f32 %v925, %v1199
        %v1417 = vsub.f32 %v926, %v1199
        %v1418 = vsub.f32 %v927, %v1199
        %v1419 = vsub.f32 %v928, %v1199
        %v1420 = vsub.f32 %v929, %v1205
        %v1421 = vsub.f32 %v930, %v1205
        %v1422 = vsub.f32 %v931, %v1205
        %v1423 = vsub.f32 %v932, %v1205
        %v1424 = vsub.f32 %v933, %v1211
        %v1425 = vsub.f32 %v934, %v1211
        %v1426 = vsub.f32 %v935, %v1211
        %v1427 = vsub.f32 %v936, %v1211
        %v1428 = vsub.f32 %v937, %v1217
        %v1429 = vsub.f32 %v938, %v1217
        %v1430 = vsub.f32 %v939, %v1217
        %v1431 = vsub.f32 %v940, %v1217
        %v1432 = vsub.f32 %v941, %v1223
        %v1433 = vsub.f32 %v942, %v1223
        %v1434 = vsub.f32 %v943, %v1223
        %v1435 = vsub.f32 %v944, %v1223
        %v1436 = vsub.f32 %v945, %v1229
        %v1437 = vsub.f32 %v946, %v1229
        %v1438 = vsub.f32 %v947, %v1229
        %v1439 = vsub.f32 %v948, %v1229
        %v1440 = vsub.f32 %v949, %v1235
        %v1441 = vsub.f32 %v950, %v1235
        %v1442 = vsub.f32 %v951, %v1235
        %v1443 = vsub.f32 %v952, %v1235
        %v1444 = vsub.f32 %v953, %v1241
        %v1445 = vsub.f32 %v954, %v1241
        %v1446 = vsub.f32 %v955, %v1241
        %v1447 = vsub.f32 %v956, %v1241
        %v1448 = vsub.f32 %v957, %v1247
        %v1449 = vsub.f32 %v958, %v1247
        %v1450 = vsub.f32 %v959, %v1247
        %v1451 = vsub.f32 %v960, %v1247
        %v1452 = vsub.f32 %v961, %v1253
        %v1453 = vsub.f32 %v962, %v1253
        %v1454 = vsub.f32 %v963, %v1253
        %v1455 = vsub.f32 %v964, %v1253
        %v1456 = vsub.f32 %v965, %v1259
        %v1457 = vsub.f32 %v966, %v1259
        %v1458 = vsub.f32 %v967, %v1259
        %v1459 = vsub.f32 %v968, %v1259
        %v1460 = vsub.f32 %v969, %v1265
        %v1461 = vsub.f32 %v970, %v1265
        %v1462 = vsub.f32 %v971, %v1265
        %v1463 = vsub.f32 %v972, %v1265
        %v1464 = vsub.f32 %v973, %v1271
        %v1465 = vsub.f32 %v974, %v1271
        %v1466 = vsub.f32 %v975, %v1271
        %v1467 = vsub.f32 %v976, %v1271
        %v1468 = vmul.f32 %v1272, 1.442695
        %v1469 = vpow.pop %v1468
        %v1470 = vmul.f32 %v1273, 1.442695
        %v1471 = vpow.pop %v1470
        %v1472 = vmul.f32 %v1274, 1.442695
        %v1473 = vpow.pop %v1472
        %v1474 = vmul.f32 %v1275, 1.442695
        %v1475 = vpow.pop %v1474
        %v1476 = vmul.f32 %v1276, 1.442695
        %v1477 = vpow.pop %v1476
        %v1478 = vmul.f32 %v1277, 1.442695
        %v1479 = vpow.pop %v1478
        %v1480 = vmul.f32 %v1278, 1.442695
        %v1481 = vpow.pop %v1480
        %v1482 = vmul.f32 %v1279, 1.442695
        %v1483 = vpow.pop %v1482
        %v1484 = vmul.f32 %v1280, 1.442695
        %v1485 = vpow.pop %v1484
        %v1486 = vmul.f32 %v1281, 1.442695
        %v1487 = vpow.pop %v1486
        %v1488 = vmul.f32 %v1282, 1.442695
        %v1489 = vpow.pop %v1488
        %v1490 = vmul.f32 %v1283, 1.442695
        %v1491 = vpow.pop %v1490
        %v1492 = vmul.f32 %v1284, 1.442695
        %v1493 = vpow.pop %v1492
        %v1494 = vmul.f32 %v1285, 1.442695
        %v1495 = vpow.pop %v1494
        %v1496 = vmul.f32 %v1286, 1.442695
        %v1497 = vpow.pop %v1496
        %v1498 = vmul.f32 %v1287, 1.442695
        %v1499 = vpow.pop %v1498
        %v1500 = vmul.f32 %v1288, 1.442695
        %v1501 = vpow.pop %v1500
        %v1502 = vmul.f32 %v1289, 1.442695
        %v1503 = vpow.pop %v1502
        %v1504 = vmul.f32 %v1290, 1.442695
        %v1505 = vpow.pop %v1504
        %v1506 = vmul.f32 %v1291, 1.442695
        %v1507 = vpow.pop %v1506
        %v1508 = vmul.f32 %v1292, 1.442695
        %v1509 = vpow.pop %v1508
        %v1510 = vmul.f32 %v1293, 1.442695
        %v1511 = vpow.pop %v1510
        %v1512 = vmul.f32 %v1294, 1.442695
        %v1513 = vpow.pop %v1512
        %v1514 = vmul.f32 %v1295, 1.442695
        %v1515 = vpow.pop %v1514
        %v1516 = vmul.f32 %v1296, 1.442695
        %v1517 = vpow.pop %v1516
        %v1518 = vmul.f32 %v1297, 1.442695
        %v1519 = vpow.pop %v1518
        %v1520 = vmul.f32 %v1298, 1.442695
        %v1521 = vpow.pop %v1520
        %v1522 = vmul.f32 %v1299, 1.442695
        %v1523 = vpow.pop %v1522
        %v1524 = vmul.f32 %v1300, 1.442695
        %v1525 = vpow.pop %v1524
        %v1526 = vmul.f32 %v1301, 1.442695
        %v1527 = vpow.pop %v1526
        %v1528 = vmul.f32 %v1302, 1.442695
        %v1529 = vpow.pop %v1528
        %v1530 = vmul.f32 %v1303, 1.442695
        %v1531 = vpow.pop %v1530
        %v1532 = vmul.f32 %v1304, 1.442695
        %v1533 = vpow.pop %v1532
        %v1534 = vmul.f32 %v1305, 1.442695
        %v1535 = vpow.pop %v1534
        %v1536 = vmul.f32 %v1306, 1.442695
        %v1537 = vpow.pop %v1536
        %v1538 = vmul.f32 %v1307, 1.442695
        %v1539 = vpow.pop %v1538
        %v1540 = vmul.f32 %v1308, 1.442695
        %v1541 = vpow.pop %v1540
        %v1542 = vmul.f32 %v1309, 1.442695
        %v1543 = vpow.pop %v1542
        %v1544 = vmul.f32 %v1310, 1.442695
        %v1545 = vpow.pop %v1544
        %v1546 = vmul.f32 %v1311, 1.442695
        %v1547 = vpow.pop %v1546
        %v1548 = vmul.f32 %v1312, 1.442695
        %v1549 = vpow.pop %v1548
        %v1550 = vmul.f32 %v1313, 1.442695
        %v1551 = vpow.pop %v1550
        %v1552 = vmul.f32 %v1314, 1.442695
        %v1553 = vpow.pop %v1552
        %v1554 = vmul.f32 %v1315, 1.442695
        %v1555 = vpow.pop %v1554
        %v1556 = vmul.f32 %v1316, 1.442695
        %v1557 = vpow.pop %v1556
        %v1558 = vmul.f32 %v1317, 1.442695
        %v1559 = vpow.pop %v1558
        %v1560 = vmul.f32 %v1318, 1.442695
        %v1561 = vpow.pop %v1560
        %v1562 = vmul.f32 %v1319, 1.442695
        %v1563 = vpow.pop %v1562
        %v1564 = vmul.f32 %v1320, 1.442695
        %v1565 = vpow.pop %v1564
        %v1566 = vmul.f32 %v1321, 1.442695
        %v1567 = vpow.pop %v1566
        %v1568 = vmul.f32 %v1322, 1.442695
        %v1569 = vpow.pop %v1568
        %v1570 = vmul.f32 %v1323, 1.442695
        %v1571 = vpow.pop %v1570
        %v1572 = vmul.f32 %v1324, 1.442695
        %v1573 = vpow.pop %v1572
        %v1574 = vmul.f32 %v1325, 1.442695
        %v1575 = vpow.pop %v1574
        %v1576 = vmul.f32 %v1326, 1.442695
        %v1577 = vpow.pop %v1576
        %v1578 = vmul.f32 %v1327, 1.442695
        %v1579 = vpow.pop %v1578
        %v1580 = vmul.f32 %v1328, 1.442695
        %v1581 = vpow.pop %v1580
        %v1582 = vmul.f32 %v1329, 1.442695
        %v1583 = vpow.pop %v1582
        %v1584 = vmul.f32 %v1330, 1.442695
        %v1585 = vpow.pop %v1584
        %v1586 = vmul.f32 %v1331, 1.442695
        %v1587 = vpow.pop %v1586
        %v1588 = vmul.f32 %v1332, 1.442695
        %v1589 = vpow.pop %v1588
        %v1590 = vmul.f32 %v1333, 1.442695
        %v1591 = vpow.pop %v1590
        %v1592 = vmul.f32 %v1334, 1.442695
        %v1593 = vpow.pop %v1592
        %v1594 = vmul.f32 %v1335, 1.442695
        %v1595 = vpow.pop %v1594
        %v1596 = vmul.f32 %v1336, 1.442695
        %v1597 = vpow.pop %v1596
        %v1598 = vmul.f32 %v1337, 1.442695
        %v1599 = vpow.pop %v1598
        %v1600 = vmul.f32 %v1338, 1.442695
        %v1601 = vpow.pop %v1600
        %v1602 = vmul.f32 %v1339, 1.442695
        %v1603 = vpow.pop %v1602
        %v1604 = vmul.f32 %v1340, 1.442695
        %v1605 = vpow.pop %v1604
        %v1606 = vmul.f32 %v1341, 1.442695
        %v1607 = vpow.pop %v1606
        %v1608 = vmul.f32 %v1342, 1.442695
        %v1609 = vpow.pop %v1608
        %v1610 = vmul.f32 %v1343, 1.442695
        %v1611 = vpow.pop %v1610
        %v1612 = vmul.f32 %v1344, 1.442695
        %v1613 = vpow.pop %v1612
        %v1614 = vmul.f32 %v1345, 1.442695
        %v1615 = vpow.pop %v1614
        %v1616 = vmul.f32 %v1346, 1.442695
        %v1617 = vpow.pop %v1616
        %v1618 = vmul.f32 %v1347, 1.442695
        %v1619 = vpow.pop %v1618
        %v1620 = vmul.f32 %v1348, 1.442695
        %v1621 = vpow.pop %v1620
        %v1622 = vmul.f32 %v1349, 1.442695
        %v1623 = vpow.pop %v1622
        %v1624 = vmul.f32 %v1350, 1.442695
        %v1625 = vpow.pop %v1624
        %v1626 = vmul.f32 %v1351, 1.442695
        %v1627 = vpow.pop %v1626
        %v1628 = vmul.f32 %v1352, 1.442695
        %v1629 = vpow.pop %v1628
        %v1630 = vmul.f32 %v1353, 1.442695
        %v1631 = vpow.pop %v1630
        %v1632 = vmul.f32 %v1354, 1.442695
        %v1633 = vpow.pop %v1632
        %v1634 = vmul.f32 %v1355, 1.442695
        %v1635 = vpow.pop %v1634
        %v1636 = vmul.f32 %v1356, 1.442695
        %v1637 = vpow.pop %v1636
        %v1638 = vmul.f32 %v1357, 1.442695
        %v1639 = vpow.pop %v1638
        %v1640 = vmul.f32 %v1358, 1.442695
        %v1641 = vpow.pop %v1640
        %v1642 = vmul.f32 %v1359, 1.442695
        %v1643 = vpow.pop %v1642
        %v1644 = vmul.f32 %v1360, 1.442695
        %v1645 = vpow.pop %v1644
        %v1646 = vmul.f32 %v1361, 1.442695
        %v1647 = vpow.pop %v1646
        %v1648 = vmul.f32 %v1362, 1.442695
        %v1649 = vpow.pop %v1648
        %v1650 = vmul.f32 %v1363, 1.442695
        %v1651 = vpow.pop %v1650
        %v1652 = vmul.f32 %v1364, 1.442695
        %v1653 = vpow.pop %v1652
        %v1654 = vmul.f32 %v1365, 1.442695
        %v1655 = vpow.pop %v1654
        %v1656 = vmul.f32 %v1366, 1.442695
        %v1657 = vpow.pop %v1656
        %v1658 = vmul.f32 %v1367, 1.442695
        %v1659 = vpow.pop %v1658
        %v1660 = vmul.f32 %v1368, 1.442695
        %v1661 = vpow.pop %v1660
        %v1662 = vmul.f32 %v1369, 1.442695
        %v1663 = vpow.pop %v1662
        %v1664 = vmul.f32 %v1370, 1.442695
        %v1665 = vpow.pop %v1664
        %v1666 = vmul.f32 %v1371, 1.442695
        %v1667 = vpow.pop %v1666
        %v1668 = vmul.f32 %v1372, 1.442695
        %v1669 = vpow.pop %v1668
        %v1670 = vmul.f32 %v1373, 1.442695
        %v1671 = vpow.pop %v1670
        %v1672 = vmul.f32 %v1374, 1.442695
        %v1673 = vpow.pop %v1672
        %v1674 = vmul.f32 %v1375, 1.442695
        %v1675 = vpow.pop %v1674
        %v1676 = vmul.f32 %v1376, 1.442695
        %v1677 = vpow.pop %v1676
        %v1678 = vmul.f32 %v1377, 1.442695
        %v1679 = vpow.pop %v1678
        %v1680 = vmul.f32 %v1378, 1.442695
        %v1681 = vpow.pop %v1680
        %v1682 = vmul.f32 %v1379, 1.442695
        %v1683 = vpow.pop %v1682
        %v1684 = vmul.f32 %v1380, 1.442695
        %v1685 = vpow.pop %v1684
        %v1686 = vmul.f32 %v1381, 1.442695
        %v1687 = vpow.pop %v1686
        %v1688 = vmul.f32 %v1382, 1.442695
        %v1689 = vpow.pop %v1688
        %v1690 = vmul.f32 %v1383, 1.442695
        %v1691 = vpow.pop %v1690
        %v1692 = vmul.f32 %v1384, 1.442695
        %v1693 = vpow.pop %v1692
        %v1694 = vmul.f32 %v1385, 1.442695
        %v1695 = vpow.pop %v1694
        %v1696 = vmul.f32 %v1386, 1.442695
        %v1697 = vpow.pop %v1696
        %v1698 = vmul.f32 %v1387, 1.442695
        %v1699 = vpow.pop %v1698
        %v1700 = vmul.f32 %v1388, 1.442695
        %v1701 = vpow.pop %v1700
        %v1702 = vmul.f32 %v1389, 1.442695
        %v1703 = vpow.pop %v1702
        %v1704 = vmul.f32 %v1390, 1.442695
        %v1705 = vpow.pop %v1704
        %v1706 = vmul.f32 %v1391, 1.442695
        %v1707 = vpow.pop %v1706
        %v1708 = vmul.f32 %v1392, 1.442695
        %v1709 = vpow.pop %v1708
        %v1710 = vmul.f32 %v1393, 1.442695
        %v1711 = vpow.pop %v1710
        %v1712 = vmul.f32 %v1394, 1.442695
        %v1713 = vpow.pop %v1712
        %v1714 = vmul.f32 %v1395, 1.442695
        %v1715 = vpow.pop %v1714
        %v1716 = vmul.f32 %v1396, 1.442695
        %v1717 = vpow.pop %v1716
        %v1718 = vmul.f32 %v1397, 1.442695
        %v1719 = vpow.pop %v1718
        %v1720 = vmul.f32 %v1398, 1.442695
        %v1721 = vpow.pop %v1720
        %v1722 = vmul.f32 %v1399, 1.442695
        %v1723 = vpow.pop %v1722
        %v1724 = vmul.f32 %v1400, 1.442695
        %v1725 = vpow.pop %v1724
        %v1726 = vmul.f32 %v1401, 1.442695
        %v1727 = vpow.pop %v1726
        %v1728 = vmul.f32 %v1402, 1.442695
        %v1729 = vpow.pop %v1728
        %v1730 = vmul.f32 %v1403, 1.442695
        %v1731 = vpow.pop %v1730
        %v1732 = vmul.f32 %v1404, 1.442695
        %v1733 = vpow.pop %v1732
        %v1734 = vmul.f32 %v1405, 1.442695
        %v1735 = vpow.pop %v1734
        %v1736 = vmul.f32 %v1406, 1.442695
        %v1737 = vpow.pop %v1736
        %v1738 = vmul.f32 %v1407, 1.442695
        %v1739 = vpow.pop %v1738
        %v1740 = vmul.f32 %v1408, 1.442695
        %v1741 = vpow.pop %v1740
        %v1742 = vmul.f32 %v1409, 1.442695
        %v1743 = vpow.pop %v1742
        %v1744 = vmul.f32 %v1410, 1.442695
        %v1745 = vpow.pop %v1744
        %v1746 = vmul.f32 %v1411, 1.442695
        %v1747 = vpow.pop %v1746
        %v1748 = vmul.f32 %v1412, 1.442695
        %v1749 = vpow.pop %v1748
        %v1750 = vmul.f32 %v1413, 1.442695
        %v1751 = vpow.pop %v1750
        %v1752 = vmul.f32 %v1414, 1.442695
        %v1753 = vpow.pop %v1752
        %v1754 = vmul.f32 %v1415, 1.442695
        %v1755 = vpow.pop %v1754
        %v1756 = vmul.f32 %v1416, 1.442695
        %v1757 = vpow.pop %v1756
        %v1758 = vmul.f32 %v1417, 1.442695
        %v1759 = vpow.pop %v1758
        %v1760 = vmul.f32 %v1418, 1.442695
        %v1761 = vpow.pop %v1760
        %v1762 = vmul.f32 %v1419, 1.442695
        %v1763 = vpow.pop %v1762
        %v1764 = vmul.f32 %v1420, 1.442695
        %v1765 = vpow.pop %v1764
        %v1766 = vmul.f32 %v1421, 1.442695
        %v1767 = vpow.pop %v1766
        %v1768 = vmul.f32 %v1422, 1.442695
        %v1769 = vpow.pop %v1768
        %v1770 = vmul.f32 %v1423, 1.442695
        %v1771 = vpow.pop %v1770
        %v1772 = vmul.f32 %v1424, 1.442695
        %v1773 = vpow.pop %v1772
        %v1774 = vmul.f32 %v1425, 1.442695
        %v1775 = vpow.pop %v1774
        %v1776 = vmul.f32 %v1426, 1.442695
        %v1777 = vpow.pop %v1776
        %v1778 = vmul.f32 %v1427, 1.442695
        %v1779 = vpow.pop %v1778
        %v1780 = vmul.f32 %v1428, 1.442695
        %v1781 = vpow.pop %v1780
        %v1782 = vmul.f32 %v1429, 1.442695
        %v1783 = vpow.pop %v1782
        %v1784 = vmul.f32 %v1430, 1.442695
        %v1785 = vpow.pop %v1784
        %v1786 = vmul.f32 %v1431, 1.442695
        %v1787 = vpow.pop %v1786
        %v1788 = vmul.f32 %v1432, 1.442695
        %v1789 = vpow.pop %v1788
        %v1790 = vmul.f32 %v1433, 1.442695
        %v1791 = vpow.pop %v1790
        %v1792 = vmul.f32 %v1434, 1.442695
        %v1793 = vpow.pop %v1792
        %v1794 = vmul.f32 %v1435, 1.442695
        %v1795 = vpow.pop %v1794
        %v1796 = vmul.f32 %v1436, 1.442695
        %v1797 = vpow.pop %v1796
        %v1798 = vmul.f32 %v1437, 1.442695
        %v1799 = vpow.pop %v1798
        %v1800 = vmul.f32 %v1438, 1.442695
        %v1801 = vpow.pop %v1800
        %v1802 = vmul.f32 %v1439, 1.442695
        %v1803 = vpow.pop %v1802
        %v1804 = vmul.f32 %v1440, 1.442695
        %v1805 = vpow.pop %v1804
        %v1806 = vmul.f32 %v1441, 1.442695
        %v1807 = vpow.pop %v1806
        %v1808 = vmul.f32 %v1442, 1.442695
        %v1809 = vpow.pop %v1808
        %v1810 = vmul.f32 %v1443, 1.442695
        %v1811 = vpow.pop %v1810
        %v1812 = vmul.f32 %v1444, 1.442695
        %v1813 = vpow.pop %v1812
        %v1814 = vmul.f32 %v1445, 1.442695
        %v1815 = vpow.pop %v1814
        %v1816 = vmul.f32 %v1446, 1.442695
        %v1817 = vpow.pop %v1816
        %v1818 = vmul.f32 %v1447, 1.442695
        %v1819 = vpow.pop %v1818
        %v1820 = vmul.f32 %v1448, 1.442695
        %v1821 = vpow.pop %v1820
        %v1822 = vmul.f32 %v1449, 1.442695
        %v1823 = vpow.pop %v1822
        %v1824 = vmul.f32 %v1450, 1.442695
        %v1825 = vpow.pop %v1824
        %v1826 = vmul.f32 %v1451, 1.442695
        %v1827 = vpow.pop %v1826
        %v1828 = vmul.f32 %v1452, 1.442695
        %v1829 = vpow.pop %v1828
        %v1830 = vmul.f32 %v1453, 1.442695
        %v1831 = vpow.pop %v1830
        %v1832 = vmul.f32 %v1454, 1.442695
        %v1833 = vpow.pop %v1832
        %v1834 = vmul.f32 %v1455, 1.442695
        %v1835 = vpow.pop %v1834
        %v1836 = vmul.f32 %v1456, 1.442695
        %v1837 = vpow.pop %v1836
        %v1838 = vmul.f32 %v1457, 1.442695
        %v1839 = vpow.pop %v1838
        %v1840 = vmul.f32 %v1458, 1.442695
        %v1841 = vpow.pop %v1840
        %v1842 = vmul.f32 %v1459, 1.442695
        %v1843 = vpow.pop %v1842
        %v1844 = vmul.f32 %v1460, 1.442695
        %v1845 = vpow.pop %v1844
        %v1846 = vmul.f32 %v1461, 1.442695
        %v1847 = vpow.pop %v1846
        %v1848 = vmul.f32 %v1462, 1.442695
        %v1849 = vpow.pop %v1848
        %v1850 = vmul.f32 %v1463, 1.442695
        %v1851 = vpow.pop %v1850
        %v1852 = vmul.f32 %v1464, 1.442695
        %v1853 = vpow.pop %v1852
        %v1854 = vmul.f32 %v1465, 1.442695
        %v1855 = vpow.pop %v1854
        %v1856 = vmul.f32 %v1466, 1.442695
        %v1857 = vpow.pop %v1856
        %v1858 = vmul.f32 %v1467, 1.442695
        %v1859 = vpow.pop %v1858
        %v1860 = vadd.f32 %v1469, %v1471
        %v1861 = vadd.f32 %v1860, %v1473
        %v1862 = vsel %vm979, %v1475, 0.0
        %v1863 = vadd.f32 %v1861, %v1862
        %1864 = vadd.xlane.f32.xlu0 %v1863
        %v1865 = vpop.xlane.xlu0 %1864
        %v1866 = vadd.f32 %v1477, %v1479
        %v1867 = vadd.f32 %v1866, %v1481
        %v1868 = vsel %vm979, %v1483, 0.0
        %v1869 = vadd.f32 %v1867, %v1868
        %1870 = vadd.xlane.f32.xlu0 %v1869
        %v1871 = vpop.xlane.xlu0 %1870
        %v1872 = vadd.f32 %v1485, %v1487
        %v1873 = vadd.f32 %v1872, %v1489
        %v1874 = vsel %vm979, %v1491, 0.0
        %v1875 = vadd.f32 %v1873, %v1874
        %1876 = vadd.xlane.f32.xlu0 %v1875
        %v1877 = vpop.xlane.xlu0 %1876
        %v1878 = vadd.f32 %v1493, %v1495
        %v1879 = vadd.f32 %v1878, %v1497
        %v1880 = vsel %vm979, %v1499, 0.0
        %v1881 = vadd.f32 %v1879, %v1880
        %1882 = vadd.xlane.f32.xlu0 %v1881
        %v1883 = vpop.xlane.xlu0 %1882
        %v1884 = vadd.f32 %v1501, %v1503
        %v1885 = vadd.f32 %v1884, %v1505
        %v1886 = vsel %vm979, %v1507, 0.0
        %v1887 = vadd.f32 %v1885, %v1886
        %1888 = vadd.xlane.f32.xlu0 %v1887
        %v1889 = vpop.xlane.xlu0 %1888
        %v1890 = vadd.f32 %v1509, %v1511
        %v1891 = vadd.f32 %v1890, %v1513
        %v1892 = vsel %vm979, %v1515, 0.0
        %v1893 = vadd.f32 %v1891, %v1892
        %1894 = vadd.xlane.f32.xlu0 %v1893
        %v1895 = vpop.xlane.xlu0 %1894
        %v1896 = vadd.f32 %v1517, %v1519
        %v1897 = vadd.f32 %v1896, %v1521
        %v1898 = vsel %vm979, %v1523, 0.0
        %v1899 = vadd.f32 %v1897, %v1898
        %1900 = vadd.xlane.f32.xlu0 %v1899
        %v1901 = vpop.xlane.xlu0 %1900
        %v1902 = vadd.f32 %v1525, %v1527
        %v1903 = vadd.f32 %v1902, %v1529
        %v1904 = vsel %vm979, %v1531, 0.0
        %v1905 = vadd.f32 %v1903, %v1904
        %1906 = vadd.xlane.f32.xlu0 %v1905
        %v1907 = vpop.xlane.xlu0 %1906
        %v1908 = vadd.f32 %v1533, %v1535
        %v1909 = vadd.f32 %v1908, %v1537
        %v1910 = vsel %vm979, %v1539, 0.0
        %v1911 = vadd.f32 %v1909, %v1910
        %1912 = vadd.xlane.f32.xlu0 %v1911
        %v1913 = vpop.xlane.xlu0 %1912
        %v1914 = vadd.f32 %v1541, %v1543
        %v1915 = vadd.f32 %v1914, %v1545
        %v1916 = vsel %vm979, %v1547, 0.0
        %v1917 = vadd.f32 %v1915, %v1916
        %1918 = vadd.xlane.f32.xlu0 %v1917
        %v1919 = vpop.xlane.xlu0 %1918
        %v1920 = vadd.f32 %v1549, %v1551
        %v1921 = vadd.f32 %v1920, %v1553
        %v1922 = vsel %vm979, %v1555, 0.0
        %v1923 = vadd.f32 %v1921, %v1922
        %1924 = vadd.xlane.f32.xlu0 %v1923
        %v1925 = vpop.xlane.xlu0 %1924
        %v1926 = vadd.f32 %v1557, %v1559
        %v1927 = vadd.f32 %v1926, %v1561
        %v1928 = vsel %vm979, %v1563, 0.0
        %v1929 = vadd.f32 %v1927, %v1928
        %1930 = vadd.xlane.f32.xlu0 %v1929
        %v1931 = vpop.xlane.xlu0 %1930
        %v1932 = vadd.f32 %v1565, %v1567
        %v1933 = vadd.f32 %v1932, %v1569
        %v1934 = vsel %vm979, %v1571, 0.0
        %v1935 = vadd.f32 %v1933, %v1934
        %1936 = vadd.xlane.f32.xlu0 %v1935
        %v1937 = vpop.xlane.xlu0 %1936
        %v1938 = vadd.f32 %v1573, %v1575
        %v1939 = vadd.f32 %v1938, %v1577
        %v1940 = vsel %vm979, %v1579, 0.0
        %v1941 = vadd.f32 %v1939, %v1940
        %1942 = vadd.xlane.f32.xlu0 %v1941
        %v1943 = vpop.xlane.xlu0 %1942
        %v1944 = vadd.f32 %v1581, %v1583
        %v1945 = vadd.f32 %v1944, %v1585
        %v1946 = vsel %vm979, %v1587, 0.0
        %v1947 = vadd.f32 %v1945, %v1946
        %1948 = vadd.xlane.f32.xlu0 %v1947
        %v1949 = vpop.xlane.xlu0 %1948
        %v1950 = vadd.f32 %v1589, %v1591
        %v1951 = vadd.f32 %v1950, %v1593
        %v1952 = vsel %vm979, %v1595, 0.0
        %v1953 = vadd.f32 %v1951, %v1952
        %1954 = vadd.xlane.f32.xlu0 %v1953
        %v1955 = vpop.xlane.xlu0 %1954
        %v1956 = vadd.f32 %v1597, %v1599
        %v1957 = vadd.f32 %v1956, %v1601
        %v1958 = vsel %vm979, %v1603, 0.0
        %v1959 = vadd.f32 %v1957, %v1958
        %1960 = vadd.xlane.f32.xlu0 %v1959
        %v1961 = vpop.xlane.xlu0 %1960
        %v1962 = vadd.f32 %v1605, %v1607
        %v1963 = vadd.f32 %v1962, %v1609
        %v1964 = vsel %vm979, %v1611, 0.0
        %v1965 = vadd.f32 %v1963, %v1964
        %1966 = vadd.xlane.f32.xlu0 %v1965
        %v1967 = vpop.xlane.xlu0 %1966
        %v1968 = vadd.f32 %v1613, %v1615
        %v1969 = vadd.f32 %v1968, %v1617
        %v1970 = vsel %vm979, %v1619, 0.0
        %v1971 = vadd.f32 %v1969, %v1970
        %1972 = vadd.xlane.f32.xlu0 %v1971
        %v1973 = vpop.xlane.xlu0 %1972
        %v1974 = vadd.f32 %v1621, %v1623
        %v1975 = vadd.f32 %v1974, %v1625
        %v1976 = vsel %vm979, %v1627, 0.0
        %v1977 = vadd.f32 %v1975, %v1976
        %1978 = vadd.xlane.f32.xlu0 %v1977
        %v1979 = vpop.xlane.xlu0 %1978
        %v1980 = vadd.f32 %v1629, %v1631
        %v1981 = vadd.f32 %v1980, %v1633
        %v1982 = vsel %vm979, %v1635, 0.0
        %v1983 = vadd.f32 %v1981, %v1982
        %1984 = vadd.xlane.f32.xlu0 %v1983
        %v1985 = vpop.xlane.xlu0 %1984
        %v1986 = vadd.f32 %v1637, %v1639
        %v1987 = vadd.f32 %v1986, %v1641
        %v1988 = vsel %vm979, %v1643, 0.0
        %v1989 = vadd.f32 %v1987, %v1988
        %1990 = vadd.xlane.f32.xlu0 %v1989
        %v1991 = vpop.xlane.xlu0 %1990
        %v1992 = vadd.f32 %v1645, %v1647
        %v1993 = vadd.f32 %v1992, %v1649
        %v1994 = vsel %vm979, %v1651, 0.0
        %v1995 = vadd.f32 %v1993, %v1994
        %1996 = vadd.xlane.f32.xlu0 %v1995
        %v1997 = vpop.xlane.xlu0 %1996
        %v1998 = vadd.f32 %v1653, %v1655
        %v1999 = vadd.f32 %v1998, %v1657
        %v2000 = vsel %vm979, %v1659, 0.0
        %v2001 = vadd.f32 %v1999, %v2000
        %2002 = vadd.xlane.f32.xlu0 %v2001
        %v2003 = vpop.xlane.xlu0 %2002
        %v2004 = vadd.f32 %v1661, %v1663
        %v2005 = vadd.f32 %v2004, %v1665
        %v2006 = vsel %vm979, %v1667, 0.0
        %v2007 = vadd.f32 %v2005, %v2006
        %2008 = vadd.xlane.f32.xlu0 %v2007
        %v2009 = vpop.xlane.xlu0 %2008
        %v2010 = vadd.f32 %v1669, %v1671
        %v2011 = vadd.f32 %v2010, %v1673
        %v2012 = vsel %vm979, %v1675, 0.0
        %v2013 = vadd.f32 %v2011, %v2012
        %2014 = vadd.xlane.f32.xlu0 %v2013
        %v2015 = vpop.xlane.xlu0 %2014
        %v2016 = vadd.f32 %v1677, %v1679
        %v2017 = vadd.f32 %v2016, %v1681
        %v2018 = vsel %vm979, %v1683, 0.0
        %v2019 = vadd.f32 %v2017, %v2018
        %2020 = vadd.xlane.f32.xlu0 %v2019
        %v2021 = vpop.xlane.xlu0 %2020
        %v2022 = vadd.f32 %v1685, %v1687
        %v2023 = vadd.f32 %v2022, %v1689
        %v2024 = vsel %vm979, %v1691, 0.0
        %v2025 = vadd.f32 %v2023, %v2024
        %2026 = vadd.xlane.f32.xlu0 %v2025
        %v2027 = vpop.xlane.xlu0 %2026
        %v2028 = vadd.f32 %v1693, %v1695
        %v2029 = vadd.f32 %v2028, %v1697
        %v2030 = vsel %vm979, %v1699, 0.0
        %v2031 = vadd.f32 %v2029, %v2030
        %2032 = vadd.xlane.f32.xlu0 %v2031
        %v2033 = vpop.xlane.xlu0 %2032
        %v2034 = vadd.f32 %v1701, %v1703
        %v2035 = vadd.f32 %v2034, %v1705
        %v2036 = vsel %vm979, %v1707, 0.0
        %v2037 = vadd.f32 %v2035, %v2036
        %2038 = vadd.xlane.f32.xlu0 %v2037
        %v2039 = vpop.xlane.xlu0 %2038
        %v2040 = vadd.f32 %v1709, %v1711
        %v2041 = vadd.f32 %v2040, %v1713
        %v2042 = vsel %vm979, %v1715, 0.0
        %v2043 = vadd.f32 %v2041, %v2042
        %2044 = vadd.xlane.f32.xlu0 %v2043
        %v2045 = vpop.xlane.xlu0 %2044
        %v2046 = vadd.f32 %v1717, %v1719
        %v2047 = vadd.f32 %v2046, %v1721
        %v2048 = vsel %vm979, %v1723, 0.0
        %v2049 = vadd.f32 %v2047, %v2048
        %2050 = vadd.xlane.f32.xlu0 %v2049
        %v2051 = vpop.xlane.xlu0 %2050
        %v2052 = vadd.f32 %v1725, %v1727
        %v2053 = vadd.f32 %v2052, %v1729
        %v2054 = vsel %vm979, %v1731, 0.0
        %v2055 = vadd.f32 %v2053, %v2054
        %2056 = vadd.xlane.f32.xlu0 %v2055
        %v2057 = vpop.xlane.xlu0 %2056
        %v2058 = vadd.f32 %v1733, %v1735
        %v2059 = vadd.f32 %v2058, %v1737
        %v2060 = vsel %vm979, %v1739, 0.0
        %v2061 = vadd.f32 %v2059, %v2060
        %2062 = vadd.xlane.f32.xlu0 %v2061
        %v2063 = vpop.xlane.xlu0 %2062
        %v2064 = vadd.f32 %v1741, %v1743
        %v2065 = vadd.f32 %v2064, %v1745
        %v2066 = vsel %vm979, %v1747, 0.0
        %v2067 = vadd.f32 %v2065, %v2066
        %2068 = vadd.xlane.f32.xlu0 %v2067
        %v2069 = vpop.xlane.xlu0 %2068
        %v2070 = vadd.f32 %v1749, %v1751
        %v2071 = vadd.f32 %v2070, %v1753
        %v2072 = vsel %vm979, %v1755, 0.0
        %v2073 = vadd.f32 %v2071, %v2072
        %2074 = vadd.xlane.f32.xlu0 %v2073
        %v2075 = vpop.xlane.xlu0 %2074
        %v2076 = vadd.f32 %v1757, %v1759
        %v2077 = vadd.f32 %v2076, %v1761
        %v2078 = vsel %vm979, %v1763, 0.0
        %v2079 = vadd.f32 %v2077, %v2078
        %2080 = vadd.xlane.f32.xlu0 %v2079
        %v2081 = vpop.xlane.xlu0 %2080
        %v2082 = vadd.f32 %v1765, %v1767
        %v2083 = vadd.f32 %v2082, %v1769
        %v2084 = vsel %vm979, %v1771, 0.0
        %v2085 = vadd.f32 %v2083, %v2084
        %2086 = vadd.xlane.f32.xlu0 %v2085
        %v2087 = vpop.xlane.xlu0 %2086
        %v2088 = vadd.f32 %v1773, %v1775
        %v2089 = vadd.f32 %v2088, %v1777
        %v2090 = vsel %vm979, %v1779, 0.0
        %v2091 = vadd.f32 %v2089, %v2090
        %2092 = vadd.xlane.f32.xlu0 %v2091
        %v2093 = vpop.xlane.xlu0 %2092
        %v2094 = vadd.f32 %v1781, %v1783
        %v2095 = vadd.f32 %v2094, %v1785
        %v2096 = vsel %vm979, %v1787, 0.0
        %v2097 = vadd.f32 %v2095, %v2096
        %2098 = vadd.xlane.f32.xlu0 %v2097
        %v2099 = vpop.xlane.xlu0 %2098
        %v2100 = vadd.f32 %v1789, %v1791
        %v2101 = vadd.f32 %v2100, %v1793
        %v2102 = vsel %vm979, %v1795, 0.0
        %v2103 = vadd.f32 %v2101, %v2102
        %2104 = vadd.xlane.f32.xlu0 %v2103
        %v2105 = vpop.xlane.xlu0 %2104
        %v2106 = vadd.f32 %v1797, %v1799
        %v2107 = vadd.f32 %v2106, %v1801
        %v2108 = vsel %vm979, %v1803, 0.0
        %v2109 = vadd.f32 %v2107, %v2108
        %2110 = vadd.xlane.f32.xlu0 %v2109
        %v2111 = vpop.xlane.xlu0 %2110
        %v2112 = vadd.f32 %v1805, %v1807
        %v2113 = vadd.f32 %v2112, %v1809
        %v2114 = vsel %vm979, %v1811, 0.0
        %v2115 = vadd.f32 %v2113, %v2114
        %2116 = vadd.xlane.f32.xlu0 %v2115
        %v2117 = vpop.xlane.xlu0 %2116
        %v2118 = vadd.f32 %v1813, %v1815
        %v2119 = vadd.f32 %v2118, %v1817
        %v2120 = vsel %vm979, %v1819, 0.0
        %v2121 = vadd.f32 %v2119, %v2120
        %2122 = vadd.xlane.f32.xlu0 %v2121
        %v2123 = vpop.xlane.xlu0 %2122
        %v2124 = vadd.f32 %v1821, %v1823
        %v2125 = vadd.f32 %v2124, %v1825
        %v2126 = vsel %vm979, %v1827, 0.0
        %v2127 = vadd.f32 %v2125, %v2126
        %2128 = vadd.xlane.f32.xlu0 %v2127
        %v2129 = vpop.xlane.xlu0 %2128
        %v2130 = vadd.f32 %v1829, %v1831
        %v2131 = vadd.f32 %v2130, %v1833
        %v2132 = vsel %vm979, %v1835, 0.0
        %v2133 = vadd.f32 %v2131, %v2132
        %2134 = vadd.xlane.f32.xlu0 %v2133
        %v2135 = vpop.xlane.xlu0 %2134
        %v2136 = vadd.f32 %v1837, %v1839
        %v2137 = vadd.f32 %v2136, %v1841
        %v2138 = vsel %vm979, %v1843, 0.0
        %v2139 = vadd.f32 %v2137, %v2138
        %2140 = vadd.xlane.f32.xlu0 %v2139
        %v2141 = vpop.xlane.xlu0 %2140
        %v2142 = vadd.f32 %v1845, %v1847
        %v2143 = vadd.f32 %v2142, %v1849
        %v2144 = vsel %vm979, %v1851, 0.0
        %v2145 = vadd.f32 %v2143, %v2144
        %2146 = vadd.xlane.f32.xlu0 %v2145
        %v2147 = vpop.xlane.xlu0 %2146
        %v2148 = vadd.f32 %v1853, %v1855
        %v2149 = vadd.f32 %v2148, %v1857
        %v2150 = vsel %vm979, %v1859, 0.0
        %v2151 = vadd.f32 %v2149, %v2150
        %2152 = vadd.xlane.f32.xlu0 %v2151
        %v2153 = vpop.xlane.xlu0 %2152
        %v2154 = vrcp.pop %v1865
        %v2155 = vrcp.pop %v1871
        %v2156 = vrcp.pop %v1877
        %v2157 = vrcp.pop %v1883
        %v2158 = vrcp.pop %v1889
        %v2159 = vrcp.pop %v1895
        %v2160 = vrcp.pop %v1901
        %v2161 = vrcp.pop %v1907
        %v2162 = vrcp.pop %v1913
        %v2163 = vrcp.pop %v1919
        %v2164 = vrcp.pop %v1925
        %v2165 = vrcp.pop %v1931
        %v2166 = vrcp.pop %v1937
        %v2167 = vrcp.pop %v1943
        %v2168 = vrcp.pop %v1949
        %v2169 = vrcp.pop %v1955
        %v2170 = vrcp.pop %v1961
        %v2171 = vrcp.pop %v1967
        %v2172 = vrcp.pop %v1973
        %v2173 = vrcp.pop %v1979
        %v2174 = vrcp.pop %v1985
        %v2175 = vrcp.pop %v1991
        %v2176 = vrcp.pop %v1997
        %v2177 = vrcp.pop %v2003
        %v2178 = vrcp.pop %v2009
        %v2179 = vrcp.pop %v2015
        %v2180 = vrcp.pop %v2021
        %v2181 = vrcp.pop %v2027
        %v2182 = vrcp.pop %v2033
        %v2183 = vrcp.pop %v2039
        %v2184 = vrcp.pop %v2045
        %v2185 = vrcp.pop %v2051
        %v2186 = vrcp.pop %v2057
        %v2187 = vrcp.pop %v2063
        %v2188 = vrcp.pop %v2069
        %v2189 = vrcp.pop %v2075
        %v2190 = vrcp.pop %v2081
        %v2191 = vrcp.pop %v2087
        %v2192 = vrcp.pop %v2093
        %v2193 = vrcp.pop %v2099
        %v2194 = vrcp.pop %v2105
        %v2195 = vrcp.pop %v2111
        %v2196 = vrcp.pop %v2117
        %v2197 = vrcp.pop %v2123
        %v2198 = vrcp.pop %v2129
        %v2199 = vrcp.pop %v2135
        %v2200 = vrcp.pop %v2141
        %v2201 = vrcp.pop %v2147
        %v2202 = vrcp.pop %v2153
        %v2203 = vmul.f32 %v1469, %v2154
        %v2204 = vmul.f32 %v1471, %v2154
        %v2205 = vmul.f32 %v1473, %v2154
        %v2206 = vmul.f32 %v1475, %v2154
        %v2207 = vmul.f32 %v1477, %v2155
        %v2208 = vmul.f32 %v1479, %v2155
        %v2209 = vmul.f32 %v1481, %v2155
        %v2210 = vmul.f32 %v1483, %v2155
        %v2211 = vmul.f32 %v1485, %v2156
        %v2212 = vmul.f32 %v1487, %v2156
        %v2213 = vmul.f32 %v1489, %v2156
        %v2214 = vmul.f32 %v1491, %v2156
        %v2215 = vmul.f32 %v1493, %v2157
        %v2216 = vmul.f32 %v1495, %v2157
        %v2217 = vmul.f32 %v1497, %v2157
        %v2218 = vmul.f32 %v1499, %v2157
        %v2219 = vmul.f32 %v1501, %v2158
        %v2220 = vmul.f32 %v1503, %v2158
        %v2221 = vmul.f32 %v1505, %v2158
        %v2222 = vmul.f32 %v1507, %v2158
        %v2223 = vmul.f32 %v1509, %v2159
        %v2224 = vmul.f32 %v1511, %v2159
        %v2225 = vmul.f32 %v1513, %v2159
        %v2226 = vmul.f32 %v1515, %v2159
        %v2227 = vmul.f32 %v1517, %v2160
        %v2228 = vmul.f32 %v1519, %v2160
        %v2229 = vmul.f32 %v1521, %v2160
        %v2230 = vmul.f32 %v1523, %v2160
        %v2231 = vmul.f32 %v1525, %v2161
        %v2232 = vmul.f32 %v1527, %v2161
        %v2233 = vmul.f32 %v1529, %v2161
        %v2234 = vmul.f32 %v1531, %v2161
        %v2235 = vmul.f32 %v1533, %v2162
        %v2236 = vmul.f32 %v1535, %v2162
        %v2237 = vmul.f32 %v1537, %v2162
        %v2238 = vmul.f32 %v1539, %v2162
        %v2239 = vmul.f32 %v1541, %v2163
        %v2240 = vmul.f32 %v1543, %v2163
        %v2241 = vmul.f32 %v1545, %v2163
        %v2242 = vmul.f32 %v1547, %v2163
        %v2243 = vmul.f32 %v1549, %v2164
        %v2244 = vmul.f32 %v1551, %v2164
        %v2245 = vmul.f32 %v1553, %v2164
        %v2246 = vmul.f32 %v1555, %v2164
        %v2247 = vmul.f32 %v1557, %v2165
        %v2248 = vmul.f32 %v1559, %v2165
        %v2249 = vmul.f32 %v1561, %v2165
        %v2250 = vmul.f32 %v1563, %v2165
        %v2251 = vmul.f32 %v1565, %v2166
        %v2252 = vmul.f32 %v1567, %v2166
        %v2253 = vmul.f32 %v1569, %v2166
        %v2254 = vmul.f32 %v1571, %v2166
        %v2255 = vmul.f32 %v1573, %v2167
        %v2256 = vmul.f32 %v1575, %v2167
        %v2257 = vmul.f32 %v1577, %v2167
        %v2258 = vmul.f32 %v1579, %v2167
        %v2259 = vmul.f32 %v1581, %v2168
        %v2260 = vmul.f32 %v1583, %v2168
        %v2261 = vmul.f32 %v1585, %v2168
        %v2262 = vmul.f32 %v1587, %v2168
        %v2263 = vmul.f32 %v1589, %v2169
        %v2264 = vmul.f32 %v1591, %v2169
        %v2265 = vmul.f32 %v1593, %v2169
        %v2266 = vmul.f32 %v1595, %v2169
        %v2267 = vmul.f32 %v1597, %v2170
        %v2268 = vmul.f32 %v1599, %v2170
        %v2269 = vmul.f32 %v1601, %v2170
        %v2270 = vmul.f32 %v1603, %v2170
        %v2271 = vmul.f32 %v1605, %v2171
        %v2272 = vmul.f32 %v1607, %v2171
        %v2273 = vmul.f32 %v1609, %v2171
        %v2274 = vmul.f32 %v1611, %v2171
        %v2275 = vmul.f32 %v1613, %v2172
        %v2276 = vmul.f32 %v1615, %v2172
        %v2277 = vmul.f32 %v1617, %v2172
        %v2278 = vmul.f32 %v1619, %v2172
        %v2279 = vmul.f32 %v1621, %v2173
        %v2280 = vmul.f32 %v1623, %v2173
        %v2281 = vmul.f32 %v1625, %v2173
        %v2282 = vmul.f32 %v1627, %v2173
        %v2283 = vmul.f32 %v1629, %v2174
        %v2284 = vmul.f32 %v1631, %v2174
        %v2285 = vmul.f32 %v1633, %v2174
        %v2286 = vmul.f32 %v1635, %v2174
        %v2287 = vmul.f32 %v1637, %v2175
        %v2288 = vmul.f32 %v1639, %v2175
        %v2289 = vmul.f32 %v1641, %v2175
        %v2290 = vmul.f32 %v1643, %v2175
        %v2291 = vmul.f32 %v1645, %v2176
        %v2292 = vmul.f32 %v1647, %v2176
        %v2293 = vmul.f32 %v1649, %v2176
        %v2294 = vmul.f32 %v1651, %v2176
        %v2295 = vmul.f32 %v1653, %v2177
        %v2296 = vmul.f32 %v1655, %v2177
        %v2297 = vmul.f32 %v1657, %v2177
        %v2298 = vmul.f32 %v1659, %v2177
        %v2299 = vmul.f32 %v1661, %v2178
        %v2300 = vmul.f32 %v1663, %v2178
        %v2301 = vmul.f32 %v1665, %v2178
        %v2302 = vmul.f32 %v1667, %v2178
        %v2303 = vmul.f32 %v1669, %v2179
        %v2304 = vmul.f32 %v1671, %v2179
        %v2305 = vmul.f32 %v1673, %v2179
        %v2306 = vmul.f32 %v1675, %v2179
        %v2307 = vmul.f32 %v1677, %v2180
        %v2308 = vmul.f32 %v1679, %v2180
        %v2309 = vmul.f32 %v1681, %v2180
        %v2310 = vmul.f32 %v1683, %v2180
        %v2311 = vmul.f32 %v1685, %v2181
        %v2312 = vmul.f32 %v1687, %v2181
        %v2313 = vmul.f32 %v1689, %v2181
        %v2314 = vmul.f32 %v1691, %v2181
        %v2315 = vmul.f32 %v1693, %v2182
        %v2316 = vmul.f32 %v1695, %v2182
        %v2317 = vmul.f32 %v1697, %v2182
        %v2318 = vmul.f32 %v1699, %v2182
        %v2319 = vmul.f32 %v1701, %v2183
        %v2320 = vmul.f32 %v1703, %v2183
        %v2321 = vmul.f32 %v1705, %v2183
        %v2322 = vmul.f32 %v1707, %v2183
        %v2323 = vmul.f32 %v1709, %v2184
        %v2324 = vmul.f32 %v1711, %v2184
        %v2325 = vmul.f32 %v1713, %v2184
        %v2326 = vmul.f32 %v1715, %v2184
        %v2327 = vmul.f32 %v1717, %v2185
        %v2328 = vmul.f32 %v1719, %v2185
        %v2329 = vmul.f32 %v1721, %v2185
        %v2330 = vmul.f32 %v1723, %v2185
        %v2331 = vmul.f32 %v1725, %v2186
        %v2332 = vmul.f32 %v1727, %v2186
        %v2333 = vmul.f32 %v1729, %v2186
        %v2334 = vmul.f32 %v1731, %v2186
        %v2335 = vmul.f32 %v1733, %v2187
        %v2336 = vmul.f32 %v1735, %v2187
        %v2337 = vmul.f32 %v1737, %v2187
        %v2338 = vmul.f32 %v1739, %v2187
        %v2339 = vmul.f32 %v1741, %v2188
        %v2340 = vmul.f32 %v1743, %v2188
        %v2341 = vmul.f32 %v1745, %v2188
        %v2342 = vmul.f32 %v1747, %v2188
        %v2343 = vmul.f32 %v1749, %v2189
        %v2344 = vmul.f32 %v1751, %v2189
        %v2345 = vmul.f32 %v1753, %v2189
        %v2346 = vmul.f32 %v1755, %v2189
        %v2347 = vmul.f32 %v1757, %v2190
        %v2348 = vmul.f32 %v1759, %v2190
        %v2349 = vmul.f32 %v1761, %v2190
        %v2350 = vmul.f32 %v1763, %v2190
        %v2351 = vmul.f32 %v1765, %v2191
        %v2352 = vmul.f32 %v1767, %v2191
        %v2353 = vmul.f32 %v1769, %v2191
        %v2354 = vmul.f32 %v1771, %v2191
        %v2355 = vmul.f32 %v1773, %v2192
        %v2356 = vmul.f32 %v1775, %v2192
        %v2357 = vmul.f32 %v1777, %v2192
        %v2358 = vmul.f32 %v1779, %v2192
        %v2359 = vmul.f32 %v1781, %v2193
        %v2360 = vmul.f32 %v1783, %v2193
        %v2361 = vmul.f32 %v1785, %v2193
        %v2362 = vmul.f32 %v1787, %v2193
        %v2363 = vmul.f32 %v1789, %v2194
        %v2364 = vmul.f32 %v1791, %v2194
        %v2365 = vmul.f32 %v1793, %v2194
        %v2366 = vmul.f32 %v1795, %v2194
        %v2367 = vmul.f32 %v1797, %v2195
        %v2368 = vmul.f32 %v1799, %v2195
        %v2369 = vmul.f32 %v1801, %v2195
        %v2370 = vmul.f32 %v1803, %v2195
        %v2371 = vmul.f32 %v1805, %v2196
        %v2372 = vmul.f32 %v1807, %v2196
        %v2373 = vmul.f32 %v1809, %v2196
        %v2374 = vmul.f32 %v1811, %v2196
        %v2375 = vmul.f32 %v1813, %v2197
        %v2376 = vmul.f32 %v1815, %v2197
        %v2377 = vmul.f32 %v1817, %v2197
        %v2378 = vmul.f32 %v1819, %v2197
        %v2379 = vmul.f32 %v1821, %v2198
        %v2380 = vmul.f32 %v1823, %v2198
        %v2381 = vmul.f32 %v1825, %v2198
        %v2382 = vmul.f32 %v1827, %v2198
        %v2383 = vmul.f32 %v1829, %v2199
        %v2384 = vmul.f32 %v1831, %v2199
        %v2385 = vmul.f32 %v1833, %v2199
        %v2386 = vmul.f32 %v1835, %v2199
        %v2387 = vmul.f32 %v1837, %v2200
        %v2388 = vmul.f32 %v1839, %v2200
        %v2389 = vmul.f32 %v1841, %v2200
        %v2390 = vmul.f32 %v1843, %v2200
        %v2391 = vmul.f32 %v1845, %v2201
        %v2392 = vmul.f32 %v1847, %v2201
        %v2393 = vmul.f32 %v1849, %v2201
        %v2394 = vmul.f32 %v1851, %v2201
        %v2395 = vmul.f32 %v1853, %v2202
        %v2396 = vmul.f32 %v1855, %v2202
        %v2397 = vmul.f32 %v1857, %v2202
        %v2398 = vmul.f32 %v1859, %v2202
        %v2399 = vsel %vm979, %v776, 0
        %v2402 = vsel %vm979, %v2206, 0
        %v2405 = vsel %vm979, %v2210, 0
        %v2408 = vsel %vm979, %v2214, 0
        %v2411 = vsel %vm979, %v2218, 0
        %v2414 = vsel %vm979, %v2222, 0
        %v2417 = vsel %vm979, %v2226, 0
        %v2420 = vsel %vm979, %v2230, 0
        %v2423 = vsel %vm979, %v2234, 0
        %v2426 = vsel %vm979, %v2238, 0
        %v2429 = vsel %vm979, %v2242, 0
        %v2432 = vsel %vm979, %v2246, 0
        %v2435 = vsel %vm979, %v2250, 0
        %v2438 = vsel %vm979, %v2254, 0
        %v2441 = vsel %vm979, %v2258, 0
        %v2444 = vsel %vm979, %v2262, 0
        %v2447 = vsel %vm979, %v2266, 0
        %v2450 = vsel %vm979, %v2270, 0
        %v2453 = vsel %vm979, %v2274, 0
        %v2456 = vsel %vm979, %v2278, 0
        %v2459 = vsel %vm979, %v2282, 0
        %v2462 = vsel %vm979, %v2286, 0
        %v2465 = vsel %vm979, %v2290, 0
        %v2468 = vsel %vm979, %v2294, 0
        %v2471 = vsel %vm979, %v2298, 0
        %v2474 = vsel %vm979, %v2302, 0
        %v2477 = vsel %vm979, %v2306, 0
        %v2480 = vsel %vm979, %v2310, 0
        %v2483 = vsel %vm979, %v2314, 0
        %v2486 = vsel %vm979, %v2318, 0
        %v2489 = vsel %vm979, %v2322, 0
        %v2492 = vsel %vm979, %v2326, 0
        %v2495 = vsel %vm979, %v2330, 0
        %v2498 = vsel %vm979, %v2334, 0
        %v2501 = vsel %vm979, %v2338, 0
        %v2504 = vsel %vm979, %v2342, 0
        %v2507 = vsel %vm979, %v2346, 0
        %v2510 = vsel %vm979, %v2350, 0
        %v2513 = vsel %vm979, %v2354, 0
        %v2516 = vsel %vm979, %v2358, 0
        %v2519 = vsel %vm979, %v2362, 0
        %v2522 = vsel %vm979, %v2366, 0
        %v2525 = vsel %vm979, %v2370, 0
        %v2528 = vsel %vm979, %v2374, 0
        %v2531 = vsel %vm979, %v2378, 0
        %v2534 = vsel %vm979, %v2382, 0
        %v2537 = vsel %vm979, %v2386, 0
        %v2540 = vsel %vm979, %v2390, 0
        %v2543 = vsel %vm979, %v2394, 0
        %v2546 = vsel %vm979, %v2398, 0
        %2548 = vmatpush.xpose.msra.mxu0 %v2263
        %2549 = vmatpush.xpose.msra.mxu0 %v2259
        %2550 = vmatpush.xpose.msra.mxu0 %v2255
        %2551 = vmatpush.xpose.msra.mxu0 %v2251
        %2552 = vmatpush.xpose.msra.mxu0 %v2247
        %2553 = vmatpush.xpose.msra.mxu0 %v2243
        %2554 = vmatpush.xpose.msra.mxu0 %v2239
        %2555 = vmatpush.xpose.msra.mxu0 %v2235
        %2556 = vmatpush.xpose.msra.mxu0 %v2231
        %2557 = vmatpush.xpose.msra.mxu0 %v2227
        %2558 = vmatpush.xpose.msra.mxu0 %v2223
        %2559 = vmatpush.xpose.msra.mxu0 %v2219
        %2560 = vmatpush.xpose.msra.mxu0 %v2215
        %2561 = vmatpush.xpose.msra.mxu0 %v2211
        %2562 = vmatpush.xpose.msra.mxu0 %v2207
        %2563 = vmatpush.xpose.msra.mxu0 %v2203
        %2564 = vmatmul.f32.gmra.mxu0 %v773
        %v2565 = vpop.f32.mrf.mxu0
        %v2566 = vadd.f32 0.0, %v2565
        %2567 = vdwg.mxu0
        %2568 = vmatpush.xpose.msra.mxu0 %v2264
        %2569 = vmatpush.xpose.msra.mxu0 %v2260
        %2570 = vmatpush.xpose.msra.mxu0 %v2256
        %2571 = vmatpush.xpose.msra.mxu0 %v2252
        %2572 = vmatpush.xpose.msra.mxu0 %v2248
        %2573 = vmatpush.xpose.msra.mxu0 %v2244
        %2574 = vmatpush.xpose.msra.mxu0 %v2240
        %2575 = vmatpush.xpose.msra.mxu0 %v2236
        %2576 = vmatpush.xpose.msra.mxu0 %v2232
        %2577 = vmatpush.xpose.msra.mxu0 %v2228
        %2578 = vmatpush.xpose.msra.mxu0 %v2224
        %2579 = vmatpush.xpose.msra.mxu0 %v2220
        %2580 = vmatpush.xpose.msra.mxu0 %v2216
        %2581 = vmatpush.xpose.msra.mxu0 %v2212
        %2582 = vmatpush.xpose.msra.mxu0 %v2208
        %2583 = vmatpush.xpose.msra.mxu0 %v2204
        %2584 = vmatmul.f32.gmra.mxu0 %v774
        %v2585 = vpop.f32.mrf.mxu0
        %v2586 = vadd.f32 %v2566, %v2585
        %2587 = vdwg.mxu0
        %2588 = vmatpush.xpose.msra.mxu0 %v2265
        %2589 = vmatpush.xpose.msra.mxu0 %v2261
        %2590 = vmatpush.xpose.msra.mxu0 %v2257
        %2591 = vmatpush.xpose.msra.mxu0 %v2253
        %2592 = vmatpush.xpose.msra.mxu0 %v2249
        %2593 = vmatpush.xpose.msra.mxu0 %v2245
        %2594 = vmatpush.xpose.msra.mxu0 %v2241
        %2595 = vmatpush.xpose.msra.mxu0 %v2237
        %2596 = vmatpush.xpose.msra.mxu0 %v2233
        %2597 = vmatpush.xpose.msra.mxu0 %v2229
        %2598 = vmatpush.xpose.msra.mxu0 %v2225
        %2599 = vmatpush.xpose.msra.mxu0 %v2221
        %2600 = vmatpush.xpose.msra.mxu0 %v2217
        %2601 = vmatpush.xpose.msra.mxu0 %v2213
        %2602 = vmatpush.xpose.msra.mxu0 %v2209
        %2603 = vmatpush.xpose.msra.mxu0 %v2205
        %2604 = vmatmul.f32.gmra.mxu0 %v775
        %v2605 = vpop.f32.mrf.mxu0
        %v2606 = vadd.f32 %v2586, %v2605
        %2607 = vdwg.mxu0
        %2608 = vmatpush.xpose.msra.mxu0 %v2447
        %2609 = vmatpush.xpose.msra.mxu0 %v2444
        %2610 = vmatpush.xpose.msra.mxu0 %v2441
        %2611 = vmatpush.xpose.msra.mxu0 %v2438
        %2612 = vmatpush.xpose.msra.mxu0 %v2435
        %2613 = vmatpush.xpose.msra.mxu0 %v2432
        %2614 = vmatpush.xpose.msra.mxu0 %v2429
        %2615 = vmatpush.xpose.msra.mxu0 %v2426
        %2616 = vmatpush.xpose.msra.mxu0 %v2423
        %2617 = vmatpush.xpose.msra.mxu0 %v2420
        %2618 = vmatpush.xpose.msra.mxu0 %v2417
        %2619 = vmatpush.xpose.msra.mxu0 %v2414
        %2620 = vmatpush.xpose.msra.mxu0 %v2411
        %2621 = vmatpush.xpose.msra.mxu0 %v2408
        %2622 = vmatpush.xpose.msra.mxu0 %v2405
        %2623 = vmatpush.xpose.msra.mxu0 %v2402
        %2624 = vmatmul.f32.gmra.mxu0 %v2399
        %v2625 = vpop.f32.mrf.mxu0
        %v2626 = vadd.f32 %v2606, %v2625
        %2627 = vdwg.mxu0
        %2628 = vmatpush.xpose.msra.mxu0 %v2327
        %2629 = vmatpush.xpose.msra.mxu0 %v2323
        %2630 = vmatpush.xpose.msra.mxu0 %v2319
        %2631 = vmatpush.xpose.msra.mxu0 %v2315
        %2632 = vmatpush.xpose.msra.mxu0 %v2311
        %2633 = vmatpush.xpose.msra.mxu0 %v2307
        %2634 = vmatpush.xpose.msra.mxu0 %v2303
        %2635 = vmatpush.xpose.msra.mxu0 %v2299
        %2636 = vmatpush.xpose.msra.mxu0 %v2295
        %2637 = vmatpush.xpose.msra.mxu0 %v2291
        %2638 = vmatpush.xpose.msra.mxu0 %v2287
        %2639 = vmatpush.xpose.msra.mxu0 %v2283
        %2640 = vmatpush.xpose.msra.mxu0 %v2279
        %2641 = vmatpush.xpose.msra.mxu0 %v2275
        %2642 = vmatpush.xpose.msra.mxu0 %v2271
        %2643 = vmatpush.xpose.msra.mxu0 %v2267
        %2644 = vmatmul.f32.gmra.mxu0 %v773
        %v2645 = vpop.f32.mrf.mxu0
        %v2646 = vadd.f32 0.0, %v2645
        %2647 = vdwg.mxu0
        %2648 = vmatpush.xpose.msra.mxu0 %v2328
        %2649 = vmatpush.xpose.msra.mxu0 %v2324
        %2650 = vmatpush.xpose.msra.mxu0 %v2320
        %2651 = vmatpush.xpose.msra.mxu0 %v2316
        %2652 = vmatpush.xpose.msra.mxu0 %v2312
        %2653 = vmatpush.xpose.msra.mxu0 %v2308
        %2654 = vmatpush.xpose.msra.mxu0 %v2304
        %2655 = vmatpush.xpose.msra.mxu0 %v2300
        %2656 = vmatpush.xpose.msra.mxu0 %v2296
        %2657 = vmatpush.xpose.msra.mxu0 %v2292
        %2658 = vmatpush.xpose.msra.mxu0 %v2288
        %2659 = vmatpush.xpose.msra.mxu0 %v2284
        %2660 = vmatpush.xpose.msra.mxu0 %v2280
        %2661 = vmatpush.xpose.msra.mxu0 %v2276
        %2662 = vmatpush.xpose.msra.mxu0 %v2272
        %2663 = vmatpush.xpose.msra.mxu0 %v2268
        %2664 = vmatmul.f32.gmra.mxu0 %v774
        %v2665 = vpop.f32.mrf.mxu0
        %v2666 = vadd.f32 %v2646, %v2665
        %2667 = vdwg.mxu0
        %2668 = vmatpush.xpose.msra.mxu0 %v2329
        %2669 = vmatpush.xpose.msra.mxu0 %v2325
        %2670 = vmatpush.xpose.msra.mxu0 %v2321
        %2671 = vmatpush.xpose.msra.mxu0 %v2317
        %2672 = vmatpush.xpose.msra.mxu0 %v2313
        %2673 = vmatpush.xpose.msra.mxu0 %v2309
        %2674 = vmatpush.xpose.msra.mxu0 %v2305
        %2675 = vmatpush.xpose.msra.mxu0 %v2301
        %2676 = vmatpush.xpose.msra.mxu0 %v2297
        %2677 = vmatpush.xpose.msra.mxu0 %v2293
        %2678 = vmatpush.xpose.msra.mxu0 %v2289
        %2679 = vmatpush.xpose.msra.mxu0 %v2285
        %2680 = vmatpush.xpose.msra.mxu0 %v2281
        %2681 = vmatpush.xpose.msra.mxu0 %v2277
        %2682 = vmatpush.xpose.msra.mxu0 %v2273
        %2683 = vmatpush.xpose.msra.mxu0 %v2269
        %2684 = vmatmul.f32.gmra.mxu0 %v775
        %v2685 = vpop.f32.mrf.mxu0
        %v2686 = vadd.f32 %v2666, %v2685
        %2687 = vdwg.mxu0
        %2688 = vmatpush.xpose.msra.mxu0 %v2495
        %2689 = vmatpush.xpose.msra.mxu0 %v2492
        %2690 = vmatpush.xpose.msra.mxu0 %v2489
        %2691 = vmatpush.xpose.msra.mxu0 %v2486
        %2692 = vmatpush.xpose.msra.mxu0 %v2483
        %2693 = vmatpush.xpose.msra.mxu0 %v2480
        %2694 = vmatpush.xpose.msra.mxu0 %v2477
        %2695 = vmatpush.xpose.msra.mxu0 %v2474
        %2696 = vmatpush.xpose.msra.mxu0 %v2471
        %2697 = vmatpush.xpose.msra.mxu0 %v2468
        %2698 = vmatpush.xpose.msra.mxu0 %v2465
        %2699 = vmatpush.xpose.msra.mxu0 %v2462
        %2700 = vmatpush.xpose.msra.mxu0 %v2459
        %2701 = vmatpush.xpose.msra.mxu0 %v2456
        %2702 = vmatpush.xpose.msra.mxu0 %v2453
        %2703 = vmatpush.xpose.msra.mxu0 %v2450
        %2704 = vmatmul.f32.gmra.mxu0 %v2399
        %v2705 = vpop.f32.mrf.mxu0
        %v2706 = vadd.f32 %v2686, %v2705
        %2707 = vdwg.mxu0
        %2708 = vmatpush.xpose.msra.mxu0 %v2391
        %2709 = vmatpush.xpose.msra.mxu0 %v2387
        %2710 = vmatpush.xpose.msra.mxu0 %v2383
        %2711 = vmatpush.xpose.msra.mxu0 %v2379
        %2712 = vmatpush.xpose.msra.mxu0 %v2375
        %2713 = vmatpush.xpose.msra.mxu0 %v2371
        %2714 = vmatpush.xpose.msra.mxu0 %v2367
        %2715 = vmatpush.xpose.msra.mxu0 %v2363
        %2716 = vmatpush.xpose.msra.mxu0 %v2359
        %2717 = vmatpush.xpose.msra.mxu0 %v2355
        %2718 = vmatpush.xpose.msra.mxu0 %v2351
        %2719 = vmatpush.xpose.msra.mxu0 %v2347
        %2720 = vmatpush.xpose.msra.mxu0 %v2343
        %2721 = vmatpush.xpose.msra.mxu0 %v2339
        %2722 = vmatpush.xpose.msra.mxu0 %v2335
        %2723 = vmatpush.xpose.msra.mxu0 %v2331
        %2724 = vmatmul.f32.gmra.mxu0 %v773
        %v2725 = vpop.f32.mrf.mxu0
        %v2726 = vadd.f32 0.0, %v2725
        %2727 = vdwg.mxu0
        %2728 = vmatpush.xpose.msra.mxu0 %v2392
        %2729 = vmatpush.xpose.msra.mxu0 %v2388
        %2730 = vmatpush.xpose.msra.mxu0 %v2384
        %2731 = vmatpush.xpose.msra.mxu0 %v2380
        %2732 = vmatpush.xpose.msra.mxu0 %v2376
        %2733 = vmatpush.xpose.msra.mxu0 %v2372
        %2734 = vmatpush.xpose.msra.mxu0 %v2368
        %2735 = vmatpush.xpose.msra.mxu0 %v2364
        %2736 = vmatpush.xpose.msra.mxu0 %v2360
        %2737 = vmatpush.xpose.msra.mxu0 %v2356
        %2738 = vmatpush.xpose.msra.mxu0 %v2352
        %2739 = vmatpush.xpose.msra.mxu0 %v2348
        %2740 = vmatpush.xpose.msra.mxu0 %v2344
        %2741 = vmatpush.xpose.msra.mxu0 %v2340
        %2742 = vmatpush.xpose.msra.mxu0 %v2336
        %2743 = vmatpush.xpose.msra.mxu0 %v2332
        %2744 = vmatmul.f32.gmra.mxu0 %v774
        %v2745 = vpop.f32.mrf.mxu0
        %v2746 = vadd.f32 %v2726, %v2745
        %2747 = vdwg.mxu0
        %2748 = vmatpush.xpose.msra.mxu0 %v2393
        %2749 = vmatpush.xpose.msra.mxu0 %v2389
        %2750 = vmatpush.xpose.msra.mxu0 %v2385
        %2751 = vmatpush.xpose.msra.mxu0 %v2381
        %2752 = vmatpush.xpose.msra.mxu0 %v2377
        %2753 = vmatpush.xpose.msra.mxu0 %v2373
        %2754 = vmatpush.xpose.msra.mxu0 %v2369
        %2755 = vmatpush.xpose.msra.mxu0 %v2365
        %2756 = vmatpush.xpose.msra.mxu0 %v2361
        %2757 = vmatpush.xpose.msra.mxu0 %v2357
        %2758 = vmatpush.xpose.msra.mxu0 %v2353
        %2759 = vmatpush.xpose.msra.mxu0 %v2349
        %2760 = vmatpush.xpose.msra.mxu0 %v2345
        %2761 = vmatpush.xpose.msra.mxu0 %v2341
        %2762 = vmatpush.xpose.msra.mxu0 %v2337
        %2763 = vmatpush.xpose.msra.mxu0 %v2333
        %2764 = vmatmul.f32.gmra.mxu0 %v775
        %v2765 = vpop.f32.mrf.mxu0
        %v2766 = vadd.f32 %v2746, %v2765
        %2767 = vdwg.mxu0
        %2768 = vmatpush.xpose.msra.mxu0 %v2543
        %2769 = vmatpush.xpose.msra.mxu0 %v2540
        %2770 = vmatpush.xpose.msra.mxu0 %v2537
        %2771 = vmatpush.xpose.msra.mxu0 %v2534
        %2772 = vmatpush.xpose.msra.mxu0 %v2531
        %2773 = vmatpush.xpose.msra.mxu0 %v2528
        %2774 = vmatpush.xpose.msra.mxu0 %v2525
        %2775 = vmatpush.xpose.msra.mxu0 %v2522
        %2776 = vmatpush.xpose.msra.mxu0 %v2519
        %2777 = vmatpush.xpose.msra.mxu0 %v2516
        %2778 = vmatpush.xpose.msra.mxu0 %v2513
        %2779 = vmatpush.xpose.msra.mxu0 %v2510
        %2780 = vmatpush.xpose.msra.mxu0 %v2507
        %2781 = vmatpush.xpose.msra.mxu0 %v2504
        %2782 = vmatpush.xpose.msra.mxu0 %v2501
        %2783 = vmatpush.xpose.msra.mxu0 %v2498
        %2784 = vmatmul.f32.gmra.mxu0 %v2399
        %v2785 = vpop.f32.mrf.mxu0
        %v2786 = vadd.f32 %v2766, %v2785
        %2787 = vdwg.mxu0
        %2788 = vmatpush.xpose.msra.mxu0 0.0
        %2789 = vmatpush.xpose.msra.mxu0 0.0
        %2790 = vmatpush.xpose.msra.mxu0 0.0
        %2791 = vmatpush.xpose.msra.mxu0 0.0
        %2792 = vmatpush.xpose.msra.mxu0 0.0
        %2793 = vmatpush.xpose.msra.mxu0 0.0
        %2794 = vmatpush.xpose.msra.mxu0 0.0
        %2795 = vmatpush.xpose.msra.mxu0 0.0
        %2796 = vmatpush.xpose.msra.mxu0 0.0
        %2797 = vmatpush.xpose.msra.mxu0 0.0
        %2798 = vmatpush.xpose.msra.mxu0 0.0
        %2799 = vmatpush.xpose.msra.mxu0 0.0
        %2800 = vmatpush.xpose.msra.mxu0 0.0
        %2801 = vmatpush.xpose.msra.mxu0 0.0
        %2802 = vmatpush.xpose.msra.mxu0 0.0
        %2803 = vmatpush.xpose.msra.mxu0 %v2395
        %2804 = vmatmul.f32.gmra.mxu0 %v773
        %v2805 = vpop.f32.mrf.mxu0
        %v2806 = vadd.f32 0.0, %v2805
        %2807 = vdwg.mxu0
        %2808 = vmatpush.xpose.msra.mxu0 0.0
        %2809 = vmatpush.xpose.msra.mxu0 0.0
        %2810 = vmatpush.xpose.msra.mxu0 0.0
        %2811 = vmatpush.xpose.msra.mxu0 0.0
        %2812 = vmatpush.xpose.msra.mxu0 0.0
        %2813 = vmatpush.xpose.msra.mxu0 0.0
        %2814 = vmatpush.xpose.msra.mxu0 0.0
        %2815 = vmatpush.xpose.msra.mxu0 0.0
        %2816 = vmatpush.xpose.msra.mxu0 0.0
        %2817 = vmatpush.xpose.msra.mxu0 0.0
        %2818 = vmatpush.xpose.msra.mxu0 0.0
        %2819 = vmatpush.xpose.msra.mxu0 0.0
        %2820 = vmatpush.xpose.msra.mxu0 0.0
        %2821 = vmatpush.xpose.msra.mxu0 0.0
        %2822 = vmatpush.xpose.msra.mxu0 0.0
        %2823 = vmatpush.xpose.msra.mxu0 %v2396
        %2824 = vmatmul.f32.gmra.mxu0 %v774
        %v2825 = vpop.f32.mrf.mxu0
        %v2826 = vadd.f32 %v2806, %v2825
        %2827 = vdwg.mxu0
        %2828 = vmatpush.xpose.msra.mxu0 0.0
        %2829 = vmatpush.xpose.msra.mxu0 0.0
        %2830 = vmatpush.xpose.msra.mxu0 0.0
        %2831 = vmatpush.xpose.msra.mxu0 0.0
        %2832 = vmatpush.xpose.msra.mxu0 0.0
        %2833 = vmatpush.xpose.msra.mxu0 0.0
        %2834 = vmatpush.xpose.msra.mxu0 0.0
        %2835 = vmatpush.xpose.msra.mxu0 0.0
        %2836 = vmatpush.xpose.msra.mxu0 0.0
        %2837 = vmatpush.xpose.msra.mxu0 0.0
        %2838 = vmatpush.xpose.msra.mxu0 0.0
        %2839 = vmatpush.xpose.msra.mxu0 0.0
        %2840 = vmatpush.xpose.msra.mxu0 0.0
        %2841 = vmatpush.xpose.msra.mxu0 0.0
        %2842 = vmatpush.xpose.msra.mxu0 0.0
        %2843 = vmatpush.xpose.msra.mxu0 %v2397
        %2844 = vmatmul.f32.gmra.mxu0 %v775
        %v2845 = vpop.f32.mrf.mxu0
        %v2846 = vadd.f32 %v2826, %v2845
        %2847 = vdwg.mxu0
        %2848 = vmatpush.xpose.msra.mxu0 0.0
        %2849 = vmatpush.xpose.msra.mxu0 0.0
        %2850 = vmatpush.xpose.msra.mxu0 0.0
        %2851 = vmatpush.xpose.msra.mxu0 0.0
        %2852 = vmatpush.xpose.msra.mxu0 0.0
        %2853 = vmatpush.xpose.msra.mxu0 0.0
        %2854 = vmatpush.xpose.msra.mxu0 0.0
        %2855 = vmatpush.xpose.msra.mxu0 0.0
        %2856 = vmatpush.xpose.msra.mxu0 0.0
        %2857 = vmatpush.xpose.msra.mxu0 0.0
        %2858 = vmatpush.xpose.msra.mxu0 0.0
        %2859 = vmatpush.xpose.msra.mxu0 0.0
        %2860 = vmatpush.xpose.msra.mxu0 0.0
        %2861 = vmatpush.xpose.msra.mxu0 0.0
        %2862 = vmatpush.xpose.msra.mxu0 0.0
        %2863 = vmatpush.xpose.msra.mxu0 %v2546
        %2864 = vmatmul.f32.gmra.mxu0 %v2399
        %v2865 = vpop.f32.mrf.mxu0
        %v2866 = vadd.f32 %v2846, %v2865
        %2867 = vdwg.mxu0
        %v2868 = vld [vmem:[%s2] sm:$0xff]
        %v2869 = vld [vmem:[%s2 + $0x8] sm:$0xff]
        %v2870 = vld [vmem:[%s2 + $0x10] sm:$0xff]
        %v2871 = vld [vmem:[%s2 + $0x18] sm:$0xff]
        %v2872 = vld [vmem:[%s2 + $0x20] sm:$0xff]
        %v2873 = vld [vmem:[%s2 + $0x28] sm:$0xff]
        %v2874 = vld [vmem:[%s2 + $0x30] sm:$0xff]
        %v2875 = vld [vmem:[%s2 + $0x38] sm:$0xff]
        %v2876 = vld [vmem:[%s2 + $0x40] sm:$0xff]
        %v2877 = vld [vmem:[%s2 + $0x48] sm:$0xff]
        %v2878 = vld [vmem:[%s2 + $0x50] sm:$0xff]
        %v2879 = vld [vmem:[%s2 + $0x58] sm:$0xff]
        %v2880 = vld [vmem:[%s2 + $0x60] sm:$0xff]
        %v2881 = vld [vmem:[%s2 + $0x68] sm:$0xff]
        %v2882 = vld [vmem:[%s2 + $0x70] sm:$0xff]
        %v2883 = vld [vmem:[%s2 + $0x78] sm:$0xff]
        %v2884 = vld [vmem:[%s2 + $0x80] sm:$0xff]
        %v2885 = vld [vmem:[%s2 + $0x88] sm:$0xff]
        %v2886 = vld [vmem:[%s2 + $0x90] sm:$0xff]
        %v2887 = vld [vmem:[%s2 + $0x98] sm:$0xff]
        %v2888 = vld [vmem:[%s2 + $0xa0] sm:$0xff]
        %v2889 = vld [vmem:[%s2 + $0xa8] sm:$0xff]
        %v2890 = vld [vmem:[%s2 + $0xb0] sm:$0xff]
        %v2891 = vld [vmem:[%s2 + $0xb8] sm:$0xff]
        %v2892 = vld [vmem:[%s2 + $0xc0] sm:$0xff]
        %v2893 = vld [vmem:[%s2 + $0xc8] sm:$0xff]
        %v2894 = vld [vmem:[%s2 + $0xd0] sm:$0xff]
        %v2895 = vld [vmem:[%s2 + $0xd8] sm:$0xff]
        %v2896 = vld [vmem:[%s2 + $0xe0] sm:$0xff]
        %v2897 = vld [vmem:[%s2 + $0xe8] sm:$0xff]
        %v2898 = vld [vmem:[%s2 + $0xf0] sm:$0xff]
        %v2899 = vld [vmem:[%s2 + $0xf8] sm:$0xff]
        %v2900 = vld [vmem:[%s2 + $0x100] sm:$0xff]
        %v2901 = vld [vmem:[%s2 + $0x108] sm:$0xff]
        %v2902 = vld [vmem:[%s2 + $0x110] sm:$0xff]
        %v2903 = vld [vmem:[%s2 + $0x118] sm:$0xff]
        %v2904 = vld [vmem:[%s2 + $0x120] sm:$0xff]
        %v2905 = vld [vmem:[%s2 + $0x128] sm:$0xff]
        %v2906 = vld [vmem:[%s2 + $0x130] sm:$0xff]
        %v2907 = vld [vmem:[%s2 + $0x138] sm:$0xff]
        %v2908 = vld [vmem:[%s2 + $0x140] sm:$0xff]
        %v2909 = vld [vmem:[%s2 + $0x148] sm:$0xff]
        %v2910 = vld [vmem:[%s2 + $0x150] sm:$0xff]
        %v2911 = vld [vmem:[%s2 + $0x158] sm:$0xff]
        %v2912 = vld [vmem:[%s2 + $0x160] sm:$0xff]
        %v2913 = vld [vmem:[%s2 + $0x168] sm:$0xff]
        %v2914 = vld [vmem:[%s2 + $0x170] sm:$0xff]
        %v2915 = vld [vmem:[%s2 + $0x178] sm:$0xff]
        %v2916 = vld [vmem:[%s2 + $0x180] sm:$0xff]
        %v2917 = vld [vmem:[%s3] sm:$0xff]
        %v2918 = vld [vmem:[%s3 + $0x8] sm:$0xff]
        %v2919 = vld [vmem:[%s3 + $0x10] sm:$0xff]
        %v2920 = vld [vmem:[%s3 + $0x18] sm:$0xff]
        %v2921 = vld [vmem:[%s3 + $0x20] sm:$0xff]
        %v2922 = vld [vmem:[%s3 + $0x28] sm:$0xff]
        %v2923 = vld [vmem:[%s3 + $0x30] sm:$0xff]
        %v2924 = vld [vmem:[%s3 + $0x38] sm:$0xff]
        %v2925 = vld [vmem:[%s3 + $0x40] sm:$0xff]
        %v2926 = vld [vmem:[%s3 + $0x48] sm:$0xff]
        %v2927 = vld [vmem:[%s3 + $0x50] sm:$0xff]
        %v2928 = vld [vmem:[%s3 + $0x58] sm:$0xff]
        %v2929 = vld [vmem:[%s3 + $0x60] sm:$0xff]
        %v2930 = vld [vmem:[%s3 + $0x68] sm:$0xff]
        %v2931 = vld [vmem:[%s3 + $0x70] sm:$0xff]
        %v2932 = vld [vmem:[%s3 + $0x78] sm:$0xff]
        %v2933 = vld [vmem:[%s3 + $0x80] sm:$0xff]
        %v2934 = vld [vmem:[%s3 + $0x88] sm:$0xff]
        %v2935 = vld [vmem:[%s3 + $0x90] sm:$0xff]
        %v2936 = vld [vmem:[%s3 + $0x98] sm:$0xff]
        %v2937 = vld [vmem:[%s3 + $0xa0] sm:$0xff]
        %v2938 = vld [vmem:[%s3 + $0xa8] sm:$0xff]
        %v2939 = vld [vmem:[%s3 + $0xb0] sm:$0xff]
        %v2940 = vld [vmem:[%s3 + $0xb8] sm:$0xff]
        %v2941 = vld [vmem:[%s3 + $0xc0] sm:$0xff]
        %v2942 = vld [vmem:[%s3 + $0xc8] sm:$0xff]
        %v2943 = vld [vmem:[%s3 + $0xd0] sm:$0xff]
        %v2944 = vld [vmem:[%s3 + $0xd8] sm:$0xff]
        %v2945 = vld [vmem:[%s3 + $0xe0] sm:$0xff]
        %v2946 = vld [vmem:[%s3 + $0xe8] sm:$0xff]
        %v2947 = vld [vmem:[%s3 + $0xf0] sm:$0xff]
        %v2948 = vld [vmem:[%s3 + $0xf8] sm:$0xff]
        %v2949 = vld [vmem:[%s3 + $0x100] sm:$0xff]
        %v2950 = vld [vmem:[%s3 + $0x108] sm:$0xff]
        %v2951 = vld [vmem:[%s3 + $0x110] sm:$0xff]
        %v2952 = vld [vmem:[%s3 + $0x118] sm:$0xff]
        %v2953 = vld [vmem:[%s3 + $0x120] sm:$0xff]
        %v2954 = vld [vmem:[%s3 + $0x128] sm:$0xff]
        %v2955 = vld [vmem:[%s3 + $0x130] sm:$0xff]
        %v2956 = vld [vmem:[%s3 + $0x138] sm:$0xff]
        %v2957 = vld [vmem:[%s3 + $0x140] sm:$0xff]
        %v2958 = vld [vmem:[%s3 + $0x148] sm:$0xff]
        %v2959 = vld [vmem:[%s3 + $0x150] sm:$0xff]
        %v2960 = vld [vmem:[%s3 + $0x158] sm:$0xff]
        %v2961 = vld [vmem:[%s3 + $0x160] sm:$0xff]
        %v2962 = vld [vmem:[%s3 + $0x168] sm:$0xff]
        %v2963 = vld [vmem:[%s3 + $0x170] sm:$0xff]
        %v2964 = vld [vmem:[%s3 + $0x178] sm:$0xff]
        %v2965 = vld [vmem:[%s3 + $0x180] sm:$0xff]
        %2966 = vmatpush.msra.mxu0 %v2932
        %2967 = vmatpush.msra.mxu0 %v2931
        %2968 = vmatpush.msra.mxu0 %v2930
        %2969 = vmatpush.msra.mxu0 %v2929
        %2970 = vmatpush.msra.mxu0 %v2928
        %2971 = vmatpush.msra.mxu0 %v2927
        %2972 = vmatpush.msra.mxu0 %v2926
        %2973 = vmatpush.msra.mxu0 %v2925
        %2974 = vmatpush.msra.mxu0 %v2924
        %2975 = vmatpush.msra.mxu0 %v2923
        %2976 = vmatpush.msra.mxu0 %v2922
        %2977 = vmatpush.msra.mxu0 %v2921
        %2978 = vmatpush.msra.mxu0 %v2920
        %2979 = vmatpush.msra.mxu0 %v2919
        %2980 = vmatpush.msra.mxu0 %v2918
        %2981 = vmatpush.msra.mxu0 %v2917
        %2982 = vmatmul.f32.gmra.mxu0 %v773
        %v2983 = vpop.f32.mrf.mxu0
        %v2984 = vadd.f32 0.0, %v2983
        %2985 = vdwg.mxu0
        %2986 = vmatpush.msra.mxu0 %v2948
        %2987 = vmatpush.msra.mxu0 %v2947
        %2988 = vmatpush.msra.mxu0 %v2946
        %2989 = vmatpush.msra.mxu0 %v2945
        %2990 = vmatpush.msra.mxu0 %v2944
        %2991 = vmatpush.msra.mxu0 %v2943
        %2992 = vmatpush.msra.mxu0 %v2942
        %2993 = vmatpush.msra.mxu0 %v2941
        %2994 = vmatpush.msra.mxu0 %v2940
        %2995 = vmatpush.msra.mxu0 %v2939
        %2996 = vmatpush.msra.mxu0 %v2938
        %2997 = vmatpush.msra.mxu0 %v2937
        %2998 = vmatpush.msra.mxu0 %v2936
        %2999 = vmatpush.msra.mxu0 %v2935
        %3000 = vmatpush.msra.mxu0 %v2934
        %3001 = vmatpush.msra.mxu0 %v2933
        %3002 = vmatmul.f32.gmra.mxu0 %v774
        %v3003 = vpop.f32.mrf.mxu0
        %v3004 = vadd.f32 %v2984, %v3003
        %3005 = vdwg.mxu0
        %3006 = vmatpush.msra.mxu0 %v2964
        %3007 = vmatpush.msra.mxu0 %v2963
        %3008 = vmatpush.msra.mxu0 %v2962
        %3009 = vmatpush.msra.mxu0 %v2961
        %3010 = vmatpush.msra.mxu0 %v2960
        %3011 = vmatpush.msra.mxu0 %v2959
        %3012 = vmatpush.msra.mxu0 %v2958
        %3013 = vmatpush.msra.mxu0 %v2957
        %3014 = vmatpush.msra.mxu0 %v2956
        %3015 = vmatpush.msra.mxu0 %v2955
        %3016 = vmatpush.msra.mxu0 %v2954
        %3017 = vmatpush.msra.mxu0 %v2953
        %3018 = vmatpush.msra.mxu0 %v2952
        %3019 = vmatpush.msra.mxu0 %v2951
        %3020 = vmatpush.msra.mxu0 %v2950
        %3021 = vmatpush.msra.mxu0 %v2949
        %3022 = vmatmul.f32.gmra.mxu0 %v775
        %v3023 = vpop.f32.mrf.mxu0
        %v3024 = vadd.f32 %v3004, %v3023
        %3025 = vdwg.mxu0
        %3026 = vmatpush.msra.mxu0 0.0
        %3027 = vmatpush.msra.mxu0 0.0
        %3028 = vmatpush.msra.mxu0 0.0
        %3029 = vmatpush.msra.mxu0 0.0
        %3030 = vmatpush.msra.mxu0 0.0
        %3031 = vmatpush.msra.mxu0 0.0
        %3032 = vmatpush.msra.mxu0 0.0
        %3033 = vmatpush.msra.mxu0 0.0
        %3034 = vmatpush.msra.mxu0 0.0
        %3035 = vmatpush.msra.mxu0 0.0
        %3036 = vmatpush.msra.mxu0 0.0
        %3037 = vmatpush.msra.mxu0 0.0
        %3038 = vmatpush.msra.mxu0 0.0
        %3039 = vmatpush.msra.mxu0 0.0
        %3040 = vmatpush.msra.mxu0 0.0
        %3041 = vmatpush.msra.mxu0 %v2965
        %3042 = vmatmul.f32.gmra.mxu0 %v2399
        %v3043 = vpop.f32.mrf.mxu0
        %v3044 = vadd.f32 %v3024, %v3043
        %3045 = vdwg.mxu0
        %v3047 = vsel %vm979, %v2866, 0
        %3049 = vmatpush.msra.mxu0 %v2883
        %3050 = vmatpush.msra.mxu0 %v2882
        %3051 = vmatpush.msra.mxu0 %v2881
        %3052 = vmatpush.msra.mxu0 %v2880
        %3053 = vmatpush.msra.mxu0 %v2879
        %3054 = vmatpush.msra.mxu0 %v2878
        %3055 = vmatpush.msra.mxu0 %v2877
        %3056 = vmatpush.msra.mxu0 %v2876
        %3057 = vmatpush.msra.mxu0 %v2875
        %3058 = vmatpush.msra.mxu0 %v2874
        %3059 = vmatpush.msra.mxu0 %v2873
        %3060 = vmatpush.msra.mxu0 %v2872
        %3061 = vmatpush.msra.mxu0 %v2871
        %3062 = vmatpush.msra.mxu0 %v2870
        %3063 = vmatpush.msra.mxu0 %v2869
        %3064 = vmatpush.msra.mxu0 %v2868
        %3065 = vmatmul.f32.gmra.mxu0 %v2626
        %v3066 = vpop.f32.mrf.mxu0
        %v3067 = vadd.f32 %v3044, %v3066
        %3068 = vdwg.mxu0
        %3069 = vmatpush.msra.mxu0 %v2899
        %3070 = vmatpush.msra.mxu0 %v2898
        %3071 = vmatpush.msra.mxu0 %v2897
        %3072 = vmatpush.msra.mxu0 %v2896
        %3073 = vmatpush.msra.mxu0 %v2895
        %3074 = vmatpush.msra.mxu0 %v2894
        %3075 = vmatpush.msra.mxu0 %v2893
        %3076 = vmatpush.msra.mxu0 %v2892
        %3077 = vmatpush.msra.mxu0 %v2891
        %3078 = vmatpush.msra.mxu0 %v2890
        %3079 = vmatpush.msra.mxu0 %v2889
        %3080 = vmatpush.msra.mxu0 %v2888
        %3081 = vmatpush.msra.mxu0 %v2887
        %3082 = vmatpush.msra.mxu0 %v2886
        %3083 = vmatpush.msra.mxu0 %v2885
        %3084 = vmatpush.msra.mxu0 %v2884
        %3085 = vmatmul.f32.gmra.mxu0 %v2706
        %v3086 = vpop.f32.mrf.mxu0
        %v3087 = vadd.f32 %v3067, %v3086
        %3088 = vdwg.mxu0
        %3089 = vmatpush.msra.mxu0 %v2915
        %3090 = vmatpush.msra.mxu0 %v2914
        %3091 = vmatpush.msra.mxu0 %v2913
        %3092 = vmatpush.msra.mxu0 %v2912
        %3093 = vmatpush.msra.mxu0 %v2911
        %3094 = vmatpush.msra.mxu0 %v2910
        %3095 = vmatpush.msra.mxu0 %v2909
        %3096 = vmatpush.msra.mxu0 %v2908
        %3097 = vmatpush.msra.mxu0 %v2907
        %3098 = vmatpush.msra.mxu0 %v2906
        %3099 = vmatpush.msra.mxu0 %v2905
        %3100 = vmatpush.msra.mxu0 %v2904
        %3101 = vmatpush.msra.mxu0 %v2903
        %3102 = vmatpush.msra.mxu0 %v2902
        %3103 = vmatpush.msra.mxu0 %v2901
        %3104 = vmatpush.msra.mxu0 %v2900
        %3105 = vmatmul.f32.gmra.mxu0 %v2786
        %v3106 = vpop.f32.mrf.mxu0
        %v3107 = vadd.f32 %v3087, %v3106
        %3108 = vdwg.mxu0
        %3109 = vmatpush.msra.mxu0 0.0
        %3110 = vmatpush.msra.mxu0 0.0
        %3111 = vmatpush.msra.mxu0 0.0
        %3112 = vmatpush.msra.mxu0 0.0
        %3113 = vmatpush.msra.mxu0 0.0
        %3114 = vmatpush.msra.mxu0 0.0
        %3115 = vmatpush.msra.mxu0 0.0
        %3116 = vmatpush.msra.mxu0 0.0
        %3117 = vmatpush.msra.mxu0 0.0
        %3118 = vmatpush.msra.mxu0 0.0
        %3119 = vmatpush.msra.mxu0 0.0
        %3120 = vmatpush.msra.mxu0 0.0
        %3121 = vmatpush.msra.mxu0 0.0
        %3122 = vmatpush.msra.mxu0 0.0
        %3123 = vmatpush.msra.mxu0 0.0
        %3124 = vmatpush.msra.mxu0 %v2916
        %3125 = vmatmul.f32.gmra.mxu0 %v3047
        %v3126 = vpop.f32.mrf.mxu0
        %v3127 = vadd.f32 %v3107, %v3126
        %3128 = vdwg.mxu0
        %v3129 = vld [vmem:[%s4] sm:$0x1]
        %v3130 = vmul.f32 %v3127, %v3129
        %v3131 = vld [vmem:[%s5] sm:$0x1]
        %v3132 = vadd.f32 %v3130, %v3131
        %v3133 = vmax.f32 %v3132, 0.0
        %v3134 = vld [vmem:[%s6] sm:$0xff]
        %v3135 = vld [vmem:[%s6 + $0x8] sm:$0xff]
        %v3136 = vld [vmem:[%s6 + $0x10] sm:$0xff]
        %v3137 = vld [vmem:[%s6 + $0x18] sm:$0xff]
        %v3138 = vld [vmem:[%s6 + $0x20] sm:$0xff]
        %v3139 = vld [vmem:[%s6 + $0x28] sm:$0xff]
        %v3140 = vld [vmem:[%s6 + $0x30] sm:$0xff]
        %v3141 = vld [vmem:[%s6 + $0x38] sm:$0xff]
        %v3142 = vld [vmem:[%s6 + $0x40] sm:$0xff]
        %v3143 = vld [vmem:[%s6 + $0x48] sm:$0xff]
        %v3144 = vld [vmem:[%s6 + $0x50] sm:$0xff]
        %v3145 = vld [vmem:[%s6 + $0x58] sm:$0xff]
        %v3146 = vld [vmem:[%s6 + $0x60] sm:$0xff]
        %v3147 = vld [vmem:[%s6 + $0x68] sm:$0xff]
        %v3148 = vld [vmem:[%s6 + $0x70] sm:$0xff]
        %v3149 = vld [vmem:[%s6 + $0x78] sm:$0xff]
        %3150 = vmatpush.msra.mxu0 %v3149
        %3151 = vmatpush.msra.mxu0 %v3148
        %3152 = vmatpush.msra.mxu0 %v3147
        %3153 = vmatpush.msra.mxu0 %v3146
        %3154 = vmatpush.msra.mxu0 %v3145
        %3155 = vmatpush.msra.mxu0 %v3144
        %3156 = vmatpush.msra.mxu0 %v3143
        %3157 = vmatpush.msra.mxu0 %v3142
        %3158 = vmatpush.msra.mxu0 %v3141
        %3159 = vmatpush.msra.mxu0 %v3140
        %3160 = vmatpush.msra.mxu0 %v3139
        %3161 = vmatpush.msra.mxu0 %v3138
        %3162 = vmatpush.msra.mxu0 %v3137
        %3163 = vmatpush.msra.mxu0 %v3136
        %3164 = vmatpush.msra.mxu0 %v3135
        %3165 = vmatpush.msra.mxu0 %v3134
        %3166 = vmatmul.f32.gmra.mxu0 %v3133
        %v3167 = vpop.f32.mrf.mxu0
        %v3168 = vadd.f32 0.0, %v3167
        %3169 = vdwg.mxu0
        %v3170 = vld [vmem:[%s7] sm:$0x1]
        %v3171 = vmul.f32 %v3168, %v3170
        %v3172 = vld [vmem:[%s8] sm:$0x1]
        %v3173 = vadd.f32 %v3171, %v3172
        %v3174 = vmax.f32 %v3173, 0.0
        %v3175 = vld [vmem:[%s9] sm:$0xff]
        %v3176 = vld [vmem:[%s9 + $0x8] sm:$0xff]
        %v3177 = vld [vmem:[%s9 + $0x10] sm:$0xff]
        %v3178 = vld [vmem:[%s9 + $0x18] sm:$0xff]
        %v3179 = vld [vmem:[%s9 + $0x20] sm:$0xff]
        %v3180 = vld [vmem:[%s9 + $0x28] sm:$0xff]
        %v3181 = vld [vmem:[%s9 + $0x30] sm:$0xff]
        %v3182 = vld [vmem:[%s9 + $0x38] sm:$0xff]
        %vm3183 = vcmask 523264
        %v3185 = vsel %vm3183, %v3174, 0
        %3187 = vmatpush.msra.mxu0 0.0
        %3188 = vmatpush.msra.mxu0 0.0
        %3189 = vmatpush.msra.mxu0 0.0
        %3190 = vmatpush.msra.mxu0 0.0
        %3191 = vmatpush.msra.mxu0 0.0
        %3192 = vmatpush.msra.mxu0 0.0
        %3193 = vmatpush.msra.mxu0 0.0
        %3194 = vmatpush.msra.mxu0 0.0
        %3195 = vmatpush.msra.mxu0 %v3182
        %3196 = vmatpush.msra.mxu0 %v3181
        %3197 = vmatpush.msra.mxu0 %v3180
        %3198 = vmatpush.msra.mxu0 %v3179
        %3199 = vmatpush.msra.mxu0 %v3178
        %3200 = vmatpush.msra.mxu0 %v3177
        %3201 = vmatpush.msra.mxu0 %v3176
        %3202 = vmatpush.msra.mxu0 %v3175
        %3203 = vmatmul.f32.gmra.mxu0 %v3185
        %v3204 = vpop.f32.mrf.mxu0
        %v3205 = vadd.f32 0.0, %v3204
        %3206 = vdwg.mxu0
        %v3207 = vld [vmem:[%s10] sm:$0x1]
        %v3208 = vmul.f32 %v3205, %v3207
        %v3209 = vld [vmem:[%s11] sm:$0x1]
        %v3210 = vadd.f32 %v3208, %v3209
        %v3211 = vmax.f32 %v3210, 0.0
        %vm3212 = vcmask 98304
        %3213 = vst.msk [vmem:[%s418] sm:$0x1] %vm3212, %v3211
        %s3214 = sand.u32 %s296, 1
        %s3215 = scalar_lea.sflag [#allocation3], %s3214
        %s3216 = sand.u32 %s296, 1
        %s3217 = scalar_lea.vmem [#allocation2], %s3216
        // Predicated region
        $region69: #{forward.41} parent=67 // pred_check
          %p3218 = pneg %p306
        $region70: #{forward.41} parent=67 // pred_check_branch
          %3220 = sbr.rel (%p3218) target = $region72
        $region71: #{forward.41} parent=67 // pred_region
          %3222 = vsyncadd %s3215, 0
          %s3223 = scalar_lea.hbm %s12, %s26
          %s3225 = sshll.u32 %s3217, 4
          %s3226 = int_to_ptr.vmem [resolvable:$true] %s3225
          %s3227 = sshll.u32 %s3223, 4
          %s3228 = int_to_ptr.hbm [resolvable:$true] %s3227
          %3230 = dma.vmem_to_hbm [thread:$0]  %s3226, 16, %s3228, %s3215
        $region72: #{forward.41} parent=67 // pred_fallthru
          _
      $region68: #{forward.41} parent=5 // pred_fallthru
        _
      %p3231 = scmp.le.s32.totalorder 2, %s21
      // Predicated region
      $region73: #{forward.41} parent=5 // pred_check
        %p3232 = pneg %p3231
      $region74: #{forward.41} parent=5 // pred_check_branch
        %3234 = sbr.rel (%p3232) target = $region76
      $region75: #{forward.41} parent=5 // pred_region
        %s3235 = ssub.s32 %s21, 2
        // Predicated region
        $region77: #{forward.41} parent=75 // pred_check
          %p3236 = pneg %p312
        $region78: #{forward.41} parent=75 // pred_check_branch
          %3238 = sbr.rel (%p3236) target = $region80
        $region79: #{forward.41} parent=75 // pred_region
          %s3239 = sand.u32 %s297, 1
          %s3240 = scalar_lea.sflag [#allocation3], %s3239
          %s3241 = sand.u32 %s297, 1
          %s3242 = scalar_lea.vmem [#allocation2], %s3241
          %3244 = dma.done %s3240, 16
        $region80: #{forward.41} parent=75 // pred_fallthru
          _
      $region76: #{forward.41} parent=5 // pred_fallthru
        _
    $region6: #{forward.41} parent=1 // loop_footer
      %s25 = sadd.s32 1, %s21
    $region7: #{forward.41} parent=1 // loop_footer_branch
      %20 = sbr.rel target = $region3
    $region8: #{forward.41} parent=1 // loop_exit
      _
    %3245 = vsyncpa [#allocation3], 1
    %s3246 = scalar_lea.sflag [#allocation3], 1
    %3247 = vsyncpa %s3246, 1

</llo_original>
